<compile_context>
chip_gen: v5e
topology: v5e:2x2
jax: 0.10.0
libtpu: 0.0.40
codegen_flags: <defaults>
</compile_context>

<pallas_src>
import jax
import jax.numpy as jnp
from jax.experimental import pallas as pl
from jax.experimental.pallas import tpu as pltpu

EPS = 1e-5
LANE = 128

# Architecture constants. Linear(256, 512) after three valid 5x5 convs implies a
# 13x13 input: 13 -> 9 -> 5 -> 1.
B = 2
KH = KW = 5
H_IN = W_IN = 13
C_IN = 3
C1, C2, C3 = 32, 128, 256
OH1 = OW1 = 9
OH2 = OW2 = 5
M1 = B * OH1 * OW1          # 162 conv1 output rows (b-major, then i, then j)
M2 = B * OH2 * OW2          # 50  conv2 output rows
K1 = KH * KW * C_IN         # 75
K1P = LANE                  # conv1 K padded to 128
K2 = KH * KW * LANE         # 3200 (conv1 Cout padded 32 -> 128)
K3 = KH * KW * C2           # 3200
D1 = 512
KC = 640                    # K-chunk for the big matmuls (multiple of 128)


# ----------------------------------------------------------------------------
# The single fused kernel.
# ----------------------------------------------------------------------------
def _discriminator_kernel(p1_ref, w1_ref, s1_ref,
                          w2_ref, s2_ref,
                          w3_ref, s3_ref,
                          wd1_ref, sd1_ref,
                          wd2_ref, sd2_ref,
                          o_ref,
                          y1_ref, p2_ref, y2_ref, p3_ref):
    # ---- conv1 + folded BN + ReLU : (162,128) x (128,128) bf16 -> f32 ----
    a1 = jnp.dot(p1_ref[...], w1_ref[...], preferred_element_type=jnp.float32)
    y1_ref[...] = jnp.maximum(a1 + s1_ref[...], 0.0)

    # ---- in-VMEM im2col for conv2: shape-matched (5,128) copies only ----
    # P2[b*25 + i*5 + j, t*128 + c] = conv1_out[b, i+di, j+dj, c],  t = di*5 + dj
    for di in range(KH):
        for dj in range(KW):
            t = di * KW + dj
            for b in range(B):
                for i in range(OH2):
                    src = b * (OH1 * OW1) + (i + di) * OW1 + dj
                    dst = b * (OH2 * OW2) + i * OW2
                    p2_ref[dst:dst + OW2, t * LANE:(t + 1) * LANE] = (
                        y1_ref[src:src + OW2, :])

    # ---- conv2 + folded BN + ReLU : (50,3200) x (3200,128), K chunked ----
    acc2 = jnp.zeros((M2, C2), jnp.float32)
    for kc in range(0, K2, KC):
        acc2 = acc2 + jnp.dot(p2_ref[:, kc:kc + KC].astype(jnp.bfloat16),
                              w2_ref[kc:kc + KC, :],
                              preferred_element_type=jnp.float32)
    y2_ref[...] = jnp.maximum(acc2 + s2_ref[...], 0.0)

    # ---- flatten conv2 output into the conv3 (== flatten) row layout (B, 3200) ----
    for b in range(B):
        for s in range(OH2 * OW2):
            r = b * OH2 * OW2 + s
            p3_ref[b:b + 1, s * LANE:(s + 1) * LANE] = y2_ref[r:r + 1, :]

    # ---- conv3 + folded BN + ReLU : spatial 1x1 -> dense (2,3200) x (3200,256) ----
    acc3 = jnp.zeros((B, C3), jnp.float32)
    for kc in range(0, K3, KC):
        acc3 = acc3 + jnp.dot(p3_ref[:, kc:kc + KC].astype(jnp.bfloat16),
                              w3_ref[kc:kc + KC, :],
                              preferred_element_type=jnp.float32)
    y3 = jnp.maximum(acc3 + s3_ref[...], 0.0).astype(jnp.bfloat16)

    # ---- dense1 + folded BN + ReLU : (2,256) x (256,512) ----
    h = jnp.dot(y3, wd1_ref[...], preferred_element_type=jnp.float32)
    h = jnp.maximum(h + sd1_ref[...], 0.0).astype(jnp.bfloat16)

    # ---- dense2 + sigmoid : (2,512) x (512,128-padded); caller slices column 0 ----
    z = jnp.dot(h, wd2_ref[...], preferred_element_type=jnp.float32) + sd2_ref[...]
    o_ref[...] = jax.nn.sigmoid(z)


# ----------------------------------------------------------------------------
# Wrapper: conv1 im2col (tiny, done once in XLA) + one pallas_call.
# ----------------------------------------------------------------------------
@jax.jit
def discriminator_forward(x_nchw, params):
    x = jnp.transpose(x_nchw, (0, 2, 3, 1)).astype(jnp.float32)   # NCHW -> NHWC
    # conv1 im2col, columns tap-major: col = (di*5+dj)*C_IN + c; rows b-major.
    cols = [x[:, di:di + OH1, dj:dj + OW1, :] for di in range(KH) for dj in range(KW)]
    patches = jnp.stack(cols, axis=3).reshape(M1, K1)
    patches = jnp.pad(patches, ((0, 0), (0, K1P - K1))).astype(jnp.bfloat16)

    def full2d(shape):
        return pl.BlockSpec(shape, lambda i: (0, 0))

    out = pl.pallas_call(
        _discriminator_kernel,
        out_shape=jax.ShapeDtypeStruct((B, LANE), jnp.float32),
        grid=(1,),
        in_specs=[
            full2d((M1, K1P)),                       # conv1 patches
            full2d((K1P, LANE)), full2d((1, LANE)),  # conv1 W', shift'
            full2d((K2, LANE)), full2d((1, LANE)),   # conv2 W', shift'
            full2d((K3, C3)), full2d((1, C3)),       # conv3 W', shift'
            full2d((C3, D1)), full2d((1, D1)),       # dense1 W', shift'
            full2d((D1, LANE)), full2d((1, LANE)),   # dense2 W (padded), bias
        ],
        out_specs=full2d((B, LANE)),
        scratch_shapes=[
            pltpu.VMEM((M1, LANE), jnp.float32),     # conv1 activations
            pltpu.VMEM((M2, K2), jnp.float32),       # conv2 im2col matrix
            pltpu.VMEM((M2, LANE), jnp.float32),     # conv2 activations
            pltpu.VMEM((B, K3), jnp.float32),        # conv3/flatten input
        ],
        compiler_params=pltpu.CompilerParams(
            dimension_semantics=("arbitrary",),
            vmem_limit_bytes=32 * 1024 * 1024,
        ),
    )(patches, params["w1"], params["s1"], params["w2"], params["s2"],
      params["w3"], params["s3"], params["wd1"], params["sd1"],
      params["wd2"], params["sd2"])
    return out[:, :1]   # real dense2 output is column 0 of the lane-dense block


# ----------------------------------------------------------------------------
# Deterministic synthetic parameters with BN + bias folded into the weights.
# (If loading real PyTorch Conv2d weights, permute (Cout,Cin,KH,KW)->(KH,KW,Cin,Cout)
#  before flattening to match the tap-major im2col column order used here.)
# ----------------------------------------------------------------------------
def _bn_fold(key, c):
    k1, k2, k3, k4 = jax.random.split(key, 4)
    gamma = 1.0 + 0.1 * jax.random.normal(k1, (c,), jnp.float32)
    beta = 0.1 * jax.random.normal(k2, (c,), jnp.float32)
    mean = 0.1 * jax.random.normal(k3, (c,), jnp.float32)
    var = jnp.abs(jax.random.normal(k4, (c,), jnp.float32)) + 0.5
    scale = gamma / jnp.sqrt(var + EPS)
    shift = beta - mean * scale
    return scale, shift


def init_params(key):
    ks = jax.random.split(key, 10)
    p = {}

    # conv1 (3 -> 32): K padded 75 -> 128, Cout padded 32 -> 128.
    w = jax.random.normal(ks[0], (KH, KW, C_IN, C1), jnp.float32) / jnp.sqrt(float(K1))
    b = 0.01 * jax.random.normal(ks[1], (C1,), jnp.float32)
    sc, sh = _bn_fold(ks[1], C1)
    wm = w.reshape(K1, C1) * sc[None, :]
    sv = b * sc + sh
    wm = jnp.pad(wm, ((0, K1P - K1), (0, LANE - C1)))
    sv = jnp.pad(sv, (0, LANE - C1))
    p["w1"], p["s1"] = wm.astype(jnp.bfloat16), sv.reshape(1, LANE)

    # conv2 (32 -> 128): input channels zero-padded 32 -> 128 to match conv1's padding.
    w = jax.random.normal(ks[2], (KH, KW, C1, C2), jnp.float32) / jnp.sqrt(float(KH * KW * C1))
    b = 0.01 * jax.random.normal(ks[3], (C2,), jnp.float32)
    sc, sh = _bn_fold(ks[3], C2)
    w = jnp.pad(w, ((0, 0), (0, 0), (0, LANE - C1), (0, 0)))       # (5,5,128,128)
    wm = w.reshape(K2, C2) * sc[None, :]
    sv = b * sc + sh
    p["w2"], p["s2"] = wm.astype(jnp.bfloat16), sv.reshape(1, C2)

    # conv3 (128 -> 256)
    w = jax.random.normal(ks[4], (KH, KW, C2, C3), jnp.float32) / jnp.sqrt(float(K3))
    b = 0.01 * jax.random.normal(ks[5], (C3,), jnp.float32)
    sc, sh = _bn_fold(ks[5], C3)
    wm = w.reshape(K3, C3) * sc[None, :]
    sv = b * sc + sh
    p["w3"], p["s3"] = wm.astype(jnp.bfloat16), sv.reshape(1, C3)

    # dense1 (256 -> 512) + BN
    w = jax.random.normal(ks[6], (C3, D1), jnp.float32) / jnp.sqrt(float(C3))
    b = 0.01 * jax.random.normal(ks[7], (D1,), jnp.float32)
    sc, sh = _bn_fold(ks[7], D1)
    wm = w * sc[None, :]
    sv = b * sc + sh
    p["wd1"], p["sd1"] = wm.astype(jnp.bfloat16), sv.reshape(1, D1)

    # dense2 (512 -> 1), no BN; output padded 1 -> 128 lanes.
    w = jax.random.normal(ks[8], (D1, 1), jnp.float32) / jnp.sqrt(float(D1))
    b = 0.01 * jax.random.normal(ks[9], (1,), jnp.float32)
    wm = jnp.pad(w, ((0, 0), (0, LANE - 1)))
    sv = jnp.pad(b, (0, LANE - 1))
    p["wd2"], p["sd2"] = wm.astype(jnp.bfloat16), sv.reshape(1, LANE)
    return p


if __name__ == "__main__":
    key = jax.random.PRNGKey(0)
    pkey, xkey = jax.random.split(key)
    params = init_params(pkey)

    # PyTorch-style NCHW input; spatial 13x13 is what the architecture requires.
    x_nchw = jax.random.normal(xkey, (B, C_IN, H_IN, W_IN), dtype=jnp.float32)

    out = discriminator_forward(x_nchw, params)
    out = jax.block_until_ready(out)

    assert out.shape == (B, 1), out.shape
    assert bool(jnp.all((out >= 0.0) & (out <= 1.0)))   # sigmoid range sanity check
    print("KERNEL_OK")
</pallas_src>

<mosaic_0001>
module attributes {stable_mosaic.version = 11 : i64} {
  func.func @_discriminator_kernel(%arg0: i32, %arg1: memref<162x128xbf16, #tpu.memory_space<vmem>>, %arg2: memref<128x128xbf16, #tpu.memory_space<vmem>>, %arg3: memref<1x128xf32, #tpu.memory_space<vmem>>, %arg4: memref<3200x128xbf16, #tpu.memory_space<vmem>>, %arg5: memref<1x128xf32, #tpu.memory_space<vmem>>, %arg6: memref<3200x256xbf16, #tpu.memory_space<vmem>>, %arg7: memref<1x256xf32, #tpu.memory_space<vmem>>, %arg8: memref<256x512xbf16, #tpu.memory_space<vmem>>, %arg9: memref<1x512xf32, #tpu.memory_space<vmem>>, %arg10: memref<512x128xbf16, #tpu.memory_space<vmem>>, %arg11: memref<1x128xf32, #tpu.memory_space<vmem>>, %arg12: memref<2x128xf32, #tpu.memory_space<vmem>>, %arg13: memref<162x128xf32, #tpu.memory_space<vmem>>, %arg14: memref<50x3200xf32, #tpu.memory_space<vmem>>, %arg15: memref<50x128xf32, #tpu.memory_space<vmem>>, %arg16: memref<2x3200xf32, #tpu.memory_space<vmem>>) attributes {dimension_semantics = [#tpu.dimension_semantics<arbitrary>], iteration_bounds = array<i64: 1>, scalar_prefetch = 0 : i64, scratch_operands = 4 : i64, tpu.core_type = #tpu.core_type<tc>, window_params = [{pipeline_mode = #tpu.pipeline_mode<synchronous>, transform_indices = @transform_0, window_bounds = array<i64: 162, 128>}, {pipeline_mode = #tpu.pipeline_mode<synchronous>, transform_indices = @transform_1, window_bounds = array<i64: 128, 128>}, {pipeline_mode = #tpu.pipeline_mode<synchronous>, transform_indices = @transform_2, window_bounds = array<i64: 1, 128>}, {pipeline_mode = #tpu.pipeline_mode<synchronous>, transform_indices = @transform_3, window_bounds = array<i64: 3200, 128>}, {pipeline_mode = #tpu.pipeline_mode<synchronous>, transform_indices = @transform_4, window_bounds = array<i64: 1, 128>}, {pipeline_mode = #tpu.pipeline_mode<synchronous>, transform_indices = @transform_5, window_bounds = array<i64: 3200, 256>}, {pipeline_mode = #tpu.pipeline_mode<synchronous>, transform_indices = @transform_6, window_bounds = array<i64: 1, 256>}, {pipeline_mode = #tpu.pipeline_mode<synchronous>, transform_indices = @transform_7, window_bounds = array<i64: 256, 512>}, {pipeline_mode = #tpu.pipeline_mode<synchronous>, transform_indices = @transform_8, window_bounds = array<i64: 1, 512>}, {pipeline_mode = #tpu.pipeline_mode<synchronous>, transform_indices = @transform_9, window_bounds = array<i64: 512, 128>}, {pipeline_mode = #tpu.pipeline_mode<synchronous>, transform_indices = @transform_10, window_bounds = array<i64: 1, 128>}, {pipeline_mode = #tpu.pipeline_mode<synchronous>, transform_indices = @transform_11, window_bounds = array<i64: 2, 128>}]} {
    %c0 = arith.constant 0 : index
    %c0_0 = arith.constant 0 : index
    %0 = vector.load %arg1[%c0, %c0_0] : memref<162x128xbf16, #tpu.memory_space<vmem>>, vector<162x128xbf16>
    %c0_1 = arith.constant 0 : index
    %c0_2 = arith.constant 0 : index
    %1 = vector.load %arg2[%c0_1, %c0_2] : memref<128x128xbf16, #tpu.memory_space<vmem>>, vector<128x128xbf16>
    %cst = arith.constant dense<0.000000e+00> : vector<162x128xf32>
    %2 = tpu.matmul %0, %1, %cst {dimension_numbers = #tpu.dot_dimension_numbers<[1], [0], [0], [1], [0, 0, 1, 1], [], []>} : vector<162x128xbf16>, vector<128x128xbf16>, vector<162x128xf32> -> vector<162x128xf32>
    %c0_3 = arith.constant 0 : index
    %c0_4 = arith.constant 0 : index
    %3 = vector.load %arg3[%c0_3, %c0_4] : memref<1x128xf32, #tpu.memory_space<vmem>>, vector<1x128xf32>
    %4 = vector.broadcast %3 : vector<1x128xf32> to vector<162x128xf32>
    %5 = arith.addf %2, %4 : vector<162x128xf32>
    %cst_5 = arith.constant 0.000000e+00 : f32
    %6 = vector.broadcast %cst_5 : f32 to vector<162x128xf32>
    %7 = arith.maximumf %5, %6 : vector<162x128xf32>
    %c0_6 = arith.constant 0 : index
    %c0_7 = arith.constant 0 : index
    %8 = vector.load %arg13[%c0_6, %c0_7] : memref<162x128xf32, #tpu.memory_space<vmem>>, vector<162x128xf32>
    tpu.vector_store %arg13[%c0_6, %c0_7], %7 {strides = array<i32>} : memref<162x128xf32, #tpu.memory_space<vmem>>, vector<162x128xf32>,
    %c0_8 = arith.constant 0 : index
    %c0_9 = arith.constant 0 : index
    %9 = vector.load %arg13[%c0_8, %c0_9] : memref<162x128xf32, #tpu.memory_space<vmem>>, vector<5x128xf32>
    %c0_10 = arith.constant 0 : index
    %c0_11 = arith.constant 0 : index
    %10 = vector.load %arg14[%c0_10, %c0_11] : memref<50x3200xf32, #tpu.memory_space<vmem>>, vector<5x128xf32>
    tpu.vector_store %arg14[%c0_10, %c0_11], %9 {strides = array<i32>} : memref<50x3200xf32, #tpu.memory_space<vmem>>, vector<5x128xf32>,
    %c9 = arith.constant 9 : index
    %c0_12 = arith.constant 0 : index
    %11 = vector.load %arg13[%c9, %c0_12] : memref<162x128xf32, #tpu.memory_space<vmem>>, vector<5x128xf32>
    %c5 = arith.constant 5 : index
    %c0_13 = arith.constant 0 : index
    %12 = vector.load %arg14[%c5, %c0_13] : memref<50x3200xf32, #tpu.memory_space<vmem>>, vector<5x128xf32>
    tpu.vector_store %arg14[%c5, %c0_13], %11 {strides = array<i32>} : memref<50x3200xf32, #tpu.memory_space<vmem>>, vector<5x128xf32>,
    %c18 = arith.constant 18 : index
    %c0_14 = arith.constant 0 : index
    %13 = vector.load %arg13[%c18, %c0_14] : memref<162x128xf32, #tpu.memory_space<vmem>>, vector<5x128xf32>
    %c10 = arith.constant 10 : index
    %c0_15 = arith.constant 0 : index
    %14 = vector.load %arg14[%c10, %c0_15] : memref<50x3200xf32, #tpu.memory_space<vmem>>, vector<5x128xf32>
    tpu.vector_store %arg14[%c10, %c0_15], %13 {strides = array<i32>} : memref<50x3200xf32, #tpu.memory_space<vmem>>, vector<5x128xf32>,
    %c27 = arith.constant 27 : index
    %c0_16 = arith.constant 0 : index
    %15 = vector.load %arg13[%c27, %c0_16] : memref<162x128xf32, #tpu.memory_space<vmem>>, vector<5x128xf32>
    %c15 = arith.constant 15 : index
    %c0_17 = arith.constant 0 : index
    %16 = vector.load %arg14[%c15, %c0_17] : memref<50x3200xf32, #tpu.memory_space<vmem>>, vector<5x128xf32>
    tpu.vector_store %arg14[%c15, %c0_17], %15 {strides = array<i32>} : memref<50x3200xf32, #tpu.memory_space<vmem>>, vector<5x128xf32>,
    %c36 = arith.constant 36 : index
    %c0_18 = arith.constant 0 : index
    %17 = vector.load %arg13[%c36, %c0_18] : memref<162x128xf32, #tpu.memory_space<vmem>>, vector<5x128xf32>
    %c20 = arith.constant 20 : index
    %c0_19 = arith.constant 0 : index
    %18 = vector.load %arg14[%c20, %c0_19] : memref<50x3200xf32, #tpu.memory_space<vmem>>, vector<5x128xf32>
    tpu.vector_store %arg14[%c20, %c0_19], %17 {strides = array<i32>} : memref<50x3200xf32, #tpu.memory_space<vmem>>, vector<5x128xf32>,
    %c81 = arith.constant 81 : index
    %c0_20 = arith.constant 0 : index
    %19 = vector.load %arg13[%c81, %c0_20] : memref<162x128xf32, #tpu.memory_space<vmem>>, vector<5x128xf32>
    %c25 = arith.constant 25 : index
    %c0_21 = arith.constant 0 : index
    %20 = vector.load %arg14[%c25, %c0_21] : memref<50x3200xf32, #tpu.memory_space<vmem>>, vector<5x128xf32>
    tpu.vector_store %arg14[%c25, %c0_21], %19 {strides = array<i32>} : memref<50x3200xf32, #tpu.memory_space<vmem>>, vector<5x128xf32>,
    %c90 = arith.constant 90 : index
    %c0_22 = arith.constant 0 : index
    %21 = vector.load %arg13[%c90, %c0_22] : memref<162x128xf32, #tpu.memory_space<vmem>>, vector<5x128xf32>
    %c30 = arith.constant 30 : index
    %c0_23 = arith.constant 0 : index
    %22 = vector.load %arg14[%c30, %c0_23] : memref<50x3200xf32, #tpu.memory_space<vmem>>, vector<5x128xf32>
    tpu.vector_store %arg14[%c30, %c0_23], %21 {strides = array<i32>} : memref<50x3200xf32, #tpu.memory_space<vmem>>, vector<5x128xf32>,
    %c99 = arith.constant 99 : index
    %c0_24 = arith.constant 0 : index
    %23 = vector.load %arg13[%c99, %c0_24] : memref<162x128xf32, #tpu.memory_space<vmem>>, vector<5x128xf32>
    %c35 = arith.constant 35 : index
    %c0_25 = arith.constant 0 : index
    %24 = vector.load %arg14[%c35, %c0_25] : memref<50x3200xf32, #tpu.memory_space<vmem>>, vector<5x128xf32>
    tpu.vector_store %arg14[%c35, %c0_25], %23 {strides = array<i32>} : memref<50x3200xf32, #tpu.memory_space<vmem>>, vector<5x128xf32>,
    %c108 = arith.constant 108 : index
    %c0_26 = arith.constant 0 : index
    %25 = vector.load %arg13[%c108, %c0_26] : memref<162x128xf32, #tpu.memory_space<vmem>>, vector<5x128xf32>
    %c40 = arith.constant 40 : index
    %c0_27 = arith.constant 0 : index
    %26 = vector.load %arg14[%c40, %c0_27] : memref<50x3200xf32, #tpu.memory_space<vmem>>, vector<5x128xf32>
    tpu.vector_store %arg14[%c40, %c0_27], %25 {strides = array<i32>} : memref<50x3200xf32, #tpu.memory_space<vmem>>, vector<5x128xf32>,
    %c117 = arith.constant 117 : index
    %c0_28 = arith.constant 0 : index
    %27 = vector.load %arg13[%c117, %c0_28] : memref<162x128xf32, #tpu.memory_space<vmem>>, vector<5x128xf32>
    %c45 = arith.constant 45 : index
    %c0_29 = arith.constant 0 : index
    %28 = vector.load %arg14[%c45, %c0_29] : memref<50x3200xf32, #tpu.memory_space<vmem>>, vector<5x128xf32>
    tpu.vector_store %arg14[%c45, %c0_29], %27 {strides = array<i32>} : memref<50x3200xf32, #tpu.memory_space<vmem>>, vector<5x128xf32>,
    %c1 = arith.constant 1 : index
    %c0_30 = arith.constant 0 : index
    %29 = vector.load %arg13[%c1, %c0_30] : memref<162x128xf32, #tpu.memory_space<vmem>>, vector<5x128xf32>
    %c0_31 = arith.constant 0 : index
    %c128 = arith.constant 128 : index
    %30 = vector.load %arg14[%c0_31, %c128] : memref<50x3200xf32, #tpu.memory_space<vmem>>, vector<5x128xf32>
    tpu.vector_store %arg14[%c0_31, %c128], %29 {strides = array<i32>} : memref<50x3200xf32, #tpu.memory_space<vmem>>, vector<5x128xf32>,
    %c10_32 = arith.constant 10 : index
    %c0_33 = arith.constant 0 : index
    %31 = vector.load %arg13[%c10_32, %c0_33] : memref<162x128xf32, #tpu.memory_space<vmem>>, vector<5x128xf32>
    %c5_34 = arith.constant 5 : index
    %c128_35 = arith.constant 128 : index
    %32 = vector.load %arg14[%c5_34, %c128_35] : memref<50x3200xf32, #tpu.memory_space<vmem>>, vector<5x128xf32>
    tpu.vector_store %arg14[%c5_34, %c128_35], %31 {strides = array<i32>} : memref<50x3200xf32, #tpu.memory_space<vmem>>, vector<5x128xf32>,
    %c19 = arith.constant 19 : index
    %c0_36 = arith.constant 0 : index
    %33 = vector.load %arg13[%c19, %c0_36] : memref<162x128xf32, #tpu.memory_space<vmem>>, vector<5x128xf32>
    %c10_37 = arith.constant 10 : index
    %c128_38 = arith.constant 128 : index
    %34 = vector.load %arg14[%c10_37, %c128_38] : memref<50x3200xf32, #tpu.memory_space<vmem>>, vector<5x128xf32>
    tpu.vector_store %arg14[%c10_37, %c128_38], %33 {strides = array<i32>} : memref<50x3200xf32, #tpu.memory_space<vmem>>, vector<5x128xf32>,
    %c28 = arith.constant 28 : index
    %c0_39 = arith.constant 0 : index
    %35 = vector.load %arg13[%c28, %c0_39] : memref<162x128xf32, #tpu.memory_space<vmem>>, vector<5x128xf32>
    %c15_40 = arith.constant 15 : index
    %c128_41 = arith.constant 128 : index
    %36 = vector.load %arg14[%c15_40, %c128_41] : memref<50x3200xf32, #tpu.memory_space<vmem>>, vector<5x128xf32>
    tpu.vector_store %arg14[%c15_40, %c128_41], %35 {strides = array<i32>} : memref<50x3200xf32, #tpu.memory_space<vmem>>, vector<5x128xf32>,
    %c37 = arith.constant 37 : index
    %c0_42 = arith.constant 0 : index
    %37 = vector.load %arg13[%c37, %c0_42] : memref<162x128xf32, #tpu.memory_space<vmem>>, vector<5x128xf32>
    %c20_43 = arith.constant 20 : index
    %c128_44 = arith.constant 128 : index
    %38 = vector.load %arg14[%c20_43, %c128_44] : memref<50x3200xf32, #tpu.memory_space<vmem>>, vector<5x128xf32>
    tpu.vector_store %arg14[%c20_43, %c128_44], %37 {strides = array<i32>} : memref<50x3200xf32, #tpu.memory_space<vmem>>, vector<5x128xf32>,
    %c82 = arith.constant 82 : index
    %c0_45 = arith.constant 0 : index
    %39 = vector.load %arg13[%c82, %c0_45] : memref<162x128xf32, #tpu.memory_space<vmem>>, vector<5x128xf32>
    %c25_46 = arith.constant 25 : index
    %c128_47 = arith.constant 128 : index
    %40 = vector.load %arg14[%c25_46, %c128_47] : memref<50x3200xf32, #tpu.memory_space<vmem>>, vector<5x128xf32>
    tpu.vector_store %arg14[%c25_46, %c128_47], %39 {strides = array<i32>} : memref<50x3200xf32, #tpu.memory_space<vmem>>, vector<5x128xf32>,
    %c91 = arith.constant 91 : index
    %c0_48 = arith.constant 0 : index
    %41 = vector.load %arg13[%c91, %c0_48] : memref<162x128xf32, #tpu.memory_space<vmem>>, vector<5x128xf32>
    %c30_49 = arith.constant 30 : index
    %c128_50 = arith.constant 128 : index
    %42 = vector.load %arg14[%c30_49, %c128_50] : memref<50x3200xf32, #tpu.memory_space<vmem>>, vector<5x128xf32>
    tpu.vector_store %arg14[%c30_49, %c128_50], %41 {strides = array<i32>} : memref<50x3200xf32, #tpu.memory_space<vmem>>, vector<5x128xf32>,
    %c100 = arith.constant 100 : index
    %c0_51 = arith.constant 0 : index
    %43 = vector.load %arg13[%c100, %c0_51] : memref<162x128xf32, #tpu.memory_space<vmem>>, vector<5x128xf32>
    %c35_52 = arith.constant 35 : index
    %c128_53 = arith.constant 128 : index
    %44 = vector.load %arg14[%c35_52, %c128_53] : memref<50x3200xf32, #tpu.memory_space<vmem>>, vector<5x128xf32>
    tpu.vector_store %arg14[%c35_52, %c128_53], %43 {strides = array<i32>} : memref<50x3200xf32, #tpu.memory_space<vmem>>, vector<5x128xf32>,
    %c109 = arith.constant 109 : index
    %c0_54 = arith.constant 0 : index
    %45 = vector.load %arg13[%c109, %c0_54] : memref<162x128xf32, #tpu.memory_space<vmem>>, vector<5x128xf32>
    %c40_55 = arith.constant 40 : index
    %c128_56 = arith.constant 128 : index
    %46 = vector.load %arg14[%c40_55, %c128_56] : memref<50x3200xf32, #tpu.memory_space<vmem>>, vector<5x128xf32>
    tpu.vector_store %arg14[%c40_55, %c128_56], %45 {strides = array<i32>} : memref<50x3200xf32, #tpu.memory_space<vmem>>, vector<5x128xf32>,
    %c118 = arith.constant 118 : index
    %c0_57 = arith.constant 0 : index
    %47 = vector.load %arg13[%c118, %c0_57] : memref<162x128xf32, #tpu.memory_space<vmem>>, vector<5x128xf32>
    %c45_58 = arith.constant 45 : index
    %c128_59 = arith.constant 128 : index
    %48 = vector.load %arg14[%c45_58, %c128_59] : memref<50x3200xf32, #tpu.memory_space<vmem>>, vector<5x128xf32>
    tpu.vector_store %arg14[%c45_58, %c128_59], %47 {strides = array<i32>} : memref<50x3200xf32, #tpu.memory_space<vmem>>, vector<5x128xf32>,
    %c2 = arith.constant 2 : index
    %c0_60 = arith.constant 0 : index
    %49 = vector.load %arg13[%c2, %c0_60] : memref<162x128xf32, #tpu.memory_space<vmem>>, vector<5x128xf32>
    %c0_61 = arith.constant 0 : index
    %c256 = arith.constant 256 : index
    %50 = vector.load %arg14[%c0_61, %c256] : memref<50x3200xf32, #tpu.memory_space<vmem>>, vector<5x128xf32>
    tpu.vector_store %arg14[%c0_61, %c256], %49 {strides = array<i32>} : memref<50x3200xf32, #tpu.memory_space<vmem>>, vector<5x128xf32>,
    %c11 = arith.constant 11 : index
    %c0_62 = arith.constant 0 : index
    %51 = vector.load %arg13[%c11, %c0_62] : memref<162x128xf32, #tpu.memory_space<vmem>>, vector<5x128xf32>
    %c5_63 = arith.constant 5 : index
    %c256_64 = arith.constant 256 : index
    %52 = vector.load %arg14[%c5_63, %c256_64] : memref<50x3200xf32, #tpu.memory_space<vmem>>, vector<5x128xf32>
    tpu.vector_store %arg14[%c5_63, %c256_64], %51 {strides = array<i32>} : memref<50x3200xf32, #tpu.memory_space<vmem>>, vector<5x128xf32>,
    %c20_65 = arith.constant 20 : index
    %c0_66 = arith.constant 0 : index
    %53 = vector.load %arg13[%c20_65, %c0_66] : memref<162x128xf32, #tpu.memory_space<vmem>>, vector<5x128xf32>
    %c10_67 = arith.constant 10 : index
    %c256_68 = arith.constant 256 : index
    %54 = vector.load %arg14[%c10_67, %c256_68] : memref<50x3200xf32, #tpu.memory_space<vmem>>, vector<5x128xf32>
    tpu.vector_store %arg14[%c10_67, %c256_68], %53 {strides = array<i32>} : memref<50x3200xf32, #tpu.memory_space<vmem>>, vector<5x128xf32>,
    %c29 = arith.constant 29 : index
    %c0_69 = arith.constant 0 : index
    %55 = vector.load %arg13[%c29, %c0_69] : memref<162x128xf32, #tpu.memory_space<vmem>>, vector<5x128xf32>
    %c15_70 = arith.constant 15 : index
    %c256_71 = arith.constant 256 : index
    %56 = vector.load %arg14[%c15_70, %c256_71] : memref<50x3200xf32, #tpu.memory_space<vmem>>, vector<5x128xf32>
    tpu.vector_store %arg14[%c15_70, %c256_71], %55 {strides = array<i32>} : memref<50x3200xf32, #tpu.memory_space<vmem>>, vector<5x128xf32>,
    %c38 = arith.constant 38 : index
    %c0_72 = arith.constant 0 : index
    %57 = vector.load %arg13[%c38, %c0_72] : memref<162x128xf32, #tpu.memory_space<vmem>>, vector<5x128xf32>
    %c20_73 = arith.constant 20 : index
    %c256_74 = arith.constant 256 : index
    %58 = vector.load %arg14[%c20_73, %c256_74] : memref<50x3200xf32, #tpu.memory_space<vmem>>, vector<5x128xf32>
    tpu.vector_store %arg14[%c20_73, %c256_74], %57 {strides = array<i32>} : memref<50x3200xf32, #tpu.memory_space<vmem>>, vector<5x128xf32>,
    %c83 = arith.constant 83 : index
    %c0_75 = arith.constant 0 : index
    %59 = vector.load %arg13[%c83, %c0_75] : memref<162x128xf32, #tpu.memory_space<vmem>>, vector<5x128xf32>
    %c25_76 = arith.constant 25 : index
    %c256_77 = arith.constant 256 : index
    %60 = vector.load %arg14[%c25_76, %c256_77] : memref<50x3200xf32, #tpu.memory_space<vmem>>, vector<5x128xf32>
    tpu.vector_store %arg14[%c25_76, %c256_77], %59 {strides = array<i32>} : memref<50x3200xf32, #tpu.memory_space<vmem>>, vector<5x128xf32>,
    %c92 = arith.constant 92 : index
    %c0_78 = arith.constant 0 : index
    %61 = vector.load %arg13[%c92, %c0_78] : memref<162x128xf32, #tpu.memory_space<vmem>>, vector<5x128xf32>
    %c30_79 = arith.constant 30 : index
    %c256_80 = arith.constant 256 : index
    %62 = vector.load %arg14[%c30_79, %c256_80] : memref<50x3200xf32, #tpu.memory_space<vmem>>, vector<5x128xf32>
    tpu.vector_store %arg14[%c30_79, %c256_80], %61 {strides = array<i32>} : memref<50x3200xf32, #tpu.memory_space<vmem>>, vector<5x128xf32>,
    %c101 = arith.constant 101 : index
    %c0_81 = arith.constant 0 : index
    %63 = vector.load %arg13[%c101, %c0_81] : memref<162x128xf32, #tpu.memory_space<vmem>>, vector<5x128xf32>
    %c35_82 = arith.constant 35 : index
    %c256_83 = arith.constant 256 : index
    %64 = vector.load %arg14[%c35_82, %c256_83] : memref<50x3200xf32, #tpu.memory_space<vmem>>, vector<5x128xf32>
    tpu.vector_store %arg14[%c35_82, %c256_83], %63 {strides = array<i32>} : memref<50x3200xf32, #tpu.memory_space<vmem>>, vector<5x128xf32>,
    %c110 = arith.constant 110 : index
    %c0_84 = arith.constant 0 : index
    %65 = vector.load %arg13[%c110, %c0_84] : memref<162x128xf32, #tpu.memory_space<vmem>>, vector<5x128xf32>
    %c40_85 = arith.constant 40 : index
    %c256_86 = arith.constant 256 : index
    %66 = vector.load %arg14[%c40_85, %c256_86] : memref<50x3200xf32, #tpu.memory_space<vmem>>, vector<5x128xf32>
    tpu.vector_store %arg14[%c40_85, %c256_86], %65 {strides = array<i32>} : memref<50x3200xf32, #tpu.memory_space<vmem>>, vector<5x128xf32>,
    %c119 = arith.constant 119 : index
    %c0_87 = arith.constant 0 : index
    %67 = vector.load %arg13[%c119, %c0_87] : memref<162x128xf32, #tpu.memory_space<vmem>>, vector<5x128xf32>
    %c45_88 = arith.constant 45 : index
    %c256_89 = arith.constant 256 : index
    %68 = vector.load %arg14[%c45_88, %c256_89] : memref<50x3200xf32, #tpu.memory_space<vmem>>, vector<5x128xf32>
    tpu.vector_store %arg14[%c45_88, %c256_89], %67 {strides = array<i32>} : memref<50x3200xf32, #tpu.memory_space<vmem>>, vector<5x128xf32>,
    %c3 = arith.constant 3 : index
    %c0_90 = arith.constant 0 : index
    %69 = vector.load %arg13[%c3, %c0_90] : memref<162x128xf32, #tpu.memory_space<vmem>>, vector<5x128xf32>
    %c0_91 = arith.constant 0 : index
    %c384 = arith.constant 384 : index
    %70 = vector.load %arg14[%c0_91, %c384] : memref<50x3200xf32, #tpu.memory_space<vmem>>, vector<5x128xf32>
    tpu.vector_store %arg14[%c0_91, %c384], %69 {strides = array<i32>} : memref<50x3200xf32, #tpu.memory_space<vmem>>, vector<5x128xf32>,
    %c12 = arith.constant 12 : index
    %c0_92 = arith.constant 0 : index
    %71 = vector.load %arg13[%c12, %c0_92] : memref<162x128xf32, #tpu.memory_space<vmem>>, vector<5x128xf32>
    %c5_93 = arith.constant 5 : index
    %c384_94 = arith.constant 384 : index
    %72 = vector.load %arg14[%c5_93, %c384_94] : memref<50x3200xf32, #tpu.memory_space<vmem>>, vector<5x128xf32>
    tpu.vector_store %arg14[%c5_93, %c384_94], %71 {strides = array<i32>} : memref<50x3200xf32, #tpu.memory_space<vmem>>, vector<5x128xf32>,
    %c21 = arith.constant 21 : index
    %c0_95 = arith.constant 0 : index
    %73 = vector.load %arg13[%c21, %c0_95] : memref<162x128xf32, #tpu.memory_space<vmem>>, vector<5x128xf32>
    %c10_96 = arith.constant 10 : index
    %c384_97 = arith.constant 384 : index
    %74 = vector.load %arg14[%c10_96, %c384_97] : memref<50x3200xf32, #tpu.memory_space<vmem>>, vector<5x128xf32>
    tpu.vector_store %arg14[%c10_96, %c384_97], %73 {strides = array<i32>} : memref<50x3200xf32, #tpu.memory_space<vmem>>, vector<5x128xf32>,
    %c30_98 = arith.constant 30 : index
    %c0_99 = arith.constant 0 : index
    %75 = vector.load %arg13[%c30_98, %c0_99] : memref<162x128xf32, #tpu.memory_space<vmem>>, vector<5x128xf32>
    %c15_100 = arith.constant 15 : index
    %c384_101 = arith.constant 384 : index
    %76 = vector.load %arg14[%c15_100, %c384_101] : memref<50x3200xf32, #tpu.memory_space<vmem>>, vector<5x128xf32>
    tpu.vector_store %arg14[%c15_100, %c384_101], %75 {strides = array<i32>} : memref<50x3200xf32, #tpu.memory_space<vmem>>, vector<5x128xf32>,
    %c39 = arith.constant 39 : index
    %c0_102 = arith.constant 0 : index
    %77 = vector.load %arg13[%c39, %c0_102] : memref<162x128xf32, #tpu.memory_space<vmem>>, vector<5x128xf32>
    %c20_103 = arith.constant 20 : index
    %c384_104 = arith.constant 384 : index
    %78 = vector.load %arg14[%c20_103, %c384_104] : memref<50x3200xf32, #tpu.memory_space<vmem>>, vector<5x128xf32>
    tpu.vector_store %arg14[%c20_103, %c384_104], %77 {strides = array<i32>} : memref<50x3200xf32, #tpu.memory_space<vmem>>, vector<5x128xf32>,
    %c84 = arith.constant 84 : index
    %c0_105 = arith.constant 0 : index
    %79 = vector.load %arg13[%c84, %c0_105] : memref<162x128xf32, #tpu.memory_space<vmem>>, vector<5x128xf32>
    %c25_106 = arith.constant 25 : index
    %c384_107 = arith.constant 384 : index
    %80 = vector.load %arg14[%c25_106, %c384_107] : memref<50x3200xf32, #tpu.memory_space<vmem>>, vector<5x128xf32>
    tpu.vector_store %arg14[%c25_106, %c384_107], %79 {strides = array<i32>} : memref<50x3200xf32, #tpu.memory_space<vmem>>, vector<5x128xf32>,
    %c93 = arith.constant 93 : index
    %c0_108 = arith.constant 0 : index
    %81 = vector.load %arg13[%c93, %c0_108] : memref<162x128xf32, #tpu.memory_space<vmem>>, vector<5x128xf32>
    %c30_109 = arith.constant 30 : index
    %c384_110 = arith.constant 384 : index
    %82 = vector.load %arg14[%c30_109, %c384_110] : memref<50x3200xf32, #tpu.memory_space<vmem>>, vector<5x128xf32>
    tpu.vector_store %arg14[%c30_109, %c384_110], %81 {strides = array<i32>} : memref<50x3200xf32, #tpu.memory_space<vmem>>, vector<5x128xf32>,
    %c102 = arith.constant 102 : index
    %c0_111 = arith.constant 0 : index
    %83 = vector.load %arg13[%c102, %c0_111] : memref<162x128xf32, #tpu.memory_space<vmem>>, vector<5x128xf32>
    %c35_112 = arith.constant 35 : index
    %c384_113 = arith.constant 384 : index
    %84 = vector.load %arg14[%c35_112, %c384_113] : memref<50x3200xf32, #tpu.memory_space<vmem>>, vector<5x128xf32>
    tpu.vector_store %arg14[%c35_112, %c384_113], %83 {strides = array<i32>} : memref<50x3200xf32, #tpu.memory_space<vmem>>, vector<5x128xf32>,
    %c111 = arith.constant 111 : index
    %c0_114 = arith.constant 0 : index
    %85 = vector.load %arg13[%c111, %c0_114] : memref<162x128xf32, #tpu.memory_space<vmem>>, vector<5x128xf32>
    %c40_115 = arith.constant 40 : index
    %c384_116 = arith.constant 384 : index
    %86 = vector.load %arg14[%c40_115, %c384_116] : memref<50x3200xf32, #tpu.memory_space<vmem>>, vector<5x128xf32>
    tpu.vector_store %arg14[%c40_115, %c384_116], %85 {strides = array<i32>} : memref<50x3200xf32, #tpu.memory_space<vmem>>, vector<5x128xf32>,
    %c120 = arith.constant 120 : index
    %c0_117 = arith.constant 0 : index
    %87 = vector.load %arg13[%c120, %c0_117] : memref<162x128xf32, #tpu.memory_space<vmem>>, vector<5x128xf32>
    %c45_118 = arith.constant 45 : index
    %c384_119 = arith.constant 384 : index
    %88 = vector.load %arg14[%c45_118, %c384_119] : memref<50x3200xf32, #tpu.memory_space<vmem>>, vector<5x128xf32>
    tpu.vector_store %arg14[%c45_118, %c384_119], %87 {strides = array<i32>} : memref<50x3200xf32, #tpu.memory_space<vmem>>, vector<5x128xf32>,
    %c4 = arith.constant 4 : index
    %c0_120 = arith.constant 0 : index
    %89 = vector.load %arg13[%c4, %c0_120] : memref<162x128xf32, #tpu.memory_space<vmem>>, vector<5x128xf32>
    %c0_121 = arith.constant 0 : index
    %c512 = arith.constant 512 : index
    %90 = vector.load %arg14[%c0_121, %c512] : memref<50x3200xf32, #tpu.memory_space<vmem>>, vector<5x128xf32>
    tpu.vector_store %arg14[%c0_121, %c512], %89 {strides = array<i32>} : memref<50x3200xf32, #tpu.memory_space<vmem>>, vector<5x128xf32>,
    %c13 = arith.constant 13 : index
    %c0_122 = arith.constant 0 : index
    %91 = vector.load %arg13[%c13, %c0_122] : memref<162x128xf32, #tpu.memory_space<vmem>>, vector<5x128xf32>
    %c5_123 = arith.constant 5 : index
    %c512_124 = arith.constant 512 : index
    %92 = vector.load %arg14[%c5_123, %c512_124] : memref<50x3200xf32, #tpu.memory_space<vmem>>, vector<5x128xf32>
    tpu.vector_store %arg14[%c5_123, %c512_124], %91 {strides = array<i32>} : memref<50x3200xf32, #tpu.memory_space<vmem>>, vector<5x128xf32>,
    %c22 = arith.constant 22 : index
    %c0_125 = arith.constant 0 : index
    %93 = vector.load %arg13[%c22, %c0_125] : memref<162x128xf32, #tpu.memory_space<vmem>>, vector<5x128xf32>
    %c10_126 = arith.constant 10 : index
    %c512_127 = arith.constant 512 : index
    %94 = vector.load %arg14[%c10_126, %c512_127] : memref<50x3200xf32, #tpu.memory_space<vmem>>, vector<5x128xf32>
    tpu.vector_store %arg14[%c10_126, %c512_127], %93 {strides = array<i32>} : memref<50x3200xf32, #tpu.memory_space<vmem>>, vector<5x128xf32>,
    %c31 = arith.constant 31 : index
    %c0_128 = arith.constant 0 : index
    %95 = vector.load %arg13[%c31, %c0_128] : memref<162x128xf32, #tpu.memory_space<vmem>>, vector<5x128xf32>
    %c15_129 = arith.constant 15 : index
    %c512_130 = arith.constant 512 : index
    %96 = vector.load %arg14[%c15_129, %c512_130] : memref<50x3200xf32, #tpu.memory_space<vmem>>, vector<5x128xf32>
    tpu.vector_store %arg14[%c15_129, %c512_130], %95 {strides = array<i32>} : memref<50x3200xf32, #tpu.memory_space<vmem>>, vector<5x128xf32>,
    %c40_131 = arith.constant 40 : index
    %c0_132 = arith.constant 0 : index
    %97 = vector.load %arg13[%c40_131, %c0_132] : memref<162x128xf32, #tpu.memory_space<vmem>>, vector<5x128xf32>
    %c20_133 = arith.constant 20 : index
    %c512_134 = arith.constant 512 : index
    %98 = vector.load %arg14[%c20_133, %c512_134] : memref<50x3200xf32, #tpu.memory_space<vmem>>, vector<5x128xf32>
    tpu.vector_store %arg14[%c20_133, %c512_134], %97 {strides = array<i32>} : memref<50x3200xf32, #tpu.memory_space<vmem>>, vector<5x128xf32>,
    %c85 = arith.constant 85 : index
    %c0_135 = arith.constant 0 : index
    %99 = vector.load %arg13[%c85, %c0_135] : memref<162x128xf32, #tpu.memory_space<vmem>>, vector<5x128xf32>
    %c25_136 = arith.constant 25 : index
    %c512_137 = arith.constant 512 : index
    %100 = vector.load %arg14[%c25_136, %c512_137] : memref<50x3200xf32, #tpu.memory_space<vmem>>, vector<5x128xf32>
    tpu.vector_store %arg14[%c25_136, %c512_137], %99 {strides = array<i32>} : memref<50x3200xf32, #tpu.memory_space<vmem>>, vector<5x128xf32>,
    %c94 = arith.constant 94 : index
    %c0_138 = arith.constant 0 : index
    %101 = vector.load %arg13[%c94, %c0_138] : memref<162x128xf32, #tpu.memory_space<vmem>>, vector<5x128xf32>
    %c30_139 = arith.constant 30 : index
    %c512_140 = arith.constant 512 : index
    %102 = vector.load %arg14[%c30_139, %c512_140] : memref<50x3200xf32, #tpu.memory_space<vmem>>, vector<5x128xf32>
    tpu.vector_store %arg14[%c30_139, %c512_140], %101 {strides = array<i32>} : memref<50x3200xf32, #tpu.memory_space<vmem>>, vector<5x128xf32>,
    %c103 = arith.constant 103 : index
    %c0_141 = arith.constant 0 : index
    %103 = vector.load %arg13[%c103, %c0_141] : memref<162x128xf32, #tpu.memory_space<vmem>>, vector<5x128xf32>
    %c35_142 = arith.constant 35 : index
    %c512_143 = arith.constant 512 : index
    %104 = vector.load %arg14[%c35_142, %c512_143] : memref<50x3200xf32, #tpu.memory_space<vmem>>, vector<5x128xf32>
    tpu.vector_store %arg14[%c35_142, %c512_143], %103 {strides = array<i32>} : memref<50x3200xf32, #tpu.memory_space<vmem>>, vector<5x128xf32>,
    %c112 = arith.constant 112 : index
    %c0_144 = arith.constant 0 : index
    %105 = vector.load %arg13[%c112, %c0_144] : memref<162x128xf32, #tpu.memory_space<vmem>>, vector<5x128xf32>
    %c40_145 = arith.constant 40 : index
    %c512_146 = arith.constant 512 : index
    %106 = vector.load %arg14[%c40_145, %c512_146] : memref<50x3200xf32, #tpu.memory_space<vmem>>, vector<5x128xf32>
    tpu.vector_store %arg14[%c40_145, %c512_146], %105 {strides = array<i32>} : memref<50x3200xf32, #tpu.memory_space<vmem>>, vector<5x128xf32>,
    %c121 = arith.constant 121 : index
    %c0_147 = arith.constant 0 : index
    %107 = vector.load %arg13[%c121, %c0_147] : memref<162x128xf32, #tpu.memory_space<vmem>>, vector<5x128xf32>
    %c45_148 = arith.constant 45 : index
    %c512_149 = arith.constant 512 : index
    %108 = vector.load %arg14[%c45_148, %c512_149] : memref<50x3200xf32, #tpu.memory_space<vmem>>, vector<5x128xf32>
    tpu.vector_store %arg14[%c45_148, %c512_149], %107 {strides = array<i32>} : memref<50x3200xf32, #tpu.memory_space<vmem>>, vector<5x128xf32>,
    %c9_150 = arith.constant 9 : index
    %c0_151 = arith.constant 0 : index
    %109 = vector.load %arg13[%c9_150, %c0_151] : memref<162x128xf32, #tpu.memory_space<vmem>>, vector<5x128xf32>
    %c0_152 = arith.constant 0 : index
    %c640 = arith.constant 640 : index
    %110 = vector.load %arg14[%c0_152, %c640] : memref<50x3200xf32, #tpu.memory_space<vmem>>, vector<5x128xf32>
    tpu.vector_store %arg14[%c0_152, %c640], %109 {strides = array<i32>} : memref<50x3200xf32, #tpu.memory_space<vmem>>, vector<5x128xf32>,
    %c18_153 = arith.constant 18 : index
    %c0_154 = arith.constant 0 : index
    %111 = vector.load %arg13[%c18_153, %c0_154] : memref<162x128xf32, #tpu.memory_space<vmem>>, vector<5x128xf32>
    %c5_155 = arith.constant 5 : index
    %c640_156 = arith.constant 640 : index
    %112 = vector.load %arg14[%c5_155, %c640_156] : memref<50x3200xf32, #tpu.memory_space<vmem>>, vector<5x128xf32>
    tpu.vector_store %arg14[%c5_155, %c640_156], %111 {strides = array<i32>} : memref<50x3200xf32, #tpu.memory_space<vmem>>, vector<5x128xf32>,
    %c27_157 = arith.constant 27 : index
    %c0_158 = arith.constant 0 : index
    %113 = vector.load %arg13[%c27_157, %c0_158] : memref<162x128xf32, #tpu.memory_space<vmem>>, vector<5x128xf32>
    %c10_159 = arith.constant 10 : index
    %c640_160 = arith.constant 640 : index
    %114 = vector.load %arg14[%c10_159, %c640_160] : memref<50x3200xf32, #tpu.memory_space<vmem>>, vector<5x128xf32>
    tpu.vector_store %arg14[%c10_159, %c640_160], %113 {strides = array<i32>} : memref<50x3200xf32, #tpu.memory_space<vmem>>, vector<5x128xf32>,
    %c36_161 = arith.constant 36 : index
    %c0_162 = arith.constant 0 : index
    %115 = vector.load %arg13[%c36_161, %c0_162] : memref<162x128xf32, #tpu.memory_space<vmem>>, vector<5x128xf32>
    %c15_163 = arith.constant 15 : index
    %c640_164 = arith.constant 640 : index
    %116 = vector.load %arg14[%c15_163, %c640_164] : memref<50x3200xf32, #tpu.memory_space<vmem>>, vector<5x128xf32>
    tpu.vector_store %arg14[%c15_163, %c640_164], %115 {strides = array<i32>} : memref<50x3200xf32, #tpu.memory_space<vmem>>, vector<5x128xf32>,
    %c45_165 = arith.constant 45 : index
    %c0_166 = arith.constant 0 : index
    %117 = vector.load %arg13[%c45_165, %c0_166] : memref<162x128xf32, #tpu.memory_space<vmem>>, vector<5x128xf32>
    %c20_167 = arith.constant 20 : index
    %c640_168 = arith.constant 640 : index
    %118 = vector.load %arg14[%c20_167, %c640_168] : memref<50x3200xf32, #tpu.memory_space<vmem>>, vector<5x128xf32>
    tpu.vector_store %arg14[%c20_167, %c640_168], %117 {strides = array<i32>} : memref<50x3200xf32, #tpu.memory_space<vmem>>, vector<5x128xf32>,
    %c90_169 = arith.constant 90 : index
    %c0_170 = arith.constant 0 : index
    %119 = vector.load %arg13[%c90_169, %c0_170] : memref<162x128xf32, #tpu.memory_space<vmem>>, vector<5x128xf32>
    %c25_171 = arith.constant 25 : index
    %c640_172 = arith.constant 640 : index
    %120 = vector.load %arg14[%c25_171, %c640_172] : memref<50x3200xf32, #tpu.memory_space<vmem>>, vector<5x128xf32>
    tpu.vector_store %arg14[%c25_171, %c640_172], %119 {strides = array<i32>} : memref<50x3200xf32, #tpu.memory_space<vmem>>, vector<5x128xf32>,
    %c99_173 = arith.constant 99 : index
    %c0_174 = arith.constant 0 : index
    %121 = vector.load %arg13[%c99_173, %c0_174] : memref<162x128xf32, #tpu.memory_space<vmem>>, vector<5x128xf32>
    %c30_175 = arith.constant 30 : index
    %c640_176 = arith.constant 640 : index
    %122 = vector.load %arg14[%c30_175, %c640_176] : memref<50x3200xf32, #tpu.memory_space<vmem>>, vector<5x128xf32>
    tpu.vector_store %arg14[%c30_175, %c640_176], %121 {strides = array<i32>} : memref<50x3200xf32, #tpu.memory_space<vmem>>, vector<5x128xf32>,
    %c108_177 = arith.constant 108 : index
    %c0_178 = arith.constant 0 : index
    %123 = vector.load %arg13[%c108_177, %c0_178] : memref<162x128xf32, #tpu.memory_space<vmem>>, vector<5x128xf32>
    %c35_179 = arith.constant 35 : index
    %c640_180 = arith.constant 640 : index
    %124 = vector.load %arg14[%c35_179, %c640_180] : memref<50x3200xf32, #tpu.memory_space<vmem>>, vector<5x128xf32>
    tpu.vector_store %arg14[%c35_179, %c640_180], %123 {strides = array<i32>} : memref<50x3200xf32, #tpu.memory_space<vmem>>, vector<5x128xf32>,
    %c117_181 = arith.constant 117 : index
    %c0_182 = arith.constant 0 : index
    %125 = vector.load %arg13[%c117_181, %c0_182] : memref<162x128xf32, #tpu.memory_space<vmem>>, vector<5x128xf32>
    %c40_183 = arith.constant 40 : index
    %c640_184 = arith.constant 640 : index
    %126 = vector.load %arg14[%c40_183, %c640_184] : memref<50x3200xf32, #tpu.memory_space<vmem>>, vector<5x128xf32>
    tpu.vector_store %arg14[%c40_183, %c640_184], %125 {strides = array<i32>} : memref<50x3200xf32, #tpu.memory_space<vmem>>, vector<5x128xf32>,
    %c126 = arith.constant 126 : index
    %c0_185 = arith.constant 0 : index
    %127 = vector.load %arg13[%c126, %c0_185] : memref<162x128xf32, #tpu.memory_space<vmem>>, vector<5x128xf32>
    %c45_186 = arith.constant 45 : index
    %c640_187 = arith.constant 640 : index
    %128 = vector.load %arg14[%c45_186, %c640_187] : memref<50x3200xf32, #tpu.memory_space<vmem>>, vector<5x128xf32>
    tpu.vector_store %arg14[%c45_186, %c640_187], %127 {strides = array<i32>} : memref<50x3200xf32, #tpu.memory_space<vmem>>, vector<5x128xf32>,
    %c10_188 = arith.constant 10 : index
    %c0_189 = arith.constant 0 : index
    %129 = vector.load %arg13[%c10_188, %c0_189] : memref<162x128xf32, #tpu.memory_space<vmem>>, vector<5x128xf32>
    %c0_190 = arith.constant 0 : index
    %c768 = arith.constant 768 : index
    %130 = vector.load %arg14[%c0_190, %c768] : memref<50x3200xf32, #tpu.memory_space<vmem>>, vector<5x128xf32>
    tpu.vector_store %arg14[%c0_190, %c768], %129 {strides = array<i32>} : memref<50x3200xf32, #tpu.memory_space<vmem>>, vector<5x128xf32>,
    %c19_191 = arith.constant 19 : index
    %c0_192 = arith.constant 0 : index
    %131 = vector.load %arg13[%c19_191, %c0_192] : memref<162x128xf32, #tpu.memory_space<vmem>>, vector<5x128xf32>
    %c5_193 = arith.constant 5 : index
    %c768_194 = arith.constant 768 : index
    %132 = vector.load %arg14[%c5_193, %c768_194] : memref<50x3200xf32, #tpu.memory_space<vmem>>, vector<5x128xf32>
    tpu.vector_store %arg14[%c5_193, %c768_194], %131 {strides = array<i32>} : memref<50x3200xf32, #tpu.memory_space<vmem>>, vector<5x128xf32>,
    %c28_195 = arith.constant 28 : index
    %c0_196 = arith.constant 0 : index
    %133 = vector.load %arg13[%c28_195, %c0_196] : memref<162x128xf32, #tpu.memory_space<vmem>>, vector<5x128xf32>
    %c10_197 = arith.constant 10 : index
    %c768_198 = arith.constant 768 : index
    %134 = vector.load %arg14[%c10_197, %c768_198] : memref<50x3200xf32, #tpu.memory_space<vmem>>, vector<5x128xf32>
    tpu.vector_store %arg14[%c10_197, %c768_198], %133 {strides = array<i32>} : memref<50x3200xf32, #tpu.memory_space<vmem>>, vector<5x128xf32>,
    %c37_199 = arith.constant 37 : index
    %c0_200 = arith.constant 0 : index
    %135 = vector.load %arg13[%c37_199, %c0_200] : memref<162x128xf32, #tpu.memory_space<vmem>>, vector<5x128xf32>
    %c15_201 = arith.constant 15 : index
    %c768_202 = arith.constant 768 : index
    %136 = vector.load %arg14[%c15_201, %c768_202] : memref<50x3200xf32, #tpu.memory_space<vmem>>, vector<5x128xf32>
    tpu.vector_store %arg14[%c15_201, %c768_202], %135 {strides = array<i32>} : memref<50x3200xf32, #tpu.memory_space<vmem>>, vector<5x128xf32>,
    %c46 = arith.constant 46 : index
    %c0_203 = arith.constant 0 : index
    %137 = vector.load %arg13[%c46, %c0_203] : memref<162x128xf32, #tpu.memory_space<vmem>>, vector<5x128xf32>
    %c20_204 = arith.constant 20 : index
    %c768_205 = arith.constant 768 : index
    %138 = vector.load %arg14[%c20_204, %c768_205] : memref<50x3200xf32, #tpu.memory_space<vmem>>, vector<5x128xf32>
    tpu.vector_store %arg14[%c20_204, %c768_205], %137 {strides = array<i32>} : memref<50x3200xf32, #tpu.memory_space<vmem>>, vector<5x128xf32>,
    %c91_206 = arith.constant 91 : index
    %c0_207 = arith.constant 0 : index
    %139 = vector.load %arg13[%c91_206, %c0_207] : memref<162x128xf32, #tpu.memory_space<vmem>>, vector<5x128xf32>
    %c25_208 = arith.constant 25 : index
    %c768_209 = arith.constant 768 : index
    %140 = vector.load %arg14[%c25_208, %c768_209] : memref<50x3200xf32, #tpu.memory_space<vmem>>, vector<5x128xf32>
    tpu.vector_store %arg14[%c25_208, %c768_209], %139 {strides = array<i32>} : memref<50x3200xf32, #tpu.memory_space<vmem>>, vector<5x128xf32>,
    %c100_210 = arith.constant 100 : index
    %c0_211 = arith.constant 0 : index
    %141 = vector.load %arg13[%c100_210, %c0_211] : memref<162x128xf32, #tpu.memory_space<vmem>>, vector<5x128xf32>
    %c30_212 = arith.constant 30 : index
    %c768_213 = arith.constant 768 : index
    %142 = vector.load %arg14[%c30_212, %c768_213] : memref<50x3200xf32, #tpu.memory_space<vmem>>, vector<5x128xf32>
    tpu.vector_store %arg14[%c30_212, %c768_213], %141 {strides = array<i32>} : memref<50x3200xf32, #tpu.memory_space<vmem>>, vector<5x128xf32>,
    %c109_214 = arith.constant 109 : index
    %c0_215 = arith.constant 0 : index
    %143 = vector.load %arg13[%c109_214, %c0_215] : memref<162x128xf32, #tpu.memory_space<vmem>>, vector<5x128xf32>
    %c35_216 = arith.constant 35 : index
    %c768_217 = arith.constant 768 : index
    %144 = vector.load %arg14[%c35_216, %c768_217] : memref<50x3200xf32, #tpu.memory_space<vmem>>, vector<5x128xf32>
    tpu.vector_store %arg14[%c35_216, %c768_217], %143 {strides = array<i32>} : memref<50x3200xf32, #tpu.memory_space<vmem>>, vector<5x128xf32>,
    %c118_218 = arith.constant 118 : index
    %c0_219 = arith.constant 0 : index
    %145 = vector.load %arg13[%c118_218, %c0_219] : memref<162x128xf32, #tpu.memory_space<vmem>>, vector<5x128xf32>
    %c40_220 = arith.constant 40 : index
    %c768_221 = arith.constant 768 : index
    %146 = vector.load %arg14[%c40_220, %c768_221] : memref<50x3200xf32, #tpu.memory_space<vmem>>, vector<5x128xf32>
    tpu.vector_store %arg14[%c40_220, %c768_221], %145 {strides = array<i32>} : memref<50x3200xf32, #tpu.memory_space<vmem>>, vector<5x128xf32>,
    %c127 = arith.constant 127 : index
    %c0_222 = arith.constant 0 : index
    %147 = vector.load %arg13[%c127, %c0_222] : memref<162x128xf32, #tpu.memory_space<vmem>>, vector<5x128xf32>
    %c45_223 = arith.constant 45 : index
    %c768_224 = arith.constant 768 : index
    %148 = vector.load %arg14[%c45_223, %c768_224] : memref<50x3200xf32, #tpu.memory_space<vmem>>, vector<5x128xf32>
    tpu.vector_store %arg14[%c45_223, %c768_224], %147 {strides = array<i32>} : memref<50x3200xf32, #tpu.memory_space<vmem>>, vector<5x128xf32>,
    %c11_225 = arith.constant 11 : index
    %c0_226 = arith.constant 0 : index
    %149 = vector.load %arg13[%c11_225, %c0_226] : memref<162x128xf32, #tpu.memory_space<vmem>>, vector<5x128xf32>
    %c0_227 = arith.constant 0 : index
    %c896 = arith.constant 896 : index
    %150 = vector.load %arg14[%c0_227, %c896] : memref<50x3200xf32, #tpu.memory_space<vmem>>, vector<5x128xf32>
    tpu.vector_store %arg14[%c0_227, %c896], %149 {strides = array<i32>} : memref<50x3200xf32, #tpu.memory_space<vmem>>, vector<5x128xf32>,
    %c20_228 = arith.constant 20 : index
    %c0_229 = arith.constant 0 : index
    %151 = vector.load %arg13[%c20_228, %c0_229] : memref<162x128xf32, #tpu.memory_space<vmem>>, vector<5x128xf32>
    %c5_230 = arith.constant 5 : index
    %c896_231 = arith.constant 896 : index
    %152 = vector.load %arg14[%c5_230, %c896_231] : memref<50x3200xf32, #tpu.memory_space<vmem>>, vector<5x128xf32>
    tpu.vector_store %arg14[%c5_230, %c896_231], %151 {strides = array<i32>} : memref<50x3200xf32, #tpu.memory_space<vmem>>, vector<5x128xf32>,
    %c29_232 = arith.constant 29 : index
    %c0_233 = arith.constant 0 : index
    %153 = vector.load %arg13[%c29_232, %c0_233] : memref<162x128xf32, #tpu.memory_space<vmem>>, vector<5x128xf32>
    %c10_234 = arith.constant 10 : index
    %c896_235 = arith.constant 896 : index
    %154 = vector.load %arg14[%c10_234, %c896_235] : memref<50x3200xf32, #tpu.memory_space<vmem>>, vector<5x128xf32>
    tpu.vector_store %arg14[%c10_234, %c896_235], %153 {strides = array<i32>} : memref<50x3200xf32, #tpu.memory_space<vmem>>, vector<5x128xf32>,
    %c38_236 = arith.constant 38 : index
    %c0_237 = arith.constant 0 : index
    %155 = vector.load %arg13[%c38_236, %c0_237] : memref<162x128xf32, #tpu.memory_space<vmem>>, vector<5x128xf32>
    %c15_238 = arith.constant 15 : index
    %c896_239 = arith.constant 896 : index
    %156 = vector.load %arg14[%c15_238, %c896_239] : memref<50x3200xf32, #tpu.memory_space<vmem>>, vector<5x128xf32>
    tpu.vector_store %arg14[%c15_238, %c896_239], %155 {strides = array<i32>} : memref<50x3200xf32, #tpu.memory_space<vmem>>, vector<5x128xf32>,
    %c47 = arith.constant 47 : index
    %c0_240 = arith.constant 0 : index
    %157 = vector.load %arg13[%c47, %c0_240] : memref<162x128xf32, #tpu.memory_space<vmem>>, vector<5x128xf32>
    %c20_241 = arith.constant 20 : index
    %c896_242 = arith.constant 896 : index
    %158 = vector.load %arg14[%c20_241, %c896_242] : memref<50x3200xf32, #tpu.memory_space<vmem>>, vector<5x128xf32>
    tpu.vector_store %arg14[%c20_241, %c896_242], %157 {strides = array<i32>} : memref<50x3200xf32, #tpu.memory_space<vmem>>, vector<5x128xf32>,
    %c92_243 = arith.constant 92 : index
    %c0_244 = arith.constant 0 : index
    %159 = vector.load %arg13[%c92_243, %c0_244] : memref<162x128xf32, #tpu.memory_space<vmem>>, vector<5x128xf32>
    %c25_245 = arith.constant 25 : index
    %c896_246 = arith.constant 896 : index
    %160 = vector.load %arg14[%c25_245, %c896_246] : memref<50x3200xf32, #tpu.memory_space<vmem>>, vector<5x128xf32>
    tpu.vector_store %arg14[%c25_245, %c896_246], %159 {strides = array<i32>} : memref<50x3200xf32, #tpu.memory_space<vmem>>, vector<5x128xf32>,
    %c101_247 = arith.constant 101 : index
    %c0_248 = arith.constant 0 : index
    %161 = vector.load %arg13[%c101_247, %c0_248] : memref<162x128xf32, #tpu.memory_space<vmem>>, vector<5x128xf32>
    %c30_249 = arith.constant 30 : index
    %c896_250 = arith.constant 896 : index
    %162 = vector.load %arg14[%c30_249, %c896_250] : memref<50x3200xf32, #tpu.memory_space<vmem>>, vector<5x128xf32>
    tpu.vector_store %arg14[%c30_249, %c896_250], %161 {strides = array<i32>} : memref<50x3200xf32, #tpu.memory_space<vmem>>, vector<5x128xf32>,
    %c110_251 = arith.constant 110 : index
    %c0_252 = arith.constant 0 : index
    %163 = vector.load %arg13[%c110_251, %c0_252] : memref<162x128xf32, #tpu.memory_space<vmem>>, vector<5x128xf32>
    %c35_253 = arith.constant 35 : index
    %c896_254 = arith.constant 896 : index
    %164 = vector.load %arg14[%c35_253, %c896_254] : memref<50x3200xf32, #tpu.memory_space<vmem>>, vector<5x128xf32>
    tpu.vector_store %arg14[%c35_253, %c896_254], %163 {strides = array<i32>} : memref<50x3200xf32, #tpu.memory_space<vmem>>, vector<5x128xf32>,
    %c119_255 = arith.constant 119 : index
    %c0_256 = arith.constant 0 : index
    %165 = vector.load %arg13[%c119_255, %c0_256] : memref<162x128xf32, #tpu.memory_space<vmem>>, vector<5x128xf32>
    %c40_257 = arith.constant 40 : index
    %c896_258 = arith.constant 896 : index
    %166 = vector.load %arg14[%c40_257, %c896_258] : memref<50x3200xf32, #tpu.memory_space<vmem>>, vector<5x128xf32>
    tpu.vector_store %arg14[%c40_257, %c896_258], %165 {strides = array<i32>} : memref<50x3200xf32, #tpu.memory_space<vmem>>, vector<5x128xf32>,
    %c128_259 = arith.constant 128 : index
    %c0_260 = arith.constant 0 : index
    %167 = vector.load %arg13[%c128_259, %c0_260] : memref<162x128xf32, #tpu.memory_space<vmem>>, vector<5x128xf32>
    %c45_261 = arith.constant 45 : index
    %c896_262 = arith.constant 896 : index
    %168 = vector.load %arg14[%c45_261, %c896_262] : memref<50x3200xf32, #tpu.memory_space<vmem>>, vector<5x128xf32>
    tpu.vector_store %arg14[%c45_261, %c896_262], %167 {strides = array<i32>} : memref<50x3200xf32, #tpu.memory_space<vmem>>, vector<5x128xf32>,
    %c12_263 = arith.constant 12 : index
    %c0_264 = arith.constant 0 : index
    %169 = vector.load %arg13[%c12_263, %c0_264] : memref<162x128xf32, #tpu.memory_space<vmem>>, vector<5x128xf32>
    %c0_265 = arith.constant 0 : index
    %c1024 = arith.constant 1024 : index
    %170 = vector.load %arg14[%c0_265, %c1024] : memref<50x3200xf32, #tpu.memory_space<vmem>>, vector<5x128xf32>
    tpu.vector_store %arg14[%c0_265, %c1024], %169 {strides = array<i32>} : memref<50x3200xf32, #tpu.memory_space<vmem>>, vector<5x128xf32>,
    %c21_266 = arith.constant 21 : index
    %c0_267 = arith.constant 0 : index
    %171 = vector.load %arg13[%c21_266, %c0_267] : memref<162x128xf32, #tpu.memory_space<vmem>>, vector<5x128xf32>
    %c5_268 = arith.constant 5 : index
    %c1024_269 = arith.constant 1024 : index
    %172 = vector.load %arg14[%c5_268, %c1024_269] : memref<50x3200xf32, #tpu.memory_space<vmem>>, vector<5x128xf32>
    tpu.vector_store %arg14[%c5_268, %c1024_269], %171 {strides = array<i32>} : memref<50x3200xf32, #tpu.memory_space<vmem>>, vector<5x128xf32>,
    %c30_270 = arith.constant 30 : index
    %c0_271 = arith.constant 0 : index
    %173 = vector.load %arg13[%c30_270, %c0_271] : memref<162x128xf32, #tpu.memory_space<vmem>>, vector<5x128xf32>
    %c10_272 = arith.constant 10 : index
    %c1024_273 = arith.constant 1024 : index
    %174 = vector.load %arg14[%c10_272, %c1024_273] : memref<50x3200xf32, #tpu.memory_space<vmem>>, vector<5x128xf32>
    tpu.vector_store %arg14[%c10_272, %c1024_273], %173 {strides = array<i32>} : memref<50x3200xf32, #tpu.memory_space<vmem>>, vector<5x128xf32>,
    %c39_274 = arith.constant 39 : index
    %c0_275 = arith.constant 0 : index
    %175 = vector.load %arg13[%c39_274, %c0_275] : memref<162x128xf32, #tpu.memory_space<vmem>>, vector<5x128xf32>
    %c15_276 = arith.constant 15 : index
    %c1024_277 = arith.constant 1024 : index
    %176 = vector.load %arg14[%c15_276, %c1024_277] : memref<50x3200xf32, #tpu.memory_space<vmem>>, vector<5x128xf32>
    tpu.vector_store %arg14[%c15_276, %c1024_277], %175 {strides = array<i32>} : memref<50x3200xf32, #tpu.memory_space<vmem>>, vector<5x128xf32>,
    %c48 = arith.constant 48 : index
    %c0_278 = arith.constant 0 : index
    %177 = vector.load %arg13[%c48, %c0_278] : memref<162x128xf32, #tpu.memory_space<vmem>>, vector<5x128xf32>
    %c20_279 = arith.constant 20 : index
    %c1024_280 = arith.constant 1024 : index
    %178 = vector.load %arg14[%c20_279, %c1024_280] : memref<50x3200xf32, #tpu.memory_space<vmem>>, vector<5x128xf32>
    tpu.vector_store %arg14[%c20_279, %c1024_280], %177 {strides = array<i32>} : memref<50x3200xf32, #tpu.memory_space<vmem>>, vector<5x128xf32>,
    %c93_281 = arith.constant 93 : index
    %c0_282 = arith.constant 0 : index
    %179 = vector.load %arg13[%c93_281, %c0_282] : memref<162x128xf32, #tpu.memory_space<vmem>>, vector<5x128xf32>
    %c25_283 = arith.constant 25 : index
    %c1024_284 = arith.constant 1024 : index
    %180 = vector.load %arg14[%c25_283, %c1024_284] : memref<50x3200xf32, #tpu.memory_space<vmem>>, vector<5x128xf32>
    tpu.vector_store %arg14[%c25_283, %c1024_284], %179 {strides = array<i32>} : memref<50x3200xf32, #tpu.memory_space<vmem>>, vector<5x128xf32>,
    %c102_285 = arith.constant 102 : index
    %c0_286 = arith.constant 0 : index
    %181 = vector.load %arg13[%c102_285, %c0_286] : memref<162x128xf32, #tpu.memory_space<vmem>>, vector<5x128xf32>
    %c30_287 = arith.constant 30 : index
    %c1024_288 = arith.constant 1024 : index
    %182 = vector.load %arg14[%c30_287, %c1024_288] : memref<50x3200xf32, #tpu.memory_space<vmem>>, vector<5x128xf32>
    tpu.vector_store %arg14[%c30_287, %c1024_288], %181 {strides = array<i32>} : memref<50x3200xf32, #tpu.memory_space<vmem>>, vector<5x128xf32>,
    %c111_289 = arith.constant 111 : index
    %c0_290 = arith.constant 0 : index
    %183 = vector.load %arg13[%c111_289, %c0_290] : memref<162x128xf32, #tpu.memory_space<vmem>>, vector<5x128xf32>
    %c35_291 = arith.constant 35 : index
    %c1024_292 = arith.constant 1024 : index
    %184 = vector.load %arg14[%c35_291, %c1024_292] : memref<50x3200xf32, #tpu.memory_space<vmem>>, vector<5x128xf32>
    tpu.vector_store %arg14[%c35_291, %c1024_292], %183 {strides = array<i32>} : memref<50x3200xf32, #tpu.memory_space<vmem>>, vector<5x128xf32>,
    %c120_293 = arith.constant 120 : index
    %c0_294 = arith.constant 0 : index
    %185 = vector.load %arg13[%c120_293, %c0_294] : memref<162x128xf32, #tpu.memory_space<vmem>>, vector<5x128xf32>
    %c40_295 = arith.constant 40 : index
    %c1024_296 = arith.constant 1024 : index
    %186 = vector.load %arg14[%c40_295, %c1024_296] : memref<50x3200xf32, #tpu.memory_space<vmem>>, vector<5x128xf32>
    tpu.vector_store %arg14[%c40_295, %c1024_296], %185 {strides = array<i32>} : memref<50x3200xf32, #tpu.memory_space<vmem>>, vector<5x128xf32>,
    %c129 = arith.constant 129 : index
    %c0_297 = arith.constant 0 : index
    %187 = vector.load %arg13[%c129, %c0_297] : memref<162x128xf32, #tpu.memory_space<vmem>>, vector<5x128xf32>
    %c45_298 = arith.constant 45 : index
    %c1024_299 = arith.constant 1024 : index
    %188 = vector.load %arg14[%c45_298, %c1024_299] : memref<50x3200xf32, #tpu.memory_space<vmem>>, vector<5x128xf32>
    tpu.vector_store %arg14[%c45_298, %c1024_299], %187 {strides = array<i32>} : memref<50x3200xf32, #tpu.memory_space<vmem>>, vector<5x128xf32>,
    %c13_300 = arith.constant 13 : index
    %c0_301 = arith.constant 0 : index
    %189 = vector.load %arg13[%c13_300, %c0_301] : memref<162x128xf32, #tpu.memory_space<vmem>>, vector<5x128xf32>
    %c0_302 = arith.constant 0 : index
    %c1152 = arith.constant 1152 : index
    %190 = vector.load %arg14[%c0_302, %c1152] : memref<50x3200xf32, #tpu.memory_space<vmem>>, vector<5x128xf32>
    tpu.vector_store %arg14[%c0_302, %c1152], %189 {strides = array<i32>} : memref<50x3200xf32, #tpu.memory_space<vmem>>, vector<5x128xf32>,
    %c22_303 = arith.constant 22 : index
    %c0_304 = arith.constant 0 : index
    %191 = vector.load %arg13[%c22_303, %c0_304] : memref<162x128xf32, #tpu.memory_space<vmem>>, vector<5x128xf32>
    %c5_305 = arith.constant 5 : index
    %c1152_306 = arith.constant 1152 : index
    %192 = vector.load %arg14[%c5_305, %c1152_306] : memref<50x3200xf32, #tpu.memory_space<vmem>>, vector<5x128xf32>
    tpu.vector_store %arg14[%c5_305, %c1152_306], %191 {strides = array<i32>} : memref<50x3200xf32, #tpu.memory_space<vmem>>, vector<5x128xf32>,
    %c31_307 = arith.constant 31 : index
    %c0_308 = arith.constant 0 : index
    %193 = vector.load %arg13[%c31_307, %c0_308] : memref<162x128xf32, #tpu.memory_space<vmem>>, vector<5x128xf32>
    %c10_309 = arith.constant 10 : index
    %c1152_310 = arith.constant 1152 : index
    %194 = vector.load %arg14[%c10_309, %c1152_310] : memref<50x3200xf32, #tpu.memory_space<vmem>>, vector<5x128xf32>
    tpu.vector_store %arg14[%c10_309, %c1152_310], %193 {strides = array<i32>} : memref<50x3200xf32, #tpu.memory_space<vmem>>, vector<5x128xf32>,
    %c40_311 = arith.constant 40 : index
    %c0_312 = arith.constant 0 : index
    %195 = vector.load %arg13[%c40_311, %c0_312] : memref<162x128xf32, #tpu.memory_space<vmem>>, vector<5x128xf32>
    %c15_313 = arith.constant 15 : index
    %c1152_314 = arith.constant 1152 : index
    %196 = vector.load %arg14[%c15_313, %c1152_314] : memref<50x3200xf32, #tpu.memory_space<vmem>>, vector<5x128xf32>
    tpu.vector_store %arg14[%c15_313, %c1152_314], %195 {strides = array<i32>} : memref<50x3200xf32, #tpu.memory_space<vmem>>, vector<5x128xf32>,
    %c49 = arith.constant 49 : index
    %c0_315 = arith.constant 0 : index
    %197 = vector.load %arg13[%c49, %c0_315] : memref<162x128xf32, #tpu.memory_space<vmem>>, vector<5x128xf32>
    %c20_316 = arith.constant 20 : index
    %c1152_317 = arith.constant 1152 : index
    %198 = vector.load %arg14[%c20_316, %c1152_317] : memref<50x3200xf32, #tpu.memory_space<vmem>>, vector<5x128xf32>
    tpu.vector_store %arg14[%c20_316, %c1152_317], %197 {strides = array<i32>} : memref<50x3200xf32, #tpu.memory_space<vmem>>, vector<5x128xf32>,
    %c94_318 = arith.constant 94 : index
    %c0_319 = arith.constant 0 : index
    %199 = vector.load %arg13[%c94_318, %c0_319] : memref<162x128xf32, #tpu.memory_space<vmem>>, vector<5x128xf32>
    %c25_320 = arith.constant 25 : index
    %c1152_321 = arith.constant 1152 : index
    %200 = vector.load %arg14[%c25_320, %c1152_321] : memref<50x3200xf32, #tpu.memory_space<vmem>>, vector<5x128xf32>
    tpu.vector_store %arg14[%c25_320, %c1152_321], %199 {strides = array<i32>} : memref<50x3200xf32, #tpu.memory_space<vmem>>, vector<5x128xf32>,
    %c103_322 = arith.constant 103 : index
    %c0_323 = arith.constant 0 : index
    %201 = vector.load %arg13[%c103_322, %c0_323] : memref<162x128xf32, #tpu.memory_space<vmem>>, vector<5x128xf32>
    %c30_324 = arith.constant 30 : index
    %c1152_325 = arith.constant 1152 : index
    %202 = vector.load %arg14[%c30_324, %c1152_325] : memref<50x3200xf32, #tpu.memory_space<vmem>>, vector<5x128xf32>
    tpu.vector_store %arg14[%c30_324, %c1152_325], %201 {strides = array<i32>} : memref<50x3200xf32, #tpu.memory_space<vmem>>, vector<5x128xf32>,
    %c112_326 = arith.constant 112 : index
    %c0_327 = arith.constant 0 : index
    %203 = vector.load %arg13[%c112_326, %c0_327] : memref<162x128xf32, #tpu.memory_space<vmem>>, vector<5x128xf32>
    %c35_328 = arith.constant 35 : index
    %c1152_329 = arith.constant 1152 : index
    %204 = vector.load %arg14[%c35_328, %c1152_329] : memref<50x3200xf32, #tpu.memory_space<vmem>>, vector<5x128xf32>
    tpu.vector_store %arg14[%c35_328, %c1152_329], %203 {strides = array<i32>} : memref<50x3200xf32, #tpu.memory_space<vmem>>, vector<5x128xf32>,
    %c121_330 = arith.constant 121 : index
    %c0_331 = arith.constant 0 : index
    %205 = vector.load %arg13[%c121_330, %c0_331] : memref<162x128xf32, #tpu.memory_space<vmem>>, vector<5x128xf32>
    %c40_332 = arith.constant 40 : index
    %c1152_333 = arith.constant 1152 : index
    %206 = vector.load %arg14[%c40_332, %c1152_333] : memref<50x3200xf32, #tpu.memory_space<vmem>>, vector<5x128xf32>
    tpu.vector_store %arg14[%c40_332, %c1152_333], %205 {strides = array<i32>} : memref<50x3200xf32, #tpu.memory_space<vmem>>, vector<5x128xf32>,
    %c130 = arith.constant 130 : index
    %c0_334 = arith.constant 0 : index
    %207 = vector.load %arg13[%c130, %c0_334] : memref<162x128xf32, #tpu.memory_space<vmem>>, vector<5x128xf32>
    %c45_335 = arith.constant 45 : index
    %c1152_336 = arith.constant 1152 : index
    %208 = vector.load %arg14[%c45_335, %c1152_336] : memref<50x3200xf32, #tpu.memory_space<vmem>>, vector<5x128xf32>
    tpu.vector_store %arg14[%c45_335, %c1152_336], %207 {strides = array<i32>} : memref<50x3200xf32, #tpu.memory_space<vmem>>, vector<5x128xf32>,
    %c18_337 = arith.constant 18 : index
    %c0_338 = arith.constant 0 : index
    %209 = vector.load %arg13[%c18_337, %c0_338] : memref<162x128xf32, #tpu.memory_space<vmem>>, vector<5x128xf32>
    %c0_339 = arith.constant 0 : index
    %c1280 = arith.constant 1280 : index
    %210 = vector.load %arg14[%c0_339, %c1280] : memref<50x3200xf32, #tpu.memory_space<vmem>>, vector<5x128xf32>
    tpu.vector_store %arg14[%c0_339, %c1280], %209 {strides = array<i32>} : memref<50x3200xf32, #tpu.memory_space<vmem>>, vector<5x128xf32>,
    %c27_340 = arith.constant 27 : index
    %c0_341 = arith.constant 0 : index
    %211 = vector.load %arg13[%c27_340, %c0_341] : memref<162x128xf32, #tpu.memory_space<vmem>>, vector<5x128xf32>
    %c5_342 = arith.constant 5 : index
    %c1280_343 = arith.constant 1280 : index
    %212 = vector.load %arg14[%c5_342, %c1280_343] : memref<50x3200xf32, #tpu.memory_space<vmem>>, vector<5x128xf32>
    tpu.vector_store %arg14[%c5_342, %c1280_343], %211 {strides = array<i32>} : memref<50x3200xf32, #tpu.memory_space<vmem>>, vector<5x128xf32>,
    %c36_344 = arith.constant 36 : index
    %c0_345 = arith.constant 0 : index
    %213 = vector.load %arg13[%c36_344, %c0_345] : memref<162x128xf32, #tpu.memory_space<vmem>>, vector<5x128xf32>
    %c10_346 = arith.constant 10 : index
    %c1280_347 = arith.constant 1280 : index
    %214 = vector.load %arg14[%c10_346, %c1280_347] : memref<50x3200xf32, #tpu.memory_space<vmem>>, vector<5x128xf32>
    tpu.vector_store %arg14[%c10_346, %c1280_347], %213 {strides = array<i32>} : memref<50x3200xf32, #tpu.memory_space<vmem>>, vector<5x128xf32>,
    %c45_348 = arith.constant 45 : index
    %c0_349 = arith.constant 0 : index
    %215 = vector.load %arg13[%c45_348, %c0_349] : memref<162x128xf32, #tpu.memory_space<vmem>>, vector<5x128xf32>
    %c15_350 = arith.constant 15 : index
    %c1280_351 = arith.constant 1280 : index
    %216 = vector.load %arg14[%c15_350, %c1280_351] : memref<50x3200xf32, #tpu.memory_space<vmem>>, vector<5x128xf32>
    tpu.vector_store %arg14[%c15_350, %c1280_351], %215 {strides = array<i32>} : memref<50x3200xf32, #tpu.memory_space<vmem>>, vector<5x128xf32>,
    %c54 = arith.constant 54 : index
    %c0_352 = arith.constant 0 : index
    %217 = vector.load %arg13[%c54, %c0_352] : memref<162x128xf32, #tpu.memory_space<vmem>>, vector<5x128xf32>
    %c20_353 = arith.constant 20 : index
    %c1280_354 = arith.constant 1280 : index
    %218 = vector.load %arg14[%c20_353, %c1280_354] : memref<50x3200xf32, #tpu.memory_space<vmem>>, vector<5x128xf32>
    tpu.vector_store %arg14[%c20_353, %c1280_354], %217 {strides = array<i32>} : memref<50x3200xf32, #tpu.memory_space<vmem>>, vector<5x128xf32>,
    %c99_355 = arith.constant 99 : index
    %c0_356 = arith.constant 0 : index
    %219 = vector.load %arg13[%c99_355, %c0_356] : memref<162x128xf32, #tpu.memory_space<vmem>>, vector<5x128xf32>
    %c25_357 = arith.constant 25 : index
    %c1280_358 = arith.constant 1280 : index
    %220 = vector.load %arg14[%c25_357, %c1280_358] : memref<50x3200xf32, #tpu.memory_space<vmem>>, vector<5x128xf32>
    tpu.vector_store %arg14[%c25_357, %c1280_358], %219 {strides = array<i32>} : memref<50x3200xf32, #tpu.memory_space<vmem>>, vector<5x128xf32>,
    %c108_359 = arith.constant 108 : index
    %c0_360 = arith.constant 0 : index
    %221 = vector.load %arg13[%c108_359, %c0_360] : memref<162x128xf32, #tpu.memory_space<vmem>>, vector<5x128xf32>
    %c30_361 = arith.constant 30 : index
    %c1280_362 = arith.constant 1280 : index
    %222 = vector.load %arg14[%c30_361, %c1280_362] : memref<50x3200xf32, #tpu.memory_space<vmem>>, vector<5x128xf32>
    tpu.vector_store %arg14[%c30_361, %c1280_362], %221 {strides = array<i32>} : memref<50x3200xf32, #tpu.memory_space<vmem>>, vector<5x128xf32>,
    %c117_363 = arith.constant 117 : index
    %c0_364 = arith.constant 0 : index
    %223 = vector.load %arg13[%c117_363, %c0_364] : memref<162x128xf32, #tpu.memory_space<vmem>>, vector<5x128xf32>
    %c35_365 = arith.constant 35 : index
    %c1280_366 = arith.constant 1280 : index
    %224 = vector.load %arg14[%c35_365, %c1280_366] : memref<50x3200xf32, #tpu.memory_space<vmem>>, vector<5x128xf32>
    tpu.vector_store %arg14[%c35_365, %c1280_366], %223 {strides = array<i32>} : memref<50x3200xf32, #tpu.memory_space<vmem>>, vector<5x128xf32>,
    %c126_367 = arith.constant 126 : index
    %c0_368 = arith.constant 0 : index
    %225 = vector.load %arg13[%c126_367, %c0_368] : memref<162x128xf32, #tpu.memory_space<vmem>>, vector<5x128xf32>
    %c40_369 = arith.constant 40 : index
    %c1280_370 = arith.constant 1280 : index
    %226 = vector.load %arg14[%c40_369, %c1280_370] : memref<50x3200xf32, #tpu.memory_space<vmem>>, vector<5x128xf32>
    tpu.vector_store %arg14[%c40_369, %c1280_370], %225 {strides = array<i32>} : memref<50x3200xf32, #tpu.memory_space<vmem>>, vector<5x128xf32>,
    %c135 = arith.constant 135 : index
    %c0_371 = arith.constant 0 : index
    %227 = vector.load %arg13[%c135, %c0_371] : memref<162x128xf32, #tpu.memory_space<vmem>>, vector<5x128xf32>
    %c45_372 = arith.constant 45 : index
    %c1280_373 = arith.constant 1280 : index
    %228 = vector.load %arg14[%c45_372, %c1280_373] : memref<50x3200xf32, #tpu.memory_space<vmem>>, vector<5x128xf32>
    tpu.vector_store %arg14[%c45_372, %c1280_373], %227 {strides = array<i32>} : memref<50x3200xf32, #tpu.memory_space<vmem>>, vector<5x128xf32>,
    %c19_374 = arith.constant 19 : index
    %c0_375 = arith.constant 0 : index
    %229 = vector.load %arg13[%c19_374, %c0_375] : memref<162x128xf32, #tpu.memory_space<vmem>>, vector<5x128xf32>
    %c0_376 = arith.constant 0 : index
    %c1408 = arith.constant 1408 : index
    %230 = vector.load %arg14[%c0_376, %c1408] : memref<50x3200xf32, #tpu.memory_space<vmem>>, vector<5x128xf32>
    tpu.vector_store %arg14[%c0_376, %c1408], %229 {strides = array<i32>} : memref<50x3200xf32, #tpu.memory_space<vmem>>, vector<5x128xf32>,
    %c28_377 = arith.constant 28 : index
    %c0_378 = arith.constant 0 : index
    %231 = vector.load %arg13[%c28_377, %c0_378] : memref<162x128xf32, #tpu.memory_space<vmem>>, vector<5x128xf32>
    %c5_379 = arith.constant 5 : index
    %c1408_380 = arith.constant 1408 : index
    %232 = vector.load %arg14[%c5_379, %c1408_380] : memref<50x3200xf32, #tpu.memory_space<vmem>>, vector<5x128xf32>
    tpu.vector_store %arg14[%c5_379, %c1408_380], %231 {strides = array<i32>} : memref<50x3200xf32, #tpu.memory_space<vmem>>, vector<5x128xf32>,
    %c37_381 = arith.constant 37 : index
    %c0_382 = arith.constant 0 : index
    %233 = vector.load %arg13[%c37_381, %c0_382] : memref<162x128xf32, #tpu.memory_space<vmem>>, vector<5x128xf32>
    %c10_383 = arith.constant 10 : index
    %c1408_384 = arith.constant 1408 : index
    %234 = vector.load %arg14[%c10_383, %c1408_384] : memref<50x3200xf32, #tpu.memory_space<vmem>>, vector<5x128xf32>
    tpu.vector_store %arg14[%c10_383, %c1408_384], %233 {strides = array<i32>} : memref<50x3200xf32, #tpu.memory_space<vmem>>, vector<5x128xf32>,
    %c46_385 = arith.constant 46 : index
    %c0_386 = arith.constant 0 : index
    %235 = vector.load %arg13[%c46_385, %c0_386] : memref<162x128xf32, #tpu.memory_space<vmem>>, vector<5x128xf32>
    %c15_387 = arith.constant 15 : index
    %c1408_388 = arith.constant 1408 : index
    %236 = vector.load %arg14[%c15_387, %c1408_388] : memref<50x3200xf32, #tpu.memory_space<vmem>>, vector<5x128xf32>
    tpu.vector_store %arg14[%c15_387, %c1408_388], %235 {strides = array<i32>} : memref<50x3200xf32, #tpu.memory_space<vmem>>, vector<5x128xf32>,
    %c55 = arith.constant 55 : index
    %c0_389 = arith.constant 0 : index
    %237 = vector.load %arg13[%c55, %c0_389] : memref<162x128xf32, #tpu.memory_space<vmem>>, vector<5x128xf32>
    %c20_390 = arith.constant 20 : index
    %c1408_391 = arith.constant 1408 : index
    %238 = vector.load %arg14[%c20_390, %c1408_391] : memref<50x3200xf32, #tpu.memory_space<vmem>>, vector<5x128xf32>
    tpu.vector_store %arg14[%c20_390, %c1408_391], %237 {strides = array<i32>} : memref<50x3200xf32, #tpu.memory_space<vmem>>, vector<5x128xf32>,
    %c100_392 = arith.constant 100 : index
    %c0_393 = arith.constant 0 : index
    %239 = vector.load %arg13[%c100_392, %c0_393] : memref<162x128xf32, #tpu.memory_space<vmem>>, vector<5x128xf32>
    %c25_394 = arith.constant 25 : index
    %c1408_395 = arith.constant 1408 : index
    %240 = vector.load %arg14[%c25_394, %c1408_395] : memref<50x3200xf32, #tpu.memory_space<vmem>>, vector<5x128xf32>
    tpu.vector_store %arg14[%c25_394, %c1408_395], %239 {strides = array<i32>} : memref<50x3200xf32, #tpu.memory_space<vmem>>, vector<5x128xf32>,
    %c109_396 = arith.constant 109 : index
    %c0_397 = arith.constant 0 : index
    %241 = vector.load %arg13[%c109_396, %c0_397] : memref<162x128xf32, #tpu.memory_space<vmem>>, vector<5x128xf32>
    %c30_398 = arith.constant 30 : index
    %c1408_399 = arith.constant 1408 : index
    %242 = vector.load %arg14[%c30_398, %c1408_399] : memref<50x3200xf32, #tpu.memory_space<vmem>>, vector<5x128xf32>
    tpu.vector_store %arg14[%c30_398, %c1408_399], %241 {strides = array<i32>} : memref<50x3200xf32, #tpu.memory_space<vmem>>, vector<5x128xf32>,
    %c118_400 = arith.constant 118 : index
    %c0_401 = arith.constant 0 : index
    %243 = vector.load %arg13[%c118_400, %c0_401] : memref<162x128xf32, #tpu.memory_space<vmem>>, vector<5x128xf32>
    %c35_402 = arith.constant 35 : index
    %c1408_403 = arith.constant 1408 : index
    %244 = vector.load %arg14[%c35_402, %c1408_403] : memref<50x3200xf32, #tpu.memory_space<vmem>>, vector<5x128xf32>
    tpu.vector_store %arg14[%c35_402, %c1408_403], %243 {strides = array<i32>} : memref<50x3200xf32, #tpu.memory_space<vmem>>, vector<5x128xf32>,
    %c127_404 = arith.constant 127 : index
    %c0_405 = arith.constant 0 : index
    %245 = vector.load %arg13[%c127_404, %c0_405] : memref<162x128xf32, #tpu.memory_space<vmem>>, vector<5x128xf32>
    %c40_406 = arith.constant 40 : index
    %c1408_407 = arith.constant 1408 : index
    %246 = vector.load %arg14[%c40_406, %c1408_407] : memref<50x3200xf32, #tpu.memory_space<vmem>>, vector<5x128xf32>
    tpu.vector_store %arg14[%c40_406, %c1408_407], %245 {strides = array<i32>} : memref<50x3200xf32, #tpu.memory_space<vmem>>, vector<5x128xf32>,
    %c136 = arith.constant 136 : index
    %c0_408 = arith.constant 0 : index
    %247 = vector.load %arg13[%c136, %c0_408] : memref<162x128xf32, #tpu.memory_space<vmem>>, vector<5x128xf32>
    %c45_409 = arith.constant 45 : index
    %c1408_410 = arith.constant 1408 : index
    %248 = vector.load %arg14[%c45_409, %c1408_410] : memref<50x3200xf32, #tpu.memory_space<vmem>>, vector<5x128xf32>
    tpu.vector_store %arg14[%c45_409, %c1408_410], %247 {strides = array<i32>} : memref<50x3200xf32, #tpu.memory_space<vmem>>, vector<5x128xf32>,
    %c20_411 = arith.constant 20 : index
    %c0_412 = arith.constant 0 : index
    %249 = vector.load %arg13[%c20_411, %c0_412] : memref<162x128xf32, #tpu.memory_space<vmem>>, vector<5x128xf32>
    %c0_413 = arith.constant 0 : index
    %c1536 = arith.constant 1536 : index
    %250 = vector.load %arg14[%c0_413, %c1536] : memref<50x3200xf32, #tpu.memory_space<vmem>>, vector<5x128xf32>
    tpu.vector_store %arg14[%c0_413, %c1536], %249 {strides = array<i32>} : memref<50x3200xf32, #tpu.memory_space<vmem>>, vector<5x128xf32>,
    %c29_414 = arith.constant 29 : index
    %c0_415 = arith.constant 0 : index
    %251 = vector.load %arg13[%c29_414, %c0_415] : memref<162x128xf32, #tpu.memory_space<vmem>>, vector<5x128xf32>
    %c5_416 = arith.constant 5 : index
    %c1536_417 = arith.constant 1536 : index
    %252 = vector.load %arg14[%c5_416, %c1536_417] : memref<50x3200xf32, #tpu.memory_space<vmem>>, vector<5x128xf32>
    tpu.vector_store %arg14[%c5_416, %c1536_417], %251 {strides = array<i32>} : memref<50x3200xf32, #tpu.memory_space<vmem>>, vector<5x128xf32>,
    %c38_418 = arith.constant 38 : index
    %c0_419 = arith.constant 0 : index
    %253 = vector.load %arg13[%c38_418, %c0_419] : memref<162x128xf32, #tpu.memory_space<vmem>>, vector<5x128xf32>
    %c10_420 = arith.constant 10 : index
    %c1536_421 = arith.constant 1536 : index
    %254 = vector.load %arg14[%c10_420, %c1536_421] : memref<50x3200xf32, #tpu.memory_space<vmem>>, vector<5x128xf32>
    tpu.vector_store %arg14[%c10_420, %c1536_421], %253 {strides = array<i32>} : memref<50x3200xf32, #tpu.memory_space<vmem>>, vector<5x128xf32>,
    %c47_422 = arith.constant 47 : index
    %c0_423 = arith.constant 0 : index
    %255 = vector.load %arg13[%c47_422, %c0_423] : memref<162x128xf32, #tpu.memory_space<vmem>>, vector<5x128xf32>
    %c15_424 = arith.constant 15 : index
    %c1536_425 = arith.constant 1536 : index
    %256 = vector.load %arg14[%c15_424, %c1536_425] : memref<50x3200xf32, #tpu.memory_space<vmem>>, vector<5x128xf32>
    tpu.vector_store %arg14[%c15_424, %c1536_425], %255 {strides = array<i32>} : memref<50x3200xf32, #tpu.memory_space<vmem>>, vector<5x128xf32>,
    %c56 = arith.constant 56 : index
    %c0_426 = arith.constant 0 : index
    %257 = vector.load %arg13[%c56, %c0_426] : memref<162x128xf32, #tpu.memory_space<vmem>>, vector<5x128xf32>
    %c20_427 = arith.constant 20 : index
    %c1536_428 = arith.constant 1536 : index
    %258 = vector.load %arg14[%c20_427, %c1536_428] : memref<50x3200xf32, #tpu.memory_space<vmem>>, vector<5x128xf32>
    tpu.vector_store %arg14[%c20_427, %c1536_428], %257 {strides = array<i32>} : memref<50x3200xf32, #tpu.memory_space<vmem>>, vector<5x128xf32>,
    %c101_429 = arith.constant 101 : index
    %c0_430 = arith.constant 0 : index
    %259 = vector.load %arg13[%c101_429, %c0_430] : memref<162x128xf32, #tpu.memory_space<vmem>>, vector<5x128xf32>
    %c25_431 = arith.constant 25 : index
    %c1536_432 = arith.constant 1536 : index
    %260 = vector.load %arg14[%c25_431, %c1536_432] : memref<50x3200xf32, #tpu.memory_space<vmem>>, vector<5x128xf32>
    tpu.vector_store %arg14[%c25_431, %c1536_432], %259 {strides = array<i32>} : memref<50x3200xf32, #tpu.memory_space<vmem>>, vector<5x128xf32>,
    %c110_433 = arith.constant 110 : index
    %c0_434 = arith.constant 0 : index
    %261 = vector.load %arg13[%c110_433, %c0_434] : memref<162x128xf32, #tpu.memory_space<vmem>>, vector<5x128xf32>
    %c30_435 = arith.constant 30 : index
    %c1536_436 = arith.constant 1536 : index
    %262 = vector.load %arg14[%c30_435, %c1536_436] : memref<50x3200xf32, #tpu.memory_space<vmem>>, vector<5x128xf32>
    tpu.vector_store %arg14[%c30_435, %c1536_436], %261 {strides = array<i32>} : memref<50x3200xf32, #tpu.memory_space<vmem>>, vector<5x128xf32>,
    %c119_437 = arith.constant 119 : index
    %c0_438 = arith.constant 0 : index
    %263 = vector.load %arg13[%c119_437, %c0_438] : memref<162x128xf32, #tpu.memory_space<vmem>>, vector<5x128xf32>
    %c35_439 = arith.constant 35 : index
    %c1536_440 = arith.constant 1536 : index
    %264 = vector.load %arg14[%c35_439, %c1536_440] : memref<50x3200xf32, #tpu.memory_space<vmem>>, vector<5x128xf32>
    tpu.vector_store %arg14[%c35_439, %c1536_440], %263 {strides = array<i32>} : memref<50x3200xf32, #tpu.memory_space<vmem>>, vector<5x128xf32>,
    %c128_441 = arith.constant 128 : index
    %c0_442 = arith.constant 0 : index
    %265 = vector.load %arg13[%c128_441, %c0_442] : memref<162x128xf32, #tpu.memory_space<vmem>>, vector<5x128xf32>
    %c40_443 = arith.constant 40 : index
    %c1536_444 = arith.constant 1536 : index
    %266 = vector.load %arg14[%c40_443, %c1536_444] : memref<50x3200xf32, #tpu.memory_space<vmem>>, vector<5x128xf32>
    tpu.vector_store %arg14[%c40_443, %c1536_444], %265 {strides = array<i32>} : memref<50x3200xf32, #tpu.memory_space<vmem>>, vector<5x128xf32>,
    %c137 = arith.constant 137 : index
    %c0_445 = arith.constant 0 : index
    %267 = vector.load %arg13[%c137, %c0_445] : memref<162x128xf32, #tpu.memory_space<vmem>>, vector<5x128xf32>
    %c45_446 = arith.constant 45 : index
    %c1536_447 = arith.constant 1536 : index
    %268 = vector.load %arg14[%c45_446, %c1536_447] : memref<50x3200xf32, #tpu.memory_space<vmem>>, vector<5x128xf32>
    tpu.vector_store %arg14[%c45_446, %c1536_447], %267 {strides = array<i32>} : memref<50x3200xf32, #tpu.memory_space<vmem>>, vector<5x128xf32>,
    %c21_448 = arith.constant 21 : index
    %c0_449 = arith.constant 0 : index
    %269 = vector.load %arg13[%c21_448, %c0_449] : memref<162x128xf32, #tpu.memory_space<vmem>>, vector<5x128xf32>
    %c0_450 = arith.constant 0 : index
    %c1664 = arith.constant 1664 : index
    %270 = vector.load %arg14[%c0_450, %c1664] : memref<50x3200xf32, #tpu.memory_space<vmem>>, vector<5x128xf32>
    tpu.vector_store %arg14[%c0_450, %c1664], %269 {strides = array<i32>} : memref<50x3200xf32, #tpu.memory_space<vmem>>, vector<5x128xf32>,
    %c30_451 = arith.constant 30 : index
    %c0_452 = arith.constant 0 : index
    %271 = vector.load %arg13[%c30_451, %c0_452] : memref<162x128xf32, #tpu.memory_space<vmem>>, vector<5x128xf32>
    %c5_453 = arith.constant 5 : index
    %c1664_454 = arith.constant 1664 : index
    %272 = vector.load %arg14[%c5_453, %c1664_454] : memref<50x3200xf32, #tpu.memory_space<vmem>>, vector<5x128xf32>
    tpu.vector_store %arg14[%c5_453, %c1664_454], %271 {strides = array<i32>} : memref<50x3200xf32, #tpu.memory_space<vmem>>, vector<5x128xf32>,
    %c39_455 = arith.constant 39 : index
    %c0_456 = arith.constant 0 : index
    %273 = vector.load %arg13[%c39_455, %c0_456] : memref<162x128xf32, #tpu.memory_space<vmem>>, vector<5x128xf32>
    %c10_457 = arith.constant 10 : index
    %c1664_458 = arith.constant 1664 : index
    %274 = vector.load %arg14[%c10_457, %c1664_458] : memref<50x3200xf32, #tpu.memory_space<vmem>>, vector<5x128xf32>
    tpu.vector_store %arg14[%c10_457, %c1664_458], %273 {strides = array<i32>} : memref<50x3200xf32, #tpu.memory_space<vmem>>, vector<5x128xf32>,
    %c48_459 = arith.constant 48 : index
    %c0_460 = arith.constant 0 : index
    %275 = vector.load %arg13[%c48_459, %c0_460] : memref<162x128xf32, #tpu.memory_space<vmem>>, vector<5x128xf32>
    %c15_461 = arith.constant 15 : index
    %c1664_462 = arith.constant 1664 : index
    %276 = vector.load %arg14[%c15_461, %c1664_462] : memref<50x3200xf32, #tpu.memory_space<vmem>>, vector<5x128xf32>
    tpu.vector_store %arg14[%c15_461, %c1664_462], %275 {strides = array<i32>} : memref<50x3200xf32, #tpu.memory_space<vmem>>, vector<5x128xf32>,
    %c57 = arith.constant 57 : index
    %c0_463 = arith.constant 0 : index
    %277 = vector.load %arg13[%c57, %c0_463] : memref<162x128xf32, #tpu.memory_space<vmem>>, vector<5x128xf32>
    %c20_464 = arith.constant 20 : index
    %c1664_465 = arith.constant 1664 : index
    %278 = vector.load %arg14[%c20_464, %c1664_465] : memref<50x3200xf32, #tpu.memory_space<vmem>>, vector<5x128xf32>
    tpu.vector_store %arg14[%c20_464, %c1664_465], %277 {strides = array<i32>} : memref<50x3200xf32, #tpu.memory_space<vmem>>, vector<5x128xf32>,
    %c102_466 = arith.constant 102 : index
    %c0_467 = arith.constant 0 : index
    %279 = vector.load %arg13[%c102_466, %c0_467] : memref<162x128xf32, #tpu.memory_space<vmem>>, vector<5x128xf32>
    %c25_468 = arith.constant 25 : index
    %c1664_469 = arith.constant 1664 : index
    %280 = vector.load %arg14[%c25_468, %c1664_469] : memref<50x3200xf32, #tpu.memory_space<vmem>>, vector<5x128xf32>
    tpu.vector_store %arg14[%c25_468, %c1664_469], %279 {strides = array<i32>} : memref<50x3200xf32, #tpu.memory_space<vmem>>, vector<5x128xf32>,
    %c111_470 = arith.constant 111 : index
    %c0_471 = arith.constant 0 : index
    %281 = vector.load %arg13[%c111_470, %c0_471] : memref<162x128xf32, #tpu.memory_space<vmem>>, vector<5x128xf32>
    %c30_472 = arith.constant 30 : index
    %c1664_473 = arith.constant 1664 : index
    %282 = vector.load %arg14[%c30_472, %c1664_473] : memref<50x3200xf32, #tpu.memory_space<vmem>>, vector<5x128xf32>
    tpu.vector_store %arg14[%c30_472, %c1664_473], %281 {strides = array<i32>} : memref<50x3200xf32, #tpu.memory_space<vmem>>, vector<5x128xf32>,
    %c120_474 = arith.constant 120 : index
    %c0_475 = arith.constant 0 : index
    %283 = vector.load %arg13[%c120_474, %c0_475] : memref<162x128xf32, #tpu.memory_space<vmem>>, vector<5x128xf32>
    %c35_476 = arith.constant 35 : index
    %c1664_477 = arith.constant 1664 : index
    %284 = vector.load %arg14[%c35_476, %c1664_477] : memref<50x3200xf32, #tpu.memory_space<vmem>>, vector<5x128xf32>
    tpu.vector_store %arg14[%c35_476, %c1664_477], %283 {strides = array<i32>} : memref<50x3200xf32, #tpu.memory_space<vmem>>, vector<5x128xf32>,
    %c129_478 = arith.constant 129 : index
    %c0_479 = arith.constant 0 : index
    %285 = vector.load %arg13[%c129_478, %c0_479] : memref<162x128xf32, #tpu.memory_space<vmem>>, vector<5x128xf32>
    %c40_480 = arith.constant 40 : index
    %c1664_481 = arith.constant 1664 : index
    %286 = vector.load %arg14[%c40_480, %c1664_481] : memref<50x3200xf32, #tpu.memory_space<vmem>>, vector<5x128xf32>
    tpu.vector_store %arg14[%c40_480, %c1664_481], %285 {strides = array<i32>} : memref<50x3200xf32, #tpu.memory_space<vmem>>, vector<5x128xf32>,
    %c138 = arith.constant 138 : index
    %c0_482 = arith.constant 0 : index
    %287 = vector.load %arg13[%c138, %c0_482] : memref<162x128xf32, #tpu.memory_space<vmem>>, vector<5x128xf32>
    %c45_483 = arith.constant 45 : index
    %c1664_484 = arith.constant 1664 : index
    %288 = vector.load %arg14[%c45_483, %c1664_484] : memref<50x3200xf32, #tpu.memory_space<vmem>>, vector<5x128xf32>
    tpu.vector_store %arg14[%c45_483, %c1664_484], %287 {strides = array<i32>} : memref<50x3200xf32, #tpu.memory_space<vmem>>, vector<5x128xf32>,
    %c22_485 = arith.constant 22 : index
    %c0_486 = arith.constant 0 : index
    %289 = vector.load %arg13[%c22_485, %c0_486] : memref<162x128xf32, #tpu.memory_space<vmem>>, vector<5x128xf32>
    %c0_487 = arith.constant 0 : index
    %c1792 = arith.constant 1792 : index
    %290 = vector.load %arg14[%c0_487, %c1792] : memref<50x3200xf32, #tpu.memory_space<vmem>>, vector<5x128xf32>
    tpu.vector_store %arg14[%c0_487, %c1792], %289 {strides = array<i32>} : memref<50x3200xf32, #tpu.memory_space<vmem>>, vector<5x128xf32>,
    %c31_488 = arith.constant 31 : index
    %c0_489 = arith.constant 0 : index
    %291 = vector.load %arg13[%c31_488, %c0_489] : memref<162x128xf32, #tpu.memory_space<vmem>>, vector<5x128xf32>
    %c5_490 = arith.constant 5 : index
    %c1792_491 = arith.constant 1792 : index
    %292 = vector.load %arg14[%c5_490, %c1792_491] : memref<50x3200xf32, #tpu.memory_space<vmem>>, vector<5x128xf32>
    tpu.vector_store %arg14[%c5_490, %c1792_491], %291 {strides = array<i32>} : memref<50x3200xf32, #tpu.memory_space<vmem>>, vector<5x128xf32>,
    %c40_492 = arith.constant 40 : index
    %c0_493 = arith.constant 0 : index
    %293 = vector.load %arg13[%c40_492, %c0_493] : memref<162x128xf32, #tpu.memory_space<vmem>>, vector<5x128xf32>
    %c10_494 = arith.constant 10 : index
    %c1792_495 = arith.constant 1792 : index
    %294 = vector.load %arg14[%c10_494, %c1792_495] : memref<50x3200xf32, #tpu.memory_space<vmem>>, vector<5x128xf32>
    tpu.vector_store %arg14[%c10_494, %c1792_495], %293 {strides = array<i32>} : memref<50x3200xf32, #tpu.memory_space<vmem>>, vector<5x128xf32>,
    %c49_496 = arith.constant 49 : index
    %c0_497 = arith.constant 0 : index
    %295 = vector.load %arg13[%c49_496, %c0_497] : memref<162x128xf32, #tpu.memory_space<vmem>>, vector<5x128xf32>
    %c15_498 = arith.constant 15 : index
    %c1792_499 = arith.constant 1792 : index
    %296 = vector.load %arg14[%c15_498, %c1792_499] : memref<50x3200xf32, #tpu.memory_space<vmem>>, vector<5x128xf32>
    tpu.vector_store %arg14[%c15_498, %c1792_499], %295 {strides = array<i32>} : memref<50x3200xf32, #tpu.memory_space<vmem>>, vector<5x128xf32>,
    %c58 = arith.constant 58 : index
    %c0_500 = arith.constant 0 : index
    %297 = vector.load %arg13[%c58, %c0_500] : memref<162x128xf32, #tpu.memory_space<vmem>>, vector<5x128xf32>
    %c20_501 = arith.constant 20 : index
    %c1792_502 = arith.constant 1792 : index
    %298 = vector.load %arg14[%c20_501, %c1792_502] : memref<50x3200xf32, #tpu.memory_space<vmem>>, vector<5x128xf32>
    tpu.vector_store %arg14[%c20_501, %c1792_502], %297 {strides = array<i32>} : memref<50x3200xf32, #tpu.memory_space<vmem>>, vector<5x128xf32>,
    %c103_503 = arith.constant 103 : index
    %c0_504 = arith.constant 0 : index
    %299 = vector.load %arg13[%c103_503, %c0_504] : memref<162x128xf32, #tpu.memory_space<vmem>>, vector<5x128xf32>
    %c25_505 = arith.constant 25 : index
    %c1792_506 = arith.constant 1792 : index
    %300 = vector.load %arg14[%c25_505, %c1792_506] : memref<50x3200xf32, #tpu.memory_space<vmem>>, vector<5x128xf32>
    tpu.vector_store %arg14[%c25_505, %c1792_506], %299 {strides = array<i32>} : memref<50x3200xf32, #tpu.memory_space<vmem>>, vector<5x128xf32>,
    %c112_507 = arith.constant 112 : index
    %c0_508 = arith.constant 0 : index
    %301 = vector.load %arg13[%c112_507, %c0_508] : memref<162x128xf32, #tpu.memory_space<vmem>>, vector<5x128xf32>
    %c30_509 = arith.constant 30 : index
    %c1792_510 = arith.constant 1792 : index
    %302 = vector.load %arg14[%c30_509, %c1792_510] : memref<50x3200xf32, #tpu.memory_space<vmem>>, vector<5x128xf32>
    tpu.vector_store %arg14[%c30_509, %c1792_510], %301 {strides = array<i32>} : memref<50x3200xf32, #tpu.memory_space<vmem>>, vector<5x128xf32>,
    %c121_511 = arith.constant 121 : index
    %c0_512 = arith.constant 0 : index
    %303 = vector.load %arg13[%c121_511, %c0_512] : memref<162x128xf32, #tpu.memory_space<vmem>>, vector<5x128xf32>
    %c35_513 = arith.constant 35 : index
    %c1792_514 = arith.constant 1792 : index
    %304 = vector.load %arg14[%c35_513, %c1792_514] : memref<50x3200xf32, #tpu.memory_space<vmem>>, vector<5x128xf32>
    tpu.vector_store %arg14[%c35_513, %c1792_514], %303 {strides = array<i32>} : memref<50x3200xf32, #tpu.memory_space<vmem>>, vector<5x128xf32>,
    %c130_515 = arith.constant 130 : index
    %c0_516 = arith.constant 0 : index
    %305 = vector.load %arg13[%c130_515, %c0_516] : memref<162x128xf32, #tpu.memory_space<vmem>>, vector<5x128xf32>
    %c40_517 = arith.constant 40 : index
    %c1792_518 = arith.constant 1792 : index
    %306 = vector.load %arg14[%c40_517, %c1792_518] : memref<50x3200xf32, #tpu.memory_space<vmem>>, vector<5x128xf32>
    tpu.vector_store %arg14[%c40_517, %c1792_518], %305 {strides = array<i32>} : memref<50x3200xf32, #tpu.memory_space<vmem>>, vector<5x128xf32>,
    %c139 = arith.constant 139 : index
    %c0_519 = arith.constant 0 : index
    %307 = vector.load %arg13[%c139, %c0_519] : memref<162x128xf32, #tpu.memory_space<vmem>>, vector<5x128xf32>
    %c45_520 = arith.constant 45 : index
    %c1792_521 = arith.constant 1792 : index
    %308 = vector.load %arg14[%c45_520, %c1792_521] : memref<50x3200xf32, #tpu.memory_space<vmem>>, vector<5x128xf32>
    tpu.vector_store %arg14[%c45_520, %c1792_521], %307 {strides = array<i32>} : memref<50x3200xf32, #tpu.memory_space<vmem>>, vector<5x128xf32>,
    %c27_522 = arith.constant 27 : index
    %c0_523 = arith.constant 0 : index
    %309 = vector.load %arg13[%c27_522, %c0_523] : memref<162x128xf32, #tpu.memory_space<vmem>>, vector<5x128xf32>
    %c0_524 = arith.constant 0 : index
    %c1920 = arith.constant 1920 : index
    %310 = vector.load %arg14[%c0_524, %c1920] : memref<50x3200xf32, #tpu.memory_space<vmem>>, vector<5x128xf32>
    tpu.vector_store %arg14[%c0_524, %c1920], %309 {strides = array<i32>} : memref<50x3200xf32, #tpu.memory_space<vmem>>, vector<5x128xf32>,
    %c36_525 = arith.constant 36 : index
    %c0_526 = arith.constant 0 : index
    %311 = vector.load %arg13[%c36_525, %c0_526] : memref<162x128xf32, #tpu.memory_space<vmem>>, vector<5x128xf32>
    %c5_527 = arith.constant 5 : index
    %c1920_528 = arith.constant 1920 : index
    %312 = vector.load %arg14[%c5_527, %c1920_528] : memref<50x3200xf32, #tpu.memory_space<vmem>>, vector<5x128xf32>
    tpu.vector_store %arg14[%c5_527, %c1920_528], %311 {strides = array<i32>} : memref<50x3200xf32, #tpu.memory_space<vmem>>, vector<5x128xf32>,
    %c45_529 = arith.constant 45 : index
    %c0_530 = arith.constant 0 : index
    %313 = vector.load %arg13[%c45_529, %c0_530] : memref<162x128xf32, #tpu.memory_space<vmem>>, vector<5x128xf32>
    %c10_531 = arith.constant 10 : index
    %c1920_532 = arith.constant 1920 : index
    %314 = vector.load %arg14[%c10_531, %c1920_532] : memref<50x3200xf32, #tpu.memory_space<vmem>>, vector<5x128xf32>
    tpu.vector_store %arg14[%c10_531, %c1920_532], %313 {strides = array<i32>} : memref<50x3200xf32, #tpu.memory_space<vmem>>, vector<5x128xf32>,
    %c54_533 = arith.constant 54 : index
    %c0_534 = arith.constant 0 : index
    %315 = vector.load %arg13[%c54_533, %c0_534] : memref<162x128xf32, #tpu.memory_space<vmem>>, vector<5x128xf32>
    %c15_535 = arith.constant 15 : index
    %c1920_536 = arith.constant 1920 : index
    %316 = vector.load %arg14[%c15_535, %c1920_536] : memref<50x3200xf32, #tpu.memory_space<vmem>>, vector<5x128xf32>
    tpu.vector_store %arg14[%c15_535, %c1920_536], %315 {strides = array<i32>} : memref<50x3200xf32, #tpu.memory_space<vmem>>, vector<5x128xf32>,
    %c63 = arith.constant 63 : index
    %c0_537 = arith.constant 0 : index
    %317 = vector.load %arg13[%c63, %c0_537] : memref<162x128xf32, #tpu.memory_space<vmem>>, vector<5x128xf32>
    %c20_538 = arith.constant 20 : index
    %c1920_539 = arith.constant 1920 : index
    %318 = vector.load %arg14[%c20_538, %c1920_539] : memref<50x3200xf32, #tpu.memory_space<vmem>>, vector<5x128xf32>
    tpu.vector_store %arg14[%c20_538, %c1920_539], %317 {strides = array<i32>} : memref<50x3200xf32, #tpu.memory_space<vmem>>, vector<5x128xf32>,
    %c108_540 = arith.constant 108 : index
    %c0_541 = arith.constant 0 : index
    %319 = vector.load %arg13[%c108_540, %c0_541] : memref<162x128xf32, #tpu.memory_space<vmem>>, vector<5x128xf32>
    %c25_542 = arith.constant 25 : index
    %c1920_543 = arith.constant 1920 : index
    %320 = vector.load %arg14[%c25_542, %c1920_543] : memref<50x3200xf32, #tpu.memory_space<vmem>>, vector<5x128xf32>
    tpu.vector_store %arg14[%c25_542, %c1920_543], %319 {strides = array<i32>} : memref<50x3200xf32, #tpu.memory_space<vmem>>, vector<5x128xf32>,
    %c117_544 = arith.constant 117 : index
    %c0_545 = arith.constant 0 : index
    %321 = vector.load %arg13[%c117_544, %c0_545] : memref<162x128xf32, #tpu.memory_space<vmem>>, vector<5x128xf32>
    %c30_546 = arith.constant 30 : index
    %c1920_547 = arith.constant 1920 : index
    %322 = vector.load %arg14[%c30_546, %c1920_547] : memref<50x3200xf32, #tpu.memory_space<vmem>>, vector<5x128xf32>
    tpu.vector_store %arg14[%c30_546, %c1920_547], %321 {strides = array<i32>} : memref<50x3200xf32, #tpu.memory_space<vmem>>, vector<5x128xf32>,
    %c126_548 = arith.constant 126 : index
    %c0_549 = arith.constant 0 : index
    %323 = vector.load %arg13[%c126_548, %c0_549] : memref<162x128xf32, #tpu.memory_space<vmem>>, vector<5x128xf32>
    %c35_550 = arith.constant 35 : index
    %c1920_551 = arith.constant 1920 : index
    %324 = vector.load %arg14[%c35_550, %c1920_551] : memref<50x3200xf32, #tpu.memory_space<vmem>>, vector<5x128xf32>
    tpu.vector_store %arg14[%c35_550, %c1920_551], %323 {strides = array<i32>} : memref<50x3200xf32, #tpu.memory_space<vmem>>, vector<5x128xf32>,
    %c135_552 = arith.constant 135 : index
    %c0_553 = arith.constant 0 : index
    %325 = vector.load %arg13[%c135_552, %c0_553] : memref<162x128xf32, #tpu.memory_space<vmem>>, vector<5x128xf32>
    %c40_554 = arith.constant 40 : index
    %c1920_555 = arith.constant 1920 : index
    %326 = vector.load %arg14[%c40_554, %c1920_555] : memref<50x3200xf32, #tpu.memory_space<vmem>>, vector<5x128xf32>
    tpu.vector_store %arg14[%c40_554, %c1920_555], %325 {strides = array<i32>} : memref<50x3200xf32, #tpu.memory_space<vmem>>, vector<5x128xf32>,
    %c144 = arith.constant 144 : index
    %c0_556 = arith.constant 0 : index
    %327 = vector.load %arg13[%c144, %c0_556] : memref<162x128xf32, #tpu.memory_space<vmem>>, vector<5x128xf32>
    %c45_557 = arith.constant 45 : index
    %c1920_558 = arith.constant 1920 : index
    %328 = vector.load %arg14[%c45_557, %c1920_558] : memref<50x3200xf32, #tpu.memory_space<vmem>>, vector<5x128xf32>
    tpu.vector_store %arg14[%c45_557, %c1920_558], %327 {strides = array<i32>} : memref<50x3200xf32, #tpu.memory_space<vmem>>, vector<5x128xf32>,
    %c28_559 = arith.constant 28 : index
    %c0_560 = arith.constant 0 : index
    %329 = vector.load %arg13[%c28_559, %c0_560] : memref<162x128xf32, #tpu.memory_space<vmem>>, vector<5x128xf32>
    %c0_561 = arith.constant 0 : index
    %c2048 = arith.constant 2048 : index
    %330 = vector.load %arg14[%c0_561, %c2048] : memref<50x3200xf32, #tpu.memory_space<vmem>>, vector<5x128xf32>
    tpu.vector_store %arg14[%c0_561, %c2048], %329 {strides = array<i32>} : memref<50x3200xf32, #tpu.memory_space<vmem>>, vector<5x128xf32>,
    %c37_562 = arith.constant 37 : index
    %c0_563 = arith.constant 0 : index
    %331 = vector.load %arg13[%c37_562, %c0_563] : memref<162x128xf32, #tpu.memory_space<vmem>>, vector<5x128xf32>
    %c5_564 = arith.constant 5 : index
    %c2048_565 = arith.constant 2048 : index
    %332 = vector.load %arg14[%c5_564, %c2048_565] : memref<50x3200xf32, #tpu.memory_space<vmem>>, vector<5x128xf32>
    tpu.vector_store %arg14[%c5_564, %c2048_565], %331 {strides = array<i32>} : memref<50x3200xf32, #tpu.memory_space<vmem>>, vector<5x128xf32>,
    %c46_566 = arith.constant 46 : index
    %c0_567 = arith.constant 0 : index
    %333 = vector.load %arg13[%c46_566, %c0_567] : memref<162x128xf32, #tpu.memory_space<vmem>>, vector<5x128xf32>
    %c10_568 = arith.constant 10 : index
    %c2048_569 = arith.constant 2048 : index
    %334 = vector.load %arg14[%c10_568, %c2048_569] : memref<50x3200xf32, #tpu.memory_space<vmem>>, vector<5x128xf32>
    tpu.vector_store %arg14[%c10_568, %c2048_569], %333 {strides = array<i32>} : memref<50x3200xf32, #tpu.memory_space<vmem>>, vector<5x128xf32>,
    %c55_570 = arith.constant 55 : index
    %c0_571 = arith.constant 0 : index
    %335 = vector.load %arg13[%c55_570, %c0_571] : memref<162x128xf32, #tpu.memory_space<vmem>>, vector<5x128xf32>
    %c15_572 = arith.constant 15 : index
    %c2048_573 = arith.constant 2048 : index
    %336 = vector.load %arg14[%c15_572, %c2048_573] : memref<50x3200xf32, #tpu.memory_space<vmem>>, vector<5x128xf32>
    tpu.vector_store %arg14[%c15_572, %c2048_573], %335 {strides = array<i32>} : memref<50x3200xf32, #tpu.memory_space<vmem>>, vector<5x128xf32>,
    %c64 = arith.constant 64 : index
    %c0_574 = arith.constant 0 : index
    %337 = vector.load %arg13[%c64, %c0_574] : memref<162x128xf32, #tpu.memory_space<vmem>>, vector<5x128xf32>
    %c20_575 = arith.constant 20 : index
    %c2048_576 = arith.constant 2048 : index
    %338 = vector.load %arg14[%c20_575, %c2048_576] : memref<50x3200xf32, #tpu.memory_space<vmem>>, vector<5x128xf32>
    tpu.vector_store %arg14[%c20_575, %c2048_576], %337 {strides = array<i32>} : memref<50x3200xf32, #tpu.memory_space<vmem>>, vector<5x128xf32>,
    %c109_577 = arith.constant 109 : index
    %c0_578 = arith.constant 0 : index
    %339 = vector.load %arg13[%c109_577, %c0_578] : memref<162x128xf32, #tpu.memory_space<vmem>>, vector<5x128xf32>
    %c25_579 = arith.constant 25 : index
    %c2048_580 = arith.constant 2048 : index
    %340 = vector.load %arg14[%c25_579, %c2048_580] : memref<50x3200xf32, #tpu.memory_space<vmem>>, vector<5x128xf32>
    tpu.vector_store %arg14[%c25_579, %c2048_580], %339 {strides = array<i32>} : memref<50x3200xf32, #tpu.memory_space<vmem>>, vector<5x128xf32>,
    %c118_581 = arith.constant 118 : index
    %c0_582 = arith.constant 0 : index
    %341 = vector.load %arg13[%c118_581, %c0_582] : memref<162x128xf32, #tpu.memory_space<vmem>>, vector<5x128xf32>
    %c30_583 = arith.constant 30 : index
    %c2048_584 = arith.constant 2048 : index
    %342 = vector.load %arg14[%c30_583, %c2048_584] : memref<50x3200xf32, #tpu.memory_space<vmem>>, vector<5x128xf32>
    tpu.vector_store %arg14[%c30_583, %c2048_584], %341 {strides = array<i32>} : memref<50x3200xf32, #tpu.memory_space<vmem>>, vector<5x128xf32>,
    %c127_585 = arith.constant 127 : index
    %c0_586 = arith.constant 0 : index
    %343 = vector.load %arg13[%c127_585, %c0_586] : memref<162x128xf32, #tpu.memory_space<vmem>>, vector<5x128xf32>
    %c35_587 = arith.constant 35 : index
    %c2048_588 = arith.constant 2048 : index
    %344 = vector.load %arg14[%c35_587, %c2048_588] : memref<50x3200xf32, #tpu.memory_space<vmem>>, vector<5x128xf32>
    tpu.vector_store %arg14[%c35_587, %c2048_588], %343 {strides = array<i32>} : memref<50x3200xf32, #tpu.memory_space<vmem>>, vector<5x128xf32>,
    %c136_589 = arith.constant 136 : index
    %c0_590 = arith.constant 0 : index
    %345 = vector.load %arg13[%c136_589, %c0_590] : memref<162x128xf32, #tpu.memory_space<vmem>>, vector<5x128xf32>
    %c40_591 = arith.constant 40 : index
    %c2048_592 = arith.constant 2048 : index
    %346 = vector.load %arg14[%c40_591, %c2048_592] : memref<50x3200xf32, #tpu.memory_space<vmem>>, vector<5x128xf32>
    tpu.vector_store %arg14[%c40_591, %c2048_592], %345 {strides = array<i32>} : memref<50x3200xf32, #tpu.memory_space<vmem>>, vector<5x128xf32>,
    %c145 = arith.constant 145 : index
    %c0_593 = arith.constant 0 : index
    %347 = vector.load %arg13[%c145, %c0_593] : memref<162x128xf32, #tpu.memory_space<vmem>>, vector<5x128xf32>
    %c45_594 = arith.constant 45 : index
    %c2048_595 = arith.constant 2048 : index
    %348 = vector.load %arg14[%c45_594, %c2048_595] : memref<50x3200xf32, #tpu.memory_space<vmem>>, vector<5x128xf32>
    tpu.vector_store %arg14[%c45_594, %c2048_595], %347 {strides = array<i32>} : memref<50x3200xf32, #tpu.memory_space<vmem>>, vector<5x128xf32>,
    %c29_596 = arith.constant 29 : index
    %c0_597 = arith.constant 0 : index
    %349 = vector.load %arg13[%c29_596, %c0_597] : memref<162x128xf32, #tpu.memory_space<vmem>>, vector<5x128xf32>
    %c0_598 = arith.constant 0 : index
    %c2176 = arith.constant 2176 : index
    %350 = vector.load %arg14[%c0_598, %c2176] : memref<50x3200xf32, #tpu.memory_space<vmem>>, vector<5x128xf32>
    tpu.vector_store %arg14[%c0_598, %c2176], %349 {strides = array<i32>} : memref<50x3200xf32, #tpu.memory_space<vmem>>, vector<5x128xf32>,
    %c38_599 = arith.constant 38 : index
    %c0_600 = arith.constant 0 : index
    %351 = vector.load %arg13[%c38_599, %c0_600] : memref<162x128xf32, #tpu.memory_space<vmem>>, vector<5x128xf32>
    %c5_601 = arith.constant 5 : index
    %c2176_602 = arith.constant 2176 : index
    %352 = vector.load %arg14[%c5_601, %c2176_602] : memref<50x3200xf32, #tpu.memory_space<vmem>>, vector<5x128xf32>
    tpu.vector_store %arg14[%c5_601, %c2176_602], %351 {strides = array<i32>} : memref<50x3200xf32, #tpu.memory_space<vmem>>, vector<5x128xf32>,
    %c47_603 = arith.constant 47 : index
    %c0_604 = arith.constant 0 : index
    %353 = vector.load %arg13[%c47_603, %c0_604] : memref<162x128xf32, #tpu.memory_space<vmem>>, vector<5x128xf32>
    %c10_605 = arith.constant 10 : index
    %c2176_606 = arith.constant 2176 : index
    %354 = vector.load %arg14[%c10_605, %c2176_606] : memref<50x3200xf32, #tpu.memory_space<vmem>>, vector<5x128xf32>
    tpu.vector_store %arg14[%c10_605, %c2176_606], %353 {strides = array<i32>} : memref<50x3200xf32, #tpu.memory_space<vmem>>, vector<5x128xf32>,
    %c56_607 = arith.constant 56 : index
    %c0_608 = arith.constant 0 : index
    %355 = vector.load %arg13[%c56_607, %c0_608] : memref<162x128xf32, #tpu.memory_space<vmem>>, vector<5x128xf32>
    %c15_609 = arith.constant 15 : index
    %c2176_610 = arith.constant 2176 : index
    %356 = vector.load %arg14[%c15_609, %c2176_610] : memref<50x3200xf32, #tpu.memory_space<vmem>>, vector<5x128xf32>
    tpu.vector_store %arg14[%c15_609, %c2176_610], %355 {strides = array<i32>} : memref<50x3200xf32, #tpu.memory_space<vmem>>, vector<5x128xf32>,
    %c65 = arith.constant 65 : index
    %c0_611 = arith.constant 0 : index
    %357 = vector.load %arg13[%c65, %c0_611] : memref<162x128xf32, #tpu.memory_space<vmem>>, vector<5x128xf32>
    %c20_612 = arith.constant 20 : index
    %c2176_613 = arith.constant 2176 : index
    %358 = vector.load %arg14[%c20_612, %c2176_613] : memref<50x3200xf32, #tpu.memory_space<vmem>>, vector<5x128xf32>
    tpu.vector_store %arg14[%c20_612, %c2176_613], %357 {strides = array<i32>} : memref<50x3200xf32, #tpu.memory_space<vmem>>, vector<5x128xf32>,
    %c110_614 = arith.constant 110 : index
    %c0_615 = arith.constant 0 : index
    %359 = vector.load %arg13[%c110_614, %c0_615] : memref<162x128xf32, #tpu.memory_space<vmem>>, vector<5x128xf32>
    %c25_616 = arith.constant 25 : index
    %c2176_617 = arith.constant 2176 : index
    %360 = vector.load %arg14[%c25_616, %c2176_617] : memref<50x3200xf32, #tpu.memory_space<vmem>>, vector<5x128xf32>
    tpu.vector_store %arg14[%c25_616, %c2176_617], %359 {strides = array<i32>} : memref<50x3200xf32, #tpu.memory_space<vmem>>, vector<5x128xf32>,
    %c119_618 = arith.constant 119 : index
    %c0_619 = arith.constant 0 : index
    %361 = vector.load %arg13[%c119_618, %c0_619] : memref<162x128xf32, #tpu.memory_space<vmem>>, vector<5x128xf32>
    %c30_620 = arith.constant 30 : index
    %c2176_621 = arith.constant 2176 : index
    %362 = vector.load %arg14[%c30_620, %c2176_621] : memref<50x3200xf32, #tpu.memory_space<vmem>>, vector<5x128xf32>
    tpu.vector_store %arg14[%c30_620, %c2176_621], %361 {strides = array<i32>} : memref<50x3200xf32, #tpu.memory_space<vmem>>, vector<5x128xf32>,
    %c128_622 = arith.constant 128 : index
    %c0_623 = arith.constant 0 : index
    %363 = vector.load %arg13[%c128_622, %c0_623] : memref<162x128xf32, #tpu.memory_space<vmem>>, vector<5x128xf32>
    %c35_624 = arith.constant 35 : index
    %c2176_625 = arith.constant 2176 : index
    %364 = vector.load %arg14[%c35_624, %c2176_625] : memref<50x3200xf32, #tpu.memory_space<vmem>>, vector<5x128xf32>
    tpu.vector_store %arg14[%c35_624, %c2176_625], %363 {strides = array<i32>} : memref<50x3200xf32, #tpu.memory_space<vmem>>, vector<5x128xf32>,
    %c137_626 = arith.constant 137 : index
    %c0_627 = arith.constant 0 : index
    %365 = vector.load %arg13[%c137_626, %c0_627] : memref<162x128xf32, #tpu.memory_space<vmem>>, vector<5x128xf32>
    %c40_628 = arith.constant 40 : index
    %c2176_629 = arith.constant 2176 : index
    %366 = vector.load %arg14[%c40_628, %c2176_629] : memref<50x3200xf32, #tpu.memory_space<vmem>>, vector<5x128xf32>
    tpu.vector_store %arg14[%c40_628, %c2176_629], %365 {strides = array<i32>} : memref<50x3200xf32, #tpu.memory_space<vmem>>, vector<5x128xf32>,
    %c146 = arith.constant 146 : index
    %c0_630 = arith.constant 0 : index
    %367 = vector.load %arg13[%c146, %c0_630] : memref<162x128xf32, #tpu.memory_space<vmem>>, vector<5x128xf32>
    %c45_631 = arith.constant 45 : index
    %c2176_632 = arith.constant 2176 : index
    %368 = vector.load %arg14[%c45_631, %c2176_632] : memref<50x3200xf32, #tpu.memory_space<vmem>>, vector<5x128xf32>
    tpu.vector_store %arg14[%c45_631, %c2176_632], %367 {strides = array<i32>} : memref<50x3200xf32, #tpu.memory_space<vmem>>, vector<5x128xf32>,
    %c30_633 = arith.constant 30 : index
    %c0_634 = arith.constant 0 : index
    %369 = vector.load %arg13[%c30_633, %c0_634] : memref<162x128xf32, #tpu.memory_space<vmem>>, vector<5x128xf32>
    %c0_635 = arith.constant 0 : index
    %c2304 = arith.constant 2304 : index
    %370 = vector.load %arg14[%c0_635, %c2304] : memref<50x3200xf32, #tpu.memory_space<vmem>>, vector<5x128xf32>
    tpu.vector_store %arg14[%c0_635, %c2304], %369 {strides = array<i32>} : memref<50x3200xf32, #tpu.memory_space<vmem>>, vector<5x128xf32>,
    %c39_636 = arith.constant 39 : index
    %c0_637 = arith.constant 0 : index
    %371 = vector.load %arg13[%c39_636, %c0_637] : memref<162x128xf32, #tpu.memory_space<vmem>>, vector<5x128xf32>
    %c5_638 = arith.constant 5 : index
    %c2304_639 = arith.constant 2304 : index
    %372 = vector.load %arg14[%c5_638, %c2304_639] : memref<50x3200xf32, #tpu.memory_space<vmem>>, vector<5x128xf32>
    tpu.vector_store %arg14[%c5_638, %c2304_639], %371 {strides = array<i32>} : memref<50x3200xf32, #tpu.memory_space<vmem>>, vector<5x128xf32>,
    %c48_640 = arith.constant 48 : index
    %c0_641 = arith.constant 0 : index
    %373 = vector.load %arg13[%c48_640, %c0_641] : memref<162x128xf32, #tpu.memory_space<vmem>>, vector<5x128xf32>
    %c10_642 = arith.constant 10 : index
    %c2304_643 = arith.constant 2304 : index
    %374 = vector.load %arg14[%c10_642, %c2304_643] : memref<50x3200xf32, #tpu.memory_space<vmem>>, vector<5x128xf32>
    tpu.vector_store %arg14[%c10_642, %c2304_643], %373 {strides = array<i32>} : memref<50x3200xf32, #tpu.memory_space<vmem>>, vector<5x128xf32>,
    %c57_644 = arith.constant 57 : index
    %c0_645 = arith.constant 0 : index
    %375 = vector.load %arg13[%c57_644, %c0_645] : memref<162x128xf32, #tpu.memory_space<vmem>>, vector<5x128xf32>
    %c15_646 = arith.constant 15 : index
    %c2304_647 = arith.constant 2304 : index
    %376 = vector.load %arg14[%c15_646, %c2304_647] : memref<50x3200xf32, #tpu.memory_space<vmem>>, vector<5x128xf32>
    tpu.vector_store %arg14[%c15_646, %c2304_647], %375 {strides = array<i32>} : memref<50x3200xf32, #tpu.memory_space<vmem>>, vector<5x128xf32>,
    %c66 = arith.constant 66 : index
    %c0_648 = arith.constant 0 : index
    %377 = vector.load %arg13[%c66, %c0_648] : memref<162x128xf32, #tpu.memory_space<vmem>>, vector<5x128xf32>
    %c20_649 = arith.constant 20 : index
    %c2304_650 = arith.constant 2304 : index
    %378 = vector.load %arg14[%c20_649, %c2304_650] : memref<50x3200xf32, #tpu.memory_space<vmem>>, vector<5x128xf32>
    tpu.vector_store %arg14[%c20_649, %c2304_650], %377 {strides = array<i32>} : memref<50x3200xf32, #tpu.memory_space<vmem>>, vector<5x128xf32>,
    %c111_651 = arith.constant 111 : index
    %c0_652 = arith.constant 0 : index
    %379 = vector.load %arg13[%c111_651, %c0_652] : memref<162x128xf32, #tpu.memory_space<vmem>>, vector<5x128xf32>
    %c25_653 = arith.constant 25 : index
    %c2304_654 = arith.constant 2304 : index
    %380 = vector.load %arg14[%c25_653, %c2304_654] : memref<50x3200xf32, #tpu.memory_space<vmem>>, vector<5x128xf32>
    tpu.vector_store %arg14[%c25_653, %c2304_654], %379 {strides = array<i32>} : memref<50x3200xf32, #tpu.memory_space<vmem>>, vector<5x128xf32>,
    %c120_655 = arith.constant 120 : index
    %c0_656 = arith.constant 0 : index
    %381 = vector.load %arg13[%c120_655, %c0_656] : memref<162x128xf32, #tpu.memory_space<vmem>>, vector<5x128xf32>
    %c30_657 = arith.constant 30 : index
    %c2304_658 = arith.constant 2304 : index
    %382 = vector.load %arg14[%c30_657, %c2304_658] : memref<50x3200xf32, #tpu.memory_space<vmem>>, vector<5x128xf32>
    tpu.vector_store %arg14[%c30_657, %c2304_658], %381 {strides = array<i32>} : memref<50x3200xf32, #tpu.memory_space<vmem>>, vector<5x128xf32>,
    %c129_659 = arith.constant 129 : index
    %c0_660 = arith.constant 0 : index
    %383 = vector.load %arg13[%c129_659, %c0_660] : memref<162x128xf32, #tpu.memory_space<vmem>>, vector<5x128xf32>
    %c35_661 = arith.constant 35 : index
    %c2304_662 = arith.constant 2304 : index
    %384 = vector.load %arg14[%c35_661, %c2304_662] : memref<50x3200xf32, #tpu.memory_space<vmem>>, vector<5x128xf32>
    tpu.vector_store %arg14[%c35_661, %c2304_662], %383 {strides = array<i32>} : memref<50x3200xf32, #tpu.memory_space<vmem>>, vector<5x128xf32>,
    %c138_663 = arith.constant 138 : index
    %c0_664 = arith.constant 0 : index
    %385 = vector.load %arg13[%c138_663, %c0_664] : memref<162x128xf32, #tpu.memory_space<vmem>>, vector<5x128xf32>
    %c40_665 = arith.constant 40 : index
    %c2304_666 = arith.constant 2304 : index
    %386 = vector.load %arg14[%c40_665, %c2304_666] : memref<50x3200xf32, #tpu.memory_space<vmem>>, vector<5x128xf32>
    tpu.vector_store %arg14[%c40_665, %c2304_666], %385 {strides = array<i32>} : memref<50x3200xf32, #tpu.memory_space<vmem>>, vector<5x128xf32>,
    %c147 = arith.constant 147 : index
    %c0_667 = arith.constant 0 : index
    %387 = vector.load %arg13[%c147, %c0_667] : memref<162x128xf32, #tpu.memory_space<vmem>>, vector<5x128xf32>
    %c45_668 = arith.constant 45 : index
    %c2304_669 = arith.constant 2304 : index
    %388 = vector.load %arg14[%c45_668, %c2304_669] : memref<50x3200xf32, #tpu.memory_space<vmem>>, vector<5x128xf32>
    tpu.vector_store %arg14[%c45_668, %c2304_669], %387 {strides = array<i32>} : memref<50x3200xf32, #tpu.memory_space<vmem>>, vector<5x128xf32>,
    %c31_670 = arith.constant 31 : index
    %c0_671 = arith.constant 0 : index
    %389 = vector.load %arg13[%c31_670, %c0_671] : memref<162x128xf32, #tpu.memory_space<vmem>>, vector<5x128xf32>
    %c0_672 = arith.constant 0 : index
    %c2432 = arith.constant 2432 : index
    %390 = vector.load %arg14[%c0_672, %c2432] : memref<50x3200xf32, #tpu.memory_space<vmem>>, vector<5x128xf32>
    tpu.vector_store %arg14[%c0_672, %c2432], %389 {strides = array<i32>} : memref<50x3200xf32, #tpu.memory_space<vmem>>, vector<5x128xf32>,
    %c40_673 = arith.constant 40 : index
    %c0_674 = arith.constant 0 : index
    %391 = vector.load %arg13[%c40_673, %c0_674] : memref<162x128xf32, #tpu.memory_space<vmem>>, vector<5x128xf32>
    %c5_675 = arith.constant 5 : index
    %c2432_676 = arith.constant 2432 : index
    %392 = vector.load %arg14[%c5_675, %c2432_676] : memref<50x3200xf32, #tpu.memory_space<vmem>>, vector<5x128xf32>
    tpu.vector_store %arg14[%c5_675, %c2432_676], %391 {strides = array<i32>} : memref<50x3200xf32, #tpu.memory_space<vmem>>, vector<5x128xf32>,
    %c49_677 = arith.constant 49 : index
    %c0_678 = arith.constant 0 : index
    %393 = vector.load %arg13[%c49_677, %c0_678] : memref<162x128xf32, #tpu.memory_space<vmem>>, vector<5x128xf32>
    %c10_679 = arith.constant 10 : index
    %c2432_680 = arith.constant 2432 : index
    %394 = vector.load %arg14[%c10_679, %c2432_680] : memref<50x3200xf32, #tpu.memory_space<vmem>>, vector<5x128xf32>
    tpu.vector_store %arg14[%c10_679, %c2432_680], %393 {strides = array<i32>} : memref<50x3200xf32, #tpu.memory_space<vmem>>, vector<5x128xf32>,
    %c58_681 = arith.constant 58 : index
    %c0_682 = arith.constant 0 : index
    %395 = vector.load %arg13[%c58_681, %c0_682] : memref<162x128xf32, #tpu.memory_space<vmem>>, vector<5x128xf32>
    %c15_683 = arith.constant 15 : index
    %c2432_684 = arith.constant 2432 : index
    %396 = vector.load %arg14[%c15_683, %c2432_684] : memref<50x3200xf32, #tpu.memory_space<vmem>>, vector<5x128xf32>
    tpu.vector_store %arg14[%c15_683, %c2432_684], %395 {strides = array<i32>} : memref<50x3200xf32, #tpu.memory_space<vmem>>, vector<5x128xf32>,
    %c67 = arith.constant 67 : index
    %c0_685 = arith.constant 0 : index
    %397 = vector.load %arg13[%c67, %c0_685] : memref<162x128xf32, #tpu.memory_space<vmem>>, vector<5x128xf32>
    %c20_686 = arith.constant 20 : index
    %c2432_687 = arith.constant 2432 : index
    %398 = vector.load %arg14[%c20_686, %c2432_687] : memref<50x3200xf32, #tpu.memory_space<vmem>>, vector<5x128xf32>
    tpu.vector_store %arg14[%c20_686, %c2432_687], %397 {strides = array<i32>} : memref<50x3200xf32, #tpu.memory_space<vmem>>, vector<5x128xf32>,
    %c112_688 = arith.constant 112 : index
    %c0_689 = arith.constant 0 : index
    %399 = vector.load %arg13[%c112_688, %c0_689] : memref<162x128xf32, #tpu.memory_space<vmem>>, vector<5x128xf32>
    %c25_690 = arith.constant 25 : index
    %c2432_691 = arith.constant 2432 : index
    %400 = vector.load %arg14[%c25_690, %c2432_691] : memref<50x3200xf32, #tpu.memory_space<vmem>>, vector<5x128xf32>
    tpu.vector_store %arg14[%c25_690, %c2432_691], %399 {strides = array<i32>} : memref<50x3200xf32, #tpu.memory_space<vmem>>, vector<5x128xf32>,
    %c121_692 = arith.constant 121 : index
    %c0_693 = arith.constant 0 : index
    %401 = vector.load %arg13[%c121_692, %c0_693] : memref<162x128xf32, #tpu.memory_space<vmem>>, vector<5x128xf32>
    %c30_694 = arith.constant 30 : index
    %c2432_695 = arith.constant 2432 : index
    %402 = vector.load %arg14[%c30_694, %c2432_695] : memref<50x3200xf32, #tpu.memory_space<vmem>>, vector<5x128xf32>
    tpu.vector_store %arg14[%c30_694, %c2432_695], %401 {strides = array<i32>} : memref<50x3200xf32, #tpu.memory_space<vmem>>, vector<5x128xf32>,
    %c130_696 = arith.constant 130 : index
    %c0_697 = arith.constant 0 : index
    %403 = vector.load %arg13[%c130_696, %c0_697] : memref<162x128xf32, #tpu.memory_space<vmem>>, vector<5x128xf32>
    %c35_698 = arith.constant 35 : index
    %c2432_699 = arith.constant 2432 : index
    %404 = vector.load %arg14[%c35_698, %c2432_699] : memref<50x3200xf32, #tpu.memory_space<vmem>>, vector<5x128xf32>
    tpu.vector_store %arg14[%c35_698, %c2432_699], %403 {strides = array<i32>} : memref<50x3200xf32, #tpu.memory_space<vmem>>, vector<5x128xf32>,
    %c139_700 = arith.constant 139 : index
    %c0_701 = arith.constant 0 : index
    %405 = vector.load %arg13[%c139_700, %c0_701] : memref<162x128xf32, #tpu.memory_space<vmem>>, vector<5x128xf32>
    %c40_702 = arith.constant 40 : index
    %c2432_703 = arith.constant 2432 : index
    %406 = vector.load %arg14[%c40_702, %c2432_703] : memref<50x3200xf32, #tpu.memory_space<vmem>>, vector<5x128xf32>
    tpu.vector_store %arg14[%c40_702, %c2432_703], %405 {strides = array<i32>} : memref<50x3200xf32, #tpu.memory_space<vmem>>, vector<5x128xf32>,
    %c148 = arith.constant 148 : index
    %c0_704 = arith.constant 0 : index
    %407 = vector.load %arg13[%c148, %c0_704] : memref<162x128xf32, #tpu.memory_space<vmem>>, vector<5x128xf32>
    %c45_705 = arith.constant 45 : index
    %c2432_706 = arith.constant 2432 : index
    %408 = vector.load %arg14[%c45_705, %c2432_706] : memref<50x3200xf32, #tpu.memory_space<vmem>>, vector<5x128xf32>
    tpu.vector_store %arg14[%c45_705, %c2432_706], %407 {strides = array<i32>} : memref<50x3200xf32, #tpu.memory_space<vmem>>, vector<5x128xf32>,
    %c36_707 = arith.constant 36 : index
    %c0_708 = arith.constant 0 : index
    %409 = vector.load %arg13[%c36_707, %c0_708] : memref<162x128xf32, #tpu.memory_space<vmem>>, vector<5x128xf32>
    %c0_709 = arith.constant 0 : index
    %c2560 = arith.constant 2560 : index
    %410 = vector.load %arg14[%c0_709, %c2560] : memref<50x3200xf32, #tpu.memory_space<vmem>>, vector<5x128xf32>
    tpu.vector_store %arg14[%c0_709, %c2560], %409 {strides = array<i32>} : memref<50x3200xf32, #tpu.memory_space<vmem>>, vector<5x128xf32>,
    %c45_710 = arith.constant 45 : index
    %c0_711 = arith.constant 0 : index
    %411 = vector.load %arg13[%c45_710, %c0_711] : memref<162x128xf32, #tpu.memory_space<vmem>>, vector<5x128xf32>
    %c5_712 = arith.constant 5 : index
    %c2560_713 = arith.constant 2560 : index
    %412 = vector.load %arg14[%c5_712, %c2560_713] : memref<50x3200xf32, #tpu.memory_space<vmem>>, vector<5x128xf32>
    tpu.vector_store %arg14[%c5_712, %c2560_713], %411 {strides = array<i32>} : memref<50x3200xf32, #tpu.memory_space<vmem>>, vector<5x128xf32>,
    %c54_714 = arith.constant 54 : index
    %c0_715 = arith.constant 0 : index
    %413 = vector.load %arg13[%c54_714, %c0_715] : memref<162x128xf32, #tpu.memory_space<vmem>>, vector<5x128xf32>
    %c10_716 = arith.constant 10 : index
    %c2560_717 = arith.constant 2560 : index
    %414 = vector.load %arg14[%c10_716, %c2560_717] : memref<50x3200xf32, #tpu.memory_space<vmem>>, vector<5x128xf32>
    tpu.vector_store %arg14[%c10_716, %c2560_717], %413 {strides = array<i32>} : memref<50x3200xf32, #tpu.memory_space<vmem>>, vector<5x128xf32>,
    %c63_718 = arith.constant 63 : index
    %c0_719 = arith.constant 0 : index
    %415 = vector.load %arg13[%c63_718, %c0_719] : memref<162x128xf32, #tpu.memory_space<vmem>>, vector<5x128xf32>
    %c15_720 = arith.constant 15 : index
    %c2560_721 = arith.constant 2560 : index
    %416 = vector.load %arg14[%c15_720, %c2560_721] : memref<50x3200xf32, #tpu.memory_space<vmem>>, vector<5x128xf32>
    tpu.vector_store %arg14[%c15_720, %c2560_721], %415 {strides = array<i32>} : memref<50x3200xf32, #tpu.memory_space<vmem>>, vector<5x128xf32>,
    %c72 = arith.constant 72 : index
    %c0_722 = arith.constant 0 : index
    %417 = vector.load %arg13[%c72, %c0_722] : memref<162x128xf32, #tpu.memory_space<vmem>>, vector<5x128xf32>
    %c20_723 = arith.constant 20 : index
    %c2560_724 = arith.constant 2560 : index
    %418 = vector.load %arg14[%c20_723, %c2560_724] : memref<50x3200xf32, #tpu.memory_space<vmem>>, vector<5x128xf32>
    tpu.vector_store %arg14[%c20_723, %c2560_724], %417 {strides = array<i32>} : memref<50x3200xf32, #tpu.memory_space<vmem>>, vector<5x128xf32>,
    %c117_725 = arith.constant 117 : index
    %c0_726 = arith.constant 0 : index
    %419 = vector.load %arg13[%c117_725, %c0_726] : memref<162x128xf32, #tpu.memory_space<vmem>>, vector<5x128xf32>
    %c25_727 = arith.constant 25 : index
    %c2560_728 = arith.constant 2560 : index
    %420 = vector.load %arg14[%c25_727, %c2560_728] : memref<50x3200xf32, #tpu.memory_space<vmem>>, vector<5x128xf32>
    tpu.vector_store %arg14[%c25_727, %c2560_728], %419 {strides = array<i32>} : memref<50x3200xf32, #tpu.memory_space<vmem>>, vector<5x128xf32>,
    %c126_729 = arith.constant 126 : index
    %c0_730 = arith.constant 0 : index
    %421 = vector.load %arg13[%c126_729, %c0_730] : memref<162x128xf32, #tpu.memory_space<vmem>>, vector<5x128xf32>
    %c30_731 = arith.constant 30 : index
    %c2560_732 = arith.constant 2560 : index
    %422 = vector.load %arg14[%c30_731, %c2560_732] : memref<50x3200xf32, #tpu.memory_space<vmem>>, vector<5x128xf32>
    tpu.vector_store %arg14[%c30_731, %c2560_732], %421 {strides = array<i32>} : memref<50x3200xf32, #tpu.memory_space<vmem>>, vector<5x128xf32>,
    %c135_733 = arith.constant 135 : index
    %c0_734 = arith.constant 0 : index
    %423 = vector.load %arg13[%c135_733, %c0_734] : memref<162x128xf32, #tpu.memory_space<vmem>>, vector<5x128xf32>
    %c35_735 = arith.constant 35 : index
    %c2560_736 = arith.constant 2560 : index
    %424 = vector.load %arg14[%c35_735, %c2560_736] : memref<50x3200xf32, #tpu.memory_space<vmem>>, vector<5x128xf32>
    tpu.vector_store %arg14[%c35_735, %c2560_736], %423 {strides = array<i32>} : memref<50x3200xf32, #tpu.memory_space<vmem>>, vector<5x128xf32>,
    %c144_737 = arith.constant 144 : index
    %c0_738 = arith.constant 0 : index
    %425 = vector.load %arg13[%c144_737, %c0_738] : memref<162x128xf32, #tpu.memory_space<vmem>>, vector<5x128xf32>
    %c40_739 = arith.constant 40 : index
    %c2560_740 = arith.constant 2560 : index
    %426 = vector.load %arg14[%c40_739, %c2560_740] : memref<50x3200xf32, #tpu.memory_space<vmem>>, vector<5x128xf32>
    tpu.vector_store %arg14[%c40_739, %c2560_740], %425 {strides = array<i32>} : memref<50x3200xf32, #tpu.memory_space<vmem>>, vector<5x128xf32>,
    %c153 = arith.constant 153 : index
    %c0_741 = arith.constant 0 : index
    %427 = vector.load %arg13[%c153, %c0_741] : memref<162x128xf32, #tpu.memory_space<vmem>>, vector<5x128xf32>
    %c45_742 = arith.constant 45 : index
    %c2560_743 = arith.constant 2560 : index
    %428 = vector.load %arg14[%c45_742, %c2560_743] : memref<50x3200xf32, #tpu.memory_space<vmem>>, vector<5x128xf32>
    tpu.vector_store %arg14[%c45_742, %c2560_743], %427 {strides = array<i32>} : memref<50x3200xf32, #tpu.memory_space<vmem>>, vector<5x128xf32>,
    %c37_744 = arith.constant 37 : index
    %c0_745 = arith.constant 0 : index
    %429 = vector.load %arg13[%c37_744, %c0_745] : memref<162x128xf32, #tpu.memory_space<vmem>>, vector<5x128xf32>
    %c0_746 = arith.constant 0 : index
    %c2688 = arith.constant 2688 : index
    %430 = vector.load %arg14[%c0_746, %c2688] : memref<50x3200xf32, #tpu.memory_space<vmem>>, vector<5x128xf32>
    tpu.vector_store %arg14[%c0_746, %c2688], %429 {strides = array<i32>} : memref<50x3200xf32, #tpu.memory_space<vmem>>, vector<5x128xf32>,
    %c46_747 = arith.constant 46 : index
    %c0_748 = arith.constant 0 : index
    %431 = vector.load %arg13[%c46_747, %c0_748] : memref<162x128xf32, #tpu.memory_space<vmem>>, vector<5x128xf32>
    %c5_749 = arith.constant 5 : index
    %c2688_750 = arith.constant 2688 : index
    %432 = vector.load %arg14[%c5_749, %c2688_750] : memref<50x3200xf32, #tpu.memory_space<vmem>>, vector<5x128xf32>
    tpu.vector_store %arg14[%c5_749, %c2688_750], %431 {strides = array<i32>} : memref<50x3200xf32, #tpu.memory_space<vmem>>, vector<5x128xf32>,
    %c55_751 = arith.constant 55 : index
    %c0_752 = arith.constant 0 : index
    %433 = vector.load %arg13[%c55_751, %c0_752] : memref<162x128xf32, #tpu.memory_space<vmem>>, vector<5x128xf32>
    %c10_753 = arith.constant 10 : index
    %c2688_754 = arith.constant 2688 : index
    %434 = vector.load %arg14[%c10_753, %c2688_754] : memref<50x3200xf32, #tpu.memory_space<vmem>>, vector<5x128xf32>
    tpu.vector_store %arg14[%c10_753, %c2688_754], %433 {strides = array<i32>} : memref<50x3200xf32, #tpu.memory_space<vmem>>, vector<5x128xf32>,
    %c64_755 = arith.constant 64 : index
    %c0_756 = arith.constant 0 : index
    %435 = vector.load %arg13[%c64_755, %c0_756] : memref<162x128xf32, #tpu.memory_space<vmem>>, vector<5x128xf32>
    %c15_757 = arith.constant 15 : index
    %c2688_758 = arith.constant 2688 : index
    %436 = vector.load %arg14[%c15_757, %c2688_758] : memref<50x3200xf32, #tpu.memory_space<vmem>>, vector<5x128xf32>
    tpu.vector_store %arg14[%c15_757, %c2688_758], %435 {strides = array<i32>} : memref<50x3200xf32, #tpu.memory_space<vmem>>, vector<5x128xf32>,
    %c73 = arith.constant 73 : index
    %c0_759 = arith.constant 0 : index
    %437 = vector.load %arg13[%c73, %c0_759] : memref<162x128xf32, #tpu.memory_space<vmem>>, vector<5x128xf32>
    %c20_760 = arith.constant 20 : index
    %c2688_761 = arith.constant 2688 : index
    %438 = vector.load %arg14[%c20_760, %c2688_761] : memref<50x3200xf32, #tpu.memory_space<vmem>>, vector<5x128xf32>
    tpu.vector_store %arg14[%c20_760, %c2688_761], %437 {strides = array<i32>} : memref<50x3200xf32, #tpu.memory_space<vmem>>, vector<5x128xf32>,
    %c118_762 = arith.constant 118 : index
    %c0_763 = arith.constant 0 : index
    %439 = vector.load %arg13[%c118_762, %c0_763] : memref<162x128xf32, #tpu.memory_space<vmem>>, vector<5x128xf32>
    %c25_764 = arith.constant 25 : index
    %c2688_765 = arith.constant 2688 : index
    %440 = vector.load %arg14[%c25_764, %c2688_765] : memref<50x3200xf32, #tpu.memory_space<vmem>>, vector<5x128xf32>
    tpu.vector_store %arg14[%c25_764, %c2688_765], %439 {strides = array<i32>} : memref<50x3200xf32, #tpu.memory_space<vmem>>, vector<5x128xf32>,
    %c127_766 = arith.constant 127 : index
    %c0_767 = arith.constant 0 : index
    %441 = vector.load %arg13[%c127_766, %c0_767] : memref<162x128xf32, #tpu.memory_space<vmem>>, vector<5x128xf32>
    %c30_768 = arith.constant 30 : index
    %c2688_769 = arith.constant 2688 : index
    %442 = vector.load %arg14[%c30_768, %c2688_769] : memref<50x3200xf32, #tpu.memory_space<vmem>>, vector<5x128xf32>
    tpu.vector_store %arg14[%c30_768, %c2688_769], %441 {strides = array<i32>} : memref<50x3200xf32, #tpu.memory_space<vmem>>, vector<5x128xf32>,
    %c136_770 = arith.constant 136 : index
    %c0_771 = arith.constant 0 : index
    %443 = vector.load %arg13[%c136_770, %c0_771] : memref<162x128xf32, #tpu.memory_space<vmem>>, vector<5x128xf32>
    %c35_772 = arith.constant 35 : index
    %c2688_773 = arith.constant 2688 : index
    %444 = vector.load %arg14[%c35_772, %c2688_773] : memref<50x3200xf32, #tpu.memory_space<vmem>>, vector<5x128xf32>
    tpu.vector_store %arg14[%c35_772, %c2688_773], %443 {strides = array<i32>} : memref<50x3200xf32, #tpu.memory_space<vmem>>, vector<5x128xf32>,
    %c145_774 = arith.constant 145 : index
    %c0_775 = arith.constant 0 : index
    %445 = vector.load %arg13[%c145_774, %c0_775] : memref<162x128xf32, #tpu.memory_space<vmem>>, vector<5x128xf32>
    %c40_776 = arith.constant 40 : index
    %c2688_777 = arith.constant 2688 : index
    %446 = vector.load %arg14[%c40_776, %c2688_777] : memref<50x3200xf32, #tpu.memory_space<vmem>>, vector<5x128xf32>
    tpu.vector_store %arg14[%c40_776, %c2688_777], %445 {strides = array<i32>} : memref<50x3200xf32, #tpu.memory_space<vmem>>, vector<5x128xf32>,
    %c154 = arith.constant 154 : index
    %c0_778 = arith.constant 0 : index
    %447 = vector.load %arg13[%c154, %c0_778] : memref<162x128xf32, #tpu.memory_space<vmem>>, vector<5x128xf32>
    %c45_779 = arith.constant 45 : index
    %c2688_780 = arith.constant 2688 : index
    %448 = vector.load %arg14[%c45_779, %c2688_780] : memref<50x3200xf32, #tpu.memory_space<vmem>>, vector<5x128xf32>
    tpu.vector_store %arg14[%c45_779, %c2688_780], %447 {strides = array<i32>} : memref<50x3200xf32, #tpu.memory_space<vmem>>, vector<5x128xf32>,
    %c38_781 = arith.constant 38 : index
    %c0_782 = arith.constant 0 : index
    %449 = vector.load %arg13[%c38_781, %c0_782] : memref<162x128xf32, #tpu.memory_space<vmem>>, vector<5x128xf32>
    %c0_783 = arith.constant 0 : index
    %c2816 = arith.constant 2816 : index
    %450 = vector.load %arg14[%c0_783, %c2816] : memref<50x3200xf32, #tpu.memory_space<vmem>>, vector<5x128xf32>
    tpu.vector_store %arg14[%c0_783, %c2816], %449 {strides = array<i32>} : memref<50x3200xf32, #tpu.memory_space<vmem>>, vector<5x128xf32>,
    %c47_784 = arith.constant 47 : index
    %c0_785 = arith.constant 0 : index
    %451 = vector.load %arg13[%c47_784, %c0_785] : memref<162x128xf32, #tpu.memory_space<vmem>>, vector<5x128xf32>
    %c5_786 = arith.constant 5 : index
    %c2816_787 = arith.constant 2816 : index
    %452 = vector.load %arg14[%c5_786, %c2816_787] : memref<50x3200xf32, #tpu.memory_space<vmem>>, vector<5x128xf32>
    tpu.vector_store %arg14[%c5_786, %c2816_787], %451 {strides = array<i32>} : memref<50x3200xf32, #tpu.memory_space<vmem>>, vector<5x128xf32>,
    %c56_788 = arith.constant 56 : index
    %c0_789 = arith.constant 0 : index
    %453 = vector.load %arg13[%c56_788, %c0_789] : memref<162x128xf32, #tpu.memory_space<vmem>>, vector<5x128xf32>
    %c10_790 = arith.constant 10 : index
    %c2816_791 = arith.constant 2816 : index
    %454 = vector.load %arg14[%c10_790, %c2816_791] : memref<50x3200xf32, #tpu.memory_space<vmem>>, vector<5x128xf32>
    tpu.vector_store %arg14[%c10_790, %c2816_791], %453 {strides = array<i32>} : memref<50x3200xf32, #tpu.memory_space<vmem>>, vector<5x128xf32>,
    %c65_792 = arith.constant 65 : index
    %c0_793 = arith.constant 0 : index
    %455 = vector.load %arg13[%c65_792, %c0_793] : memref<162x128xf32, #tpu.memory_space<vmem>>, vector<5x128xf32>
    %c15_794 = arith.constant 15 : index
    %c2816_795 = arith.constant 2816 : index
    %456 = vector.load %arg14[%c15_794, %c2816_795] : memref<50x3200xf32, #tpu.memory_space<vmem>>, vector<5x128xf32>
    tpu.vector_store %arg14[%c15_794, %c2816_795], %455 {strides = array<i32>} : memref<50x3200xf32, #tpu.memory_space<vmem>>, vector<5x128xf32>,
    %c74 = arith.constant 74 : index
    %c0_796 = arith.constant 0 : index
    %457 = vector.load %arg13[%c74, %c0_796] : memref<162x128xf32, #tpu.memory_space<vmem>>, vector<5x128xf32>
    %c20_797 = arith.constant 20 : index
    %c2816_798 = arith.constant 2816 : index
    %458 = vector.load %arg14[%c20_797, %c2816_798] : memref<50x3200xf32, #tpu.memory_space<vmem>>, vector<5x128xf32>
    tpu.vector_store %arg14[%c20_797, %c2816_798], %457 {strides = array<i32>} : memref<50x3200xf32, #tpu.memory_space<vmem>>, vector<5x128xf32>,
    %c119_799 = arith.constant 119 : index
    %c0_800 = arith.constant 0 : index
    %459 = vector.load %arg13[%c119_799, %c0_800] : memref<162x128xf32, #tpu.memory_space<vmem>>, vector<5x128xf32>
    %c25_801 = arith.constant 25 : index
    %c2816_802 = arith.constant 2816 : index
    %460 = vector.load %arg14[%c25_801, %c2816_802] : memref<50x3200xf32, #tpu.memory_space<vmem>>, vector<5x128xf32>
    tpu.vector_store %arg14[%c25_801, %c2816_802], %459 {strides = array<i32>} : memref<50x3200xf32, #tpu.memory_space<vmem>>, vector<5x128xf32>,
    %c128_803 = arith.constant 128 : index
    %c0_804 = arith.constant 0 : index
    %461 = vector.load %arg13[%c128_803, %c0_804] : memref<162x128xf32, #tpu.memory_space<vmem>>, vector<5x128xf32>
    %c30_805 = arith.constant 30 : index
    %c2816_806 = arith.constant 2816 : index
    %462 = vector.load %arg14[%c30_805, %c2816_806] : memref<50x3200xf32, #tpu.memory_space<vmem>>, vector<5x128xf32>
    tpu.vector_store %arg14[%c30_805, %c2816_806], %461 {strides = array<i32>} : memref<50x3200xf32, #tpu.memory_space<vmem>>, vector<5x128xf32>,
    %c137_807 = arith.constant 137 : index
    %c0_808 = arith.constant 0 : index
    %463 = vector.load %arg13[%c137_807, %c0_808] : memref<162x128xf32, #tpu.memory_space<vmem>>, vector<5x128xf32>
    %c35_809 = arith.constant 35 : index
    %c2816_810 = arith.constant 2816 : index
    %464 = vector.load %arg14[%c35_809, %c2816_810] : memref<50x3200xf32, #tpu.memory_space<vmem>>, vector<5x128xf32>
    tpu.vector_store %arg14[%c35_809, %c2816_810], %463 {strides = array<i32>} : memref<50x3200xf32, #tpu.memory_space<vmem>>, vector<5x128xf32>,
    %c146_811 = arith.constant 146 : index
    %c0_812 = arith.constant 0 : index
    %465 = vector.load %arg13[%c146_811, %c0_812] : memref<162x128xf32, #tpu.memory_space<vmem>>, vector<5x128xf32>
    %c40_813 = arith.constant 40 : index
    %c2816_814 = arith.constant 2816 : index
    %466 = vector.load %arg14[%c40_813, %c2816_814] : memref<50x3200xf32, #tpu.memory_space<vmem>>, vector<5x128xf32>
    tpu.vector_store %arg14[%c40_813, %c2816_814], %465 {strides = array<i32>} : memref<50x3200xf32, #tpu.memory_space<vmem>>, vector<5x128xf32>,
    %c155 = arith.constant 155 : index
    %c0_815 = arith.constant 0 : index
    %467 = vector.load %arg13[%c155, %c0_815] : memref<162x128xf32, #tpu.memory_space<vmem>>, vector<5x128xf32>
    %c45_816 = arith.constant 45 : index
    %c2816_817 = arith.constant 2816 : index
    %468 = vector.load %arg14[%c45_816, %c2816_817] : memref<50x3200xf32, #tpu.memory_space<vmem>>, vector<5x128xf32>
    tpu.vector_store %arg14[%c45_816, %c2816_817], %467 {strides = array<i32>} : memref<50x3200xf32, #tpu.memory_space<vmem>>, vector<5x128xf32>,
    %c39_818 = arith.constant 39 : index
    %c0_819 = arith.constant 0 : index
    %469 = vector.load %arg13[%c39_818, %c0_819] : memref<162x128xf32, #tpu.memory_space<vmem>>, vector<5x128xf32>
    %c0_820 = arith.constant 0 : index
    %c2944 = arith.constant 2944 : index
    %470 = vector.load %arg14[%c0_820, %c2944] : memref<50x3200xf32, #tpu.memory_space<vmem>>, vector<5x128xf32>
    tpu.vector_store %arg14[%c0_820, %c2944], %469 {strides = array<i32>} : memref<50x3200xf32, #tpu.memory_space<vmem>>, vector<5x128xf32>,
    %c48_821 = arith.constant 48 : index
    %c0_822 = arith.constant 0 : index
    %471 = vector.load %arg13[%c48_821, %c0_822] : memref<162x128xf32, #tpu.memory_space<vmem>>, vector<5x128xf32>
    %c5_823 = arith.constant 5 : index
    %c2944_824 = arith.constant 2944 : index
    %472 = vector.load %arg14[%c5_823, %c2944_824] : memref<50x3200xf32, #tpu.memory_space<vmem>>, vector<5x128xf32>
    tpu.vector_store %arg14[%c5_823, %c2944_824], %471 {strides = array<i32>} : memref<50x3200xf32, #tpu.memory_space<vmem>>, vector<5x128xf32>,
    %c57_825 = arith.constant 57 : index
    %c0_826 = arith.constant 0 : index
    %473 = vector.load %arg13[%c57_825, %c0_826] : memref<162x128xf32, #tpu.memory_space<vmem>>, vector<5x128xf32>
    %c10_827 = arith.constant 10 : index
    %c2944_828 = arith.constant 2944 : index
    %474 = vector.load %arg14[%c10_827, %c2944_828] : memref<50x3200xf32, #tpu.memory_space<vmem>>, vector<5x128xf32>
    tpu.vector_store %arg14[%c10_827, %c2944_828], %473 {strides = array<i32>} : memref<50x3200xf32, #tpu.memory_space<vmem>>, vector<5x128xf32>,
    %c66_829 = arith.constant 66 : index
    %c0_830 = arith.constant 0 : index
    %475 = vector.load %arg13[%c66_829, %c0_830] : memref<162x128xf32, #tpu.memory_space<vmem>>, vector<5x128xf32>
    %c15_831 = arith.constant 15 : index
    %c2944_832 = arith.constant 2944 : index
    %476 = vector.load %arg14[%c15_831, %c2944_832] : memref<50x3200xf32, #tpu.memory_space<vmem>>, vector<5x128xf32>
    tpu.vector_store %arg14[%c15_831, %c2944_832], %475 {strides = array<i32>} : memref<50x3200xf32, #tpu.memory_space<vmem>>, vector<5x128xf32>,
    %c75 = arith.constant 75 : index
    %c0_833 = arith.constant 0 : index
    %477 = vector.load %arg13[%c75, %c0_833] : memref<162x128xf32, #tpu.memory_space<vmem>>, vector<5x128xf32>
    %c20_834 = arith.constant 20 : index
    %c2944_835 = arith.constant 2944 : index
    %478 = vector.load %arg14[%c20_834, %c2944_835] : memref<50x3200xf32, #tpu.memory_space<vmem>>, vector<5x128xf32>
    tpu.vector_store %arg14[%c20_834, %c2944_835], %477 {strides = array<i32>} : memref<50x3200xf32, #tpu.memory_space<vmem>>, vector<5x128xf32>,
    %c120_836 = arith.constant 120 : index
    %c0_837 = arith.constant 0 : index
    %479 = vector.load %arg13[%c120_836, %c0_837] : memref<162x128xf32, #tpu.memory_space<vmem>>, vector<5x128xf32>
    %c25_838 = arith.constant 25 : index
    %c2944_839 = arith.constant 2944 : index
    %480 = vector.load %arg14[%c25_838, %c2944_839] : memref<50x3200xf32, #tpu.memory_space<vmem>>, vector<5x128xf32>
    tpu.vector_store %arg14[%c25_838, %c2944_839], %479 {strides = array<i32>} : memref<50x3200xf32, #tpu.memory_space<vmem>>, vector<5x128xf32>,
    %c129_840 = arith.constant 129 : index
    %c0_841 = arith.constant 0 : index
    %481 = vector.load %arg13[%c129_840, %c0_841] : memref<162x128xf32, #tpu.memory_space<vmem>>, vector<5x128xf32>
    %c30_842 = arith.constant 30 : index
    %c2944_843 = arith.constant 2944 : index
    %482 = vector.load %arg14[%c30_842, %c2944_843] : memref<50x3200xf32, #tpu.memory_space<vmem>>, vector<5x128xf32>
    tpu.vector_store %arg14[%c30_842, %c2944_843], %481 {strides = array<i32>} : memref<50x3200xf32, #tpu.memory_space<vmem>>, vector<5x128xf32>,
    %c138_844 = arith.constant 138 : index
    %c0_845 = arith.constant 0 : index
    %483 = vector.load %arg13[%c138_844, %c0_845] : memref<162x128xf32, #tpu.memory_space<vmem>>, vector<5x128xf32>
    %c35_846 = arith.constant 35 : index
    %c2944_847 = arith.constant 2944 : index
    %484 = vector.load %arg14[%c35_846, %c2944_847] : memref<50x3200xf32, #tpu.memory_space<vmem>>, vector<5x128xf32>
    tpu.vector_store %arg14[%c35_846, %c2944_847], %483 {strides = array<i32>} : memref<50x3200xf32, #tpu.memory_space<vmem>>, vector<5x128xf32>,
    %c147_848 = arith.constant 147 : index
    %c0_849 = arith.constant 0 : index
    %485 = vector.load %arg13[%c147_848, %c0_849] : memref<162x128xf32, #tpu.memory_space<vmem>>, vector<5x128xf32>
    %c40_850 = arith.constant 40 : index
    %c2944_851 = arith.constant 2944 : index
    %486 = vector.load %arg14[%c40_850, %c2944_851] : memref<50x3200xf32, #tpu.memory_space<vmem>>, vector<5x128xf32>
    tpu.vector_store %arg14[%c40_850, %c2944_851], %485 {strides = array<i32>} : memref<50x3200xf32, #tpu.memory_space<vmem>>, vector<5x128xf32>,
    %c156 = arith.constant 156 : index
    %c0_852 = arith.constant 0 : index
    %487 = vector.load %arg13[%c156, %c0_852] : memref<162x128xf32, #tpu.memory_space<vmem>>, vector<5x128xf32>
    %c45_853 = arith.constant 45 : index
    %c2944_854 = arith.constant 2944 : index
    %488 = vector.load %arg14[%c45_853, %c2944_854] : memref<50x3200xf32, #tpu.memory_space<vmem>>, vector<5x128xf32>
    tpu.vector_store %arg14[%c45_853, %c2944_854], %487 {strides = array<i32>} : memref<50x3200xf32, #tpu.memory_space<vmem>>, vector<5x128xf32>,
    %c40_855 = arith.constant 40 : index
    %c0_856 = arith.constant 0 : index
    %489 = vector.load %arg13[%c40_855, %c0_856] : memref<162x128xf32, #tpu.memory_space<vmem>>, vector<5x128xf32>
    %c0_857 = arith.constant 0 : index
    %c3072 = arith.constant 3072 : index
    %490 = vector.load %arg14[%c0_857, %c3072] : memref<50x3200xf32, #tpu.memory_space<vmem>>, vector<5x128xf32>
    tpu.vector_store %arg14[%c0_857, %c3072], %489 {strides = array<i32>} : memref<50x3200xf32, #tpu.memory_space<vmem>>, vector<5x128xf32>,
    %c49_858 = arith.constant 49 : index
    %c0_859 = arith.constant 0 : index
    %491 = vector.load %arg13[%c49_858, %c0_859] : memref<162x128xf32, #tpu.memory_space<vmem>>, vector<5x128xf32>
    %c5_860 = arith.constant 5 : index
    %c3072_861 = arith.constant 3072 : index
    %492 = vector.load %arg14[%c5_860, %c3072_861] : memref<50x3200xf32, #tpu.memory_space<vmem>>, vector<5x128xf32>
    tpu.vector_store %arg14[%c5_860, %c3072_861], %491 {strides = array<i32>} : memref<50x3200xf32, #tpu.memory_space<vmem>>, vector<5x128xf32>,
    %c58_862 = arith.constant 58 : index
    %c0_863 = arith.constant 0 : index
    %493 = vector.load %arg13[%c58_862, %c0_863] : memref<162x128xf32, #tpu.memory_space<vmem>>, vector<5x128xf32>
    %c10_864 = arith.constant 10 : index
    %c3072_865 = arith.constant 3072 : index
    %494 = vector.load %arg14[%c10_864, %c3072_865] : memref<50x3200xf32, #tpu.memory_space<vmem>>, vector<5x128xf32>
    tpu.vector_store %arg14[%c10_864, %c3072_865], %493 {strides = array<i32>} : memref<50x3200xf32, #tpu.memory_space<vmem>>, vector<5x128xf32>,
    %c67_866 = arith.constant 67 : index
    %c0_867 = arith.constant 0 : index
    %495 = vector.load %arg13[%c67_866, %c0_867] : memref<162x128xf32, #tpu.memory_space<vmem>>, vector<5x128xf32>
    %c15_868 = arith.constant 15 : index
    %c3072_869 = arith.constant 3072 : index
    %496 = vector.load %arg14[%c15_868, %c3072_869] : memref<50x3200xf32, #tpu.memory_space<vmem>>, vector<5x128xf32>
    tpu.vector_store %arg14[%c15_868, %c3072_869], %495 {strides = array<i32>} : memref<50x3200xf32, #tpu.memory_space<vmem>>, vector<5x128xf32>,
    %c76 = arith.constant 76 : index
    %c0_870 = arith.constant 0 : index
    %497 = vector.load %arg13[%c76, %c0_870] : memref<162x128xf32, #tpu.memory_space<vmem>>, vector<5x128xf32>
    %c20_871 = arith.constant 20 : index
    %c3072_872 = arith.constant 3072 : index
    %498 = vector.load %arg14[%c20_871, %c3072_872] : memref<50x3200xf32, #tpu.memory_space<vmem>>, vector<5x128xf32>
    tpu.vector_store %arg14[%c20_871, %c3072_872], %497 {strides = array<i32>} : memref<50x3200xf32, #tpu.memory_space<vmem>>, vector<5x128xf32>,
    %c121_873 = arith.constant 121 : index
    %c0_874 = arith.constant 0 : index
    %499 = vector.load %arg13[%c121_873, %c0_874] : memref<162x128xf32, #tpu.memory_space<vmem>>, vector<5x128xf32>
    %c25_875 = arith.constant 25 : index
    %c3072_876 = arith.constant 3072 : index
    %500 = vector.load %arg14[%c25_875, %c3072_876] : memref<50x3200xf32, #tpu.memory_space<vmem>>, vector<5x128xf32>
    tpu.vector_store %arg14[%c25_875, %c3072_876], %499 {strides = array<i32>} : memref<50x3200xf32, #tpu.memory_space<vmem>>, vector<5x128xf32>,
    %c130_877 = arith.constant 130 : index
    %c0_878 = arith.constant 0 : index
    %501 = vector.load %arg13[%c130_877, %c0_878] : memref<162x128xf32, #tpu.memory_space<vmem>>, vector<5x128xf32>
    %c30_879 = arith.constant 30 : index
    %c3072_880 = arith.constant 3072 : index
    %502 = vector.load %arg14[%c30_879, %c3072_880] : memref<50x3200xf32, #tpu.memory_space<vmem>>, vector<5x128xf32>
    tpu.vector_store %arg14[%c30_879, %c3072_880], %501 {strides = array<i32>} : memref<50x3200xf32, #tpu.memory_space<vmem>>, vector<5x128xf32>,
    %c139_881 = arith.constant 139 : index
    %c0_882 = arith.constant 0 : index
    %503 = vector.load %arg13[%c139_881, %c0_882] : memref<162x128xf32, #tpu.memory_space<vmem>>, vector<5x128xf32>
    %c35_883 = arith.constant 35 : index
    %c3072_884 = arith.constant 3072 : index
    %504 = vector.load %arg14[%c35_883, %c3072_884] : memref<50x3200xf32, #tpu.memory_space<vmem>>, vector<5x128xf32>
    tpu.vector_store %arg14[%c35_883, %c3072_884], %503 {strides = array<i32>} : memref<50x3200xf32, #tpu.memory_space<vmem>>, vector<5x128xf32>,
    %c148_885 = arith.constant 148 : index
    %c0_886 = arith.constant 0 : index
    %505 = vector.load %arg13[%c148_885, %c0_886] : memref<162x128xf32, #tpu.memory_space<vmem>>, vector<5x128xf32>
    %c40_887 = arith.constant 40 : index
    %c3072_888 = arith.constant 3072 : index
    %506 = vector.load %arg14[%c40_887, %c3072_888] : memref<50x3200xf32, #tpu.memory_space<vmem>>, vector<5x128xf32>
    tpu.vector_store %arg14[%c40_887, %c3072_888], %505 {strides = array<i32>} : memref<50x3200xf32, #tpu.memory_space<vmem>>, vector<5x128xf32>,
    %c157 = arith.constant 157 : index
    %c0_889 = arith.constant 0 : index
    %507 = vector.load %arg13[%c157, %c0_889] : memref<162x128xf32, #tpu.memory_space<vmem>>, vector<5x128xf32>
    %c45_890 = arith.constant 45 : index
    %c3072_891 = arith.constant 3072 : index
    %508 = vector.load %arg14[%c45_890, %c3072_891] : memref<50x3200xf32, #tpu.memory_space<vmem>>, vector<5x128xf32>
    tpu.vector_store %arg14[%c45_890, %c3072_891], %507 {strides = array<i32>} : memref<50x3200xf32, #tpu.memory_space<vmem>>, vector<5x128xf32>,
    %cst_892 = arith.constant 0.000000e+00 : f32
    %509 = vector.broadcast %cst_892 : f32 to vector<50x128xf32>
    %c0_893 = arith.constant 0 : index
    %c0_894 = arith.constant 0 : index
    %510 = vector.load %arg14[%c0_893, %c0_894] : memref<50x3200xf32, #tpu.memory_space<vmem>>, vector<50x640xf32>
    %511 = arith.truncf %510 : vector<50x640xf32> to vector<50x640xbf16>
    %c0_895 = arith.constant 0 : index
    %c0_896 = arith.constant 0 : index
    %512 = vector.load %arg4[%c0_895, %c0_896] : memref<3200x128xbf16, #tpu.memory_space<vmem>>, vector<640x128xbf16>
    %cst_897 = arith.constant dense<0.000000e+00> : vector<50x128xf32>
    %513 = tpu.matmul %511, %512, %cst_897 {dimension_numbers = #tpu.dot_dimension_numbers<[1], [0], [0], [1], [0, 0, 1, 1], [], []>} : vector<50x640xbf16>, vector<640x128xbf16>, vector<50x128xf32> -> vector<50x128xf32>
    %514 = arith.addf %509, %513 : vector<50x128xf32>
    %c0_898 = arith.constant 0 : index
    %c640_899 = arith.constant 640 : index
    %515 = vector.load %arg14[%c0_898, %c640_899] : memref<50x3200xf32, #tpu.memory_space<vmem>>, vector<50x640xf32>
    %516 = arith.truncf %515 : vector<50x640xf32> to vector<50x640xbf16>
    %c640_900 = arith.constant 640 : index
    %c0_901 = arith.constant 0 : index
    %517 = vector.load %arg4[%c640_900, %c0_901] : memref<3200x128xbf16, #tpu.memory_space<vmem>>, vector<640x128xbf16>
    %cst_902 = arith.constant dense<0.000000e+00> : vector<50x128xf32>
    %518 = tpu.matmul %516, %517, %cst_902 {dimension_numbers = #tpu.dot_dimension_numbers<[1], [0], [0], [1], [0, 0, 1, 1], [], []>} : vector<50x640xbf16>, vector<640x128xbf16>, vector<50x128xf32> -> vector<50x128xf32>
    %519 = arith.addf %514, %518 : vector<50x128xf32>
    %c0_903 = arith.constant 0 : index
    %c1280_904 = arith.constant 1280 : index
    %520 = vector.load %arg14[%c0_903, %c1280_904] : memref<50x3200xf32, #tpu.memory_space<vmem>>, vector<50x640xf32>
    %521 = arith.truncf %520 : vector<50x640xf32> to vector<50x640xbf16>
    %c1280_905 = arith.constant 1280 : index
    %c0_906 = arith.constant 0 : index
    %522 = vector.load %arg4[%c1280_905, %c0_906] : memref<3200x128xbf16, #tpu.memory_space<vmem>>, vector<640x128xbf16>
    %cst_907 = arith.constant dense<0.000000e+00> : vector<50x128xf32>
    %523 = tpu.matmul %521, %522, %cst_907 {dimension_numbers = #tpu.dot_dimension_numbers<[1], [0], [0], [1], [0, 0, 1, 1], [], []>} : vector<50x640xbf16>, vector<640x128xbf16>, vector<50x128xf32> -> vector<50x128xf32>
    %524 = arith.addf %519, %523 : vector<50x128xf32>
    %c0_908 = arith.constant 0 : index
    %c1920_909 = arith.constant 1920 : index
    %525 = vector.load %arg14[%c0_908, %c1920_909] : memref<50x3200xf32, #tpu.memory_space<vmem>>, vector<50x640xf32>
    %526 = arith.truncf %525 : vector<50x640xf32> to vector<50x640xbf16>
    %c1920_910 = arith.constant 1920 : index
    %c0_911 = arith.constant 0 : index
    %527 = vector.load %arg4[%c1920_910, %c0_911] : memref<3200x128xbf16, #tpu.memory_space<vmem>>, vector<640x128xbf16>
    %cst_912 = arith.constant dense<0.000000e+00> : vector<50x128xf32>
    %528 = tpu.matmul %526, %527, %cst_912 {dimension_numbers = #tpu.dot_dimension_numbers<[1], [0], [0], [1], [0, 0, 1, 1], [], []>} : vector<50x640xbf16>, vector<640x128xbf16>, vector<50x128xf32> -> vector<50x128xf32>
    %529 = arith.addf %524, %528 : vector<50x128xf32>
    %c0_913 = arith.constant 0 : index
    %c2560_914 = arith.constant 2560 : index
    %530 = vector.load %arg14[%c0_913, %c2560_914] : memref<50x3200xf32, #tpu.memory_space<vmem>>, vector<50x640xf32>
    %531 = arith.truncf %530 : vector<50x640xf32> to vector<50x640xbf16>
    %c2560_915 = arith.constant 2560 : index
    %c0_916 = arith.constant 0 : index
    %532 = vector.load %arg4[%c2560_915, %c0_916] : memref<3200x128xbf16, #tpu.memory_space<vmem>>, vector<640x128xbf16>
    %cst_917 = arith.constant dense<0.000000e+00> : vector<50x128xf32>
    %533 = tpu.matmul %531, %532, %cst_917 {dimension_numbers = #tpu.dot_dimension_numbers<[1], [0], [0], [1], [0, 0, 1, 1], [], []>} : vector<50x640xbf16>, vector<640x128xbf16>, vector<50x128xf32> -> vector<50x128xf32>
    %534 = arith.addf %529, %533 : vector<50x128xf32>
    %c0_918 = arith.constant 0 : index
    %c0_919 = arith.constant 0 : index
    %535 = vector.load %arg5[%c0_918, %c0_919] : memref<1x128xf32, #tpu.memory_space<vmem>>, vector<1x128xf32>
    %536 = vector.broadcast %535 : vector<1x128xf32> to vector<50x128xf32>
    %537 = arith.addf %534, %536 : vector<50x128xf32>
    %cst_920 = arith.constant 0.000000e+00 : f32
    %538 = vector.broadcast %cst_920 : f32 to vector<50x128xf32>
    %539 = arith.maximumf %537, %538 : vector<50x128xf32>
    %c0_921 = arith.constant 0 : index
    %c0_922 = arith.constant 0 : index
    %540 = vector.load %arg15[%c0_921, %c0_922] : memref<50x128xf32, #tpu.memory_space<vmem>>, vector<50x128xf32>
    tpu.vector_store %arg15[%c0_921, %c0_922], %539 {strides = array<i32>} : memref<50x128xf32, #tpu.memory_space<vmem>>, vector<50x128xf32>,
    %c0_923 = arith.constant 0 : index
    %c0_924 = arith.constant 0 : index
    %541 = vector.load %arg15[%c0_923, %c0_924] : memref<50x128xf32, #tpu.memory_space<vmem>>, vector<1x128xf32>
    %c0_925 = arith.constant 0 : index
    %c0_926 = arith.constant 0 : index
    %542 = vector.load %arg16[%c0_925, %c0_926] : memref<2x3200xf32, #tpu.memory_space<vmem>>, vector<1x128xf32>
    tpu.vector_store %arg16[%c0_925, %c0_926], %541 {strides = array<i32>} : memref<2x3200xf32, #tpu.memory_space<vmem>>, vector<1x128xf32>,
    %c1_927 = arith.constant 1 : index
    %c0_928 = arith.constant 0 : index
    %543 = vector.load %arg15[%c1_927, %c0_928] : memref<50x128xf32, #tpu.memory_space<vmem>>, vector<1x128xf32>
    %c0_929 = arith.constant 0 : index
    %c128_930 = arith.constant 128 : index
    %544 = vector.load %arg16[%c0_929, %c128_930] : memref<2x3200xf32, #tpu.memory_space<vmem>>, vector<1x128xf32>
    tpu.vector_store %arg16[%c0_929, %c128_930], %543 {strides = array<i32>} : memref<2x3200xf32, #tpu.memory_space<vmem>>, vector<1x128xf32>,
    %c2_931 = arith.constant 2 : index
    %c0_932 = arith.constant 0 : index
    %545 = vector.load %arg15[%c2_931, %c0_932] : memref<50x128xf32, #tpu.memory_space<vmem>>, vector<1x128xf32>
    %c0_933 = arith.constant 0 : index
    %c256_934 = arith.constant 256 : index
    %546 = vector.load %arg16[%c0_933, %c256_934] : memref<2x3200xf32, #tpu.memory_space<vmem>>, vector<1x128xf32>
    tpu.vector_store %arg16[%c0_933, %c256_934], %545 {strides = array<i32>} : memref<2x3200xf32, #tpu.memory_space<vmem>>, vector<1x128xf32>,
    %c3_935 = arith.constant 3 : index
    %c0_936 = arith.constant 0 : index
    %547 = vector.load %arg15[%c3_935, %c0_936] : memref<50x128xf32, #tpu.memory_space<vmem>>, vector<1x128xf32>
    %c0_937 = arith.constant 0 : index
    %c384_938 = arith.constant 384 : index
    %548 = vector.load %arg16[%c0_937, %c384_938] : memref<2x3200xf32, #tpu.memory_space<vmem>>, vector<1x128xf32>
    tpu.vector_store %arg16[%c0_937, %c384_938], %547 {strides = array<i32>} : memref<2x3200xf32, #tpu.memory_space<vmem>>, vector<1x128xf32>,
    %c4_939 = arith.constant 4 : index
    %c0_940 = arith.constant 0 : index
    %549 = vector.load %arg15[%c4_939, %c0_940] : memref<50x128xf32, #tpu.memory_space<vmem>>, vector<1x128xf32>
    %c0_941 = arith.constant 0 : index
    %c512_942 = arith.constant 512 : index
    %550 = vector.load %arg16[%c0_941, %c512_942] : memref<2x3200xf32, #tpu.memory_space<vmem>>, vector<1x128xf32>
    tpu.vector_store %arg16[%c0_941, %c512_942], %549 {strides = array<i32>} : memref<2x3200xf32, #tpu.memory_space<vmem>>, vector<1x128xf32>,
    %c5_943 = arith.constant 5 : index
    %c0_944 = arith.constant 0 : index
    %551 = vector.load %arg15[%c5_943, %c0_944] : memref<50x128xf32, #tpu.memory_space<vmem>>, vector<1x128xf32>
    %c0_945 = arith.constant 0 : index
    %c640_946 = arith.constant 640 : index
    %552 = vector.load %arg16[%c0_945, %c640_946] : memref<2x3200xf32, #tpu.memory_space<vmem>>, vector<1x128xf32>
    tpu.vector_store %arg16[%c0_945, %c640_946], %551 {strides = array<i32>} : memref<2x3200xf32, #tpu.memory_space<vmem>>, vector<1x128xf32>,
    %c6 = arith.constant 6 : index
    %c0_947 = arith.constant 0 : index
    %553 = vector.load %arg15[%c6, %c0_947] : memref<50x128xf32, #tpu.memory_space<vmem>>, vector<1x128xf32>
    %c0_948 = arith.constant 0 : index
    %c768_949 = arith.constant 768 : index
    %554 = vector.load %arg16[%c0_948, %c768_949] : memref<2x3200xf32, #tpu.memory_space<vmem>>, vector<1x128xf32>
    tpu.vector_store %arg16[%c0_948, %c768_949], %553 {strides = array<i32>} : memref<2x3200xf32, #tpu.memory_space<vmem>>, vector<1x128xf32>,
    %c7 = arith.constant 7 : index
    %c0_950 = arith.constant 0 : index
    %555 = vector.load %arg15[%c7, %c0_950] : memref<50x128xf32, #tpu.memory_space<vmem>>, vector<1x128xf32>
    %c0_951 = arith.constant 0 : index
    %c896_952 = arith.constant 896 : index
    %556 = vector.load %arg16[%c0_951, %c896_952] : memref<2x3200xf32, #tpu.memory_space<vmem>>, vector<1x128xf32>
    tpu.vector_store %arg16[%c0_951, %c896_952], %555 {strides = array<i32>} : memref<2x3200xf32, #tpu.memory_space<vmem>>, vector<1x128xf32>,
    %c8 = arith.constant 8 : index
    %c0_953 = arith.constant 0 : index
    %557 = vector.load %arg15[%c8, %c0_953] : memref<50x128xf32, #tpu.memory_space<vmem>>, vector<1x128xf32>
    %c0_954 = arith.constant 0 : index
    %c1024_955 = arith.constant 1024 : index
    %558 = vector.load %arg16[%c0_954, %c1024_955] : memref<2x3200xf32, #tpu.memory_space<vmem>>, vector<1x128xf32>
    tpu.vector_store %arg16[%c0_954, %c1024_955], %557 {strides = array<i32>} : memref<2x3200xf32, #tpu.memory_space<vmem>>, vector<1x128xf32>,
    %c9_956 = arith.constant 9 : index
    %c0_957 = arith.constant 0 : index
    %559 = vector.load %arg15[%c9_956, %c0_957] : memref<50x128xf32, #tpu.memory_space<vmem>>, vector<1x128xf32>
    %c0_958 = arith.constant 0 : index
    %c1152_959 = arith.constant 1152 : index
    %560 = vector.load %arg16[%c0_958, %c1152_959] : memref<2x3200xf32, #tpu.memory_space<vmem>>, vector<1x128xf32>
    tpu.vector_store %arg16[%c0_958, %c1152_959], %559 {strides = array<i32>} : memref<2x3200xf32, #tpu.memory_space<vmem>>, vector<1x128xf32>,
    %c10_960 = arith.constant 10 : index
    %c0_961 = arith.constant 0 : index
    %561 = vector.load %arg15[%c10_960, %c0_961] : memref<50x128xf32, #tpu.memory_space<vmem>>, vector<1x128xf32>
    %c0_962 = arith.constant 0 : index
    %c1280_963 = arith.constant 1280 : index
    %562 = vector.load %arg16[%c0_962, %c1280_963] : memref<2x3200xf32, #tpu.memory_space<vmem>>, vector<1x128xf32>
    tpu.vector_store %arg16[%c0_962, %c1280_963], %561 {strides = array<i32>} : memref<2x3200xf32, #tpu.memory_space<vmem>>, vector<1x128xf32>,
    %c11_964 = arith.constant 11 : index
    %c0_965 = arith.constant 0 : index
    %563 = vector.load %arg15[%c11_964, %c0_965] : memref<50x128xf32, #tpu.memory_space<vmem>>, vector<1x128xf32>
    %c0_966 = arith.constant 0 : index
    %c1408_967 = arith.constant 1408 : index
    %564 = vector.load %arg16[%c0_966, %c1408_967] : memref<2x3200xf32, #tpu.memory_space<vmem>>, vector<1x128xf32>
    tpu.vector_store %arg16[%c0_966, %c1408_967], %563 {strides = array<i32>} : memref<2x3200xf32, #tpu.memory_space<vmem>>, vector<1x128xf32>,
    %c12_968 = arith.constant 12 : index
    %c0_969 = arith.constant 0 : index
    %565 = vector.load %arg15[%c12_968, %c0_969] : memref<50x128xf32, #tpu.memory_space<vmem>>, vector<1x128xf32>
    %c0_970 = arith.constant 0 : index
    %c1536_971 = arith.constant 1536 : index
    %566 = vector.load %arg16[%c0_970, %c1536_971] : memref<2x3200xf32, #tpu.memory_space<vmem>>, vector<1x128xf32>
    tpu.vector_store %arg16[%c0_970, %c1536_971], %565 {strides = array<i32>} : memref<2x3200xf32, #tpu.memory_space<vmem>>, vector<1x128xf32>,
    %c13_972 = arith.constant 13 : index
    %c0_973 = arith.constant 0 : index
    %567 = vector.load %arg15[%c13_972, %c0_973] : memref<50x128xf32, #tpu.memory_space<vmem>>, vector<1x128xf32>
    %c0_974 = arith.constant 0 : index
    %c1664_975 = arith.constant 1664 : index
    %568 = vector.load %arg16[%c0_974, %c1664_975] : memref<2x3200xf32, #tpu.memory_space<vmem>>, vector<1x128xf32>
    tpu.vector_store %arg16[%c0_974, %c1664_975], %567 {strides = array<i32>} : memref<2x3200xf32, #tpu.memory_space<vmem>>, vector<1x128xf32>,
    %c14 = arith.constant 14 : index
    %c0_976 = arith.constant 0 : index
    %569 = vector.load %arg15[%c14, %c0_976] : memref<50x128xf32, #tpu.memory_space<vmem>>, vector<1x128xf32>
    %c0_977 = arith.constant 0 : index
    %c1792_978 = arith.constant 1792 : index
    %570 = vector.load %arg16[%c0_977, %c1792_978] : memref<2x3200xf32, #tpu.memory_space<vmem>>, vector<1x128xf32>
    tpu.vector_store %arg16[%c0_977, %c1792_978], %569 {strides = array<i32>} : memref<2x3200xf32, #tpu.memory_space<vmem>>, vector<1x128xf32>,
    %c15_979 = arith.constant 15 : index
    %c0_980 = arith.constant 0 : index
    %571 = vector.load %arg15[%c15_979, %c0_980] : memref<50x128xf32, #tpu.memory_space<vmem>>, vector<1x128xf32>
    %c0_981 = arith.constant 0 : index
    %c1920_982 = arith.constant 1920 : index
    %572 = vector.load %arg16[%c0_981, %c1920_982] : memref<2x3200xf32, #tpu.memory_space<vmem>>, vector<1x128xf32>
    tpu.vector_store %arg16[%c0_981, %c1920_982], %571 {strides = array<i32>} : memref<2x3200xf32, #tpu.memory_space<vmem>>, vector<1x128xf32>,
    %c16 = arith.constant 16 : index
    %c0_983 = arith.constant 0 : index
    %573 = vector.load %arg15[%c16, %c0_983] : memref<50x128xf32, #tpu.memory_space<vmem>>, vector<1x128xf32>
    %c0_984 = arith.constant 0 : index
    %c2048_985 = arith.constant 2048 : index
    %574 = vector.load %arg16[%c0_984, %c2048_985] : memref<2x3200xf32, #tpu.memory_space<vmem>>, vector<1x128xf32>
    tpu.vector_store %arg16[%c0_984, %c2048_985], %573 {strides = array<i32>} : memref<2x3200xf32, #tpu.memory_space<vmem>>, vector<1x128xf32>,
    %c17 = arith.constant 17 : index
    %c0_986 = arith.constant 0 : index
    %575 = vector.load %arg15[%c17, %c0_986] : memref<50x128xf32, #tpu.memory_space<vmem>>, vector<1x128xf32>
    %c0_987 = arith.constant 0 : index
    %c2176_988 = arith.constant 2176 : index
    %576 = vector.load %arg16[%c0_987, %c2176_988] : memref<2x3200xf32, #tpu.memory_space<vmem>>, vector<1x128xf32>
    tpu.vector_store %arg16[%c0_987, %c2176_988], %575 {strides = array<i32>} : memref<2x3200xf32, #tpu.memory_space<vmem>>, vector<1x128xf32>,
    %c18_989 = arith.constant 18 : index
    %c0_990 = arith.constant 0 : index
    %577 = vector.load %arg15[%c18_989, %c0_990] : memref<50x128xf32, #tpu.memory_space<vmem>>, vector<1x128xf32>
    %c0_991 = arith.constant 0 : index
    %c2304_992 = arith.constant 2304 : index
    %578 = vector.load %arg16[%c0_991, %c2304_992] : memref<2x3200xf32, #tpu.memory_space<vmem>>, vector<1x128xf32>
    tpu.vector_store %arg16[%c0_991, %c2304_992], %577 {strides = array<i32>} : memref<2x3200xf32, #tpu.memory_space<vmem>>, vector<1x128xf32>,
    %c19_993 = arith.constant 19 : index
    %c0_994 = arith.constant 0 : index
    %579 = vector.load %arg15[%c19_993, %c0_994] : memref<50x128xf32, #tpu.memory_space<vmem>>, vector<1x128xf32>
    %c0_995 = arith.constant 0 : index
    %c2432_996 = arith.constant 2432 : index
    %580 = vector.load %arg16[%c0_995, %c2432_996] : memref<2x3200xf32, #tpu.memory_space<vmem>>, vector<1x128xf32>
    tpu.vector_store %arg16[%c0_995, %c2432_996], %579 {strides = array<i32>} : memref<2x3200xf32, #tpu.memory_space<vmem>>, vector<1x128xf32>,
    %c20_997 = arith.constant 20 : index
    %c0_998 = arith.constant 0 : index
    %581 = vector.load %arg15[%c20_997, %c0_998] : memref<50x128xf32, #tpu.memory_space<vmem>>, vector<1x128xf32>
    %c0_999 = arith.constant 0 : index
    %c2560_1000 = arith.constant 2560 : index
    %582 = vector.load %arg16[%c0_999, %c2560_1000] : memref<2x3200xf32, #tpu.memory_space<vmem>>, vector<1x128xf32>
    tpu.vector_store %arg16[%c0_999, %c2560_1000], %581 {strides = array<i32>} : memref<2x3200xf32, #tpu.memory_space<vmem>>, vector<1x128xf32>,
    %c21_1001 = arith.constant 21 : index
    %c0_1002 = arith.constant 0 : index
    %583 = vector.load %arg15[%c21_1001, %c0_1002] : memref<50x128xf32, #tpu.memory_space<vmem>>, vector<1x128xf32>
    %c0_1003 = arith.constant 0 : index
    %c2688_1004 = arith.constant 2688 : index
    %584 = vector.load %arg16[%c0_1003, %c2688_1004] : memref<2x3200xf32, #tpu.memory_space<vmem>>, vector<1x128xf32>
    tpu.vector_store %arg16[%c0_1003, %c2688_1004], %583 {strides = array<i32>} : memref<2x3200xf32, #tpu.memory_space<vmem>>, vector<1x128xf32>,
    %c22_1005 = arith.constant 22 : index
    %c0_1006 = arith.constant 0 : index
    %585 = vector.load %arg15[%c22_1005, %c0_1006] : memref<50x128xf32, #tpu.memory_space<vmem>>, vector<1x128xf32>
    %c0_1007 = arith.constant 0 : index
    %c2816_1008 = arith.constant 2816 : index
    %586 = vector.load %arg16[%c0_1007, %c2816_1008] : memref<2x3200xf32, #tpu.memory_space<vmem>>, vector<1x128xf32>
    tpu.vector_store %arg16[%c0_1007, %c2816_1008], %585 {strides = array<i32>} : memref<2x3200xf32, #tpu.memory_space<vmem>>, vector<1x128xf32>,
    %c23 = arith.constant 23 : index
    %c0_1009 = arith.constant 0 : index
    %587 = vector.load %arg15[%c23, %c0_1009] : memref<50x128xf32, #tpu.memory_space<vmem>>, vector<1x128xf32>
    %c0_1010 = arith.constant 0 : index
    %c2944_1011 = arith.constant 2944 : index
    %588 = vector.load %arg16[%c0_1010, %c2944_1011] : memref<2x3200xf32, #tpu.memory_space<vmem>>, vector<1x128xf32>
    tpu.vector_store %arg16[%c0_1010, %c2944_1011], %587 {strides = array<i32>} : memref<2x3200xf32, #tpu.memory_space<vmem>>, vector<1x128xf32>,
    %c24 = arith.constant 24 : index
    %c0_1012 = arith.constant 0 : index
    %589 = vector.load %arg15[%c24, %c0_1012] : memref<50x128xf32, #tpu.memory_space<vmem>>, vector<1x128xf32>
    %c0_1013 = arith.constant 0 : index
    %c3072_1014 = arith.constant 3072 : index
    %590 = vector.load %arg16[%c0_1013, %c3072_1014] : memref<2x3200xf32, #tpu.memory_space<vmem>>, vector<1x128xf32>
    tpu.vector_store %arg16[%c0_1013, %c3072_1014], %589 {strides = array<i32>} : memref<2x3200xf32, #tpu.memory_space<vmem>>, vector<1x128xf32>,
    %c25_1015 = arith.constant 25 : index
    %c0_1016 = arith.constant 0 : index
    %591 = vector.load %arg15[%c25_1015, %c0_1016] : memref<50x128xf32, #tpu.memory_space<vmem>>, vector<1x128xf32>
    %c1_1017 = arith.constant 1 : index
    %c0_1018 = arith.constant 0 : index
    %592 = vector.load %arg16[%c1_1017, %c0_1018] : memref<2x3200xf32, #tpu.memory_space<vmem>>, vector<1x128xf32>
    tpu.vector_store %arg16[%c1_1017, %c0_1018], %591 {strides = array<i32>} : memref<2x3200xf32, #tpu.memory_space<vmem>>, vector<1x128xf32>,
    %c26 = arith.constant 26 : index
    %c0_1019 = arith.constant 0 : index
    %593 = vector.load %arg15[%c26, %c0_1019] : memref<50x128xf32, #tpu.memory_space<vmem>>, vector<1x128xf32>
    %c1_1020 = arith.constant 1 : index
    %c128_1021 = arith.constant 128 : index
    %594 = vector.load %arg16[%c1_1020, %c128_1021] : memref<2x3200xf32, #tpu.memory_space<vmem>>, vector<1x128xf32>
    tpu.vector_store %arg16[%c1_1020, %c128_1021], %593 {strides = array<i32>} : memref<2x3200xf32, #tpu.memory_space<vmem>>, vector<1x128xf32>,
    %c27_1022 = arith.constant 27 : index
    %c0_1023 = arith.constant 0 : index
    %595 = vector.load %arg15[%c27_1022, %c0_1023] : memref<50x128xf32, #tpu.memory_space<vmem>>, vector<1x128xf32>
    %c1_1024 = arith.constant 1 : index
    %c256_1025 = arith.constant 256 : index
    %596 = vector.load %arg16[%c1_1024, %c256_1025] : memref<2x3200xf32, #tpu.memory_space<vmem>>, vector<1x128xf32>
    tpu.vector_store %arg16[%c1_1024, %c256_1025], %595 {strides = array<i32>} : memref<2x3200xf32, #tpu.memory_space<vmem>>, vector<1x128xf32>,
    %c28_1026 = arith.constant 28 : index
    %c0_1027 = arith.constant 0 : index
    %597 = vector.load %arg15[%c28_1026, %c0_1027] : memref<50x128xf32, #tpu.memory_space<vmem>>, vector<1x128xf32>
    %c1_1028 = arith.constant 1 : index
    %c384_1029 = arith.constant 384 : index
    %598 = vector.load %arg16[%c1_1028, %c384_1029] : memref<2x3200xf32, #tpu.memory_space<vmem>>, vector<1x128xf32>
    tpu.vector_store %arg16[%c1_1028, %c384_1029], %597 {strides = array<i32>} : memref<2x3200xf32, #tpu.memory_space<vmem>>, vector<1x128xf32>,
    %c29_1030 = arith.constant 29 : index
    %c0_1031 = arith.constant 0 : index
    %599 = vector.load %arg15[%c29_1030, %c0_1031] : memref<50x128xf32, #tpu.memory_space<vmem>>, vector<1x128xf32>
    %c1_1032 = arith.constant 1 : index
    %c512_1033 = arith.constant 512 : index
    %600 = vector.load %arg16[%c1_1032, %c512_1033] : memref<2x3200xf32, #tpu.memory_space<vmem>>, vector<1x128xf32>
    tpu.vector_store %arg16[%c1_1032, %c512_1033], %599 {strides = array<i32>} : memref<2x3200xf32, #tpu.memory_space<vmem>>, vector<1x128xf32>,
    %c30_1034 = arith.constant 30 : index
    %c0_1035 = arith.constant 0 : index
    %601 = vector.load %arg15[%c30_1034, %c0_1035] : memref<50x128xf32, #tpu.memory_space<vmem>>, vector<1x128xf32>
    %c1_1036 = arith.constant 1 : index
    %c640_1037 = arith.constant 640 : index
    %602 = vector.load %arg16[%c1_1036, %c640_1037] : memref<2x3200xf32, #tpu.memory_space<vmem>>, vector<1x128xf32>
    tpu.vector_store %arg16[%c1_1036, %c640_1037], %601 {strides = array<i32>} : memref<2x3200xf32, #tpu.memory_space<vmem>>, vector<1x128xf32>,
    %c31_1038 = arith.constant 31 : index
    %c0_1039 = arith.constant 0 : index
    %603 = vector.load %arg15[%c31_1038, %c0_1039] : memref<50x128xf32, #tpu.memory_space<vmem>>, vector<1x128xf32>
    %c1_1040 = arith.constant 1 : index
    %c768_1041 = arith.constant 768 : index
    %604 = vector.load %arg16[%c1_1040, %c768_1041] : memref<2x3200xf32, #tpu.memory_space<vmem>>, vector<1x128xf32>
    tpu.vector_store %arg16[%c1_1040, %c768_1041], %603 {strides = array<i32>} : memref<2x3200xf32, #tpu.memory_space<vmem>>, vector<1x128xf32>,
    %c32 = arith.constant 32 : index
    %c0_1042 = arith.constant 0 : index
    %605 = vector.load %arg15[%c32, %c0_1042] : memref<50x128xf32, #tpu.memory_space<vmem>>, vector<1x128xf32>
    %c1_1043 = arith.constant 1 : index
    %c896_1044 = arith.constant 896 : index
    %606 = vector.load %arg16[%c1_1043, %c896_1044] : memref<2x3200xf32, #tpu.memory_space<vmem>>, vector<1x128xf32>
    tpu.vector_store %arg16[%c1_1043, %c896_1044], %605 {strides = array<i32>} : memref<2x3200xf32, #tpu.memory_space<vmem>>, vector<1x128xf32>,
    %c33 = arith.constant 33 : index
    %c0_1045 = arith.constant 0 : index
    %607 = vector.load %arg15[%c33, %c0_1045] : memref<50x128xf32, #tpu.memory_space<vmem>>, vector<1x128xf32>
    %c1_1046 = arith.constant 1 : index
    %c1024_1047 = arith.constant 1024 : index
    %608 = vector.load %arg16[%c1_1046, %c1024_1047] : memref<2x3200xf32, #tpu.memory_space<vmem>>, vector<1x128xf32>
    tpu.vector_store %arg16[%c1_1046, %c1024_1047], %607 {strides = array<i32>} : memref<2x3200xf32, #tpu.memory_space<vmem>>, vector<1x128xf32>,
    %c34 = arith.constant 34 : index
    %c0_1048 = arith.constant 0 : index
    %609 = vector.load %arg15[%c34, %c0_1048] : memref<50x128xf32, #tpu.memory_space<vmem>>, vector<1x128xf32>
    %c1_1049 = arith.constant 1 : index
    %c1152_1050 = arith.constant 1152 : index
    %610 = vector.load %arg16[%c1_1049, %c1152_1050] : memref<2x3200xf32, #tpu.memory_space<vmem>>, vector<1x128xf32>
    tpu.vector_store %arg16[%c1_1049, %c1152_1050], %609 {strides = array<i32>} : memref<2x3200xf32, #tpu.memory_space<vmem>>, vector<1x128xf32>,
    %c35_1051 = arith.constant 35 : index
    %c0_1052 = arith.constant 0 : index
    %611 = vector.load %arg15[%c35_1051, %c0_1052] : memref<50x128xf32, #tpu.memory_space<vmem>>, vector<1x128xf32>
    %c1_1053 = arith.constant 1 : index
    %c1280_1054 = arith.constant 1280 : index
    %612 = vector.load %arg16[%c1_1053, %c1280_1054] : memref<2x3200xf32, #tpu.memory_space<vmem>>, vector<1x128xf32>
    tpu.vector_store %arg16[%c1_1053, %c1280_1054], %611 {strides = array<i32>} : memref<2x3200xf32, #tpu.memory_space<vmem>>, vector<1x128xf32>,
    %c36_1055 = arith.constant 36 : index
    %c0_1056 = arith.constant 0 : index
    %613 = vector.load %arg15[%c36_1055, %c0_1056] : memref<50x128xf32, #tpu.memory_space<vmem>>, vector<1x128xf32>
    %c1_1057 = arith.constant 1 : index
    %c1408_1058 = arith.constant 1408 : index
    %614 = vector.load %arg16[%c1_1057, %c1408_1058] : memref<2x3200xf32, #tpu.memory_space<vmem>>, vector<1x128xf32>
    tpu.vector_store %arg16[%c1_1057, %c1408_1058], %613 {strides = array<i32>} : memref<2x3200xf32, #tpu.memory_space<vmem>>, vector<1x128xf32>,
    %c37_1059 = arith.constant 37 : index
    %c0_1060 = arith.constant 0 : index
    %615 = vector.load %arg15[%c37_1059, %c0_1060] : memref<50x128xf32, #tpu.memory_space<vmem>>, vector<1x128xf32>
    %c1_1061 = arith.constant 1 : index
    %c1536_1062 = arith.constant 1536 : index
    %616 = vector.load %arg16[%c1_1061, %c1536_1062] : memref<2x3200xf32, #tpu.memory_space<vmem>>, vector<1x128xf32>
    tpu.vector_store %arg16[%c1_1061, %c1536_1062], %615 {strides = array<i32>} : memref<2x3200xf32, #tpu.memory_space<vmem>>, vector<1x128xf32>,
    %c38_1063 = arith.constant 38 : index
    %c0_1064 = arith.constant 0 : index
    %617 = vector.load %arg15[%c38_1063, %c0_1064] : memref<50x128xf32, #tpu.memory_space<vmem>>, vector<1x128xf32>
    %c1_1065 = arith.constant 1 : index
    %c1664_1066 = arith.constant 1664 : index
    %618 = vector.load %arg16[%c1_1065, %c1664_1066] : memref<2x3200xf32, #tpu.memory_space<vmem>>, vector<1x128xf32>
    tpu.vector_store %arg16[%c1_1065, %c1664_1066], %617 {strides = array<i32>} : memref<2x3200xf32, #tpu.memory_space<vmem>>, vector<1x128xf32>,
    %c39_1067 = arith.constant 39 : index
    %c0_1068 = arith.constant 0 : index
    %619 = vector.load %arg15[%c39_1067, %c0_1068] : memref<50x128xf32, #tpu.memory_space<vmem>>, vector<1x128xf32>
    %c1_1069 = arith.constant 1 : index
    %c1792_1070 = arith.constant 1792 : index
    %620 = vector.load %arg16[%c1_1069, %c1792_1070] : memref<2x3200xf32, #tpu.memory_space<vmem>>, vector<1x128xf32>
    tpu.vector_store %arg16[%c1_1069, %c1792_1070], %619 {strides = array<i32>} : memref<2x3200xf32, #tpu.memory_space<vmem>>, vector<1x128xf32>,
    %c40_1071 = arith.constant 40 : index
    %c0_1072 = arith.constant 0 : index
    %621 = vector.load %arg15[%c40_1071, %c0_1072] : memref<50x128xf32, #tpu.memory_space<vmem>>, vector<1x128xf32>
    %c1_1073 = arith.constant 1 : index
    %c1920_1074 = arith.constant 1920 : index
    %622 = vector.load %arg16[%c1_1073, %c1920_1074] : memref<2x3200xf32, #tpu.memory_space<vmem>>, vector<1x128xf32>
    tpu.vector_store %arg16[%c1_1073, %c1920_1074], %621 {strides = array<i32>} : memref<2x3200xf32, #tpu.memory_space<vmem>>, vector<1x128xf32>,
    %c41 = arith.constant 41 : index
    %c0_1075 = arith.constant 0 : index
    %623 = vector.load %arg15[%c41, %c0_1075] : memref<50x128xf32, #tpu.memory_space<vmem>>, vector<1x128xf32>
    %c1_1076 = arith.constant 1 : index
    %c2048_1077 = arith.constant 2048 : index
    %624 = vector.load %arg16[%c1_1076, %c2048_1077] : memref<2x3200xf32, #tpu.memory_space<vmem>>, vector<1x128xf32>
    tpu.vector_store %arg16[%c1_1076, %c2048_1077], %623 {strides = array<i32>} : memref<2x3200xf32, #tpu.memory_space<vmem>>, vector<1x128xf32>,
    %c42 = arith.constant 42 : index
    %c0_1078 = arith.constant 0 : index
    %625 = vector.load %arg15[%c42, %c0_1078] : memref<50x128xf32, #tpu.memory_space<vmem>>, vector<1x128xf32>
    %c1_1079 = arith.constant 1 : index
    %c2176_1080 = arith.constant 2176 : index
    %626 = vector.load %arg16[%c1_1079, %c2176_1080] : memref<2x3200xf32, #tpu.memory_space<vmem>>, vector<1x128xf32>
    tpu.vector_store %arg16[%c1_1079, %c2176_1080], %625 {strides = array<i32>} : memref<2x3200xf32, #tpu.memory_space<vmem>>, vector<1x128xf32>,
    %c43 = arith.constant 43 : index
    %c0_1081 = arith.constant 0 : index
    %627 = vector.load %arg15[%c43, %c0_1081] : memref<50x128xf32, #tpu.memory_space<vmem>>, vector<1x128xf32>
    %c1_1082 = arith.constant 1 : index
    %c2304_1083 = arith.constant 2304 : index
    %628 = vector.load %arg16[%c1_1082, %c2304_1083] : memref<2x3200xf32, #tpu.memory_space<vmem>>, vector<1x128xf32>
    tpu.vector_store %arg16[%c1_1082, %c2304_1083], %627 {strides = array<i32>} : memref<2x3200xf32, #tpu.memory_space<vmem>>, vector<1x128xf32>,
    %c44 = arith.constant 44 : index
    %c0_1084 = arith.constant 0 : index
    %629 = vector.load %arg15[%c44, %c0_1084] : memref<50x128xf32, #tpu.memory_space<vmem>>, vector<1x128xf32>
    %c1_1085 = arith.constant 1 : index
    %c2432_1086 = arith.constant 2432 : index
    %630 = vector.load %arg16[%c1_1085, %c2432_1086] : memref<2x3200xf32, #tpu.memory_space<vmem>>, vector<1x128xf32>
    tpu.vector_store %arg16[%c1_1085, %c2432_1086], %629 {strides = array<i32>} : memref<2x3200xf32, #tpu.memory_space<vmem>>, vector<1x128xf32>,
    %c45_1087 = arith.constant 45 : index
    %c0_1088 = arith.constant 0 : index
    %631 = vector.load %arg15[%c45_1087, %c0_1088] : memref<50x128xf32, #tpu.memory_space<vmem>>, vector<1x128xf32>
    %c1_1089 = arith.constant 1 : index
    %c2560_1090 = arith.constant 2560 : index
    %632 = vector.load %arg16[%c1_1089, %c2560_1090] : memref<2x3200xf32, #tpu.memory_space<vmem>>, vector<1x128xf32>
    tpu.vector_store %arg16[%c1_1089, %c2560_1090], %631 {strides = array<i32>} : memref<2x3200xf32, #tpu.memory_space<vmem>>, vector<1x128xf32>,
    %c46_1091 = arith.constant 46 : index
    %c0_1092 = arith.constant 0 : index
    %633 = vector.load %arg15[%c46_1091, %c0_1092] : memref<50x128xf32, #tpu.memory_space<vmem>>, vector<1x128xf32>
    %c1_1093 = arith.constant 1 : index
    %c2688_1094 = arith.constant 2688 : index
    %634 = vector.load %arg16[%c1_1093, %c2688_1094] : memref<2x3200xf32, #tpu.memory_space<vmem>>, vector<1x128xf32>
    tpu.vector_store %arg16[%c1_1093, %c2688_1094], %633 {strides = array<i32>} : memref<2x3200xf32, #tpu.memory_space<vmem>>, vector<1x128xf32>,
    %c47_1095 = arith.constant 47 : index
    %c0_1096 = arith.constant 0 : index
    %635 = vector.load %arg15[%c47_1095, %c0_1096] : memref<50x128xf32, #tpu.memory_space<vmem>>, vector<1x128xf32>
    %c1_1097 = arith.constant 1 : index
    %c2816_1098 = arith.constant 2816 : index
    %636 = vector.load %arg16[%c1_1097, %c2816_1098] : memref<2x3200xf32, #tpu.memory_space<vmem>>, vector<1x128xf32>
    tpu.vector_store %arg16[%c1_1097, %c2816_1098], %635 {strides = array<i32>} : memref<2x3200xf32, #tpu.memory_space<vmem>>, vector<1x128xf32>,
    %c48_1099 = arith.constant 48 : index
    %c0_1100 = arith.constant 0 : index
    %637 = vector.load %arg15[%c48_1099, %c0_1100] : memref<50x128xf32, #tpu.memory_space<vmem>>, vector<1x128xf32>
    %c1_1101 = arith.constant 1 : index
    %c2944_1102 = arith.constant 2944 : index
    %638 = vector.load %arg16[%c1_1101, %c2944_1102] : memref<2x3200xf32, #tpu.memory_space<vmem>>, vector<1x128xf32>
    tpu.vector_store %arg16[%c1_1101, %c2944_1102], %637 {strides = array<i32>} : memref<2x3200xf32, #tpu.memory_space<vmem>>, vector<1x128xf32>,
    %c49_1103 = arith.constant 49 : index
    %c0_1104 = arith.constant 0 : index
    %639 = vector.load %arg15[%c49_1103, %c0_1104] : memref<50x128xf32, #tpu.memory_space<vmem>>, vector<1x128xf32>
    %c1_1105 = arith.constant 1 : index
    %c3072_1106 = arith.constant 3072 : index
    %640 = vector.load %arg16[%c1_1105, %c3072_1106] : memref<2x3200xf32, #tpu.memory_space<vmem>>, vector<1x128xf32>
    tpu.vector_store %arg16[%c1_1105, %c3072_1106], %639 {strides = array<i32>} : memref<2x3200xf32, #tpu.memory_space<vmem>>, vector<1x128xf32>,
    %cst_1107 = arith.constant 0.000000e+00 : f32
    %641 = vector.broadcast %cst_1107 : f32 to vector<2x256xf32>
    %c0_1108 = arith.constant 0 : index
    %c0_1109 = arith.constant 0 : index
    %642 = vector.load %arg16[%c0_1108, %c0_1109] : memref<2x3200xf32, #tpu.memory_space<vmem>>, vector<2x640xf32>
    %643 = arith.truncf %642 : vector<2x640xf32> to vector<2x640xbf16>
    %c0_1110 = arith.constant 0 : index
    %c0_1111 = arith.constant 0 : index
    %644 = vector.load %arg6[%c0_1110, %c0_1111] : memref<3200x256xbf16, #tpu.memory_space<vmem>>, vector<640x256xbf16>
    %cst_1112 = arith.constant dense<0.000000e+00> : vector<2x256xf32>
    %645 = tpu.matmul %643, %644, %cst_1112 {dimension_numbers = #tpu.dot_dimension_numbers<[1], [0], [0], [1], [0, 0, 1, 1], [], []>} : vector<2x640xbf16>, vector<640x256xbf16>, vector<2x256xf32> -> vector<2x256xf32>
    %646 = arith.addf %641, %645 : vector<2x256xf32>
    %c0_1113 = arith.constant 0 : index
    %c640_1114 = arith.constant 640 : index
    %647 = vector.load %arg16[%c0_1113, %c640_1114] : memref<2x3200xf32, #tpu.memory_space<vmem>>, vector<2x640xf32>
    %648 = arith.truncf %647 : vector<2x640xf32> to vector<2x640xbf16>
    %c640_1115 = arith.constant 640 : index
    %c0_1116 = arith.constant 0 : index
    %649 = vector.load %arg6[%c640_1115, %c0_1116] : memref<3200x256xbf16, #tpu.memory_space<vmem>>, vector<640x256xbf16>
    %cst_1117 = arith.constant dense<0.000000e+00> : vector<2x256xf32>
    %650 = tpu.matmul %648, %649, %cst_1117 {dimension_numbers = #tpu.dot_dimension_numbers<[1], [0], [0], [1], [0, 0, 1, 1], [], []>} : vector<2x640xbf16>, vector<640x256xbf16>, vector<2x256xf32> -> vector<2x256xf32>
    %651 = arith.addf %646, %650 : vector<2x256xf32>
    %c0_1118 = arith.constant 0 : index
    %c1280_1119 = arith.constant 1280 : index
    %652 = vector.load %arg16[%c0_1118, %c1280_1119] : memref<2x3200xf32, #tpu.memory_space<vmem>>, vector<2x640xf32>
    %653 = arith.truncf %652 : vector<2x640xf32> to vector<2x640xbf16>
    %c1280_1120 = arith.constant 1280 : index
    %c0_1121 = arith.constant 0 : index
    %654 = vector.load %arg6[%c1280_1120, %c0_1121] : memref<3200x256xbf16, #tpu.memory_space<vmem>>, vector<640x256xbf16>
    %cst_1122 = arith.constant dense<0.000000e+00> : vector<2x256xf32>
    %655 = tpu.matmul %653, %654, %cst_1122 {dimension_numbers = #tpu.dot_dimension_numbers<[1], [0], [0], [1], [0, 0, 1, 1], [], []>} : vector<2x640xbf16>, vector<640x256xbf16>, vector<2x256xf32> -> vector<2x256xf32>
    %656 = arith.addf %651, %655 : vector<2x256xf32>
    %c0_1123 = arith.constant 0 : index
    %c1920_1124 = arith.constant 1920 : index
    %657 = vector.load %arg16[%c0_1123, %c1920_1124] : memref<2x3200xf32, #tpu.memory_space<vmem>>, vector<2x640xf32>
    %658 = arith.truncf %657 : vector<2x640xf32> to vector<2x640xbf16>
    %c1920_1125 = arith.constant 1920 : index
    %c0_1126 = arith.constant 0 : index
    %659 = vector.load %arg6[%c1920_1125, %c0_1126] : memref<3200x256xbf16, #tpu.memory_space<vmem>>, vector<640x256xbf16>
    %cst_1127 = arith.constant dense<0.000000e+00> : vector<2x256xf32>
    %660 = tpu.matmul %658, %659, %cst_1127 {dimension_numbers = #tpu.dot_dimension_numbers<[1], [0], [0], [1], [0, 0, 1, 1], [], []>} : vector<2x640xbf16>, vector<640x256xbf16>, vector<2x256xf32> -> vector<2x256xf32>
    %661 = arith.addf %656, %660 : vector<2x256xf32>
    %c0_1128 = arith.constant 0 : index
    %c2560_1129 = arith.constant 2560 : index
    %662 = vector.load %arg16[%c0_1128, %c2560_1129] : memref<2x3200xf32, #tpu.memory_space<vmem>>, vector<2x640xf32>
    %663 = arith.truncf %662 : vector<2x640xf32> to vector<2x640xbf16>
    %c2560_1130 = arith.constant 2560 : index
    %c0_1131 = arith.constant 0 : index
    %664 = vector.load %arg6[%c2560_1130, %c0_1131] : memref<3200x256xbf16, #tpu.memory_space<vmem>>, vector<640x256xbf16>
    %cst_1132 = arith.constant dense<0.000000e+00> : vector<2x256xf32>
    %665 = tpu.matmul %663, %664, %cst_1132 {dimension_numbers = #tpu.dot_dimension_numbers<[1], [0], [0], [1], [0, 0, 1, 1], [], []>} : vector<2x640xbf16>, vector<640x256xbf16>, vector<2x256xf32> -> vector<2x256xf32>
    %666 = arith.addf %661, %665 : vector<2x256xf32>
    %c0_1133 = arith.constant 0 : index
    %c0_1134 = arith.constant 0 : index
    %667 = vector.load %arg7[%c0_1133, %c0_1134] : memref<1x256xf32, #tpu.memory_space<vmem>>, vector<1x256xf32>
    %668 = vector.broadcast %667 : vector<1x256xf32> to vector<2x256xf32>
    %669 = arith.addf %666, %668 : vector<2x256xf32>
    %cst_1135 = arith.constant 0.000000e+00 : f32
    %670 = vector.broadcast %cst_1135 : f32 to vector<2x256xf32>
    %671 = arith.maximumf %669, %670 : vector<2x256xf32>
    %672 = arith.truncf %671 : vector<2x256xf32> to vector<2x256xbf16>
    %c0_1136 = arith.constant 0 : index
    %c0_1137 = arith.constant 0 : index
    %673 = vector.load %arg8[%c0_1136, %c0_1137] : memref<256x512xbf16, #tpu.memory_space<vmem>>, vector<256x512xbf16>
    %cst_1138 = arith.constant dense<0.000000e+00> : vector<2x512xf32>
    %674 = tpu.matmul %672, %673, %cst_1138 {dimension_numbers = #tpu.dot_dimension_numbers<[1], [0], [0], [1], [0, 0, 1, 1], [], []>} : vector<2x256xbf16>, vector<256x512xbf16>, vector<2x512xf32> -> vector<2x512xf32>
    %c0_1139 = arith.constant 0 : index
    %c0_1140 = arith.constant 0 : index
    %675 = vector.load %arg9[%c0_1139, %c0_1140] : memref<1x512xf32, #tpu.memory_space<vmem>>, vector<1x512xf32>
    %676 = vector.broadcast %675 : vector<1x512xf32> to vector<2x512xf32>
    %677 = arith.addf %674, %676 : vector<2x512xf32>
    %cst_1141 = arith.constant 0.000000e+00 : f32
    %678 = vector.broadcast %cst_1141 : f32 to vector<2x512xf32>
    %679 = arith.maximumf %677, %678 : vector<2x512xf32>
    %680 = arith.truncf %679 : vector<2x512xf32> to vector<2x512xbf16>
    %c0_1142 = arith.constant 0 : index
    %c0_1143 = arith.constant 0 : index
    %681 = vector.load %arg10[%c0_1142, %c0_1143] : memref<512x128xbf16, #tpu.memory_space<vmem>>, vector<512x128xbf16>
    %cst_1144 = arith.constant dense<0.000000e+00> : vector<2x128xf32>
    %682 = tpu.matmul %680, %681, %cst_1144 {dimension_numbers = #tpu.dot_dimension_numbers<[1], [0], [0], [1], [0, 0, 1, 1], [], []>} : vector<2x512xbf16>, vector<512x128xbf16>, vector<2x128xf32> -> vector<2x128xf32>
    %c0_1145 = arith.constant 0 : index
    %c0_1146 = arith.constant 0 : index
    %683 = vector.load %arg11[%c0_1145, %c0_1146] : memref<1x128xf32, #tpu.memory_space<vmem>>, vector<1x128xf32>
    %684 = vector.broadcast %683 : vector<1x128xf32> to vector<2x128xf32>
    %685 = arith.addf %682, %684 : vector<2x128xf32>
    %686 = arith.negf %685 : vector<2x128xf32>
    %687 = math.exp %686 : vector<2x128xf32>
    %cst_1147 = arith.constant 1.000000e+00 : f32
    %688 = vector.broadcast %cst_1147 : f32 to vector<2x128xf32>
    %689 = arith.addf %688, %687 : vector<2x128xf32>
    %690 = arith.divf %688, %689 : vector<2x128xf32>
    %c0_1148 = arith.constant 0 : index
    %c0_1149 = arith.constant 0 : index
    %691 = vector.load %arg12[%c0_1148, %c0_1149] : memref<2x128xf32, #tpu.memory_space<vmem>>, vector<2x128xf32>
    tpu.vector_store %arg12[%c0_1148, %c0_1149], %690 {strides = array<i32>} : memref<2x128xf32, #tpu.memory_space<vmem>>, vector<2x128xf32>,
    return
  }
  func.func @transform_0(%arg0: i32) -> (i32, i32) {
    %c0_i32 = arith.constant 0 : i32
    %c0_i32_0 = arith.constant 0 : i32
    %c0_i32_1 = arith.constant 0 : i32
    return %c0_i32, %c0_i32_0 : i32, i32
  }
  func.func @transform_1(%arg0: i32) -> (i32, i32) {
    %c0_i32 = arith.constant 0 : i32
    %c0_i32_0 = arith.constant 0 : i32
    %c0_i32_1 = arith.constant 0 : i32
    return %c0_i32, %c0_i32_0 : i32, i32
  }
  func.func @transform_2(%arg0: i32) -> (i32, i32) {
    %c0_i32 = arith.constant 0 : i32
    %c0_i32_0 = arith.constant 0 : i32
    %c0_i32_1 = arith.constant 0 : i32
    return %c0_i32, %c0_i32_0 : i32, i32
  }
  func.func @transform_3(%arg0: i32) -> (i32, i32) {
    %c0_i32 = arith.constant 0 : i32
    %c0_i32_0 = arith.constant 0 : i32
    %c0_i32_1 = arith.constant 0 : i32
    return %c0_i32, %c0_i32_0 : i32, i32
  }
  func.func @transform_4(%arg0: i32) -> (i32, i32) {
    %c0_i32 = arith.constant 0 : i32
    %c0_i32_0 = arith.constant 0 : i32
    %c0_i32_1 = arith.constant 0 : i32
    return %c0_i32, %c0_i32_0 : i32, i32
  }
  func.func @transform_5(%arg0: i32) -> (i32, i32) {
    %c0_i32 = arith.constant 0 : i32
    %c0_i32_0 = arith.constant 0 : i32
    %c0_i32_1 = arith.constant 0 : i32
    return %c0_i32, %c0_i32_0 : i32, i32
  }
  func.func @transform_6(%arg0: i32) -> (i32, i32) {
    %c0_i32 = arith.constant 0 : i32
    %c0_i32_0 = arith.constant 0 : i32
    %c0_i32_1 = arith.constant 0 : i32
    return %c0_i32, %c0_i32_0 : i32, i32
  }
  func.func @transform_7(%arg0: i32) -> (i32, i32) {
    %c0_i32 = arith.constant 0 : i32
    %c0_i32_0 = arith.constant 0 : i32
    %c0_i32_1 = arith.constant 0 : i32
    return %c0_i32, %c0_i32_0 : i32, i32
  }
  func.func @transform_8(%arg0: i32) -> (i32, i32) {
    %c0_i32 = arith.constant 0 : i32
    %c0_i32_0 = arith.constant 0 : i32
    %c0_i32_1 = arith.constant 0 : i32
    return %c0_i32, %c0_i32_0 : i32, i32
  }
  func.func @transform_9(%arg0: i32) -> (i32, i32) {
    %c0_i32 = arith.constant 0 : i32
    %c0_i32_0 = arith.constant 0 : i32
    %c0_i32_1 = arith.constant 0 : i32
    return %c0_i32, %c0_i32_0 : i32, i32
  }
  func.func @transform_10(%arg0: i32) -> (i32, i32) {
    %c0_i32 = arith.constant 0 : i32
    %c0_i32_0 = arith.constant 0 : i32
    %c0_i32_1 = arith.constant 0 : i32
    return %c0_i32, %c0_i32_0 : i32, i32
  }
  func.func @transform_11(%arg0: i32) -> (i32, i32) {
    %c0_i32 = arith.constant 0 : i32
    %c0_i32_0 = arith.constant 0 : i32
    %c0_i32_1 = arith.constant 0 : i32
    return %c0_i32, %c0_i32_0 : i32, i32
  }
}

</mosaic_0001>

<llo_original>
// kernel: discriminator_forward.1
$region0: #{discriminator_forward.1}
  #allocation0 [shape = 'u32[]', space=smem, size = 0x4, offset = 0x4, fixed_abs, tag = 'smem constant byte address 0x4 - core index']
  #allocation1 [shape = 'u32[72,128]{1,0:T(1,128)}', space=vmem, size = 0x9000, scoped, tag = 'internal scratch']
  #allocation2 [shape = 'f32[162,128]{1,0:T(8,128)}', space=vmem, size = 0x15000, scoped, tag = 'scratch operand']
  #allocation3 [shape = 'f32[50,3200]{1,0:T(8,128)}', space=vmem, size = 0xaf000, scoped, tag = 'scratch operand']
  #allocation4 [shape = 'f32[50,128]{1,0:T(8,128)}', space=vmem, size = 0x7000, scoped, tag = 'scratch operand']
  #allocation5 [shape = 'f32[2,3200]{1,0:T(2,128)}', space=vmem, size = 0x6400, scoped, tag = 'scratch operand']
  %s0 = inlined_call_operand.vmem [shape: bf16[162,128], index: 0, kind: input, shape index: {}]
  %s1 = inlined_call_operand.vmem [shape: bf16[128,128], index: 1, kind: input, shape index: {}]
  %s2 = inlined_call_operand.vmem [shape: f32[1,128], index: 2, kind: input, shape index: {}]
  %s3 = inlined_call_operand.vmem [shape: bf16[3200,128], index: 3, kind: input, shape index: {}]
  %s4 = inlined_call_operand.vmem [shape: f32[1,128], index: 4, kind: input, shape index: {}]
  %s5 = inlined_call_operand.vmem [shape: bf16[3200,256], index: 5, kind: input, shape index: {}]
  %s6 = inlined_call_operand.vmem [shape: f32[1,256], index: 6, kind: input, shape index: {}]
  %s7 = inlined_call_operand.vmem [shape: bf16[256,512], index: 7, kind: input, shape index: {}]
  %s8 = inlined_call_operand.vmem [shape: f32[1,512], index: 8, kind: input, shape index: {}]
  %s9 = inlined_call_operand.vmem [shape: bf16[512,128], index: 9, kind: input, shape index: {}]
  %s10 = inlined_call_operand.vmem [shape: f32[1,128], index: 10, kind: input, shape index: {}]
  %s11 = inlined_call_operand.vmem [shape: f32[2,128], index: 11, kind: output, shape index: {}]
  %s12 = sld [smem:[#allocation0]]
  $region54: #{discriminator_forward.1} parent=0
    _
  %s14 = ssub.s32 1, %s12
  %s15 = scalar_select 0, %s14, %s12
  // Predicated region
  $region2: #{discriminator_forward.1} parent=0 // pred_check
    _
  $region3: #{discriminator_forward.1} parent=0 // pred_check_branch
    %17 = sbr.rel (0) target = $region5
  $region4: #{discriminator_forward.1} parent=0 // pred_region
    _
  $region5: #{discriminator_forward.1} parent=0 // pred_fallthru
    _
  // Predicated region
  $region6: #{discriminator_forward.1} parent=0 // pred_check
    _
  $region7: #{discriminator_forward.1} parent=0 // pred_check_branch
    %19 = sbr.rel (0) target = $region9
  $region8: #{discriminator_forward.1} parent=0 // pred_region
    _
  $region9: #{discriminator_forward.1} parent=0 // pred_fallthru
    _
  // Predicated region
  $region10: #{discriminator_forward.1} parent=0 // pred_check
    _
  $region11: #{discriminator_forward.1} parent=0 // pred_check_branch
    %21 = sbr.rel (0) target = $region13
  $region12: #{discriminator_forward.1} parent=0 // pred_region
    _
  $region13: #{discriminator_forward.1} parent=0 // pred_fallthru
    _
  // Predicated region
  $region14: #{discriminator_forward.1} parent=0 // pred_check
    _
  $region15: #{discriminator_forward.1} parent=0 // pred_check_branch
    %23 = sbr.rel (0) target = $region17
  $region16: #{discriminator_forward.1} parent=0 // pred_region
    _
  $region17: #{discriminator_forward.1} parent=0 // pred_fallthru
    _
  // Predicated region
  $region18: #{discriminator_forward.1} parent=0 // pred_check
    _
  $region19: #{discriminator_forward.1} parent=0 // pred_check_branch
    %25 = sbr.rel (0) target = $region21
  $region20: #{discriminator_forward.1} parent=0 // pred_region
    _
  $region21: #{discriminator_forward.1} parent=0 // pred_fallthru
    _
  // Predicated region
  $region22: #{discriminator_forward.1} parent=0 // pred_check
    _
  $region23: #{discriminator_forward.1} parent=0 // pred_check_branch
    %27 = sbr.rel (0) target = $region25
  $region24: #{discriminator_forward.1} parent=0 // pred_region
    _
  $region25: #{discriminator_forward.1} parent=0 // pred_fallthru
    _
  // Predicated region
  $region26: #{discriminator_forward.1} parent=0 // pred_check
    _
  $region27: #{discriminator_forward.1} parent=0 // pred_check_branch
    %29 = sbr.rel (0) target = $region29
  $region28: #{discriminator_forward.1} parent=0 // pred_region
    _
  $region29: #{discriminator_forward.1} parent=0 // pred_fallthru
    _
  // Predicated region
  $region30: #{discriminator_forward.1} parent=0 // pred_check
    _
  $region31: #{discriminator_forward.1} parent=0 // pred_check_branch
    %31 = sbr.rel (0) target = $region33
  $region32: #{discriminator_forward.1} parent=0 // pred_region
    _
  $region33: #{discriminator_forward.1} parent=0 // pred_fallthru
    _
  // Predicated region
  $region34: #{discriminator_forward.1} parent=0 // pred_check
    _
  $region35: #{discriminator_forward.1} parent=0 // pred_check_branch
    %33 = sbr.rel (0) target = $region37
  $region36: #{discriminator_forward.1} parent=0 // pred_region
    _
  $region37: #{discriminator_forward.1} parent=0 // pred_fallthru
    _
  // Predicated region
  $region38: #{discriminator_forward.1} parent=0 // pred_check
    _
  $region39: #{discriminator_forward.1} parent=0 // pred_check_branch
    %35 = sbr.rel (0) target = $region41
  $region40: #{discriminator_forward.1} parent=0 // pred_region
    _
  $region41: #{discriminator_forward.1} parent=0 // pred_fallthru
    _
  // Predicated region
  $region42: #{discriminator_forward.1} parent=0 // pred_check
    _
  $region43: #{discriminator_forward.1} parent=0 // pred_check_branch
    %37 = sbr.rel (0) target = $region45
  $region44: #{discriminator_forward.1} parent=0 // pred_region
    _
  $region45: #{discriminator_forward.1} parent=0 // pred_fallthru
    _
  %v38 = vld [vmem:[%s0] sm:$0xf]
  %v39 = vld [vmem:[%s0 + $0x4] sm:$0xf]
  %v40 = vld [vmem:[%s0 + $0x8] sm:$0xf]
  %v41 = vld [vmem:[%s0 + $0xc] sm:$0xf]
  %v42 = vld [vmem:[%s0 + $0x10] sm:$0xf]
  %v43 = vld [vmem:[%s0 + $0x14] sm:$0xf]
  %v44 = vld [vmem:[%s0 + $0x18] sm:$0xf]
  %v45 = vld [vmem:[%s0 + $0x1c] sm:$0xf]
  %v46 = vld [vmem:[%s0 + $0x20] sm:$0xf]
  %v47 = vld [vmem:[%s0 + $0x24] sm:$0xf]
  %v48 = vld [vmem:[%s0 + $0x28] sm:$0xf]
  %v49 = vld [vmem:[%s0 + $0x2c] sm:$0xf]
  %v50 = vld [vmem:[%s0 + $0x30] sm:$0xf]
  %v51 = vld [vmem:[%s0 + $0x34] sm:$0xf]
  %v52 = vld [vmem:[%s0 + $0x38] sm:$0xf]
  %v53 = vld [vmem:[%s0 + $0x3c] sm:$0xf]
  %v54 = vld [vmem:[%s0 + $0x40] sm:$0xf]
  %v55 = vld [vmem:[%s0 + $0x44] sm:$0xf]
  %v56 = vld [vmem:[%s0 + $0x48] sm:$0xf]
  %v57 = vld [vmem:[%s0 + $0x4c] sm:$0xf]
  %v58 = vld [vmem:[%s0 + $0x50] sm:$0x1]
  %v59 = vld [vmem:[%s1] sm:$0xf]
  %v60 = vld [vmem:[%s1 + $0x4] sm:$0xf]
  %v61 = vld [vmem:[%s1 + $0x8] sm:$0xf]
  %v62 = vld [vmem:[%s1 + $0xc] sm:$0xf]
  %v63 = vld [vmem:[%s1 + $0x10] sm:$0xf]
  %v64 = vld [vmem:[%s1 + $0x14] sm:$0xf]
  %v65 = vld [vmem:[%s1 + $0x18] sm:$0xf]
  %v66 = vld [vmem:[%s1 + $0x1c] sm:$0xf]
  %v67 = vld [vmem:[%s1 + $0x20] sm:$0xf]
  %v68 = vld [vmem:[%s1 + $0x24] sm:$0xf]
  %v69 = vld [vmem:[%s1 + $0x28] sm:$0xf]
  %v70 = vld [vmem:[%s1 + $0x2c] sm:$0xf]
  %v71 = vld [vmem:[%s1 + $0x30] sm:$0xf]
  %v72 = vld [vmem:[%s1 + $0x34] sm:$0xf]
  %v73 = vld [vmem:[%s1 + $0x38] sm:$0xf]
  %v74 = vld [vmem:[%s1 + $0x3c] sm:$0xf]
  %v75 = vld [vmem:[%s2] sm:$0x1]
  %v77 = vperm.slane %v75, 0
  %v100 = vunpack.c.l.b16 %v38
  %v101 = vunpack.c.l.b16 %v39
  %v102 = vunpack.c.l.b16 %v40
  %v103 = vunpack.c.l.b16 %v41
  %v104 = vunpack.c.l.b16 %v42
  %v105 = vunpack.c.l.b16 %v43
  %v106 = vunpack.c.l.b16 %v44
  %v107 = vunpack.c.l.b16 %v45
  %v108 = vunpack.c.l.b16 %v46
  %v109 = vunpack.c.l.b16 %v47
  %v110 = vunpack.c.l.b16 %v48
  %v111 = vunpack.c.l.b16 %v49
  %v112 = vunpack.c.l.b16 %v50
  %v113 = vunpack.c.l.b16 %v51
  %v114 = vunpack.c.l.b16 %v52
  %v115 = vunpack.c.l.b16 %v53
  %v116 = vunpack.c.l.b16 %v54
  %v117 = vunpack.c.l.b16 %v55
  %v118 = vunpack.c.l.b16 %v56
  %v119 = vunpack.c.l.b16 %v57
  %v120 = vunpack.c.l.b16 %v58
  %v121 = vpack.c.b16 %v101, %v100
  %v122 = vpack.c.b16 %v103, %v102
  %v123 = vpack.c.b16 %v105, %v104
  %v124 = vpack.c.b16 %v107, %v106
  %v125 = vpack.c.b16 %v109, %v108
  %v126 = vpack.c.b16 %v111, %v110
  %v127 = vpack.c.b16 %v113, %v112
  %v128 = vpack.c.b16 %v115, %v114
  %v129 = vpack.c.b16 %v117, %v116
  %v130 = vpack.c.b16 %v119, %v118
  %v131 = vpack.c.b16 %v120, %v120
  %v159 = vunpack.c.l.b16 %v59
  %v160 = vunpack.c.l.b16 %v60
  %v161 = vunpack.c.l.b16 %v61
  %v162 = vunpack.c.l.b16 %v62
  %v163 = vunpack.c.l.b16 %v63
  %v164 = vunpack.c.l.b16 %v64
  %v165 = vunpack.c.l.b16 %v65
  %v166 = vunpack.c.l.b16 %v66
  %v167 = vunpack.c.l.b16 %v67
  %v168 = vunpack.c.l.b16 %v68
  %v169 = vunpack.c.l.b16 %v69
  %v170 = vunpack.c.l.b16 %v70
  %v171 = vunpack.c.l.b16 %v71
  %v172 = vunpack.c.l.b16 %v72
  %v173 = vunpack.c.l.b16 %v73
  %v174 = vunpack.c.l.b16 %v74
  %v175 = vpack.c.b16 %v160, %v159
  %v176 = vpack.c.b16 %v162, %v161
  %v177 = vpack.c.b16 %v164, %v163
  %v178 = vpack.c.b16 %v166, %v165
  %v179 = vpack.c.b16 %v168, %v167
  %v180 = vpack.c.b16 %v170, %v169
  %v181 = vpack.c.b16 %v172, %v171
  %v182 = vpack.c.b16 %v174, %v173
  %191 = vmatpush.bf16.msra.mxu0 %v182
  %192 = vmatpush.bf16.msra.mxu0 %v181
  %193 = vmatpush.bf16.msra.mxu0 %v180
  %194 = vmatpush.bf16.msra.mxu0 %v179
  %195 = vmatpush.bf16.msra.mxu0 %v178
  %196 = vmatpush.bf16.msra.mxu0 %v177
  %197 = vmatpush.bf16.msra.mxu0 %v176
  %198 = vmatpush.bf16.msra.mxu0 %v175
  %199 = vmatmul.bf16.gmra.mxu0 %v121
  %v200 = vpop.f32.mrf.mxu0
  %v201 = vadd.f32 %v77, %v200
  %v202 = vpop.f32.mrf.mxu0
  %v203 = vadd.f32 %v77, %v202
  %204 = vmatmul.bf16.gmra.mxu0 %v122
  %v205 = vpop.f32.mrf.mxu0
  %v206 = vadd.f32 %v77, %v205
  %v207 = vpop.f32.mrf.mxu0
  %v208 = vadd.f32 %v77, %v207
  %209 = vmatmul.bf16.gmra.mxu0 %v123
  %v210 = vpop.f32.mrf.mxu0
  %v211 = vadd.f32 %v77, %v210
  %v212 = vpop.f32.mrf.mxu0
  %v213 = vadd.f32 %v77, %v212
  %214 = vmatmul.bf16.gmra.mxu0 %v124
  %v215 = vpop.f32.mrf.mxu0
  %v216 = vadd.f32 %v77, %v215
  %v217 = vpop.f32.mrf.mxu0
  %v218 = vadd.f32 %v77, %v217
  %219 = vmatmul.bf16.gmra.mxu0 %v125
  %v220 = vpop.f32.mrf.mxu0
  %v221 = vadd.f32 %v77, %v220
  %v222 = vpop.f32.mrf.mxu0
  %v223 = vadd.f32 %v77, %v222
  %224 = vmatmul.bf16.gmra.mxu0 %v126
  %v225 = vpop.f32.mrf.mxu0
  %v226 = vadd.f32 %v77, %v225
  %v227 = vpop.f32.mrf.mxu0
  %v228 = vadd.f32 %v77, %v227
  %229 = vmatmul.bf16.gmra.mxu0 %v127
  %v230 = vpop.f32.mrf.mxu0
  %v231 = vadd.f32 %v77, %v230
  %v232 = vpop.f32.mrf.mxu0
  %v233 = vadd.f32 %v77, %v232
  %234 = vmatmul.bf16.gmra.mxu0 %v128
  %v235 = vpop.f32.mrf.mxu0
  %v236 = vadd.f32 %v77, %v235
  %v237 = vpop.f32.mrf.mxu0
  %v238 = vadd.f32 %v77, %v237
  %239 = vmatmul.bf16.gmra.mxu0 %v129
  %v240 = vpop.f32.mrf.mxu0
  %v241 = vadd.f32 %v77, %v240
  %v242 = vpop.f32.mrf.mxu0
  %v243 = vadd.f32 %v77, %v242
  %244 = vmatmul.bf16.gmra.mxu0 %v130
  %v245 = vpop.f32.mrf.mxu0
  %v246 = vadd.f32 %v77, %v245
  %v247 = vpop.f32.mrf.mxu0
  %v248 = vadd.f32 %v77, %v247
  %249 = vmatmul.bf16.gmra.mxu0 %v131
  %v250 = vpop.f32.mrf.mxu0
  %v251 = vadd.f32 %v77, %v250
  %v252 = vpop.f32.mrf.mxu0
  %253 = vdwg.mxu0
  %v254 = vmax.f32 %v201, 0.0
  %v255 = vmax.f32 %v203, 0.0
  %v256 = vmax.f32 %v206, 0.0
  %v257 = vmax.f32 %v208, 0.0
  %v258 = vmax.f32 %v211, 0.0
  %v259 = vmax.f32 %v213, 0.0
  %v260 = vmax.f32 %v216, 0.0
  %v261 = vmax.f32 %v218, 0.0
  %v262 = vmax.f32 %v221, 0.0
  %v263 = vmax.f32 %v223, 0.0
  %v264 = vmax.f32 %v226, 0.0
  %v265 = vmax.f32 %v228, 0.0
  %v266 = vmax.f32 %v231, 0.0
  %v267 = vmax.f32 %v233, 0.0
  %v268 = vmax.f32 %v236, 0.0
  %v269 = vmax.f32 %v238, 0.0
  %v270 = vmax.f32 %v241, 0.0
  %v271 = vmax.f32 %v243, 0.0
  %v272 = vmax.f32 %v246, 0.0
  %v273 = vmax.f32 %v248, 0.0
  %v274 = vmax.f32 %v251, 0.0
  %275 = vst [vmem:[#allocation2] sm:$0xff] %v254
  %276 = vst [vmem:[#allocation2 + $0x8] sm:$0xff] %v255
  %277 = vst [vmem:[#allocation2 + $0x10] sm:$0xff] %v256
  %278 = vst [vmem:[#allocation2 + $0x18] sm:$0xff] %v257
  %279 = vst [vmem:[#allocation2 + $0x20] sm:$0xff] %v258
  %280 = vst [vmem:[#allocation2 + $0x28] sm:$0xff] %v259
  %281 = vst [vmem:[#allocation2 + $0x30] sm:$0xff] %v260
  %282 = vst [vmem:[#allocation2 + $0x38] sm:$0xff] %v261
  %283 = vst [vmem:[#allocation2 + $0x40] sm:$0xff] %v262
  %284 = vst [vmem:[#allocation2 + $0x48] sm:$0xff] %v263
  %285 = vst [vmem:[#allocation2 + $0x50] sm:$0xff] %v264
  %286 = vst [vmem:[#allocation2 + $0x58] sm:$0xff] %v265
  %287 = vst [vmem:[#allocation2 + $0x60] sm:$0xff] %v266
  %288 = vst [vmem:[#allocation2 + $0x68] sm:$0xff] %v267
  %289 = vst [vmem:[#allocation2 + $0x70] sm:$0xff] %v268
  %290 = vst [vmem:[#allocation2 + $0x78] sm:$0xff] %v269
  %291 = vst [vmem:[#allocation2 + $0x80] sm:$0xff] %v270
  %292 = vst [vmem:[#allocation2 + $0x88] sm:$0xff] %v271
  %293 = vst [vmem:[#allocation2 + $0x90] sm:$0xff] %v272
  %294 = vst [vmem:[#allocation2 + $0x98] sm:$0xff] %v273
  %295 = vst [vmem:[#allocation2 + $0xa0] sm:$0x3] %v274
  %v296 = vld [vmem:[#allocation2] sm:$0x1f]
  %297 = vst [vmem:[#allocation3] sm:$0x1f] %v296
  %v298 = vld [vmem:[#allocation2 + $0x9] sm:$0x1f]
  %v300 = vrot.slane %v298, 3
  %302 = vst [vmem:[#allocation3] sm:$0xe0] %v300
  %303 = vst [vmem:[#allocation3 + $0xc8] sm:$0x3] %v300
  %v304 = vld [vmem:[#allocation2 + $0x12] sm:$0x1f]
  %v306 = vrot.slane %v304, 6
  %308 = vst [vmem:[#allocation3 + $0xc8] sm:$0x7c] %v306
  %v309 = vld [vmem:[#allocation2 + $0x1b] sm:$0x1f]
  %v311 = vrot.slane %v309, 1
  %313 = vst [vmem:[#allocation3 + $0xc8] sm:$0x80] %v311
  %314 = vst [vmem:[#allocation3 + $0x190] sm:$0xf] %v311
  %v315 = vld [vmem:[#allocation2 + $0x24] sm:$0x1f]
  %v317 = vrot.slane %v315, 4
  %319 = vst [vmem:[#allocation3 + $0x190] sm:$0xf0] %v317
  %320 = vst [vmem:[#allocation3 + $0x258] sm:$0x1] %v317
  %v321 = vld [vmem:[#allocation2 + $0x51] sm:$0x1f]
  %v323 = vrot.slane %v321, 7
  %325 = vst [vmem:[#allocation3 + $0x258] sm:$0x3e] %v323
  %v326 = vld [vmem:[#allocation2 + $0x5a] sm:$0x1f]
  %v328 = vrot.slane %v326, 2
  %330 = vst [vmem:[#allocation3 + $0x258] sm:$0xc0] %v328
  %331 = vst [vmem:[#allocation3 + $0x320] sm:$0x7] %v328
  %v332 = vld [vmem:[#allocation2 + $0x63] sm:$0x1f]
  %v334 = vrot.slane %v332, 5
  %336 = vst [vmem:[#allocation3 + $0x320] sm:$0xf8] %v334
  %v337 = vld [vmem:[#allocation2 + $0x6c] sm:$0x1f]
  %338 = vst [vmem:[#allocation3 + $0x3e8] sm:$0x1f] %v337
  %v339 = vld [vmem:[#allocation2 + $0x75] sm:$0x1f]
  %v341 = vrot.slane %v339, 3
  %343 = vst [vmem:[#allocation3 + $0x3e8] sm:$0xe0] %v341
  %344 = vst [vmem:[#allocation3 + $0x4b0] sm:$0x3] %v341
  %v345 = vld [vmem:[#allocation2 + $0x1] sm:$0x1f]
  %346 = vst [vmem:[#allocation3 + $0x8] sm:$0x1f] %v345
  %v347 = vld [vmem:[#allocation2 + $0xa] sm:$0x1f]
  %v349 = vrot.slane %v347, 3
  %351 = vst [vmem:[#allocation3 + $0x8] sm:$0xe0] %v349
  %352 = vst [vmem:[#allocation3 + $0xd0] sm:$0x3] %v349
  %v353 = vld [vmem:[#allocation2 + $0x13] sm:$0x1f]
  %v355 = vrot.slane %v353, 6
  %357 = vst [vmem:[#allocation3 + $0xd0] sm:$0x7c] %v355
  %v358 = vld [vmem:[#allocation2 + $0x1c] sm:$0x1f]
  %v360 = vrot.slane %v358, 1
  %362 = vst [vmem:[#allocation3 + $0xd0] sm:$0x80] %v360
  %363 = vst [vmem:[#allocation3 + $0x198] sm:$0xf] %v360
  %v364 = vld [vmem:[#allocation2 + $0x25] sm:$0x1f]
  %v366 = vrot.slane %v364, 4
  %368 = vst [vmem:[#allocation3 + $0x198] sm:$0xf0] %v366
  %369 = vst [vmem:[#allocation3 + $0x260] sm:$0x1] %v366
  %v370 = vld [vmem:[#allocation2 + $0x52] sm:$0x1f]
  %v372 = vrot.slane %v370, 7
  %374 = vst [vmem:[#allocation3 + $0x260] sm:$0x3e] %v372
  %v375 = vld [vmem:[#allocation2 + $0x5b] sm:$0x1f]
  %v377 = vrot.slane %v375, 2
  %379 = vst [vmem:[#allocation3 + $0x260] sm:$0xc0] %v377
  %380 = vst [vmem:[#allocation3 + $0x328] sm:$0x7] %v377
  %v381 = vld [vmem:[#allocation2 + $0x64] sm:$0x1f]
  %v383 = vrot.slane %v381, 5
  %385 = vst [vmem:[#allocation3 + $0x328] sm:$0xf8] %v383
  %v386 = vld [vmem:[#allocation2 + $0x6d] sm:$0x1f]
  %387 = vst [vmem:[#allocation3 + $0x3f0] sm:$0x1f] %v386
  %v388 = vld [vmem:[#allocation2 + $0x76] sm:$0x1f]
  %v390 = vrot.slane %v388, 3
  %392 = vst [vmem:[#allocation3 + $0x3f0] sm:$0xe0] %v390
  %393 = vst [vmem:[#allocation3 + $0x4b8] sm:$0x3] %v390
  %v394 = vld [vmem:[#allocation2 + $0x2] sm:$0x1f]
  %395 = vst [vmem:[#allocation3 + $0x10] sm:$0x1f] %v394
  %v396 = vld [vmem:[#allocation2 + $0xb] sm:$0x1f]
  %v398 = vrot.slane %v396, 3
  %400 = vst [vmem:[#allocation3 + $0x10] sm:$0xe0] %v398
  %401 = vst [vmem:[#allocation3 + $0xd8] sm:$0x3] %v398
  %v402 = vld [vmem:[#allocation2 + $0x14] sm:$0x1f]
  %v404 = vrot.slane %v402, 6
  %406 = vst [vmem:[#allocation3 + $0xd8] sm:$0x7c] %v404
  %v407 = vld [vmem:[#allocation2 + $0x1d] sm:$0x1f]
  %v409 = vrot.slane %v407, 1
  %411 = vst [vmem:[#allocation3 + $0xd8] sm:$0x80] %v409
  %412 = vst [vmem:[#allocation3 + $0x1a0] sm:$0xf] %v409
  %v413 = vld [vmem:[#allocation2 + $0x26] sm:$0x1f]
  %v415 = vrot.slane %v413, 4
  %417 = vst [vmem:[#allocation3 + $0x1a0] sm:$0xf0] %v415
  %418 = vst [vmem:[#allocation3 + $0x268] sm:$0x1] %v415
  %v419 = vld [vmem:[#allocation2 + $0x53] sm:$0x1f]
  %v421 = vrot.slane %v419, 7
  %423 = vst [vmem:[#allocation3 + $0x268] sm:$0x3e] %v421
  %v424 = vld [vmem:[#allocation2 + $0x5c] sm:$0x1f]
  %v426 = vrot.slane %v424, 2
  %428 = vst [vmem:[#allocation3 + $0x268] sm:$0xc0] %v426
  %429 = vst [vmem:[#allocation3 + $0x330] sm:$0x7] %v426
  %v430 = vld [vmem:[#allocation2 + $0x65] sm:$0x1f]
  %v432 = vrot.slane %v430, 5
  %434 = vst [vmem:[#allocation3 + $0x330] sm:$0xf8] %v432
  %v435 = vld [vmem:[#allocation2 + $0x6e] sm:$0x1f]
  %436 = vst [vmem:[#allocation3 + $0x3f8] sm:$0x1f] %v435
  %v437 = vld [vmem:[#allocation2 + $0x77] sm:$0x1f]
  %v439 = vrot.slane %v437, 3
  %441 = vst [vmem:[#allocation3 + $0x3f8] sm:$0xe0] %v439
  %442 = vst [vmem:[#allocation3 + $0x4c0] sm:$0x3] %v439
  %v443 = vld [vmem:[#allocation2 + $0x3] sm:$0x1f]
  %444 = vst [vmem:[#allocation3 + $0x18] sm:$0x1f] %v443
  %v445 = vld [vmem:[#allocation2 + $0xc] sm:$0x1f]
  %v447 = vrot.slane %v445, 3
  %449 = vst [vmem:[#allocation3 + $0x18] sm:$0xe0] %v447
  %450 = vst [vmem:[#allocation3 + $0xe0] sm:$0x3] %v447
  %v451 = vld [vmem:[#allocation2 + $0x15] sm:$0x1f]
  %v453 = vrot.slane %v451, 6
  %455 = vst [vmem:[#allocation3 + $0xe0] sm:$0x7c] %v453
  %v456 = vld [vmem:[#allocation2 + $0x1e] sm:$0x1f]
  %v458 = vrot.slane %v456, 1
  %460 = vst [vmem:[#allocation3 + $0xe0] sm:$0x80] %v458
  %461 = vst [vmem:[#allocation3 + $0x1a8] sm:$0xf] %v458
  %v462 = vld [vmem:[#allocation2 + $0x27] sm:$0x1f]
  %v464 = vrot.slane %v462, 4
  %466 = vst [vmem:[#allocation3 + $0x1a8] sm:$0xf0] %v464
  %467 = vst [vmem:[#allocation3 + $0x270] sm:$0x1] %v464
  %v468 = vld [vmem:[#allocation2 + $0x54] sm:$0x1f]
  %v470 = vrot.slane %v468, 7
  %472 = vst [vmem:[#allocation3 + $0x270] sm:$0x3e] %v470
  %v473 = vld [vmem:[#allocation2 + $0x5d] sm:$0x1f]
  %v475 = vrot.slane %v473, 2
  %477 = vst [vmem:[#allocation3 + $0x270] sm:$0xc0] %v475
  %478 = vst [vmem:[#allocation3 + $0x338] sm:$0x7] %v475
  %v479 = vld [vmem:[#allocation2 + $0x66] sm:$0x1f]
  %v481 = vrot.slane %v479, 5
  %483 = vst [vmem:[#allocation3 + $0x338] sm:$0xf8] %v481
  %v484 = vld [vmem:[#allocation2 + $0x6f] sm:$0x1f]
  %485 = vst [vmem:[#allocation3 + $0x400] sm:$0x1f] %v484
  %v486 = vld [vmem:[#allocation2 + $0x78] sm:$0x1f]
  %v488 = vrot.slane %v486, 3
  %490 = vst [vmem:[#allocation3 + $0x400] sm:$0xe0] %v488
  %491 = vst [vmem:[#allocation3 + $0x4c8] sm:$0x3] %v488
  %v492 = vld [vmem:[#allocation2 + $0x4] sm:$0x1f]
  %493 = vst [vmem:[#allocation3 + $0x20] sm:$0x1f] %v492
  %v494 = vld [vmem:[#allocation2 + $0xd] sm:$0x1f]
  %v496 = vrot.slane %v494, 3
  %498 = vst [vmem:[#allocation3 + $0x20] sm:$0xe0] %v496
  %499 = vst [vmem:[#allocation3 + $0xe8] sm:$0x3] %v496
  %v500 = vld [vmem:[#allocation2 + $0x16] sm:$0x1f]
  %v502 = vrot.slane %v500, 6
  %504 = vst [vmem:[#allocation3 + $0xe8] sm:$0x7c] %v502
  %v505 = vld [vmem:[#allocation2 + $0x1f] sm:$0x1f]
  %v507 = vrot.slane %v505, 1
  %509 = vst [vmem:[#allocation3 + $0xe8] sm:$0x80] %v507
  %510 = vst [vmem:[#allocation3 + $0x1b0] sm:$0xf] %v507
  %v511 = vld [vmem:[#allocation2 + $0x28] sm:$0x1f]
  %v513 = vrot.slane %v511, 4
  %515 = vst [vmem:[#allocation3 + $0x1b0] sm:$0xf0] %v513
  %516 = vst [vmem:[#allocation3 + $0x278] sm:$0x1] %v513
  %v517 = vld [vmem:[#allocation2 + $0x55] sm:$0x1f]
  %v519 = vrot.slane %v517, 7
  %521 = vst [vmem:[#allocation3 + $0x278] sm:$0x3e] %v519
  %v522 = vld [vmem:[#allocation2 + $0x5e] sm:$0x1f]
  %v524 = vrot.slane %v522, 2
  %526 = vst [vmem:[#allocation3 + $0x278] sm:$0xc0] %v524
  %527 = vst [vmem:[#allocation3 + $0x340] sm:$0x7] %v524
  %v528 = vld [vmem:[#allocation2 + $0x67] sm:$0x1f]
  %v530 = vrot.slane %v528, 5
  %532 = vst [vmem:[#allocation3 + $0x340] sm:$0xf8] %v530
  %v533 = vld [vmem:[#allocation2 + $0x70] sm:$0x1f]
  %534 = vst [vmem:[#allocation3 + $0x408] sm:$0x1f] %v533
  %v535 = vld [vmem:[#allocation2 + $0x79] sm:$0x1f]
  %v537 = vrot.slane %v535, 3
  %539 = vst [vmem:[#allocation3 + $0x408] sm:$0xe0] %v537
  %540 = vst [vmem:[#allocation3 + $0x4d0] sm:$0x3] %v537
  %v541 = vld [vmem:[#allocation2 + $0x9] sm:$0x1f]
  %542 = vst [vmem:[#allocation3 + $0x28] sm:$0x1f] %v541
  %v543 = vld [vmem:[#allocation2 + $0x12] sm:$0x1f]
  %v545 = vrot.slane %v543, 3
  %547 = vst [vmem:[#allocation3 + $0x28] sm:$0xe0] %v545
  %548 = vst [vmem:[#allocation3 + $0xf0] sm:$0x3] %v545
  %v549 = vld [vmem:[#allocation2 + $0x1b] sm:$0x1f]
  %v551 = vrot.slane %v549, 6
  %553 = vst [vmem:[#allocation3 + $0xf0] sm:$0x7c] %v551
  %v554 = vld [vmem:[#allocation2 + $0x24] sm:$0x1f]
  %v556 = vrot.slane %v554, 1
  %558 = vst [vmem:[#allocation3 + $0xf0] sm:$0x80] %v556
  %559 = vst [vmem:[#allocation3 + $0x1b8] sm:$0xf] %v556
  %v560 = vld [vmem:[#allocation2 + $0x2d] sm:$0x1f]
  %v562 = vrot.slane %v560, 4
  %564 = vst [vmem:[#allocation3 + $0x1b8] sm:$0xf0] %v562
  %565 = vst [vmem:[#allocation3 + $0x280] sm:$0x1] %v562
  %v566 = vld [vmem:[#allocation2 + $0x5a] sm:$0x1f]
  %v568 = vrot.slane %v566, 7
  %570 = vst [vmem:[#allocation3 + $0x280] sm:$0x3e] %v568
  %v571 = vld [vmem:[#allocation2 + $0x63] sm:$0x1f]
  %v573 = vrot.slane %v571, 2
  %575 = vst [vmem:[#allocation3 + $0x280] sm:$0xc0] %v573
  %576 = vst [vmem:[#allocation3 + $0x348] sm:$0x7] %v573
  %v577 = vld [vmem:[#allocation2 + $0x6c] sm:$0x1f]
  %v579 = vrot.slane %v577, 5
  %581 = vst [vmem:[#allocation3 + $0x348] sm:$0xf8] %v579
  %v582 = vld [vmem:[#allocation2 + $0x75] sm:$0x1f]
  %583 = vst [vmem:[#allocation3 + $0x410] sm:$0x1f] %v582
  %v584 = vld [vmem:[#allocation2 + $0x7e] sm:$0x1f]
  %v586 = vrot.slane %v584, 3
  %588 = vst [vmem:[#allocation3 + $0x410] sm:$0xe0] %v586
  %589 = vst [vmem:[#allocation3 + $0x4d8] sm:$0x3] %v586
  %v590 = vld [vmem:[#allocation2 + $0xa] sm:$0x1f]
  %591 = vst [vmem:[#allocation3 + $0x30] sm:$0x1f] %v590
  %v592 = vld [vmem:[#allocation2 + $0x13] sm:$0x1f]
  %v594 = vrot.slane %v592, 3
  %596 = vst [vmem:[#allocation3 + $0x30] sm:$0xe0] %v594
  %597 = vst [vmem:[#allocation3 + $0xf8] sm:$0x3] %v594
  %v598 = vld [vmem:[#allocation2 + $0x1c] sm:$0x1f]
  %v600 = vrot.slane %v598, 6
  %602 = vst [vmem:[#allocation3 + $0xf8] sm:$0x7c] %v600
  %v603 = vld [vmem:[#allocation2 + $0x25] sm:$0x1f]
  %v605 = vrot.slane %v603, 1
  %607 = vst [vmem:[#allocation3 + $0xf8] sm:$0x80] %v605
  %608 = vst [vmem:[#allocation3 + $0x1c0] sm:$0xf] %v605
  %v609 = vld [vmem:[#allocation2 + $0x2e] sm:$0x1f]
  %v611 = vrot.slane %v609, 4
  %613 = vst [vmem:[#allocation3 + $0x1c0] sm:$0xf0] %v611
  %614 = vst [vmem:[#allocation3 + $0x288] sm:$0x1] %v611
  %v615 = vld [vmem:[#allocation2 + $0x5b] sm:$0x1f]
  %v617 = vrot.slane %v615, 7
  %619 = vst [vmem:[#allocation3 + $0x288] sm:$0x3e] %v617
  %v620 = vld [vmem:[#allocation2 + $0x64] sm:$0x1f]
  %v622 = vrot.slane %v620, 2
  %624 = vst [vmem:[#allocation3 + $0x288] sm:$0xc0] %v622
  %625 = vst [vmem:[#allocation3 + $0x350] sm:$0x7] %v622
  %v626 = vld [vmem:[#allocation2 + $0x6d] sm:$0x1f]
  %v628 = vrot.slane %v626, 5
  %630 = vst [vmem:[#allocation3 + $0x350] sm:$0xf8] %v628
  %v631 = vld [vmem:[#allocation2 + $0x76] sm:$0x1f]
  %632 = vst [vmem:[#allocation3 + $0x418] sm:$0x1f] %v631
  %v633 = vld [vmem:[#allocation2 + $0x7f] sm:$0x1f]
  %v635 = vrot.slane %v633, 3
  %637 = vst [vmem:[#allocation3 + $0x418] sm:$0xe0] %v635
  %638 = vst [vmem:[#allocation3 + $0x4e0] sm:$0x3] %v635
  %v639 = vld [vmem:[#allocation2 + $0xb] sm:$0x1f]
  %640 = vst [vmem:[#allocation3 + $0x38] sm:$0x1f] %v639
  %v641 = vld [vmem:[#allocation2 + $0x14] sm:$0x1f]
  %v643 = vrot.slane %v641, 3
  %645 = vst [vmem:[#allocation3 + $0x38] sm:$0xe0] %v643
  %646 = vst [vmem:[#allocation3 + $0x100] sm:$0x3] %v643
  %v647 = vld [vmem:[#allocation2 + $0x1d] sm:$0x1f]
  %v649 = vrot.slane %v647, 6
  %651 = vst [vmem:[#allocation3 + $0x100] sm:$0x7c] %v649
  %v652 = vld [vmem:[#allocation2 + $0x26] sm:$0x1f]
  %v654 = vrot.slane %v652, 1
  %656 = vst [vmem:[#allocation3 + $0x100] sm:$0x80] %v654
  %657 = vst [vmem:[#allocation3 + $0x1c8] sm:$0xf] %v654
  %v658 = vld [vmem:[#allocation2 + $0x2f] sm:$0x1f]
  %v660 = vrot.slane %v658, 4
  %662 = vst [vmem:[#allocation3 + $0x1c8] sm:$0xf0] %v660
  %663 = vst [vmem:[#allocation3 + $0x290] sm:$0x1] %v660
  %v664 = vld [vmem:[#allocation2 + $0x5c] sm:$0x1f]
  %v666 = vrot.slane %v664, 7
  %668 = vst [vmem:[#allocation3 + $0x290] sm:$0x3e] %v666
  %v669 = vld [vmem:[#allocation2 + $0x65] sm:$0x1f]
  %v671 = vrot.slane %v669, 2
  %673 = vst [vmem:[#allocation3 + $0x290] sm:$0xc0] %v671
  %674 = vst [vmem:[#allocation3 + $0x358] sm:$0x7] %v671
  %v675 = vld [vmem:[#allocation2 + $0x6e] sm:$0x1f]
  %v677 = vrot.slane %v675, 5
  %679 = vst [vmem:[#allocation3 + $0x358] sm:$0xf8] %v677
  %v680 = vld [vmem:[#allocation2 + $0x77] sm:$0x1f]
  %681 = vst [vmem:[#allocation3 + $0x420] sm:$0x1f] %v680
  %v682 = vld [vmem:[#allocation2 + $0x80] sm:$0x1f]
  %v684 = vrot.slane %v682, 3
  %686 = vst [vmem:[#allocation3 + $0x420] sm:$0xe0] %v684
  %687 = vst [vmem:[#allocation3 + $0x4e8] sm:$0x3] %v684
  %v688 = vld [vmem:[#allocation2 + $0xc] sm:$0x1f]
  %689 = vst [vmem:[#allocation3 + $0x40] sm:$0x1f] %v688
  %v690 = vld [vmem:[#allocation2 + $0x15] sm:$0x1f]
  %v692 = vrot.slane %v690, 3
  %694 = vst [vmem:[#allocation3 + $0x40] sm:$0xe0] %v692
  %695 = vst [vmem:[#allocation3 + $0x108] sm:$0x3] %v692
  %v696 = vld [vmem:[#allocation2 + $0x1e] sm:$0x1f]
  %v698 = vrot.slane %v696, 6
  %700 = vst [vmem:[#allocation3 + $0x108] sm:$0x7c] %v698
  %v701 = vld [vmem:[#allocation2 + $0x27] sm:$0x1f]
  %v703 = vrot.slane %v701, 1
  %705 = vst [vmem:[#allocation3 + $0x108] sm:$0x80] %v703
  %706 = vst [vmem:[#allocation3 + $0x1d0] sm:$0xf] %v703
  %v707 = vld [vmem:[#allocation2 + $0x30] sm:$0x1f]
  %v709 = vrot.slane %v707, 4
  %711 = vst [vmem:[#allocation3 + $0x1d0] sm:$0xf0] %v709
  %712 = vst [vmem:[#allocation3 + $0x298] sm:$0x1] %v709
  %v713 = vld [vmem:[#allocation2 + $0x5d] sm:$0x1f]
  %v715 = vrot.slane %v713, 7
  %717 = vst [vmem:[#allocation3 + $0x298] sm:$0x3e] %v715
  %v718 = vld [vmem:[#allocation2 + $0x66] sm:$0x1f]
  %v720 = vrot.slane %v718, 2
  %722 = vst [vmem:[#allocation3 + $0x298] sm:$0xc0] %v720
  %723 = vst [vmem:[#allocation3 + $0x360] sm:$0x7] %v720
  %v724 = vld [vmem:[#allocation2 + $0x6f] sm:$0x1f]
  %v726 = vrot.slane %v724, 5
  %728 = vst [vmem:[#allocation3 + $0x360] sm:$0xf8] %v726
  %v729 = vld [vmem:[#allocation2 + $0x78] sm:$0x1f]
  %730 = vst [vmem:[#allocation3 + $0x428] sm:$0x1f] %v729
  %v731 = vld [vmem:[#allocation2 + $0x81] sm:$0x1f]
  %v733 = vrot.slane %v731, 3
  %735 = vst [vmem:[#allocation3 + $0x428] sm:$0xe0] %v733
  %736 = vst [vmem:[#allocation3 + $0x4f0] sm:$0x3] %v733
  %v737 = vld [vmem:[#allocation2 + $0xd] sm:$0x1f]
  %738 = vst [vmem:[#allocation3 + $0x48] sm:$0x1f] %v737
  %v739 = vld [vmem:[#allocation2 + $0x16] sm:$0x1f]
  %v741 = vrot.slane %v739, 3
  %743 = vst [vmem:[#allocation3 + $0x48] sm:$0xe0] %v741
  %744 = vst [vmem:[#allocation3 + $0x110] sm:$0x3] %v741
  %v745 = vld [vmem:[#allocation2 + $0x1f] sm:$0x1f]
  %v747 = vrot.slane %v745, 6
  %749 = vst [vmem:[#allocation3 + $0x110] sm:$0x7c] %v747
  %v750 = vld [vmem:[#allocation2 + $0x28] sm:$0x1f]
  %v752 = vrot.slane %v750, 1
  %754 = vst [vmem:[#allocation3 + $0x110] sm:$0x80] %v752
  %755 = vst [vmem:[#allocation3 + $0x1d8] sm:$0xf] %v752
  %v756 = vld [vmem:[#allocation2 + $0x31] sm:$0x1f]
  %v758 = vrot.slane %v756, 4
  %760 = vst [vmem:[#allocation3 + $0x1d8] sm:$0xf0] %v758
  %761 = vst [vmem:[#allocation3 + $0x2a0] sm:$0x1] %v758
  %v762 = vld [vmem:[#allocation2 + $0x5e] sm:$0x1f]
  %v764 = vrot.slane %v762, 7
  %766 = vst [vmem:[#allocation3 + $0x2a0] sm:$0x3e] %v764
  %v767 = vld [vmem:[#allocation2 + $0x67] sm:$0x1f]
  %v769 = vrot.slane %v767, 2
  %771 = vst [vmem:[#allocation3 + $0x2a0] sm:$0xc0] %v769
  %772 = vst [vmem:[#allocation3 + $0x368] sm:$0x7] %v769
  %v773 = vld [vmem:[#allocation2 + $0x70] sm:$0x1f]
  %v775 = vrot.slane %v773, 5
  %777 = vst [vmem:[#allocation3 + $0x368] sm:$0xf8] %v775
  %v778 = vld [vmem:[#allocation2 + $0x79] sm:$0x1f]
  %779 = vst [vmem:[#allocation3 + $0x430] sm:$0x1f] %v778
  %v780 = vld [vmem:[#allocation2 + $0x82] sm:$0x1f]
  %v782 = vrot.slane %v780, 3
  %784 = vst [vmem:[#allocation3 + $0x430] sm:$0xe0] %v782
  %785 = vst [vmem:[#allocation3 + $0x4f8] sm:$0x3] %v782
  %v786 = vld [vmem:[#allocation2 + $0x12] sm:$0x1f]
  %787 = vst [vmem:[#allocation3 + $0x50] sm:$0x1f] %v786
  %v788 = vld [vmem:[#allocation2 + $0x1b] sm:$0x1f]
  %v790 = vrot.slane %v788, 3
  %792 = vst [vmem:[#allocation3 + $0x50] sm:$0xe0] %v790
  %793 = vst [vmem:[#allocation3 + $0x118] sm:$0x3] %v790
  %v794 = vld [vmem:[#allocation2 + $0x24] sm:$0x1f]
  %v796 = vrot.slane %v794, 6
  %798 = vst [vmem:[#allocation3 + $0x118] sm:$0x7c] %v796
  %v799 = vld [vmem:[#allocation2 + $0x2d] sm:$0x1f]
  %v801 = vrot.slane %v799, 1
  %803 = vst [vmem:[#allocation3 + $0x118] sm:$0x80] %v801
  %804 = vst [vmem:[#allocation3 + $0x1e0] sm:$0xf] %v801
  %v805 = vld [vmem:[#allocation2 + $0x36] sm:$0x1f]
  %v807 = vrot.slane %v805, 4
  %809 = vst [vmem:[#allocation3 + $0x1e0] sm:$0xf0] %v807
  %810 = vst [vmem:[#allocation3 + $0x2a8] sm:$0x1] %v807
  %v811 = vld [vmem:[#allocation2 + $0x63] sm:$0x1f]
  %v813 = vrot.slane %v811, 7
  %815 = vst [vmem:[#allocation3 + $0x2a8] sm:$0x3e] %v813
  %v816 = vld [vmem:[#allocation2 + $0x6c] sm:$0x1f]
  %v818 = vrot.slane %v816, 2
  %820 = vst [vmem:[#allocation3 + $0x2a8] sm:$0xc0] %v818
  %821 = vst [vmem:[#allocation3 + $0x370] sm:$0x7] %v818
  %v822 = vld [vmem:[#allocation2 + $0x75] sm:$0x1f]
  %v824 = vrot.slane %v822, 5
  %826 = vst [vmem:[#allocation3 + $0x370] sm:$0xf8] %v824
  %v827 = vld [vmem:[#allocation2 + $0x7e] sm:$0x1f]
  %828 = vst [vmem:[#allocation3 + $0x438] sm:$0x1f] %v827
  %v829 = vld [vmem:[#allocation2 + $0x87] sm:$0x1f]
  %v831 = vrot.slane %v829, 3
  %833 = vst [vmem:[#allocation3 + $0x438] sm:$0xe0] %v831
  %834 = vst [vmem:[#allocation3 + $0x500] sm:$0x3] %v831
  %v835 = vld [vmem:[#allocation2 + $0x13] sm:$0x1f]
  %836 = vst [vmem:[#allocation3 + $0x58] sm:$0x1f] %v835
  %v837 = vld [vmem:[#allocation2 + $0x1c] sm:$0x1f]
  %v839 = vrot.slane %v837, 3
  %841 = vst [vmem:[#allocation3 + $0x58] sm:$0xe0] %v839
  %842 = vst [vmem:[#allocation3 + $0x120] sm:$0x3] %v839
  %v843 = vld [vmem:[#allocation2 + $0x25] sm:$0x1f]
  %v845 = vrot.slane %v843, 6
  %847 = vst [vmem:[#allocation3 + $0x120] sm:$0x7c] %v845
  %v848 = vld [vmem:[#allocation2 + $0x2e] sm:$0x1f]
  %v850 = vrot.slane %v848, 1
  %852 = vst [vmem:[#allocation3 + $0x120] sm:$0x80] %v850
  %853 = vst [vmem:[#allocation3 + $0x1e8] sm:$0xf] %v850
  %v854 = vld [vmem:[#allocation2 + $0x37] sm:$0x1f]
  %v856 = vrot.slane %v854, 4
  %858 = vst [vmem:[#allocation3 + $0x1e8] sm:$0xf0] %v856
  %859 = vst [vmem:[#allocation3 + $0x2b0] sm:$0x1] %v856
  %v860 = vld [vmem:[#allocation2 + $0x64] sm:$0x1f]
  %v862 = vrot.slane %v860, 7
  %864 = vst [vmem:[#allocation3 + $0x2b0] sm:$0x3e] %v862
  %v865 = vld [vmem:[#allocation2 + $0x6d] sm:$0x1f]
  %v867 = vrot.slane %v865, 2
  %869 = vst [vmem:[#allocation3 + $0x2b0] sm:$0xc0] %v867
  %870 = vst [vmem:[#allocation3 + $0x378] sm:$0x7] %v867
  %v871 = vld [vmem:[#allocation2 + $0x76] sm:$0x1f]
  %v873 = vrot.slane %v871, 5
  %875 = vst [vmem:[#allocation3 + $0x378] sm:$0xf8] %v873
  %v876 = vld [vmem:[#allocation2 + $0x7f] sm:$0x1f]
  %877 = vst [vmem:[#allocation3 + $0x440] sm:$0x1f] %v876
  %v878 = vld [vmem:[#allocation2 + $0x88] sm:$0x1f]
  %v880 = vrot.slane %v878, 3
  %882 = vst [vmem:[#allocation3 + $0x440] sm:$0xe0] %v880
  %883 = vst [vmem:[#allocation3 + $0x508] sm:$0x3] %v880
  %v884 = vld [vmem:[#allocation2 + $0x14] sm:$0x1f]
  %885 = vst [vmem:[#allocation3 + $0x60] sm:$0x1f] %v884
  %v886 = vld [vmem:[#allocation2 + $0x1d] sm:$0x1f]
  %v888 = vrot.slane %v886, 3
  %890 = vst [vmem:[#allocation3 + $0x60] sm:$0xe0] %v888
  %891 = vst [vmem:[#allocation3 + $0x128] sm:$0x3] %v888
  %v892 = vld [vmem:[#allocation2 + $0x26] sm:$0x1f]
  %v894 = vrot.slane %v892, 6
  %896 = vst [vmem:[#allocation3 + $0x128] sm:$0x7c] %v894
  %v897 = vld [vmem:[#allocation2 + $0x2f] sm:$0x1f]
  %v899 = vrot.slane %v897, 1
  %901 = vst [vmem:[#allocation3 + $0x128] sm:$0x80] %v899
  %902 = vst [vmem:[#allocation3 + $0x1f0] sm:$0xf] %v899
  %v903 = vld [vmem:[#allocation2 + $0x38] sm:$0x1f]
  %v905 = vrot.slane %v903, 4
  %907 = vst [vmem:[#allocation3 + $0x1f0] sm:$0xf0] %v905
  %908 = vst [vmem:[#allocation3 + $0x2b8] sm:$0x1] %v905
  %v909 = vld [vmem:[#allocation2 + $0x65] sm:$0x1f]
  %v911 = vrot.slane %v909, 7
  %913 = vst [vmem:[#allocation3 + $0x2b8] sm:$0x3e] %v911
  %v914 = vld [vmem:[#allocation2 + $0x6e] sm:$0x1f]
  %v916 = vrot.slane %v914, 2
  %918 = vst [vmem:[#allocation3 + $0x2b8] sm:$0xc0] %v916
  %919 = vst [vmem:[#allocation3 + $0x380] sm:$0x7] %v916
  %v920 = vld [vmem:[#allocation2 + $0x77] sm:$0x1f]
  %v922 = vrot.slane %v920, 5
  %924 = vst [vmem:[#allocation3 + $0x380] sm:$0xf8] %v922
  %v925 = vld [vmem:[#allocation2 + $0x80] sm:$0x1f]
  %926 = vst [vmem:[#allocation3 + $0x448] sm:$0x1f] %v925
  %v927 = vld [vmem:[#allocation2 + $0x89] sm:$0x1f]
  %v929 = vrot.slane %v927, 3
  %931 = vst [vmem:[#allocation3 + $0x448] sm:$0xe0] %v929
  %932 = vst [vmem:[#allocation3 + $0x510] sm:$0x3] %v929
  %v933 = vld [vmem:[#allocation2 + $0x15] sm:$0x1f]
  %934 = vst [vmem:[#allocation3 + $0x68] sm:$0x1f] %v933
  %v935 = vld [vmem:[#allocation2 + $0x1e] sm:$0x1f]
  %v937 = vrot.slane %v935, 3
  %939 = vst [vmem:[#allocation3 + $0x68] sm:$0xe0] %v937
  %940 = vst [vmem:[#allocation3 + $0x130] sm:$0x3] %v937
  %v941 = vld [vmem:[#allocation2 + $0x27] sm:$0x1f]
  %v943 = vrot.slane %v941, 6
  %945 = vst [vmem:[#allocation3 + $0x130] sm:$0x7c] %v943
  %v946 = vld [vmem:[#allocation2 + $0x30] sm:$0x1f]
  %v948 = vrot.slane %v946, 1
  %950 = vst [vmem:[#allocation3 + $0x130] sm:$0x80] %v948
  %951 = vst [vmem:[#allocation3 + $0x1f8] sm:$0xf] %v948
  %v952 = vld [vmem:[#allocation2 + $0x39] sm:$0x1f]
  %v954 = vrot.slane %v952, 4
  %956 = vst [vmem:[#allocation3 + $0x1f8] sm:$0xf0] %v954
  %957 = vst [vmem:[#allocation3 + $0x2c0] sm:$0x1] %v954
  %v958 = vld [vmem:[#allocation2 + $0x66] sm:$0x1f]
  %v960 = vrot.slane %v958, 7
  %962 = vst [vmem:[#allocation3 + $0x2c0] sm:$0x3e] %v960
  %v963 = vld [vmem:[#allocation2 + $0x6f] sm:$0x1f]
  %v965 = vrot.slane %v963, 2
  %967 = vst [vmem:[#allocation3 + $0x2c0] sm:$0xc0] %v965
  %968 = vst [vmem:[#allocation3 + $0x388] sm:$0x7] %v965
  %v969 = vld [vmem:[#allocation2 + $0x78] sm:$0x1f]
  %v971 = vrot.slane %v969, 5
  %973 = vst [vmem:[#allocation3 + $0x388] sm:$0xf8] %v971
  %v974 = vld [vmem:[#allocation2 + $0x81] sm:$0x1f]
  %975 = vst [vmem:[#allocation3 + $0x450] sm:$0x1f] %v974
  %v976 = vld [vmem:[#allocation2 + $0x8a] sm:$0x1f]
  %v978 = vrot.slane %v976, 3
  %980 = vst [vmem:[#allocation3 + $0x450] sm:$0xe0] %v978
  %981 = vst [vmem:[#allocation3 + $0x518] sm:$0x3] %v978
  %v982 = vld [vmem:[#allocation2 + $0x16] sm:$0x1f]
  %983 = vst [vmem:[#allocation3 + $0x70] sm:$0x1f] %v982
  %v984 = vld [vmem:[#allocation2 + $0x1f] sm:$0x1f]
  %v986 = vrot.slane %v984, 3
  %988 = vst [vmem:[#allocation3 + $0x70] sm:$0xe0] %v986
  %989 = vst [vmem:[#allocation3 + $0x138] sm:$0x3] %v986
  %v990 = vld [vmem:[#allocation2 + $0x28] sm:$0x1f]
  %v992 = vrot.slane %v990, 6
  %994 = vst [vmem:[#allocation3 + $0x138] sm:$0x7c] %v992
  %v995 = vld [vmem:[#allocation2 + $0x31] sm:$0x1f]
  %v997 = vrot.slane %v995, 1
  %999 = vst [vmem:[#allocation3 + $0x138] sm:$0x80] %v997
  %1000 = vst [vmem:[#allocation3 + $0x200] sm:$0xf] %v997
  %v1001 = vld [vmem:[#allocation2 + $0x3a] sm:$0x1f]
  %v1003 = vrot.slane %v1001, 4
  %1005 = vst [vmem:[#allocation3 + $0x200] sm:$0xf0] %v1003
  %1006 = vst [vmem:[#allocation3 + $0x2c8] sm:$0x1] %v1003
  %v1007 = vld [vmem:[#allocation2 + $0x67] sm:$0x1f]
  %v1009 = vrot.slane %v1007, 7
  %1011 = vst [vmem:[#allocation3 + $0x2c8] sm:$0x3e] %v1009
  %v1012 = vld [vmem:[#allocation2 + $0x70] sm:$0x1f]
  %v1014 = vrot.slane %v1012, 2
  %1016 = vst [vmem:[#allocation3 + $0x2c8] sm:$0xc0] %v1014
  %1017 = vst [vmem:[#allocation3 + $0x390] sm:$0x7] %v1014
  %v1018 = vld [vmem:[#allocation2 + $0x79] sm:$0x1f]
  %v1020 = vrot.slane %v1018, 5
  %1022 = vst [vmem:[#allocation3 + $0x390] sm:$0xf8] %v1020
  %v1023 = vld [vmem:[#allocation2 + $0x82] sm:$0x1f]
  %1024 = vst [vmem:[#allocation3 + $0x458] sm:$0x1f] %v1023
  %v1025 = vld [vmem:[#allocation2 + $0x8b] sm:$0x1f]
  %v1027 = vrot.slane %v1025, 3
  %1029 = vst [vmem:[#allocation3 + $0x458] sm:$0xe0] %v1027
  %1030 = vst [vmem:[#allocation3 + $0x520] sm:$0x3] %v1027
  %v1031 = vld [vmem:[#allocation2 + $0x1b] sm:$0x1f]
  %1032 = vst [vmem:[#allocation3 + $0x78] sm:$0x1f] %v1031
  %v1033 = vld [vmem:[#allocation2 + $0x24] sm:$0x1f]
  %v1035 = vrot.slane %v1033, 3
  %1037 = vst [vmem:[#allocation3 + $0x78] sm:$0xe0] %v1035
  %1038 = vst [vmem:[#allocation3 + $0x140] sm:$0x3] %v1035
  %v1039 = vld [vmem:[#allocation2 + $0x2d] sm:$0x1f]
  %v1041 = vrot.slane %v1039, 6
  %1043 = vst [vmem:[#allocation3 + $0x140] sm:$0x7c] %v1041
  %v1044 = vld [vmem:[#allocation2 + $0x36] sm:$0x1f]
  %v1046 = vrot.slane %v1044, 1
  %1048 = vst [vmem:[#allocation3 + $0x140] sm:$0x80] %v1046
  %1049 = vst [vmem:[#allocation3 + $0x208] sm:$0xf] %v1046
  %v1050 = vld [vmem:[#allocation2 + $0x3f] sm:$0x1f]
  %v1052 = vrot.slane %v1050, 4
  %1054 = vst [vmem:[#allocation3 + $0x208] sm:$0xf0] %v1052
  %1055 = vst [vmem:[#allocation3 + $0x2d0] sm:$0x1] %v1052
  %v1056 = vld [vmem:[#allocation2 + $0x6c] sm:$0x1f]
  %v1058 = vrot.slane %v1056, 7
  %1060 = vst [vmem:[#allocation3 + $0x2d0] sm:$0x3e] %v1058
  %v1061 = vld [vmem:[#allocation2 + $0x75] sm:$0x1f]
  %v1063 = vrot.slane %v1061, 2
  %1065 = vst [vmem:[#allocation3 + $0x2d0] sm:$0xc0] %v1063
  %1066 = vst [vmem:[#allocation3 + $0x398] sm:$0x7] %v1063
  %v1067 = vld [vmem:[#allocation2 + $0x7e] sm:$0x1f]
  %v1069 = vrot.slane %v1067, 5
  %1071 = vst [vmem:[#allocation3 + $0x398] sm:$0xf8] %v1069
  %v1072 = vld [vmem:[#allocation2 + $0x87] sm:$0x1f]
  %1073 = vst [vmem:[#allocation3 + $0x460] sm:$0x1f] %v1072
  %v1074 = vld [vmem:[#allocation2 + $0x90] sm:$0x1f]
  %v1076 = vrot.slane %v1074, 3
  %1078 = vst [vmem:[#allocation3 + $0x460] sm:$0xe0] %v1076
  %1079 = vst [vmem:[#allocation3 + $0x528] sm:$0x3] %v1076
  %v1080 = vld [vmem:[#allocation2 + $0x1c] sm:$0x1f]
  %1081 = vst [vmem:[#allocation3 + $0x80] sm:$0x1f] %v1080
  %v1082 = vld [vmem:[#allocation2 + $0x25] sm:$0x1f]
  %v1084 = vrot.slane %v1082, 3
  %1086 = vst [vmem:[#allocation3 + $0x80] sm:$0xe0] %v1084
  %1087 = vst [vmem:[#allocation3 + $0x148] sm:$0x3] %v1084
  %v1088 = vld [vmem:[#allocation2 + $0x2e] sm:$0x1f]
  %v1090 = vrot.slane %v1088, 6
  %1092 = vst [vmem:[#allocation3 + $0x148] sm:$0x7c] %v1090
  %v1093 = vld [vmem:[#allocation2 + $0x37] sm:$0x1f]
  %v1095 = vrot.slane %v1093, 1
  %1097 = vst [vmem:[#allocation3 + $0x148] sm:$0x80] %v1095
  %1098 = vst [vmem:[#allocation3 + $0x210] sm:$0xf] %v1095
  %v1099 = vld [vmem:[#allocation2 + $0x40] sm:$0x1f]
  %v1101 = vrot.slane %v1099, 4
  %1103 = vst [vmem:[#allocation3 + $0x210] sm:$0xf0] %v1101
  %1104 = vst [vmem:[#allocation3 + $0x2d8] sm:$0x1] %v1101
  %v1105 = vld [vmem:[#allocation2 + $0x6d] sm:$0x1f]
  %v1107 = vrot.slane %v1105, 7
  %1109 = vst [vmem:[#allocation3 + $0x2d8] sm:$0x3e] %v1107
  %v1110 = vld [vmem:[#allocation2 + $0x76] sm:$0x1f]
  %v1112 = vrot.slane %v1110, 2
  %1114 = vst [vmem:[#allocation3 + $0x2d8] sm:$0xc0] %v1112
  %1115 = vst [vmem:[#allocation3 + $0x3a0] sm:$0x7] %v1112
  %v1116 = vld [vmem:[#allocation2 + $0x7f] sm:$0x1f]
  %v1118 = vrot.slane %v1116, 5
  %1120 = vst [vmem:[#allocation3 + $0x3a0] sm:$0xf8] %v1118
  %v1121 = vld [vmem:[#allocation2 + $0x88] sm:$0x1f]
  %1122 = vst [vmem:[#allocation3 + $0x468] sm:$0x1f] %v1121
  %v1123 = vld [vmem:[#allocation2 + $0x91] sm:$0x1f]
  %v1125 = vrot.slane %v1123, 3
  %1127 = vst [vmem:[#allocation3 + $0x468] sm:$0xe0] %v1125
  %1128 = vst [vmem:[#allocation3 + $0x530] sm:$0x3] %v1125
  %v1129 = vld [vmem:[#allocation2 + $0x1d] sm:$0x1f]
  %1130 = vst [vmem:[#allocation3 + $0x88] sm:$0x1f] %v1129
  %v1131 = vld [vmem:[#allocation2 + $0x26] sm:$0x1f]
  %v1133 = vrot.slane %v1131, 3
  %1135 = vst [vmem:[#allocation3 + $0x88] sm:$0xe0] %v1133
  %1136 = vst [vmem:[#allocation3 + $0x150] sm:$0x3] %v1133
  %v1137 = vld [vmem:[#allocation2 + $0x2f] sm:$0x1f]
  %v1139 = vrot.slane %v1137, 6
  %1141 = vst [vmem:[#allocation3 + $0x150] sm:$0x7c] %v1139
  %v1142 = vld [vmem:[#allocation2 + $0x38] sm:$0x1f]
  %v1144 = vrot.slane %v1142, 1
  %1146 = vst [vmem:[#allocation3 + $0x150] sm:$0x80] %v1144
  %1147 = vst [vmem:[#allocation3 + $0x218] sm:$0xf] %v1144
  %v1148 = vld [vmem:[#allocation2 + $0x41] sm:$0x1f]
  %v1150 = vrot.slane %v1148, 4
  %1152 = vst [vmem:[#allocation3 + $0x218] sm:$0xf0] %v1150
  %1153 = vst [vmem:[#allocation3 + $0x2e0] sm:$0x1] %v1150
  %v1154 = vld [vmem:[#allocation2 + $0x6e] sm:$0x1f]
  %v1156 = vrot.slane %v1154, 7
  %1158 = vst [vmem:[#allocation3 + $0x2e0] sm:$0x3e] %v1156
  %v1159 = vld [vmem:[#allocation2 + $0x77] sm:$0x1f]
  %v1161 = vrot.slane %v1159, 2
  %1163 = vst [vmem:[#allocation3 + $0x2e0] sm:$0xc0] %v1161
  %1164 = vst [vmem:[#allocation3 + $0x3a8] sm:$0x7] %v1161
  %v1165 = vld [vmem:[#allocation2 + $0x80] sm:$0x1f]
  %v1167 = vrot.slane %v1165, 5
  %1169 = vst [vmem:[#allocation3 + $0x3a8] sm:$0xf8] %v1167
  %v1170 = vld [vmem:[#allocation2 + $0x89] sm:$0x1f]
  %1171 = vst [vmem:[#allocation3 + $0x470] sm:$0x1f] %v1170
  %v1172 = vld [vmem:[#allocation2 + $0x92] sm:$0x1f]
  %v1174 = vrot.slane %v1172, 3
  %1176 = vst [vmem:[#allocation3 + $0x470] sm:$0xe0] %v1174
  %1177 = vst [vmem:[#allocation3 + $0x538] sm:$0x3] %v1174
  %v1178 = vld [vmem:[#allocation2 + $0x1e] sm:$0x1f]
  %1179 = vst [vmem:[#allocation3 + $0x90] sm:$0x1f] %v1178
  %v1180 = vld [vmem:[#allocation2 + $0x27] sm:$0x1f]
  %v1182 = vrot.slane %v1180, 3
  %1184 = vst [vmem:[#allocation3 + $0x90] sm:$0xe0] %v1182
  %1185 = vst [vmem:[#allocation3 + $0x158] sm:$0x3] %v1182
  %v1186 = vld [vmem:[#allocation2 + $0x30] sm:$0x1f]
  %v1188 = vrot.slane %v1186, 6
  %1190 = vst [vmem:[#allocation3 + $0x158] sm:$0x7c] %v1188
  %v1191 = vld [vmem:[#allocation2 + $0x39] sm:$0x1f]
  %v1193 = vrot.slane %v1191, 1
  %1195 = vst [vmem:[#allocation3 + $0x158] sm:$0x80] %v1193
  %1196 = vst [vmem:[#allocation3 + $0x220] sm:$0xf] %v1193
  %v1197 = vld [vmem:[#allocation2 + $0x42] sm:$0x1f]
  %v1199 = vrot.slane %v1197, 4
  %1201 = vst [vmem:[#allocation3 + $0x220] sm:$0xf0] %v1199
  %1202 = vst [vmem:[#allocation3 + $0x2e8] sm:$0x1] %v1199
  %v1203 = vld [vmem:[#allocation2 + $0x6f] sm:$0x1f]
  %v1205 = vrot.slane %v1203, 7
  %1207 = vst [vmem:[#allocation3 + $0x2e8] sm:$0x3e] %v1205
  %v1208 = vld [vmem:[#allocation2 + $0x78] sm:$0x1f]
  %v1210 = vrot.slane %v1208, 2
  %1212 = vst [vmem:[#allocation3 + $0x2e8] sm:$0xc0] %v1210
  %1213 = vst [vmem:[#allocation3 + $0x3b0] sm:$0x7] %v1210
  %v1214 = vld [vmem:[#allocation2 + $0x81] sm:$0x1f]
  %v1216 = vrot.slane %v1214, 5
  %1218 = vst [vmem:[#allocation3 + $0x3b0] sm:$0xf8] %v1216
  %v1219 = vld [vmem:[#allocation2 + $0x8a] sm:$0x1f]
  %1220 = vst [vmem:[#allocation3 + $0x478] sm:$0x1f] %v1219
  %v1221 = vld [vmem:[#allocation2 + $0x93] sm:$0x1f]
  %v1223 = vrot.slane %v1221, 3
  %1225 = vst [vmem:[#allocation3 + $0x478] sm:$0xe0] %v1223
  %1226 = vst [vmem:[#allocation3 + $0x540] sm:$0x3] %v1223
  %v1227 = vld [vmem:[#allocation2 + $0x1f] sm:$0x1f]
  %1228 = vst [vmem:[#allocation3 + $0x98] sm:$0x1f] %v1227
  %v1229 = vld [vmem:[#allocation2 + $0x28] sm:$0x1f]
  %v1231 = vrot.slane %v1229, 3
  %1233 = vst [vmem:[#allocation3 + $0x98] sm:$0xe0] %v1231
  %1234 = vst [vmem:[#allocation3 + $0x160] sm:$0x3] %v1231
  %v1235 = vld [vmem:[#allocation2 + $0x31] sm:$0x1f]
  %v1237 = vrot.slane %v1235, 6
  %1239 = vst [vmem:[#allocation3 + $0x160] sm:$0x7c] %v1237
  %v1240 = vld [vmem:[#allocation2 + $0x3a] sm:$0x1f]
  %v1242 = vrot.slane %v1240, 1
  %1244 = vst [vmem:[#allocation3 + $0x160] sm:$0x80] %v1242
  %1245 = vst [vmem:[#allocation3 + $0x228] sm:$0xf] %v1242
  %v1246 = vld [vmem:[#allocation2 + $0x43] sm:$0x1f]
  %v1248 = vrot.slane %v1246, 4
  %1250 = vst [vmem:[#allocation3 + $0x228] sm:$0xf0] %v1248
  %1251 = vst [vmem:[#allocation3 + $0x2f0] sm:$0x1] %v1248
  %v1252 = vld [vmem:[#allocation2 + $0x70] sm:$0x1f]
  %v1254 = vrot.slane %v1252, 7
  %1256 = vst [vmem:[#allocation3 + $0x2f0] sm:$0x3e] %v1254
  %v1257 = vld [vmem:[#allocation2 + $0x79] sm:$0x1f]
  %v1259 = vrot.slane %v1257, 2
  %1261 = vst [vmem:[#allocation3 + $0x2f0] sm:$0xc0] %v1259
  %1262 = vst [vmem:[#allocation3 + $0x3b8] sm:$0x7] %v1259
  %v1263 = vld [vmem:[#allocation2 + $0x82] sm:$0x1f]
  %v1265 = vrot.slane %v1263, 5
  %1267 = vst [vmem:[#allocation3 + $0x3b8] sm:$0xf8] %v1265
  %v1268 = vld [vmem:[#allocation2 + $0x8b] sm:$0x1f]
  %1269 = vst [vmem:[#allocation3 + $0x480] sm:$0x1f] %v1268
  %v1270 = vld [vmem:[#allocation2 + $0x94] sm:$0x1f]
  %v1272 = vrot.slane %v1270, 3
  %1274 = vst [vmem:[#allocation3 + $0x480] sm:$0xe0] %v1272
  %1275 = vst [vmem:[#allocation3 + $0x548] sm:$0x3] %v1272
  %v1276 = vld [vmem:[#allocation2 + $0x24] sm:$0x1f]
  %1277 = vst [vmem:[#allocation3 + $0xa0] sm:$0x1f] %v1276
  %v1278 = vld [vmem:[#allocation2 + $0x2d] sm:$0x1f]
  %v1280 = vrot.slane %v1278, 3
  %1282 = vst [vmem:[#allocation3 + $0xa0] sm:$0xe0] %v1280
  %1283 = vst [vmem:[#allocation3 + $0x168] sm:$0x3] %v1280
  %v1284 = vld [vmem:[#allocation2 + $0x36] sm:$0x1f]
  %v1286 = vrot.slane %v1284, 6
  %1288 = vst [vmem:[#allocation3 + $0x168] sm:$0x7c] %v1286
  %v1289 = vld [vmem:[#allocation2 + $0x3f] sm:$0x1f]
  %v1291 = vrot.slane %v1289, 1
  %1293 = vst [vmem:[#allocation3 + $0x168] sm:$0x80] %v1291
  %1294 = vst [vmem:[#allocation3 + $0x230] sm:$0xf] %v1291
  %v1295 = vld [vmem:[#allocation2 + $0x48] sm:$0x1f]
  %v1297 = vrot.slane %v1295, 4
  %1299 = vst [vmem:[#allocation3 + $0x230] sm:$0xf0] %v1297
  %1300 = vst [vmem:[#allocation3 + $0x2f8] sm:$0x1] %v1297
  %v1301 = vld [vmem:[#allocation2 + $0x75] sm:$0x1f]
  %v1303 = vrot.slane %v1301, 7
  %1305 = vst [vmem:[#allocation3 + $0x2f8] sm:$0x3e] %v1303
  %v1306 = vld [vmem:[#allocation2 + $0x7e] sm:$0x1f]
  %v1308 = vrot.slane %v1306, 2
  %1310 = vst [vmem:[#allocation3 + $0x2f8] sm:$0xc0] %v1308
  %1311 = vst [vmem:[#allocation3 + $0x3c0] sm:$0x7] %v1308
  %v1312 = vld [vmem:[#allocation2 + $0x87] sm:$0x1f]
  %v1314 = vrot.slane %v1312, 5
  %1316 = vst [vmem:[#allocation3 + $0x3c0] sm:$0xf8] %v1314
  %v1317 = vld [vmem:[#allocation2 + $0x90] sm:$0x1f]
  %1318 = vst [vmem:[#allocation3 + $0x488] sm:$0x1f] %v1317
  %v1319 = vld [vmem:[#allocation2 + $0x99] sm:$0x1f]
  %v1321 = vrot.slane %v1319, 3
  %1323 = vst [vmem:[#allocation3 + $0x488] sm:$0xe0] %v1321
  %1324 = vst [vmem:[#allocation3 + $0x550] sm:$0x3] %v1321
  %v1325 = vld [vmem:[#allocation2 + $0x25] sm:$0x1f]
  %1326 = vst [vmem:[#allocation3 + $0xa8] sm:$0x1f] %v1325
  %v1327 = vld [vmem:[#allocation2 + $0x2e] sm:$0x1f]
  %v1329 = vrot.slane %v1327, 3
  %1331 = vst [vmem:[#allocation3 + $0xa8] sm:$0xe0] %v1329
  %1332 = vst [vmem:[#allocation3 + $0x170] sm:$0x3] %v1329
  %v1333 = vld [vmem:[#allocation2 + $0x37] sm:$0x1f]
  %v1335 = vrot.slane %v1333, 6
  %1337 = vst [vmem:[#allocation3 + $0x170] sm:$0x7c] %v1335
  %v1338 = vld [vmem:[#allocation2 + $0x40] sm:$0x1f]
  %v1340 = vrot.slane %v1338, 1
  %1342 = vst [vmem:[#allocation3 + $0x170] sm:$0x80] %v1340
  %1343 = vst [vmem:[#allocation3 + $0x238] sm:$0xf] %v1340
  %v1344 = vld [vmem:[#allocation2 + $0x49] sm:$0x1f]
  %v1346 = vrot.slane %v1344, 4
  %1348 = vst [vmem:[#allocation3 + $0x238] sm:$0xf0] %v1346
  %1349 = vst [vmem:[#allocation3 + $0x300] sm:$0x1] %v1346
  %v1350 = vld [vmem:[#allocation2 + $0x76] sm:$0x1f]
  %v1352 = vrot.slane %v1350, 7
  %1354 = vst [vmem:[#allocation3 + $0x300] sm:$0x3e] %v1352
  %v1355 = vld [vmem:[#allocation2 + $0x7f] sm:$0x1f]
  %v1357 = vrot.slane %v1355, 2
  %1359 = vst [vmem:[#allocation3 + $0x300] sm:$0xc0] %v1357
  %1360 = vst [vmem:[#allocation3 + $0x3c8] sm:$0x7] %v1357
  %v1361 = vld [vmem:[#allocation2 + $0x88] sm:$0x1f]
  %v1363 = vrot.slane %v1361, 5
  %1365 = vst [vmem:[#allocation3 + $0x3c8] sm:$0xf8] %v1363
  %v1366 = vld [vmem:[#allocation2 + $0x91] sm:$0x1f]
  %1367 = vst [vmem:[#allocation3 + $0x490] sm:$0x1f] %v1366
  %v1368 = vld [vmem:[#allocation2 + $0x9a] sm:$0x1f]
  %v1370 = vrot.slane %v1368, 3
  %1372 = vst [vmem:[#allocation3 + $0x490] sm:$0xe0] %v1370
  %1373 = vst [vmem:[#allocation3 + $0x558] sm:$0x3] %v1370
  %v1374 = vld [vmem:[#allocation2 + $0x26] sm:$0x1f]
  %1375 = vst [vmem:[#allocation3 + $0xb0] sm:$0x1f] %v1374
  %v1376 = vld [vmem:[#allocation2 + $0x2f] sm:$0x1f]
  %v1378 = vrot.slane %v1376, 3
  %1380 = vst [vmem:[#allocation3 + $0xb0] sm:$0xe0] %v1378
  %1381 = vst [vmem:[#allocation3 + $0x178] sm:$0x3] %v1378
  %v1382 = vld [vmem:[#allocation2 + $0x38] sm:$0x1f]
  %v1384 = vrot.slane %v1382, 6
  %1386 = vst [vmem:[#allocation3 + $0x178] sm:$0x7c] %v1384
  %v1387 = vld [vmem:[#allocation2 + $0x41] sm:$0x1f]
  %v1389 = vrot.slane %v1387, 1
  %1391 = vst [vmem:[#allocation3 + $0x178] sm:$0x80] %v1389
  %1392 = vst [vmem:[#allocation3 + $0x240] sm:$0xf] %v1389
  %v1393 = vld [vmem:[#allocation2 + $0x4a] sm:$0x1f]
  %v1395 = vrot.slane %v1393, 4
  %1397 = vst [vmem:[#allocation3 + $0x240] sm:$0xf0] %v1395
  %1398 = vst [vmem:[#allocation3 + $0x308] sm:$0x1] %v1395
  %v1399 = vld [vmem:[#allocation2 + $0x77] sm:$0x1f]
  %v1401 = vrot.slane %v1399, 7
  %1403 = vst [vmem:[#allocation3 + $0x308] sm:$0x3e] %v1401
  %v1404 = vld [vmem:[#allocation2 + $0x80] sm:$0x1f]
  %v1406 = vrot.slane %v1404, 2
  %1408 = vst [vmem:[#allocation3 + $0x308] sm:$0xc0] %v1406
  %1409 = vst [vmem:[#allocation3 + $0x3d0] sm:$0x7] %v1406
  %v1410 = vld [vmem:[#allocation2 + $0x89] sm:$0x1f]
  %v1412 = vrot.slane %v1410, 5
  %1414 = vst [vmem:[#allocation3 + $0x3d0] sm:$0xf8] %v1412
  %v1415 = vld [vmem:[#allocation2 + $0x92] sm:$0x1f]
  %1416 = vst [vmem:[#allocation3 + $0x498] sm:$0x1f] %v1415
  %v1417 = vld [vmem:[#allocation2 + $0x9b] sm:$0x1f]
  %v1419 = vrot.slane %v1417, 3
  %1421 = vst [vmem:[#allocation3 + $0x498] sm:$0xe0] %v1419
  %1422 = vst [vmem:[#allocation3 + $0x560] sm:$0x3] %v1419
  %v1423 = vld [vmem:[#allocation2 + $0x27] sm:$0x1f]
  %1424 = vst [vmem:[#allocation3 + $0xb8] sm:$0x1f] %v1423
  %v1425 = vld [vmem:[#allocation2 + $0x30] sm:$0x1f]
  %v1427 = vrot.slane %v1425, 3
  %1429 = vst [vmem:[#allocation3 + $0xb8] sm:$0xe0] %v1427
  %1430 = vst [vmem:[#allocation3 + $0x180] sm:$0x3] %v1427
  %v1431 = vld [vmem:[#allocation2 + $0x39] sm:$0x1f]
  %v1433 = vrot.slane %v1431, 6
  %1435 = vst [vmem:[#allocation3 + $0x180] sm:$0x7c] %v1433
  %v1436 = vld [vmem:[#allocation2 + $0x42] sm:$0x1f]
  %v1438 = vrot.slane %v1436, 1
  %1440 = vst [vmem:[#allocation3 + $0x180] sm:$0x80] %v1438
  %1441 = vst [vmem:[#allocation3 + $0x248] sm:$0xf] %v1438
  %v1442 = vld [vmem:[#allocation2 + $0x4b] sm:$0x1f]
  %v1444 = vrot.slane %v1442, 4
  %1446 = vst [vmem:[#allocation3 + $0x248] sm:$0xf0] %v1444
  %1447 = vst [vmem:[#allocation3 + $0x310] sm:$0x1] %v1444
  %v1448 = vld [vmem:[#allocation2 + $0x78] sm:$0x1f]
  %v1450 = vrot.slane %v1448, 7
  %1452 = vst [vmem:[#allocation3 + $0x310] sm:$0x3e] %v1450
  %v1453 = vld [vmem:[#allocation2 + $0x81] sm:$0x1f]
  %v1455 = vrot.slane %v1453, 2
  %1457 = vst [vmem:[#allocation3 + $0x310] sm:$0xc0] %v1455
  %1458 = vst [vmem:[#allocation3 + $0x3d8] sm:$0x7] %v1455
  %v1459 = vld [vmem:[#allocation2 + $0x8a] sm:$0x1f]
  %v1461 = vrot.slane %v1459, 5
  %1463 = vst [vmem:[#allocation3 + $0x3d8] sm:$0xf8] %v1461
  %v1464 = vld [vmem:[#allocation2 + $0x93] sm:$0x1f]
  %1465 = vst [vmem:[#allocation3 + $0x4a0] sm:$0x1f] %v1464
  %v1466 = vld [vmem:[#allocation2 + $0x9c] sm:$0x1f]
  %v1468 = vrot.slane %v1466, 3
  %1470 = vst [vmem:[#allocation3 + $0x4a0] sm:$0xe0] %v1468
  %1471 = vst [vmem:[#allocation3 + $0x568] sm:$0x3] %v1468
  %v1472 = vld [vmem:[#allocation2 + $0x28] sm:$0x1f]
  %1473 = vst [vmem:[#allocation3 + $0xc0] sm:$0x1f] %v1472
  %v1474 = vld [vmem:[#allocation2 + $0x31] sm:$0x1f]
  %v1476 = vrot.slane %v1474, 3
  %1478 = vst [vmem:[#allocation3 + $0xc0] sm:$0xe0] %v1476
  %1479 = vst [vmem:[#allocation3 + $0x188] sm:$0x3] %v1476
  %v1480 = vld [vmem:[#allocation2 + $0x3a] sm:$0x1f]
  %v1482 = vrot.slane %v1480, 6
  %1484 = vst [vmem:[#allocation3 + $0x188] sm:$0x7c] %v1482
  %v1485 = vld [vmem:[#allocation2 + $0x43] sm:$0x1f]
  %v1487 = vrot.slane %v1485, 1
  %1489 = vst [vmem:[#allocation3 + $0x188] sm:$0x80] %v1487
  %1490 = vst [vmem:[#allocation3 + $0x250] sm:$0xf] %v1487
  %v1491 = vld [vmem:[#allocation2 + $0x4c] sm:$0x1f]
  %v1493 = vrot.slane %v1491, 4
  %1495 = vst [vmem:[#allocation3 + $0x250] sm:$0xf0] %v1493
  %1496 = vst [vmem:[#allocation3 + $0x318] sm:$0x1] %v1493
  %v1497 = vld [vmem:[#allocation2 + $0x79] sm:$0x1f]
  %v1499 = vrot.slane %v1497, 7
  %1501 = vst [vmem:[#allocation3 + $0x318] sm:$0x3e] %v1499
  %v1502 = vld [vmem:[#allocation2 + $0x82] sm:$0x1f]
  %v1504 = vrot.slane %v1502, 2
  %1506 = vst [vmem:[#allocation3 + $0x318] sm:$0xc0] %v1504
  %1507 = vst [vmem:[#allocation3 + $0x3e0] sm:$0x7] %v1504
  %v1508 = vld [vmem:[#allocation2 + $0x8b] sm:$0x1f]
  %v1510 = vrot.slane %v1508, 5
  %1512 = vst [vmem:[#allocation3 + $0x3e0] sm:$0xf8] %v1510
  %v1513 = vld [vmem:[#allocation2 + $0x94] sm:$0x1f]
  %1514 = vst [vmem:[#allocation3 + $0x4a8] sm:$0x1f] %v1513
  %v1515 = vld [vmem:[#allocation2 + $0x9d] sm:$0x1f]
  %v1517 = vrot.slane %v1515, 3
  %1519 = vst [vmem:[#allocation3 + $0x4a8] sm:$0xe0] %v1517
  %1520 = vst [vmem:[#allocation3 + $0x570] sm:$0x3] %v1517
  %v1521 = vld [vmem:[#allocation3] sm:$0xff]
  %v1522 = vld [vmem:[#allocation3 + $0x8] sm:$0xff]
  %v1523 = vld [vmem:[#allocation3 + $0x10] sm:$0xff]
  %v1524 = vld [vmem:[#allocation3 + $0x18] sm:$0xff]
  %v1525 = vld [vmem:[#allocation3 + $0x20] sm:$0xff]
  %v1526 = vld [vmem:[#allocation3 + $0xc8] sm:$0xff]
  %v1527 = vld [vmem:[#allocation3 + $0xd0] sm:$0xff]
  %v1528 = vld [vmem:[#allocation3 + $0xd8] sm:$0xff]
  %v1529 = vld [vmem:[#allocation3 + $0xe0] sm:$0xff]
  %v1530 = vld [vmem:[#allocation3 + $0xe8] sm:$0xff]
  %v1531 = vld [vmem:[#allocation3 + $0x190] sm:$0xff]
  %v1532 = vld [vmem:[#allocation3 + $0x198] sm:$0xff]
  %v1533 = vld [vmem:[#allocation3 + $0x1a0] sm:$0xff]
  %v1534 = vld [vmem:[#allocation3 + $0x1a8] sm:$0xff]
  %v1535 = vld [vmem:[#allocation3 + $0x1b0] sm:$0xff]
  %v1536 = vld [vmem:[#allocation3 + $0x258] sm:$0xff]
  %v1537 = vld [vmem:[#allocation3 + $0x260] sm:$0xff]
  %v1538 = vld [vmem:[#allocation3 + $0x268] sm:$0xff]
  %v1539 = vld [vmem:[#allocation3 + $0x270] sm:$0xff]
  %v1540 = vld [vmem:[#allocation3 + $0x278] sm:$0xff]
  %v1541 = vld [vmem:[#allocation3 + $0x320] sm:$0xff]
  %v1542 = vld [vmem:[#allocation3 + $0x328] sm:$0xff]
  %v1543 = vld [vmem:[#allocation3 + $0x330] sm:$0xff]
  %v1544 = vld [vmem:[#allocation3 + $0x338] sm:$0xff]
  %v1545 = vld [vmem:[#allocation3 + $0x340] sm:$0xff]
  %v1546 = vld [vmem:[#allocation3 + $0x3e8] sm:$0xff]
  %v1547 = vld [vmem:[#allocation3 + $0x3f0] sm:$0xff]
  %v1548 = vld [vmem:[#allocation3 + $0x3f8] sm:$0xff]
  %v1549 = vld [vmem:[#allocation3 + $0x400] sm:$0xff]
  %v1550 = vld [vmem:[#allocation3 + $0x408] sm:$0xff]
  %v1551 = vld [vmem:[#allocation3 + $0x4b0] sm:$0x3]
  %v1552 = vld [vmem:[#allocation3 + $0x4b8] sm:$0x3]
  %v1553 = vld [vmem:[#allocation3 + $0x4c0] sm:$0x3]
  %v1554 = vld [vmem:[#allocation3 + $0x4c8] sm:$0x3]
  %v1555 = vld [vmem:[#allocation3 + $0x4d0] sm:$0x3]
  %v1556 = vpack.c.bf16 %v1526, %v1521
  %v1557 = vpack.c.bf16 %v1527, %v1522
  %v1558 = vpack.c.bf16 %v1528, %v1523
  %v1559 = vpack.c.bf16 %v1529, %v1524
  %v1560 = vpack.c.bf16 %v1530, %v1525
  %v1561 = vpack.c.bf16 %v1536, %v1531
  %v1562 = vpack.c.bf16 %v1537, %v1532
  %v1563 = vpack.c.bf16 %v1538, %v1533
  %v1564 = vpack.c.bf16 %v1539, %v1534
  %v1565 = vpack.c.bf16 %v1540, %v1535
  %v1566 = vpack.c.bf16 %v1546, %v1541
  %v1567 = vpack.c.bf16 %v1547, %v1542
  %v1568 = vpack.c.bf16 %v1548, %v1543
  %v1569 = vpack.c.bf16 %v1549, %v1544
  %v1570 = vpack.c.bf16 %v1550, %v1545
  %v1571 = vpack.c.bf16 %v1551, %v1551
  %v1572 = vpack.c.bf16 %v1552, %v1552
  %v1573 = vpack.c.bf16 %v1553, %v1553
  %v1574 = vpack.c.bf16 %v1554, %v1554
  %v1575 = vpack.c.bf16 %v1555, %v1555
  %v1576 = vld [vmem:[%s3] sm:$0xf]
  %v1577 = vld [vmem:[%s3 + $0x4] sm:$0xf]
  %v1578 = vld [vmem:[%s3 + $0x8] sm:$0xf]
  %v1579 = vld [vmem:[%s3 + $0xc] sm:$0xf]
  %v1580 = vld [vmem:[%s3 + $0x10] sm:$0xf]
  %v1581 = vld [vmem:[%s3 + $0x14] sm:$0xf]
  %v1582 = vld [vmem:[%s3 + $0x18] sm:$0xf]
  %v1583 = vld [vmem:[%s3 + $0x1c] sm:$0xf]
  %v1584 = vld [vmem:[%s3 + $0x20] sm:$0xf]
  %v1585 = vld [vmem:[%s3 + $0x24] sm:$0xf]
  %v1586 = vld [vmem:[%s3 + $0x28] sm:$0xf]
  %v1587 = vld [vmem:[%s3 + $0x2c] sm:$0xf]
  %v1588 = vld [vmem:[%s3 + $0x30] sm:$0xf]
  %v1589 = vld [vmem:[%s3 + $0x34] sm:$0xf]
  %v1590 = vld [vmem:[%s3 + $0x38] sm:$0xf]
  %v1591 = vld [vmem:[%s3 + $0x3c] sm:$0xf]
  %v1592 = vld [vmem:[%s3 + $0x40] sm:$0xf]
  %v1593 = vld [vmem:[%s3 + $0x44] sm:$0xf]
  %v1594 = vld [vmem:[%s3 + $0x48] sm:$0xf]
  %v1595 = vld [vmem:[%s3 + $0x4c] sm:$0xf]
  %v1596 = vld [vmem:[%s3 + $0x50] sm:$0xf]
  %v1597 = vld [vmem:[%s3 + $0x54] sm:$0xf]
  %v1598 = vld [vmem:[%s3 + $0x58] sm:$0xf]
  %v1599 = vld [vmem:[%s3 + $0x5c] sm:$0xf]
  %v1600 = vld [vmem:[%s3 + $0x60] sm:$0xf]
  %v1601 = vld [vmem:[%s3 + $0x64] sm:$0xf]
  %v1602 = vld [vmem:[%s3 + $0x68] sm:$0xf]
  %v1603 = vld [vmem:[%s3 + $0x6c] sm:$0xf]
  %v1604 = vld [vmem:[%s3 + $0x70] sm:$0xf]
  %v1605 = vld [vmem:[%s3 + $0x74] sm:$0xf]
  %v1606 = vld [vmem:[%s3 + $0x78] sm:$0xf]
  %v1607 = vld [vmem:[%s3 + $0x7c] sm:$0xf]
  %v1608 = vld [vmem:[%s3 + $0x80] sm:$0xf]
  %v1609 = vld [vmem:[%s3 + $0x84] sm:$0xf]
  %v1610 = vld [vmem:[%s3 + $0x88] sm:$0xf]
  %v1611 = vld [vmem:[%s3 + $0x8c] sm:$0xf]
  %v1612 = vld [vmem:[%s3 + $0x90] sm:$0xf]
  %v1613 = vld [vmem:[%s3 + $0x94] sm:$0xf]
  %v1614 = vld [vmem:[%s3 + $0x98] sm:$0xf]
  %v1615 = vld [vmem:[%s3 + $0x9c] sm:$0xf]
  %v1616 = vld [vmem:[%s3 + $0xa0] sm:$0xf]
  %v1617 = vld [vmem:[%s3 + $0xa4] sm:$0xf]
  %v1618 = vld [vmem:[%s3 + $0xa8] sm:$0xf]
  %v1619 = vld [vmem:[%s3 + $0xac] sm:$0xf]
  %v1620 = vld [vmem:[%s3 + $0xb0] sm:$0xf]
  %v1621 = vld [vmem:[%s3 + $0xb4] sm:$0xf]
  %v1622 = vld [vmem:[%s3 + $0xb8] sm:$0xf]
  %v1623 = vld [vmem:[%s3 + $0xbc] sm:$0xf]
  %v1624 = vld [vmem:[%s3 + $0xc0] sm:$0xf]
  %v1625 = vld [vmem:[%s3 + $0xc4] sm:$0xf]
  %v1626 = vld [vmem:[%s3 + $0xc8] sm:$0xf]
  %v1627 = vld [vmem:[%s3 + $0xcc] sm:$0xf]
  %v1628 = vld [vmem:[%s3 + $0xd0] sm:$0xf]
  %v1629 = vld [vmem:[%s3 + $0xd4] sm:$0xf]
  %v1630 = vld [vmem:[%s3 + $0xd8] sm:$0xf]
  %v1631 = vld [vmem:[%s3 + $0xdc] sm:$0xf]
  %v1632 = vld [vmem:[%s3 + $0xe0] sm:$0xf]
  %v1633 = vld [vmem:[%s3 + $0xe4] sm:$0xf]
  %v1634 = vld [vmem:[%s3 + $0xe8] sm:$0xf]
  %v1635 = vld [vmem:[%s3 + $0xec] sm:$0xf]
  %v1636 = vld [vmem:[%s3 + $0xf0] sm:$0xf]
  %v1637 = vld [vmem:[%s3 + $0xf4] sm:$0xf]
  %v1638 = vld [vmem:[%s3 + $0xf8] sm:$0xf]
  %v1639 = vld [vmem:[%s3 + $0xfc] sm:$0xf]
  %v1640 = vld [vmem:[%s3 + $0x100] sm:$0xf]
  %v1641 = vld [vmem:[%s3 + $0x104] sm:$0xf]
  %v1642 = vld [vmem:[%s3 + $0x108] sm:$0xf]
  %v1643 = vld [vmem:[%s3 + $0x10c] sm:$0xf]
  %v1644 = vld [vmem:[%s3 + $0x110] sm:$0xf]
  %v1645 = vld [vmem:[%s3 + $0x114] sm:$0xf]
  %v1646 = vld [vmem:[%s3 + $0x118] sm:$0xf]
  %v1647 = vld [vmem:[%s3 + $0x11c] sm:$0xf]
  %v1648 = vld [vmem:[%s3 + $0x120] sm:$0xf]
  %v1649 = vld [vmem:[%s3 + $0x124] sm:$0xf]
  %v1650 = vld [vmem:[%s3 + $0x128] sm:$0xf]
  %v1651 = vld [vmem:[%s3 + $0x12c] sm:$0xf]
  %v1652 = vld [vmem:[%s3 + $0x130] sm:$0xf]
  %v1653 = vld [vmem:[%s3 + $0x134] sm:$0xf]
  %v1654 = vld [vmem:[%s3 + $0x138] sm:$0xf]
  %v1655 = vld [vmem:[%s3 + $0x13c] sm:$0xf]
  %v1656 = vld [vmem:[#allocation3 + $0x28] sm:$0xff]
  %v1657 = vld [vmem:[#allocation3 + $0x30] sm:$0xff]
  %v1658 = vld [vmem:[#allocation3 + $0x38] sm:$0xff]
  %v1659 = vld [vmem:[#allocation3 + $0x40] sm:$0xff]
  %v1660 = vld [vmem:[#allocation3 + $0x48] sm:$0xff]
  %v1661 = vld [vmem:[#allocation3 + $0xf0] sm:$0xff]
  %v1662 = vld [vmem:[#allocation3 + $0xf8] sm:$0xff]
  %v1663 = vld [vmem:[#allocation3 + $0x100] sm:$0xff]
  %v1664 = vld [vmem:[#allocation3 + $0x108] sm:$0xff]
  %v1665 = vld [vmem:[#allocation3 + $0x110] sm:$0xff]
  %v1666 = vld [vmem:[#allocation3 + $0x1b8] sm:$0xff]
  %v1667 = vld [vmem:[#allocation3 + $0x1c0] sm:$0xff]
  %v1668 = vld [vmem:[#allocation3 + $0x1c8] sm:$0xff]
  %v1669 = vld [vmem:[#allocation3 + $0x1d0] sm:$0xff]
  %v1670 = vld [vmem:[#allocation3 + $0x1d8] sm:$0xff]
  %v1671 = vld [vmem:[#allocation3 + $0x280] sm:$0xff]
  %v1672 = vld [vmem:[#allocation3 + $0x288] sm:$0xff]
  %v1673 = vld [vmem:[#allocation3 + $0x290] sm:$0xff]
  %v1674 = vld [vmem:[#allocation3 + $0x298] sm:$0xff]
  %v1675 = vld [vmem:[#allocation3 + $0x2a0] sm:$0xff]
  %v1676 = vld [vmem:[#allocation3 + $0x348] sm:$0xff]
  %v1677 = vld [vmem:[#allocation3 + $0x350] sm:$0xff]
  %v1678 = vld [vmem:[#allocation3 + $0x358] sm:$0xff]
  %v1679 = vld [vmem:[#allocation3 + $0x360] sm:$0xff]
  %v1680 = vld [vmem:[#allocation3 + $0x368] sm:$0xff]
  %v1681 = vld [vmem:[#allocation3 + $0x410] sm:$0xff]
  %v1682 = vld [vmem:[#allocation3 + $0x418] sm:$0xff]
  %v1683 = vld [vmem:[#allocation3 + $0x420] sm:$0xff]
  %v1684 = vld [vmem:[#allocation3 + $0x428] sm:$0xff]
  %v1685 = vld [vmem:[#allocation3 + $0x430] sm:$0xff]
  %v1686 = vld [vmem:[#allocation3 + $0x4d8] sm:$0x3]
  %v1687 = vld [vmem:[#allocation3 + $0x4e0] sm:$0x3]
  %v1688 = vld [vmem:[#allocation3 + $0x4e8] sm:$0x3]
  %v1689 = vld [vmem:[#allocation3 + $0x4f0] sm:$0x3]
  %v1690 = vld [vmem:[#allocation3 + $0x4f8] sm:$0x3]
  %v1691 = vpack.c.bf16 %v1661, %v1656
  %v1692 = vpack.c.bf16 %v1662, %v1657
  %v1693 = vpack.c.bf16 %v1663, %v1658
  %v1694 = vpack.c.bf16 %v1664, %v1659
  %v1695 = vpack.c.bf16 %v1665, %v1660
  %v1696 = vpack.c.bf16 %v1671, %v1666
  %v1697 = vpack.c.bf16 %v1672, %v1667
  %v1698 = vpack.c.bf16 %v1673, %v1668
  %v1699 = vpack.c.bf16 %v1674, %v1669
  %v1700 = vpack.c.bf16 %v1675, %v1670
  %v1701 = vpack.c.bf16 %v1681, %v1676
  %v1702 = vpack.c.bf16 %v1682, %v1677
  %v1703 = vpack.c.bf16 %v1683, %v1678
  %v1704 = vpack.c.bf16 %v1684, %v1679
  %v1705 = vpack.c.bf16 %v1685, %v1680
  %v1706 = vpack.c.bf16 %v1686, %v1686
  %v1707 = vpack.c.bf16 %v1687, %v1687
  %v1708 = vpack.c.bf16 %v1688, %v1688
  %v1709 = vpack.c.bf16 %v1689, %v1689
  %v1710 = vpack.c.bf16 %v1690, %v1690
  %v1711 = vld [vmem:[%s3 + $0x140] sm:$0xf]
  %v1712 = vld [vmem:[%s3 + $0x144] sm:$0xf]
  %v1713 = vld [vmem:[%s3 + $0x148] sm:$0xf]
  %v1714 = vld [vmem:[%s3 + $0x14c] sm:$0xf]
  %v1715 = vld [vmem:[%s3 + $0x150] sm:$0xf]
  %v1716 = vld [vmem:[%s3 + $0x154] sm:$0xf]
  %v1717 = vld [vmem:[%s3 + $0x158] sm:$0xf]
  %v1718 = vld [vmem:[%s3 + $0x15c] sm:$0xf]
  %v1719 = vld [vmem:[%s3 + $0x160] sm:$0xf]
  %v1720 = vld [vmem:[%s3 + $0x164] sm:$0xf]
  %v1721 = vld [vmem:[%s3 + $0x168] sm:$0xf]
  %v1722 = vld [vmem:[%s3 + $0x16c] sm:$0xf]
  %v1723 = vld [vmem:[%s3 + $0x170] sm:$0xf]
  %v1724 = vld [vmem:[%s3 + $0x174] sm:$0xf]
  %v1725 = vld [vmem:[%s3 + $0x178] sm:$0xf]
  %v1726 = vld [vmem:[%s3 + $0x17c] sm:$0xf]
  %v1727 = vld [vmem:[%s3 + $0x180] sm:$0xf]
  %v1728 = vld [vmem:[%s3 + $0x184] sm:$0xf]
  %v1729 = vld [vmem:[%s3 + $0x188] sm:$0xf]
  %v1730 = vld [vmem:[%s3 + $0x18c] sm:$0xf]
  %v1731 = vld [vmem:[%s3 + $0x190] sm:$0xf]
  %v1732 = vld [vmem:[%s3 + $0x194] sm:$0xf]
  %v1733 = vld [vmem:[%s3 + $0x198] sm:$0xf]
  %v1734 = vld [vmem:[%s3 + $0x19c] sm:$0xf]
  %v1735 = vld [vmem:[%s3 + $0x1a0] sm:$0xf]
  %v1736 = vld [vmem:[%s3 + $0x1a4] sm:$0xf]
  %v1737 = vld [vmem:[%s3 + $0x1a8] sm:$0xf]
  %v1738 = vld [vmem:[%s3 + $0x1ac] sm:$0xf]
  %v1739 = vld [vmem:[%s3 + $0x1b0] sm:$0xf]
  %v1740 = vld [vmem:[%s3 + $0x1b4] sm:$0xf]
  %v1741 = vld [vmem:[%s3 + $0x1b8] sm:$0xf]
  %v1742 = vld [vmem:[%s3 + $0x1bc] sm:$0xf]
  %v1743 = vld [vmem:[%s3 + $0x1c0] sm:$0xf]
  %v1744 = vld [vmem:[%s3 + $0x1c4] sm:$0xf]
  %v1745 = vld [vmem:[%s3 + $0x1c8] sm:$0xf]
  %v1746 = vld [vmem:[%s3 + $0x1cc] sm:$0xf]
  %v1747 = vld [vmem:[%s3 + $0x1d0] sm:$0xf]
  %v1748 = vld [vmem:[%s3 + $0x1d4] sm:$0xf]
  %v1749 = vld [vmem:[%s3 + $0x1d8] sm:$0xf]
  %v1750 = vld [vmem:[%s3 + $0x1dc] sm:$0xf]
  %v1751 = vld [vmem:[%s3 + $0x1e0] sm:$0xf]
  %v1752 = vld [vmem:[%s3 + $0x1e4] sm:$0xf]
  %v1753 = vld [vmem:[%s3 + $0x1e8] sm:$0xf]
  %v1754 = vld [vmem:[%s3 + $0x1ec] sm:$0xf]
  %v1755 = vld [vmem:[%s3 + $0x1f0] sm:$0xf]
  %v1756 = vld [vmem:[%s3 + $0x1f4] sm:$0xf]
  %v1757 = vld [vmem:[%s3 + $0x1f8] sm:$0xf]
  %v1758 = vld [vmem:[%s3 + $0x1fc] sm:$0xf]
  %v1759 = vld [vmem:[%s3 + $0x200] sm:$0xf]
  %v1760 = vld [vmem:[%s3 + $0x204] sm:$0xf]
  %v1761 = vld [vmem:[%s3 + $0x208] sm:$0xf]
  %v1762 = vld [vmem:[%s3 + $0x20c] sm:$0xf]
  %v1763 = vld [vmem:[%s3 + $0x210] sm:$0xf]
  %v1764 = vld [vmem:[%s3 + $0x214] sm:$0xf]
  %v1765 = vld [vmem:[%s3 + $0x218] sm:$0xf]
  %v1766 = vld [vmem:[%s3 + $0x21c] sm:$0xf]
  %v1767 = vld [vmem:[%s3 + $0x220] sm:$0xf]
  %v1768 = vld [vmem:[%s3 + $0x224] sm:$0xf]
  %v1769 = vld [vmem:[%s3 + $0x228] sm:$0xf]
  %v1770 = vld [vmem:[%s3 + $0x22c] sm:$0xf]
  %v1771 = vld [vmem:[%s3 + $0x230] sm:$0xf]
  %v1772 = vld [vmem:[%s3 + $0x234] sm:$0xf]
  %v1773 = vld [vmem:[%s3 + $0x238] sm:$0xf]
  %v1774 = vld [vmem:[%s3 + $0x23c] sm:$0xf]
  %v1775 = vld [vmem:[%s3 + $0x240] sm:$0xf]
  %v1776 = vld [vmem:[%s3 + $0x244] sm:$0xf]
  %v1777 = vld [vmem:[%s3 + $0x248] sm:$0xf]
  %v1778 = vld [vmem:[%s3 + $0x24c] sm:$0xf]
  %v1779 = vld [vmem:[%s3 + $0x250] sm:$0xf]
  %v1780 = vld [vmem:[%s3 + $0x254] sm:$0xf]
  %v1781 = vld [vmem:[%s3 + $0x258] sm:$0xf]
  %v1782 = vld [vmem:[%s3 + $0x25c] sm:$0xf]
  %v1783 = vld [vmem:[%s3 + $0x260] sm:$0xf]
  %v1784 = vld [vmem:[%s3 + $0x264] sm:$0xf]
  %v1785 = vld [vmem:[%s3 + $0x268] sm:$0xf]
  %v1786 = vld [vmem:[%s3 + $0x26c] sm:$0xf]
  %v1787 = vld [vmem:[%s3 + $0x270] sm:$0xf]
  %v1788 = vld [vmem:[%s3 + $0x274] sm:$0xf]
  %v1789 = vld [vmem:[%s3 + $0x278] sm:$0xf]
  %v1790 = vld [vmem:[%s3 + $0x27c] sm:$0xf]
  %v1871 = vunpack.c.l.b16 %v1711
  %v1872 = vunpack.c.l.b16 %v1712
  %v1873 = vunpack.c.l.b16 %v1713
  %v1874 = vunpack.c.l.b16 %v1714
  %v1875 = vunpack.c.l.b16 %v1715
  %v1876 = vunpack.c.l.b16 %v1716
  %v1877 = vunpack.c.l.b16 %v1717
  %v1878 = vunpack.c.l.b16 %v1718
  %v1879 = vunpack.c.l.b16 %v1719
  %v1880 = vunpack.c.l.b16 %v1720
  %v1881 = vunpack.c.l.b16 %v1721
  %v1882 = vunpack.c.l.b16 %v1722
  %v1883 = vunpack.c.l.b16 %v1723
  %v1884 = vunpack.c.l.b16 %v1724
  %v1885 = vunpack.c.l.b16 %v1725
  %v1886 = vunpack.c.l.b16 %v1726
  %v1887 = vunpack.c.l.b16 %v1727
  %v1888 = vunpack.c.l.b16 %v1728
  %v1889 = vunpack.c.l.b16 %v1729
  %v1890 = vunpack.c.l.b16 %v1730
  %v1891 = vunpack.c.l.b16 %v1731
  %v1892 = vunpack.c.l.b16 %v1732
  %v1893 = vunpack.c.l.b16 %v1733
  %v1894 = vunpack.c.l.b16 %v1734
  %v1895 = vunpack.c.l.b16 %v1735
  %v1896 = vunpack.c.l.b16 %v1736
  %v1897 = vunpack.c.l.b16 %v1737
  %v1898 = vunpack.c.l.b16 %v1738
  %v1899 = vunpack.c.l.b16 %v1739
  %v1900 = vunpack.c.l.b16 %v1740
  %v1901 = vunpack.c.l.b16 %v1741
  %v1902 = vunpack.c.l.b16 %v1742
  %v1903 = vunpack.c.l.b16 %v1743
  %v1904 = vunpack.c.l.b16 %v1744
  %v1905 = vunpack.c.l.b16 %v1745
  %v1906 = vunpack.c.l.b16 %v1746
  %v1907 = vunpack.c.l.b16 %v1747
  %v1908 = vunpack.c.l.b16 %v1748
  %v1909 = vunpack.c.l.b16 %v1749
  %v1910 = vunpack.c.l.b16 %v1750
  %v1911 = vunpack.c.l.b16 %v1751
  %v1912 = vunpack.c.l.b16 %v1752
  %v1913 = vunpack.c.l.b16 %v1753
  %v1914 = vunpack.c.l.b16 %v1754
  %v1915 = vunpack.c.l.b16 %v1755
  %v1916 = vunpack.c.l.b16 %v1756
  %v1917 = vunpack.c.l.b16 %v1757
  %v1918 = vunpack.c.l.b16 %v1758
  %v1919 = vunpack.c.l.b16 %v1759
  %v1920 = vunpack.c.l.b16 %v1760
  %v1921 = vunpack.c.l.b16 %v1761
  %v1922 = vunpack.c.l.b16 %v1762
  %v1923 = vunpack.c.l.b16 %v1763
  %v1924 = vunpack.c.l.b16 %v1764
  %v1925 = vunpack.c.l.b16 %v1765
  %v1926 = vunpack.c.l.b16 %v1766
  %v1927 = vunpack.c.l.b16 %v1767
  %v1928 = vunpack.c.l.b16 %v1768
  %v1929 = vunpack.c.l.b16 %v1769
  %v1930 = vunpack.c.l.b16 %v1770
  %v1931 = vunpack.c.l.b16 %v1771
  %v1932 = vunpack.c.l.b16 %v1772
  %v1933 = vunpack.c.l.b16 %v1773
  %v1934 = vunpack.c.l.b16 %v1774
  %v1935 = vunpack.c.l.b16 %v1775
  %v1936 = vunpack.c.l.b16 %v1776
  %v1937 = vunpack.c.l.b16 %v1777
  %v1938 = vunpack.c.l.b16 %v1778
  %v1939 = vunpack.c.l.b16 %v1779
  %v1940 = vunpack.c.l.b16 %v1780
  %v1941 = vunpack.c.l.b16 %v1781
  %v1942 = vunpack.c.l.b16 %v1782
  %v1943 = vunpack.c.l.b16 %v1783
  %v1944 = vunpack.c.l.b16 %v1784
  %v1945 = vunpack.c.l.b16 %v1785
  %v1946 = vunpack.c.l.b16 %v1786
  %v1947 = vunpack.c.l.b16 %v1787
  %v1948 = vunpack.c.l.b16 %v1788
  %v1949 = vunpack.c.l.b16 %v1789
  %v1950 = vunpack.c.l.b16 %v1790
  %v1951 = vpack.c.b16 %v1872, %v1871
  %v1952 = vpack.c.b16 %v1874, %v1873
  %v1953 = vpack.c.b16 %v1876, %v1875
  %v1954 = vpack.c.b16 %v1878, %v1877
  %v1955 = vpack.c.b16 %v1880, %v1879
  %v1956 = vpack.c.b16 %v1882, %v1881
  %v1957 = vpack.c.b16 %v1884, %v1883
  %v1958 = vpack.c.b16 %v1886, %v1885
  %v1959 = vpack.c.b16 %v1888, %v1887
  %v1960 = vpack.c.b16 %v1890, %v1889
  %v1961 = vpack.c.b16 %v1892, %v1891
  %v1962 = vpack.c.b16 %v1894, %v1893
  %v1963 = vpack.c.b16 %v1896, %v1895
  %v1964 = vpack.c.b16 %v1898, %v1897
  %v1965 = vpack.c.b16 %v1900, %v1899
  %v1966 = vpack.c.b16 %v1902, %v1901
  %v1967 = vpack.c.b16 %v1904, %v1903
  %v1968 = vpack.c.b16 %v1906, %v1905
  %v1969 = vpack.c.b16 %v1908, %v1907
  %v1970 = vpack.c.b16 %v1910, %v1909
  %v1971 = vpack.c.b16 %v1912, %v1911
  %v1972 = vpack.c.b16 %v1914, %v1913
  %v1973 = vpack.c.b16 %v1916, %v1915
  %v1974 = vpack.c.b16 %v1918, %v1917
  %v1975 = vpack.c.b16 %v1920, %v1919
  %v1976 = vpack.c.b16 %v1922, %v1921
  %v1977 = vpack.c.b16 %v1924, %v1923
  %v1978 = vpack.c.b16 %v1926, %v1925
  %v1979 = vpack.c.b16 %v1928, %v1927
  %v1980 = vpack.c.b16 %v1930, %v1929
  %v1981 = vpack.c.b16 %v1932, %v1931
  %v1982 = vpack.c.b16 %v1934, %v1933
  %v1983 = vpack.c.b16 %v1936, %v1935
  %v1984 = vpack.c.b16 %v1938, %v1937
  %v1985 = vpack.c.b16 %v1940, %v1939
  %v1986 = vpack.c.b16 %v1942, %v1941
  %v1987 = vpack.c.b16 %v1944, %v1943
  %v1988 = vpack.c.b16 %v1946, %v1945
  %v1989 = vpack.c.b16 %v1948, %v1947
  %v1990 = vpack.c.b16 %v1950, %v1949
  %2031 = vmatpush.bf16.msra.mxu0 %v1958
  %2032 = vmatpush.bf16.msra.mxu0 %v1957
  %2033 = vmatpush.bf16.msra.mxu0 %v1956
  %2034 = vmatpush.bf16.msra.mxu0 %v1955
  %2035 = vmatpush.bf16.msra.mxu0 %v1954
  %2036 = vmatpush.bf16.msra.mxu0 %v1953
  %2037 = vmatpush.bf16.msra.mxu0 %v1952
  %2038 = vmatpush.bf16.msra.mxu0 %v1951
  %2039 = vmatmul.bf16.gmra.mxu0 %v1691
  %v2040 = vpop.f32.mrf.mxu0
  %v2041 = vadd.f32 0.0, %v2040
  %v2042 = vpop.f32.mrf.mxu0
  %v2043 = vadd.f32 0.0, %v2042
  %2044 = vmatmul.bf16.gmra.mxu0 %v1696
  %v2045 = vpop.f32.mrf.mxu0
  %v2046 = vadd.f32 0.0, %v2045
  %v2047 = vpop.f32.mrf.mxu0
  %v2048 = vadd.f32 0.0, %v2047
  %2049 = vmatmul.bf16.gmra.mxu0 %v1701
  %v2050 = vpop.f32.mrf.mxu0
  %v2051 = vadd.f32 0.0, %v2050
  %v2052 = vpop.f32.mrf.mxu0
  %v2053 = vadd.f32 0.0, %v2052
  %2054 = vmatmul.bf16.gmra.mxu0 %v1706
  %v2055 = vpop.f32.mrf.mxu0
  %v2056 = vadd.f32 0.0, %v2055
  %v2057 = vpop.f32.mrf.mxu0
  %2058 = vdwg.mxu0
  %2059 = vmatpush.bf16.msra.mxu0 %v1966
  %2060 = vmatpush.bf16.msra.mxu0 %v1965
  %2061 = vmatpush.bf16.msra.mxu0 %v1964
  %2062 = vmatpush.bf16.msra.mxu0 %v1963
  %2063 = vmatpush.bf16.msra.mxu0 %v1962
  %2064 = vmatpush.bf16.msra.mxu0 %v1961
  %2065 = vmatpush.bf16.msra.mxu0 %v1960
  %2066 = vmatpush.bf16.msra.mxu0 %v1959
  %2067 = vmatmul.bf16.gmra.mxu0 %v1692
  %v2068 = vpop.f32.mrf.mxu0
  %v2069 = vadd.f32 %v2041, %v2068
  %v2070 = vpop.f32.mrf.mxu0
  %v2071 = vadd.f32 %v2043, %v2070
  %2072 = vmatmul.bf16.gmra.mxu0 %v1697
  %v2073 = vpop.f32.mrf.mxu0
  %v2074 = vadd.f32 %v2046, %v2073
  %v2075 = vpop.f32.mrf.mxu0
  %v2076 = vadd.f32 %v2048, %v2075
  %2077 = vmatmul.bf16.gmra.mxu0 %v1702
  %v2078 = vpop.f32.mrf.mxu0
  %v2079 = vadd.f32 %v2051, %v2078
  %v2080 = vpop.f32.mrf.mxu0
  %v2081 = vadd.f32 %v2053, %v2080
  %2082 = vmatmul.bf16.gmra.mxu0 %v1707
  %v2083 = vpop.f32.mrf.mxu0
  %v2084 = vadd.f32 %v2056, %v2083
  %v2085 = vpop.f32.mrf.mxu0
  %2086 = vdwg.mxu0
  %2087 = vmatpush.bf16.msra.mxu0 %v1974
  %2088 = vmatpush.bf16.msra.mxu0 %v1973
  %2089 = vmatpush.bf16.msra.mxu0 %v1972
  %2090 = vmatpush.bf16.msra.mxu0 %v1971
  %2091 = vmatpush.bf16.msra.mxu0 %v1970
  %2092 = vmatpush.bf16.msra.mxu0 %v1969
  %2093 = vmatpush.bf16.msra.mxu0 %v1968
  %2094 = vmatpush.bf16.msra.mxu0 %v1967
  %2095 = vmatmul.bf16.gmra.mxu0 %v1693
  %v2096 = vpop.f32.mrf.mxu0
  %v2097 = vadd.f32 %v2069, %v2096
  %v2098 = vpop.f32.mrf.mxu0
  %v2099 = vadd.f32 %v2071, %v2098
  %2100 = vmatmul.bf16.gmra.mxu0 %v1698
  %v2101 = vpop.f32.mrf.mxu0
  %v2102 = vadd.f32 %v2074, %v2101
  %v2103 = vpop.f32.mrf.mxu0
  %v2104 = vadd.f32 %v2076, %v2103
  %2105 = vmatmul.bf16.gmra.mxu0 %v1703
  %v2106 = vpop.f32.mrf.mxu0
  %v2107 = vadd.f32 %v2079, %v2106
  %v2108 = vpop.f32.mrf.mxu0
  %v2109 = vadd.f32 %v2081, %v2108
  %2110 = vmatmul.bf16.gmra.mxu0 %v1708
  %v2111 = vpop.f32.mrf.mxu0
  %v2112 = vadd.f32 %v2084, %v2111
  %v2113 = vpop.f32.mrf.mxu0
  %2114 = vdwg.mxu0
  %2115 = vmatpush.bf16.msra.mxu0 %v1982
  %2116 = vmatpush.bf16.msra.mxu0 %v1981
  %2117 = vmatpush.bf16.msra.mxu0 %v1980
  %2118 = vmatpush.bf16.msra.mxu0 %v1979
  %2119 = vmatpush.bf16.msra.mxu0 %v1978
  %2120 = vmatpush.bf16.msra.mxu0 %v1977
  %2121 = vmatpush.bf16.msra.mxu0 %v1976
  %2122 = vmatpush.bf16.msra.mxu0 %v1975
  %2123 = vmatmul.bf16.gmra.mxu0 %v1694
  %v2124 = vpop.f32.mrf.mxu0
  %v2125 = vadd.f32 %v2097, %v2124
  %v2126 = vpop.f32.mrf.mxu0
  %v2127 = vadd.f32 %v2099, %v2126
  %2128 = vmatmul.bf16.gmra.mxu0 %v1699
  %v2129 = vpop.f32.mrf.mxu0
  %v2130 = vadd.f32 %v2102, %v2129
  %v2131 = vpop.f32.mrf.mxu0
  %v2132 = vadd.f32 %v2104, %v2131
  %2133 = vmatmul.bf16.gmra.mxu0 %v1704
  %v2134 = vpop.f32.mrf.mxu0
  %v2135 = vadd.f32 %v2107, %v2134
  %v2136 = vpop.f32.mrf.mxu0
  %v2137 = vadd.f32 %v2109, %v2136
  %2138 = vmatmul.bf16.gmra.mxu0 %v1709
  %v2139 = vpop.f32.mrf.mxu0
  %v2140 = vadd.f32 %v2112, %v2139
  %v2141 = vpop.f32.mrf.mxu0
  %2142 = vdwg.mxu0
  %2143 = vmatpush.bf16.msra.mxu0 %v1990
  %2144 = vmatpush.bf16.msra.mxu0 %v1989
  %2145 = vmatpush.bf16.msra.mxu0 %v1988
  %2146 = vmatpush.bf16.msra.mxu0 %v1987
  %2147 = vmatpush.bf16.msra.mxu0 %v1986
  %2148 = vmatpush.bf16.msra.mxu0 %v1985
  %2149 = vmatpush.bf16.msra.mxu0 %v1984
  %2150 = vmatpush.bf16.msra.mxu0 %v1983
  %2151 = vmatmul.bf16.gmra.mxu0 %v1695
  %v2152 = vpop.f32.mrf.mxu0
  %v2153 = vadd.f32 %v2125, %v2152
  %v2154 = vpop.f32.mrf.mxu0
  %v2155 = vadd.f32 %v2127, %v2154
  %2156 = vmatmul.bf16.gmra.mxu0 %v1700
  %v2157 = vpop.f32.mrf.mxu0
  %v2158 = vadd.f32 %v2130, %v2157
  %v2159 = vpop.f32.mrf.mxu0
  %v2160 = vadd.f32 %v2132, %v2159
  %2161 = vmatmul.bf16.gmra.mxu0 %v1705
  %v2162 = vpop.f32.mrf.mxu0
  %v2163 = vadd.f32 %v2135, %v2162
  %v2164 = vpop.f32.mrf.mxu0
  %v2165 = vadd.f32 %v2137, %v2164
  %2166 = vmatmul.bf16.gmra.mxu0 %v1710
  %v2167 = vpop.f32.mrf.mxu0
  %v2168 = vadd.f32 %v2140, %v2167
  %v2169 = vpop.f32.mrf.mxu0
  %2170 = vdwg.mxu0
  %v2251 = vunpack.c.l.b16 %v1576
  %v2252 = vunpack.c.l.b16 %v1577
  %v2253 = vunpack.c.l.b16 %v1578
  %v2254 = vunpack.c.l.b16 %v1579
  %v2255 = vunpack.c.l.b16 %v1580
  %v2256 = vunpack.c.l.b16 %v1581
  %v2257 = vunpack.c.l.b16 %v1582
  %v2258 = vunpack.c.l.b16 %v1583
  %v2259 = vunpack.c.l.b16 %v1584
  %v2260 = vunpack.c.l.b16 %v1585
  %v2261 = vunpack.c.l.b16 %v1586
  %v2262 = vunpack.c.l.b16 %v1587
  %v2263 = vunpack.c.l.b16 %v1588
  %v2264 = vunpack.c.l.b16 %v1589
  %v2265 = vunpack.c.l.b16 %v1590
  %v2266 = vunpack.c.l.b16 %v1591
  %v2267 = vunpack.c.l.b16 %v1592
  %v2268 = vunpack.c.l.b16 %v1593
  %v2269 = vunpack.c.l.b16 %v1594
  %v2270 = vunpack.c.l.b16 %v1595
  %v2271 = vunpack.c.l.b16 %v1596
  %v2272 = vunpack.c.l.b16 %v1597
  %v2273 = vunpack.c.l.b16 %v1598
  %v2274 = vunpack.c.l.b16 %v1599
  %v2275 = vunpack.c.l.b16 %v1600
  %v2276 = vunpack.c.l.b16 %v1601
  %v2277 = vunpack.c.l.b16 %v1602
  %v2278 = vunpack.c.l.b16 %v1603
  %v2279 = vunpack.c.l.b16 %v1604
  %v2280 = vunpack.c.l.b16 %v1605
  %v2281 = vunpack.c.l.b16 %v1606
  %v2282 = vunpack.c.l.b16 %v1607
  %v2283 = vunpack.c.l.b16 %v1608
  %v2284 = vunpack.c.l.b16 %v1609
  %v2285 = vunpack.c.l.b16 %v1610
  %v2286 = vunpack.c.l.b16 %v1611
  %v2287 = vunpack.c.l.b16 %v1612
  %v2288 = vunpack.c.l.b16 %v1613
  %v2289 = vunpack.c.l.b16 %v1614
  %v2290 = vunpack.c.l.b16 %v1615
  %v2291 = vunpack.c.l.b16 %v1616
  %v2292 = vunpack.c.l.b16 %v1617
  %v2293 = vunpack.c.l.b16 %v1618
  %v2294 = vunpack.c.l.b16 %v1619
  %v2295 = vunpack.c.l.b16 %v1620
  %v2296 = vunpack.c.l.b16 %v1621
  %v2297 = vunpack.c.l.b16 %v1622
  %v2298 = vunpack.c.l.b16 %v1623
  %v2299 = vunpack.c.l.b16 %v1624
  %v2300 = vunpack.c.l.b16 %v1625
  %v2301 = vunpack.c.l.b16 %v1626
  %v2302 = vunpack.c.l.b16 %v1627
  %v2303 = vunpack.c.l.b16 %v1628
  %v2304 = vunpack.c.l.b16 %v1629
  %v2305 = vunpack.c.l.b16 %v1630
  %v2306 = vunpack.c.l.b16 %v1631
  %v2307 = vunpack.c.l.b16 %v1632
  %v2308 = vunpack.c.l.b16 %v1633
  %v2309 = vunpack.c.l.b16 %v1634
  %v2310 = vunpack.c.l.b16 %v1635
  %v2311 = vunpack.c.l.b16 %v1636
  %v2312 = vunpack.c.l.b16 %v1637
  %v2313 = vunpack.c.l.b16 %v1638
  %v2314 = vunpack.c.l.b16 %v1639
  %v2315 = vunpack.c.l.b16 %v1640
  %v2316 = vunpack.c.l.b16 %v1641
  %v2317 = vunpack.c.l.b16 %v1642
  %v2318 = vunpack.c.l.b16 %v1643
  %v2319 = vunpack.c.l.b16 %v1644
  %v2320 = vunpack.c.l.b16 %v1645
  %v2321 = vunpack.c.l.b16 %v1646
  %v2322 = vunpack.c.l.b16 %v1647
  %v2323 = vunpack.c.l.b16 %v1648
  %v2324 = vunpack.c.l.b16 %v1649
  %v2325 = vunpack.c.l.b16 %v1650
  %v2326 = vunpack.c.l.b16 %v1651
  %v2327 = vunpack.c.l.b16 %v1652
  %v2328 = vunpack.c.l.b16 %v1653
  %v2329 = vunpack.c.l.b16 %v1654
  %v2330 = vunpack.c.l.b16 %v1655
  %v2331 = vpack.c.b16 %v2252, %v2251
  %v2332 = vpack.c.b16 %v2254, %v2253
  %v2333 = vpack.c.b16 %v2256, %v2255
  %v2334 = vpack.c.b16 %v2258, %v2257
  %v2335 = vpack.c.b16 %v2260, %v2259
  %v2336 = vpack.c.b16 %v2262, %v2261
  %v2337 = vpack.c.b16 %v2264, %v2263
  %v2338 = vpack.c.b16 %v2266, %v2265
  %v2339 = vpack.c.b16 %v2268, %v2267
  %v2340 = vpack.c.b16 %v2270, %v2269
  %v2341 = vpack.c.b16 %v2272, %v2271
  %v2342 = vpack.c.b16 %v2274, %v2273
  %v2343 = vpack.c.b16 %v2276, %v2275
  %v2344 = vpack.c.b16 %v2278, %v2277
  %v2345 = vpack.c.b16 %v2280, %v2279
  %v2346 = vpack.c.b16 %v2282, %v2281
  %v2347 = vpack.c.b16 %v2284, %v2283
  %v2348 = vpack.c.b16 %v2286, %v2285
  %v2349 = vpack.c.b16 %v2288, %v2287
  %v2350 = vpack.c.b16 %v2290, %v2289
  %v2351 = vpack.c.b16 %v2292, %v2291
  %v2352 = vpack.c.b16 %v2294, %v2293
  %v2353 = vpack.c.b16 %v2296, %v2295
  %v2354 = vpack.c.b16 %v2298, %v2297
  %v2355 = vpack.c.b16 %v2300, %v2299
  %v2356 = vpack.c.b16 %v2302, %v2301
  %v2357 = vpack.c.b16 %v2304, %v2303
  %v2358 = vpack.c.b16 %v2306, %v2305
  %v2359 = vpack.c.b16 %v2308, %v2307
  %v2360 = vpack.c.b16 %v2310, %v2309
  %v2361 = vpack.c.b16 %v2312, %v2311
  %v2362 = vpack.c.b16 %v2314, %v2313
  %v2363 = vpack.c.b16 %v2316, %v2315
  %v2364 = vpack.c.b16 %v2318, %v2317
  %v2365 = vpack.c.b16 %v2320, %v2319
  %v2366 = vpack.c.b16 %v2322, %v2321
  %v2367 = vpack.c.b16 %v2324, %v2323
  %v2368 = vpack.c.b16 %v2326, %v2325
  %v2369 = vpack.c.b16 %v2328, %v2327
  %v2370 = vpack.c.b16 %v2330, %v2329
  %2411 = vmatpush.bf16.msra.mxu0 %v2338
  %2412 = vmatpush.bf16.msra.mxu0 %v2337
  %2413 = vmatpush.bf16.msra.mxu0 %v2336
  %2414 = vmatpush.bf16.msra.mxu0 %v2335
  %2415 = vmatpush.bf16.msra.mxu0 %v2334
  %2416 = vmatpush.bf16.msra.mxu0 %v2333
  %2417 = vmatpush.bf16.msra.mxu0 %v2332
  %2418 = vmatpush.bf16.msra.mxu0 %v2331
  %2419 = vmatmul.bf16.gmra.mxu0 %v1556
  %v2420 = vpop.f32.mrf.mxu0
  %v2421 = vadd.f32 %v2153, %v2420
  %v2422 = vpop.f32.mrf.mxu0
  %v2423 = vadd.f32 %v2155, %v2422
  %2424 = vmatmul.bf16.gmra.mxu0 %v1561
  %v2425 = vpop.f32.mrf.mxu0
  %v2426 = vadd.f32 %v2158, %v2425
  %v2427 = vpop.f32.mrf.mxu0
  %v2428 = vadd.f32 %v2160, %v2427
  %2429 = vmatmul.bf16.gmra.mxu0 %v1566
  %v2430 = vpop.f32.mrf.mxu0
  %v2431 = vadd.f32 %v2163, %v2430
  %v2432 = vpop.f32.mrf.mxu0
  %v2433 = vadd.f32 %v2165, %v2432
  %2434 = vmatmul.bf16.gmra.mxu0 %v1571
  %v2435 = vpop.f32.mrf.mxu0
  %v2436 = vadd.f32 %v2168, %v2435
  %v2437 = vpop.f32.mrf.mxu0
  %2438 = vdwg.mxu0
  %2439 = vmatpush.bf16.msra.mxu0 %v2346
  %2440 = vmatpush.bf16.msra.mxu0 %v2345
  %2441 = vmatpush.bf16.msra.mxu0 %v2344
  %2442 = vmatpush.bf16.msra.mxu0 %v2343
  %2443 = vmatpush.bf16.msra.mxu0 %v2342
  %2444 = vmatpush.bf16.msra.mxu0 %v2341
  %2445 = vmatpush.bf16.msra.mxu0 %v2340
  %2446 = vmatpush.bf16.msra.mxu0 %v2339
  %2447 = vmatmul.bf16.gmra.mxu0 %v1557
  %v2448 = vpop.f32.mrf.mxu0
  %v2449 = vadd.f32 %v2421, %v2448
  %v2450 = vpop.f32.mrf.mxu0
  %v2451 = vadd.f32 %v2423, %v2450
  %2452 = vmatmul.bf16.gmra.mxu0 %v1562
  %v2453 = vpop.f32.mrf.mxu0
  %v2454 = vadd.f32 %v2426, %v2453
  %v2455 = vpop.f32.mrf.mxu0
  %v2456 = vadd.f32 %v2428, %v2455
  %2457 = vmatmul.bf16.gmra.mxu0 %v1567
  %v2458 = vpop.f32.mrf.mxu0
  %v2459 = vadd.f32 %v2431, %v2458
  %v2460 = vpop.f32.mrf.mxu0
  %v2461 = vadd.f32 %v2433, %v2460
  %2462 = vmatmul.bf16.gmra.mxu0 %v1572
  %v2463 = vpop.f32.mrf.mxu0
  %v2464 = vadd.f32 %v2436, %v2463
  %v2465 = vpop.f32.mrf.mxu0
  %2466 = vdwg.mxu0
  %2467 = vmatpush.bf16.msra.mxu0 %v2354
  %2468 = vmatpush.bf16.msra.mxu0 %v2353
  %2469 = vmatpush.bf16.msra.mxu0 %v2352
  %2470 = vmatpush.bf16.msra.mxu0 %v2351
  %2471 = vmatpush.bf16.msra.mxu0 %v2350
  %2472 = vmatpush.bf16.msra.mxu0 %v2349
  %2473 = vmatpush.bf16.msra.mxu0 %v2348
  %2474 = vmatpush.bf16.msra.mxu0 %v2347
  %2475 = vmatmul.bf16.gmra.mxu0 %v1558
  %v2476 = vpop.f32.mrf.mxu0
  %v2477 = vadd.f32 %v2449, %v2476
  %v2478 = vpop.f32.mrf.mxu0
  %v2479 = vadd.f32 %v2451, %v2478
  %2480 = vmatmul.bf16.gmra.mxu0 %v1563
  %v2481 = vpop.f32.mrf.mxu0
  %v2482 = vadd.f32 %v2454, %v2481
  %v2483 = vpop.f32.mrf.mxu0
  %v2484 = vadd.f32 %v2456, %v2483
  %2485 = vmatmul.bf16.gmra.mxu0 %v1568
  %v2486 = vpop.f32.mrf.mxu0
  %v2487 = vadd.f32 %v2459, %v2486
  %v2488 = vpop.f32.mrf.mxu0
  %v2489 = vadd.f32 %v2461, %v2488
  %2490 = vmatmul.bf16.gmra.mxu0 %v1573
  %v2491 = vpop.f32.mrf.mxu0
  %v2492 = vadd.f32 %v2464, %v2491
  %v2493 = vpop.f32.mrf.mxu0
  %2494 = vdwg.mxu0
  %2495 = vmatpush.bf16.msra.mxu0 %v2362
  %2496 = vmatpush.bf16.msra.mxu0 %v2361
  %2497 = vmatpush.bf16.msra.mxu0 %v2360
  %2498 = vmatpush.bf16.msra.mxu0 %v2359
  %2499 = vmatpush.bf16.msra.mxu0 %v2358
  %2500 = vmatpush.bf16.msra.mxu0 %v2357
  %2501 = vmatpush.bf16.msra.mxu0 %v2356
  %2502 = vmatpush.bf16.msra.mxu0 %v2355
  %2503 = vmatmul.bf16.gmra.mxu0 %v1559
  %v2504 = vpop.f32.mrf.mxu0
  %v2505 = vadd.f32 %v2477, %v2504
  %v2506 = vpop.f32.mrf.mxu0
  %v2507 = vadd.f32 %v2479, %v2506
  %2508 = vmatmul.bf16.gmra.mxu0 %v1564
  %v2509 = vpop.f32.mrf.mxu0
  %v2510 = vadd.f32 %v2482, %v2509
  %v2511 = vpop.f32.mrf.mxu0
  %v2512 = vadd.f32 %v2484, %v2511
  %2513 = vmatmul.bf16.gmra.mxu0 %v1569
  %v2514 = vpop.f32.mrf.mxu0
  %v2515 = vadd.f32 %v2487, %v2514
  %v2516 = vpop.f32.mrf.mxu0
  %v2517 = vadd.f32 %v2489, %v2516
  %2518 = vmatmul.bf16.gmra.mxu0 %v1574
  %v2519 = vpop.f32.mrf.mxu0
  %v2520 = vadd.f32 %v2492, %v2519
  %v2521 = vpop.f32.mrf.mxu0
  %2522 = vdwg.mxu0
  %2523 = vmatpush.bf16.msra.mxu0 %v2370
  %2524 = vmatpush.bf16.msra.mxu0 %v2369
  %2525 = vmatpush.bf16.msra.mxu0 %v2368
  %2526 = vmatpush.bf16.msra.mxu0 %v2367
  %2527 = vmatpush.bf16.msra.mxu0 %v2366
  %2528 = vmatpush.bf16.msra.mxu0 %v2365
  %2529 = vmatpush.bf16.msra.mxu0 %v2364
  %2530 = vmatpush.bf16.msra.mxu0 %v2363
  %2531 = vmatmul.bf16.gmra.mxu0 %v1560
  %v2532 = vpop.f32.mrf.mxu0
  %v2533 = vadd.f32 %v2505, %v2532
  %v2534 = vpop.f32.mrf.mxu0
  %v2535 = vadd.f32 %v2507, %v2534
  %2536 = vmatmul.bf16.gmra.mxu0 %v1565
  %v2537 = vpop.f32.mrf.mxu0
  %v2538 = vadd.f32 %v2510, %v2537
  %v2539 = vpop.f32.mrf.mxu0
  %v2540 = vadd.f32 %v2512, %v2539
  %2541 = vmatmul.bf16.gmra.mxu0 %v1570
  %v2542 = vpop.f32.mrf.mxu0
  %v2543 = vadd.f32 %v2515, %v2542
  %v2544 = vpop.f32.mrf.mxu0
  %v2545 = vadd.f32 %v2517, %v2544
  %2546 = vmatmul.bf16.gmra.mxu0 %v1575
  %v2547 = vpop.f32.mrf.mxu0
  %v2548 = vadd.f32 %v2520, %v2547
  %v2549 = vpop.f32.mrf.mxu0
  %2550 = vdwg.mxu0
  %v2551 = vld [vmem:[#allocation3 + $0x50] sm:$0xff]
  %v2552 = vld [vmem:[#allocation3 + $0x58] sm:$0xff]
  %v2553 = vld [vmem:[#allocation3 + $0x60] sm:$0xff]
  %v2554 = vld [vmem:[#allocation3 + $0x68] sm:$0xff]
  %v2555 = vld [vmem:[#allocation3 + $0x70] sm:$0xff]
  %v2556 = vld [vmem:[#allocation3 + $0x118] sm:$0xff]
  %v2557 = vld [vmem:[#allocation3 + $0x120] sm:$0xff]
  %v2558 = vld [vmem:[#allocation3 + $0x128] sm:$0xff]
  %v2559 = vld [vmem:[#allocation3 + $0x130] sm:$0xff]
  %v2560 = vld [vmem:[#allocation3 + $0x138] sm:$0xff]
  %v2561 = vld [vmem:[#allocation3 + $0x1e0] sm:$0xff]
  %v2562 = vld [vmem:[#allocation3 + $0x1e8] sm:$0xff]
  %v2563 = vld [vmem:[#allocation3 + $0x1f0] sm:$0xff]
  %v2564 = vld [vmem:[#allocation3 + $0x1f8] sm:$0xff]
  %v2565 = vld [vmem:[#allocation3 + $0x200] sm:$0xff]
  %v2566 = vld [vmem:[#allocation3 + $0x2a8] sm:$0xff]
  %v2567 = vld [vmem:[#allocation3 + $0x2b0] sm:$0xff]
  %v2568 = vld [vmem:[#allocation3 + $0x2b8] sm:$0xff]
  %v2569 = vld [vmem:[#allocation3 + $0x2c0] sm:$0xff]
  %v2570 = vld [vmem:[#allocation3 + $0x2c8] sm:$0xff]
  %v2571 = vld [vmem:[#allocation3 + $0x370] sm:$0xff]
  %v2572 = vld [vmem:[#allocation3 + $0x378] sm:$0xff]
  %v2573 = vld [vmem:[#allocation3 + $0x380] sm:$0xff]
  %v2574 = vld [vmem:[#allocation3 + $0x388] sm:$0xff]
  %v2575 = vld [vmem:[#allocation3 + $0x390] sm:$0xff]
  %v2576 = vld [vmem:[#allocation3 + $0x438] sm:$0xff]
  %v2577 = vld [vmem:[#allocation3 + $0x440] sm:$0xff]
  %v2578 = vld [vmem:[#allocation3 + $0x448] sm:$0xff]
  %v2579 = vld [vmem:[#allocation3 + $0x450] sm:$0xff]
  %v2580 = vld [vmem:[#allocation3 + $0x458] sm:$0xff]
  %v2581 = vld [vmem:[#allocation3 + $0x500] sm:$0x3]
  %v2582 = vld [vmem:[#allocation3 + $0x508] sm:$0x3]
  %v2583 = vld [vmem:[#allocation3 + $0x510] sm:$0x3]
  %v2584 = vld [vmem:[#allocation3 + $0x518] sm:$0x3]
  %v2585 = vld [vmem:[#allocation3 + $0x520] sm:$0x3]
  %v2586 = vpack.c.bf16 %v2556, %v2551
  %v2587 = vpack.c.bf16 %v2557, %v2552
  %v2588 = vpack.c.bf16 %v2558, %v2553
  %v2589 = vpack.c.bf16 %v2559, %v2554
  %v2590 = vpack.c.bf16 %v2560, %v2555
  %v2591 = vpack.c.bf16 %v2566, %v2561
  %v2592 = vpack.c.bf16 %v2567, %v2562
  %v2593 = vpack.c.bf16 %v2568, %v2563
  %v2594 = vpack.c.bf16 %v2569, %v2564
  %v2595 = vpack.c.bf16 %v2570, %v2565
  %v2596 = vpack.c.bf16 %v2576, %v2571
  %v2597 = vpack.c.bf16 %v2577, %v2572
  %v2598 = vpack.c.bf16 %v2578, %v2573
  %v2599 = vpack.c.bf16 %v2579, %v2574
  %v2600 = vpack.c.bf16 %v2580, %v2575
  %v2601 = vpack.c.bf16 %v2581, %v2581
  %v2602 = vpack.c.bf16 %v2582, %v2582
  %v2603 = vpack.c.bf16 %v2583, %v2583
  %v2604 = vpack.c.bf16 %v2584, %v2584
  %v2605 = vpack.c.bf16 %v2585, %v2585
  %v2606 = vld [vmem:[%s3 + $0x280] sm:$0xf]
  %v2607 = vld [vmem:[%s3 + $0x284] sm:$0xf]
  %v2608 = vld [vmem:[%s3 + $0x288] sm:$0xf]
  %v2609 = vld [vmem:[%s3 + $0x28c] sm:$0xf]
  %v2610 = vld [vmem:[%s3 + $0x290] sm:$0xf]
  %v2611 = vld [vmem:[%s3 + $0x294] sm:$0xf]
  %v2612 = vld [vmem:[%s3 + $0x298] sm:$0xf]
  %v2613 = vld [vmem:[%s3 + $0x29c] sm:$0xf]
  %v2614 = vld [vmem:[%s3 + $0x2a0] sm:$0xf]
  %v2615 = vld [vmem:[%s3 + $0x2a4] sm:$0xf]
  %v2616 = vld [vmem:[%s3 + $0x2a8] sm:$0xf]
  %v2617 = vld [vmem:[%s3 + $0x2ac] sm:$0xf]
  %v2618 = vld [vmem:[%s3 + $0x2b0] sm:$0xf]
  %v2619 = vld [vmem:[%s3 + $0x2b4] sm:$0xf]
  %v2620 = vld [vmem:[%s3 + $0x2b8] sm:$0xf]
  %v2621 = vld [vmem:[%s3 + $0x2bc] sm:$0xf]
  %v2622 = vld [vmem:[%s3 + $0x2c0] sm:$0xf]
  %v2623 = vld [vmem:[%s3 + $0x2c4] sm:$0xf]
  %v2624 = vld [vmem:[%s3 + $0x2c8] sm:$0xf]
  %v2625 = vld [vmem:[%s3 + $0x2cc] sm:$0xf]
  %v2626 = vld [vmem:[%s3 + $0x2d0] sm:$0xf]
  %v2627 = vld [vmem:[%s3 + $0x2d4] sm:$0xf]
  %v2628 = vld [vmem:[%s3 + $0x2d8] sm:$0xf]
  %v2629 = vld [vmem:[%s3 + $0x2dc] sm:$0xf]
  %v2630 = vld [vmem:[%s3 + $0x2e0] sm:$0xf]
  %v2631 = vld [vmem:[%s3 + $0x2e4] sm:$0xf]
  %v2632 = vld [vmem:[%s3 + $0x2e8] sm:$0xf]
  %v2633 = vld [vmem:[%s3 + $0x2ec] sm:$0xf]
  %v2634 = vld [vmem:[%s3 + $0x2f0] sm:$0xf]
  %v2635 = vld [vmem:[%s3 + $0x2f4] sm:$0xf]
  %v2636 = vld [vmem:[%s3 + $0x2f8] sm:$0xf]
  %v2637 = vld [vmem:[%s3 + $0x2fc] sm:$0xf]
  %v2638 = vld [vmem:[%s3 + $0x300] sm:$0xf]
  %v2639 = vld [vmem:[%s3 + $0x304] sm:$0xf]
  %v2640 = vld [vmem:[%s3 + $0x308] sm:$0xf]
  %v2641 = vld [vmem:[%s3 + $0x30c] sm:$0xf]
  %v2642 = vld [vmem:[%s3 + $0x310] sm:$0xf]
  %v2643 = vld [vmem:[%s3 + $0x314] sm:$0xf]
  %v2644 = vld [vmem:[%s3 + $0x318] sm:$0xf]
  %v2645 = vld [vmem:[%s3 + $0x31c] sm:$0xf]
  %v2646 = vld [vmem:[%s3 + $0x320] sm:$0xf]
  %v2647 = vld [vmem:[%s3 + $0x324] sm:$0xf]
  %v2648 = vld [vmem:[%s3 + $0x328] sm:$0xf]
  %v2649 = vld [vmem:[%s3 + $0x32c] sm:$0xf]
  %v2650 = vld [vmem:[%s3 + $0x330] sm:$0xf]
  %v2651 = vld [vmem:[%s3 + $0x334] sm:$0xf]
  %v2652 = vld [vmem:[%s3 + $0x338] sm:$0xf]
  %v2653 = vld [vmem:[%s3 + $0x33c] sm:$0xf]
  %v2654 = vld [vmem:[%s3 + $0x340] sm:$0xf]
  %v2655 = vld [vmem:[%s3 + $0x344] sm:$0xf]
  %v2656 = vld [vmem:[%s3 + $0x348] sm:$0xf]
  %v2657 = vld [vmem:[%s3 + $0x34c] sm:$0xf]
  %v2658 = vld [vmem:[%s3 + $0x350] sm:$0xf]
  %v2659 = vld [vmem:[%s3 + $0x354] sm:$0xf]
  %v2660 = vld [vmem:[%s3 + $0x358] sm:$0xf]
  %v2661 = vld [vmem:[%s3 + $0x35c] sm:$0xf]
  %v2662 = vld [vmem:[%s3 + $0x360] sm:$0xf]
  %v2663 = vld [vmem:[%s3 + $0x364] sm:$0xf]
  %v2664 = vld [vmem:[%s3 + $0x368] sm:$0xf]
  %v2665 = vld [vmem:[%s3 + $0x36c] sm:$0xf]
  %v2666 = vld [vmem:[%s3 + $0x370] sm:$0xf]
  %v2667 = vld [vmem:[%s3 + $0x374] sm:$0xf]
  %v2668 = vld [vmem:[%s3 + $0x378] sm:$0xf]
  %v2669 = vld [vmem:[%s3 + $0x37c] sm:$0xf]
  %v2670 = vld [vmem:[%s3 + $0x380] sm:$0xf]
  %v2671 = vld [vmem:[%s3 + $0x384] sm:$0xf]
  %v2672 = vld [vmem:[%s3 + $0x388] sm:$0xf]
  %v2673 = vld [vmem:[%s3 + $0x38c] sm:$0xf]
  %v2674 = vld [vmem:[%s3 + $0x390] sm:$0xf]
  %v2675 = vld [vmem:[%s3 + $0x394] sm:$0xf]
  %v2676 = vld [vmem:[%s3 + $0x398] sm:$0xf]
  %v2677 = vld [vmem:[%s3 + $0x39c] sm:$0xf]
  %v2678 = vld [vmem:[%s3 + $0x3a0] sm:$0xf]
  %v2679 = vld [vmem:[%s3 + $0x3a4] sm:$0xf]
  %v2680 = vld [vmem:[%s3 + $0x3a8] sm:$0xf]
  %v2681 = vld [vmem:[%s3 + $0x3ac] sm:$0xf]
  %v2682 = vld [vmem:[%s3 + $0x3b0] sm:$0xf]
  %v2683 = vld [vmem:[%s3 + $0x3b4] sm:$0xf]
  %v2684 = vld [vmem:[%s3 + $0x3b8] sm:$0xf]
  %v2685 = vld [vmem:[%s3 + $0x3bc] sm:$0xf]
  %v2766 = vunpack.c.l.b16 %v2606
  %v2767 = vunpack.c.l.b16 %v2607
  %v2768 = vunpack.c.l.b16 %v2608
  %v2769 = vunpack.c.l.b16 %v2609
  %v2770 = vunpack.c.l.b16 %v2610
  %v2771 = vunpack.c.l.b16 %v2611
  %v2772 = vunpack.c.l.b16 %v2612
  %v2773 = vunpack.c.l.b16 %v2613
  %v2774 = vunpack.c.l.b16 %v2614
  %v2775 = vunpack.c.l.b16 %v2615
  %v2776 = vunpack.c.l.b16 %v2616
  %v2777 = vunpack.c.l.b16 %v2617
  %v2778 = vunpack.c.l.b16 %v2618
  %v2779 = vunpack.c.l.b16 %v2619
  %v2780 = vunpack.c.l.b16 %v2620
  %v2781 = vunpack.c.l.b16 %v2621
  %v2782 = vunpack.c.l.b16 %v2622
  %v2783 = vunpack.c.l.b16 %v2623
  %v2784 = vunpack.c.l.b16 %v2624
  %v2785 = vunpack.c.l.b16 %v2625
  %v2786 = vunpack.c.l.b16 %v2626
  %v2787 = vunpack.c.l.b16 %v2627
  %v2788 = vunpack.c.l.b16 %v2628
  %v2789 = vunpack.c.l.b16 %v2629
  %v2790 = vunpack.c.l.b16 %v2630
  %v2791 = vunpack.c.l.b16 %v2631
  %v2792 = vunpack.c.l.b16 %v2632
  %v2793 = vunpack.c.l.b16 %v2633
  %v2794 = vunpack.c.l.b16 %v2634
  %v2795 = vunpack.c.l.b16 %v2635
  %v2796 = vunpack.c.l.b16 %v2636
  %v2797 = vunpack.c.l.b16 %v2637
  %v2798 = vunpack.c.l.b16 %v2638
  %v2799 = vunpack.c.l.b16 %v2639
  %v2800 = vunpack.c.l.b16 %v2640
  %v2801 = vunpack.c.l.b16 %v2641
  %v2802 = vunpack.c.l.b16 %v2642
  %v2803 = vunpack.c.l.b16 %v2643
  %v2804 = vunpack.c.l.b16 %v2644
  %v2805 = vunpack.c.l.b16 %v2645
  %v2806 = vunpack.c.l.b16 %v2646
  %v2807 = vunpack.c.l.b16 %v2647
  %v2808 = vunpack.c.l.b16 %v2648
  %v2809 = vunpack.c.l.b16 %v2649
  %v2810 = vunpack.c.l.b16 %v2650
  %v2811 = vunpack.c.l.b16 %v2651
  %v2812 = vunpack.c.l.b16 %v2652
  %v2813 = vunpack.c.l.b16 %v2653
  %v2814 = vunpack.c.l.b16 %v2654
  %v2815 = vunpack.c.l.b16 %v2655
  %v2816 = vunpack.c.l.b16 %v2656
  %v2817 = vunpack.c.l.b16 %v2657
  %v2818 = vunpack.c.l.b16 %v2658
  %v2819 = vunpack.c.l.b16 %v2659
  %v2820 = vunpack.c.l.b16 %v2660
  %v2821 = vunpack.c.l.b16 %v2661
  %v2822 = vunpack.c.l.b16 %v2662
  %v2823 = vunpack.c.l.b16 %v2663
  %v2824 = vunpack.c.l.b16 %v2664
  %v2825 = vunpack.c.l.b16 %v2665
  %v2826 = vunpack.c.l.b16 %v2666
  %v2827 = vunpack.c.l.b16 %v2667
  %v2828 = vunpack.c.l.b16 %v2668
  %v2829 = vunpack.c.l.b16 %v2669
  %v2830 = vunpack.c.l.b16 %v2670
  %v2831 = vunpack.c.l.b16 %v2671
  %v2832 = vunpack.c.l.b16 %v2672
  %v2833 = vunpack.c.l.b16 %v2673
  %v2834 = vunpack.c.l.b16 %v2674
  %v2835 = vunpack.c.l.b16 %v2675
  %v2836 = vunpack.c.l.b16 %v2676
  %v2837 = vunpack.c.l.b16 %v2677
  %v2838 = vunpack.c.l.b16 %v2678
  %v2839 = vunpack.c.l.b16 %v2679
  %v2840 = vunpack.c.l.b16 %v2680
  %v2841 = vunpack.c.l.b16 %v2681
  %v2842 = vunpack.c.l.b16 %v2682
  %v2843 = vunpack.c.l.b16 %v2683
  %v2844 = vunpack.c.l.b16 %v2684
  %v2845 = vunpack.c.l.b16 %v2685
  %v2846 = vpack.c.b16 %v2767, %v2766
  %v2847 = vpack.c.b16 %v2769, %v2768
  %v2848 = vpack.c.b16 %v2771, %v2770
  %v2849 = vpack.c.b16 %v2773, %v2772
  %v2850 = vpack.c.b16 %v2775, %v2774
  %v2851 = vpack.c.b16 %v2777, %v2776
  %v2852 = vpack.c.b16 %v2779, %v2778
  %v2853 = vpack.c.b16 %v2781, %v2780
  %v2854 = vpack.c.b16 %v2783, %v2782
  %v2855 = vpack.c.b16 %v2785, %v2784
  %v2856 = vpack.c.b16 %v2787, %v2786
  %v2857 = vpack.c.b16 %v2789, %v2788
  %v2858 = vpack.c.b16 %v2791, %v2790
  %v2859 = vpack.c.b16 %v2793, %v2792
  %v2860 = vpack.c.b16 %v2795, %v2794
  %v2861 = vpack.c.b16 %v2797, %v2796
  %v2862 = vpack.c.b16 %v2799, %v2798
  %v2863 = vpack.c.b16 %v2801, %v2800
  %v2864 = vpack.c.b16 %v2803, %v2802
  %v2865 = vpack.c.b16 %v2805, %v2804
  %v2866 = vpack.c.b16 %v2807, %v2806
  %v2867 = vpack.c.b16 %v2809, %v2808
  %v2868 = vpack.c.b16 %v2811, %v2810
  %v2869 = vpack.c.b16 %v2813, %v2812
  %v2870 = vpack.c.b16 %v2815, %v2814
  %v2871 = vpack.c.b16 %v2817, %v2816
  %v2872 = vpack.c.b16 %v2819, %v2818
  %v2873 = vpack.c.b16 %v2821, %v2820
  %v2874 = vpack.c.b16 %v2823, %v2822
  %v2875 = vpack.c.b16 %v2825, %v2824
  %v2876 = vpack.c.b16 %v2827, %v2826
  %v2877 = vpack.c.b16 %v2829, %v2828
  %v2878 = vpack.c.b16 %v2831, %v2830
  %v2879 = vpack.c.b16 %v2833, %v2832
  %v2880 = vpack.c.b16 %v2835, %v2834
  %v2881 = vpack.c.b16 %v2837, %v2836
  %v2882 = vpack.c.b16 %v2839, %v2838
  %v2883 = vpack.c.b16 %v2841, %v2840
  %v2884 = vpack.c.b16 %v2843, %v2842
  %v2885 = vpack.c.b16 %v2845, %v2844
  %2926 = vmatpush.bf16.msra.mxu0 %v2853
  %2927 = vmatpush.bf16.msra.mxu0 %v2852
  %2928 = vmatpush.bf16.msra.mxu0 %v2851
  %2929 = vmatpush.bf16.msra.mxu0 %v2850
  %2930 = vmatpush.bf16.msra.mxu0 %v2849
  %2931 = vmatpush.bf16.msra.mxu0 %v2848
  %2932 = vmatpush.bf16.msra.mxu0 %v2847
  %2933 = vmatpush.bf16.msra.mxu0 %v2846
  %2934 = vmatmul.bf16.gmra.mxu0 %v2586
  %v2935 = vpop.f32.mrf.mxu0
  %v2936 = vadd.f32 0.0, %v2935
  %v2937 = vpop.f32.mrf.mxu0
  %v2938 = vadd.f32 0.0, %v2937
  %2939 = vmatmul.bf16.gmra.mxu0 %v2591
  %v2940 = vpop.f32.mrf.mxu0
  %v2941 = vadd.f32 0.0, %v2940
  %v2942 = vpop.f32.mrf.mxu0
  %v2943 = vadd.f32 0.0, %v2942
  %2944 = vmatmul.bf16.gmra.mxu0 %v2596
  %v2945 = vpop.f32.mrf.mxu0
  %v2946 = vadd.f32 0.0, %v2945
  %v2947 = vpop.f32.mrf.mxu0
  %v2948 = vadd.f32 0.0, %v2947
  %2949 = vmatmul.bf16.gmra.mxu0 %v2601
  %v2950 = vpop.f32.mrf.mxu0
  %v2951 = vadd.f32 0.0, %v2950
  %v2952 = vpop.f32.mrf.mxu0
  %2953 = vdwg.mxu0
  %2954 = vmatpush.bf16.msra.mxu0 %v2861
  %2955 = vmatpush.bf16.msra.mxu0 %v2860
  %2956 = vmatpush.bf16.msra.mxu0 %v2859
  %2957 = vmatpush.bf16.msra.mxu0 %v2858
  %2958 = vmatpush.bf16.msra.mxu0 %v2857
  %2959 = vmatpush.bf16.msra.mxu0 %v2856
  %2960 = vmatpush.bf16.msra.mxu0 %v2855
  %2961 = vmatpush.bf16.msra.mxu0 %v2854
  %2962 = vmatmul.bf16.gmra.mxu0 %v2587
  %v2963 = vpop.f32.mrf.mxu0
  %v2964 = vadd.f32 %v2936, %v2963
  %v2965 = vpop.f32.mrf.mxu0
  %v2966 = vadd.f32 %v2938, %v2965
  %2967 = vmatmul.bf16.gmra.mxu0 %v2592
  %v2968 = vpop.f32.mrf.mxu0
  %v2969 = vadd.f32 %v2941, %v2968
  %v2970 = vpop.f32.mrf.mxu0
  %v2971 = vadd.f32 %v2943, %v2970
  %2972 = vmatmul.bf16.gmra.mxu0 %v2597
  %v2973 = vpop.f32.mrf.mxu0
  %v2974 = vadd.f32 %v2946, %v2973
  %v2975 = vpop.f32.mrf.mxu0
  %v2976 = vadd.f32 %v2948, %v2975
  %2977 = vmatmul.bf16.gmra.mxu0 %v2602
  %v2978 = vpop.f32.mrf.mxu0
  %v2979 = vadd.f32 %v2951, %v2978
  %v2980 = vpop.f32.mrf.mxu0
  %2981 = vdwg.mxu0
  %2982 = vmatpush.bf16.msra.mxu0 %v2869
  %2983 = vmatpush.bf16.msra.mxu0 %v2868
  %2984 = vmatpush.bf16.msra.mxu0 %v2867
  %2985 = vmatpush.bf16.msra.mxu0 %v2866
  %2986 = vmatpush.bf16.msra.mxu0 %v2865
  %2987 = vmatpush.bf16.msra.mxu0 %v2864
  %2988 = vmatpush.bf16.msra.mxu0 %v2863
  %2989 = vmatpush.bf16.msra.mxu0 %v2862
  %2990 = vmatmul.bf16.gmra.mxu0 %v2588
  %v2991 = vpop.f32.mrf.mxu0
  %v2992 = vadd.f32 %v2964, %v2991
  %v2993 = vpop.f32.mrf.mxu0
  %v2994 = vadd.f32 %v2966, %v2993
  %2995 = vmatmul.bf16.gmra.mxu0 %v2593
  %v2996 = vpop.f32.mrf.mxu0
  %v2997 = vadd.f32 %v2969, %v2996
  %v2998 = vpop.f32.mrf.mxu0
  %v2999 = vadd.f32 %v2971, %v2998
  %3000 = vmatmul.bf16.gmra.mxu0 %v2598
  %v3001 = vpop.f32.mrf.mxu0
  %v3002 = vadd.f32 %v2974, %v3001
  %v3003 = vpop.f32.mrf.mxu0
  %v3004 = vadd.f32 %v2976, %v3003
  %3005 = vmatmul.bf16.gmra.mxu0 %v2603
  %v3006 = vpop.f32.mrf.mxu0
  %v3007 = vadd.f32 %v2979, %v3006
  %v3008 = vpop.f32.mrf.mxu0
  %3009 = vdwg.mxu0
  %3010 = vmatpush.bf16.msra.mxu0 %v2877
  %3011 = vmatpush.bf16.msra.mxu0 %v2876
  %3012 = vmatpush.bf16.msra.mxu0 %v2875
  %3013 = vmatpush.bf16.msra.mxu0 %v2874
  %3014 = vmatpush.bf16.msra.mxu0 %v2873
  %3015 = vmatpush.bf16.msra.mxu0 %v2872
  %3016 = vmatpush.bf16.msra.mxu0 %v2871
  %3017 = vmatpush.bf16.msra.mxu0 %v2870
  %3018 = vmatmul.bf16.gmra.mxu0 %v2589
  %v3019 = vpop.f32.mrf.mxu0
  %v3020 = vadd.f32 %v2992, %v3019
  %v3021 = vpop.f32.mrf.mxu0
  %v3022 = vadd.f32 %v2994, %v3021
  %3023 = vmatmul.bf16.gmra.mxu0 %v2594
  %v3024 = vpop.f32.mrf.mxu0
  %v3025 = vadd.f32 %v2997, %v3024
  %v3026 = vpop.f32.mrf.mxu0
  %v3027 = vadd.f32 %v2999, %v3026
  %3028 = vmatmul.bf16.gmra.mxu0 %v2599
  %v3029 = vpop.f32.mrf.mxu0
  %v3030 = vadd.f32 %v3002, %v3029
  %v3031 = vpop.f32.mrf.mxu0
  %v3032 = vadd.f32 %v3004, %v3031
  %3033 = vmatmul.bf16.gmra.mxu0 %v2604
  %v3034 = vpop.f32.mrf.mxu0
  %v3035 = vadd.f32 %v3007, %v3034
  %v3036 = vpop.f32.mrf.mxu0
  %3037 = vdwg.mxu0
  %3038 = vmatpush.bf16.msra.mxu0 %v2885
  %3039 = vmatpush.bf16.msra.mxu0 %v2884
  %3040 = vmatpush.bf16.msra.mxu0 %v2883
  %3041 = vmatpush.bf16.msra.mxu0 %v2882
  %3042 = vmatpush.bf16.msra.mxu0 %v2881
  %3043 = vmatpush.bf16.msra.mxu0 %v2880
  %3044 = vmatpush.bf16.msra.mxu0 %v2879
  %3045 = vmatpush.bf16.msra.mxu0 %v2878
  %3046 = vmatmul.bf16.gmra.mxu0 %v2590
  %v3047 = vpop.f32.mrf.mxu0
  %v3048 = vadd.f32 %v3020, %v3047
  %v3049 = vpop.f32.mrf.mxu0
  %v3050 = vadd.f32 %v3022, %v3049
  %3051 = vmatmul.bf16.gmra.mxu0 %v2595
  %v3052 = vpop.f32.mrf.mxu0
  %v3053 = vadd.f32 %v3025, %v3052
  %v3054 = vpop.f32.mrf.mxu0
  %v3055 = vadd.f32 %v3027, %v3054
  %3056 = vmatmul.bf16.gmra.mxu0 %v2600
  %v3057 = vpop.f32.mrf.mxu0
  %v3058 = vadd.f32 %v3030, %v3057
  %v3059 = vpop.f32.mrf.mxu0
  %v3060 = vadd.f32 %v3032, %v3059
  %3061 = vmatmul.bf16.gmra.mxu0 %v2605
  %v3062 = vpop.f32.mrf.mxu0
  %v3063 = vadd.f32 %v3035, %v3062
  %v3064 = vpop.f32.mrf.mxu0
  %3065 = vdwg.mxu0
  %v3066 = vadd.f32 %v2533, %v3048
  %v3067 = vadd.f32 %v2535, %v3050
  %v3068 = vadd.f32 %v2538, %v3053
  %v3069 = vadd.f32 %v2540, %v3055
  %v3070 = vadd.f32 %v2543, %v3058
  %v3071 = vadd.f32 %v2545, %v3060
  %v3072 = vadd.f32 %v2548, %v3063
  %v3073 = vld [vmem:[#allocation3 + $0x78] sm:$0xff]
  %v3074 = vld [vmem:[#allocation3 + $0x80] sm:$0xff]
  %v3075 = vld [vmem:[#allocation3 + $0x88] sm:$0xff]
  %v3076 = vld [vmem:[#allocation3 + $0x90] sm:$0xff]
  %v3077 = vld [vmem:[#allocation3 + $0x98] sm:$0xff]
  %v3078 = vld [vmem:[#allocation3 + $0x140] sm:$0xff]
  %v3079 = vld [vmem:[#allocation3 + $0x148] sm:$0xff]
  %v3080 = vld [vmem:[#allocation3 + $0x150] sm:$0xff]
  %v3081 = vld [vmem:[#allocation3 + $0x158] sm:$0xff]
  %v3082 = vld [vmem:[#allocation3 + $0x160] sm:$0xff]
  %v3083 = vld [vmem:[#allocation3 + $0x208] sm:$0xff]
  %v3084 = vld [vmem:[#allocation3 + $0x210] sm:$0xff]
  %v3085 = vld [vmem:[#allocation3 + $0x218] sm:$0xff]
  %v3086 = vld [vmem:[#allocation3 + $0x220] sm:$0xff]
  %v3087 = vld [vmem:[#allocation3 + $0x228] sm:$0xff]
  %v3088 = vld [vmem:[#allocation3 + $0x2d0] sm:$0xff]
  %v3089 = vld [vmem:[#allocation3 + $0x2d8] sm:$0xff]
  %v3090 = vld [vmem:[#allocation3 + $0x2e0] sm:$0xff]
  %v3091 = vld [vmem:[#allocation3 + $0x2e8] sm:$0xff]
  %v3092 = vld [vmem:[#allocation3 + $0x2f0] sm:$0xff]
  %v3093 = vld [vmem:[#allocation3 + $0x398] sm:$0xff]
  %v3094 = vld [vmem:[#allocation3 + $0x3a0] sm:$0xff]
  %v3095 = vld [vmem:[#allocation3 + $0x3a8] sm:$0xff]
  %v3096 = vld [vmem:[#allocation3 + $0x3b0] sm:$0xff]
  %v3097 = vld [vmem:[#allocation3 + $0x3b8] sm:$0xff]
  %v3098 = vld [vmem:[#allocation3 + $0x460] sm:$0xff]
  %v3099 = vld [vmem:[#allocation3 + $0x468] sm:$0xff]
  %v3100 = vld [vmem:[#allocation3 + $0x470] sm:$0xff]
  %v3101 = vld [vmem:[#allocation3 + $0x478] sm:$0xff]
  %v3102 = vld [vmem:[#allocation3 + $0x480] sm:$0xff]
  %v3103 = vld [vmem:[#allocation3 + $0x528] sm:$0x3]
  %v3104 = vld [vmem:[#allocation3 + $0x530] sm:$0x3]
  %v3105 = vld [vmem:[#allocation3 + $0x538] sm:$0x3]
  %v3106 = vld [vmem:[#allocation3 + $0x540] sm:$0x3]
  %v3107 = vld [vmem:[#allocation3 + $0x548] sm:$0x3]
  %v3108 = vpack.c.bf16 %v3078, %v3073
  %v3109 = vpack.c.bf16 %v3079, %v3074
  %v3110 = vpack.c.bf16 %v3080, %v3075
  %v3111 = vpack.c.bf16 %v3081, %v3076
  %v3112 = vpack.c.bf16 %v3082, %v3077
  %v3113 = vpack.c.bf16 %v3088, %v3083
  %v3114 = vpack.c.bf16 %v3089, %v3084
  %v3115 = vpack.c.bf16 %v3090, %v3085
  %v3116 = vpack.c.bf16 %v3091, %v3086
  %v3117 = vpack.c.bf16 %v3092, %v3087
  %v3118 = vpack.c.bf16 %v3098, %v3093
  %v3119 = vpack.c.bf16 %v3099, %v3094
  %v3120 = vpack.c.bf16 %v3100, %v3095
  %v3121 = vpack.c.bf16 %v3101, %v3096
  %v3122 = vpack.c.bf16 %v3102, %v3097
  %v3123 = vpack.c.bf16 %v3103, %v3103
  %v3124 = vpack.c.bf16 %v3104, %v3104
  %v3125 = vpack.c.bf16 %v3105, %v3105
  %v3126 = vpack.c.bf16 %v3106, %v3106
  %v3127 = vpack.c.bf16 %v3107, %v3107
  %v3128 = vld [vmem:[%s3 + $0x3c0] sm:$0xf]
  %v3129 = vld [vmem:[%s3 + $0x3c4] sm:$0xf]
  %v3130 = vld [vmem:[%s3 + $0x3c8] sm:$0xf]
  %v3131 = vld [vmem:[%s3 + $0x3cc] sm:$0xf]
  %v3132 = vld [vmem:[%s3 + $0x3d0] sm:$0xf]
  %v3133 = vld [vmem:[%s3 + $0x3d4] sm:$0xf]
  %v3134 = vld [vmem:[%s3 + $0x3d8] sm:$0xf]
  %v3135 = vld [vmem:[%s3 + $0x3dc] sm:$0xf]
  %v3136 = vld [vmem:[%s3 + $0x3e0] sm:$0xf]
  %v3137 = vld [vmem:[%s3 + $0x3e4] sm:$0xf]
  %v3138 = vld [vmem:[%s3 + $0x3e8] sm:$0xf]
  %v3139 = vld [vmem:[%s3 + $0x3ec] sm:$0xf]
  %v3140 = vld [vmem:[%s3 + $0x3f0] sm:$0xf]
  %v3141 = vld [vmem:[%s3 + $0x3f4] sm:$0xf]
  %v3142 = vld [vmem:[%s3 + $0x3f8] sm:$0xf]
  %v3143 = vld [vmem:[%s3 + $0x3fc] sm:$0xf]
  %v3144 = vld [vmem:[%s3 + $0x400] sm:$0xf]
  %v3145 = vld [vmem:[%s3 + $0x404] sm:$0xf]
  %v3146 = vld [vmem:[%s3 + $0x408] sm:$0xf]
  %v3147 = vld [vmem:[%s3 + $0x40c] sm:$0xf]
  %v3148 = vld [vmem:[%s3 + $0x410] sm:$0xf]
  %v3149 = vld [vmem:[%s3 + $0x414] sm:$0xf]
  %v3150 = vld [vmem:[%s3 + $0x418] sm:$0xf]
  %v3151 = vld [vmem:[%s3 + $0x41c] sm:$0xf]
  %v3152 = vld [vmem:[%s3 + $0x420] sm:$0xf]
  %v3153 = vld [vmem:[%s3 + $0x424] sm:$0xf]
  %v3154 = vld [vmem:[%s3 + $0x428] sm:$0xf]
  %v3155 = vld [vmem:[%s3 + $0x42c] sm:$0xf]
  %v3156 = vld [vmem:[%s3 + $0x430] sm:$0xf]
  %v3157 = vld [vmem:[%s3 + $0x434] sm:$0xf]
  %v3158 = vld [vmem:[%s3 + $0x438] sm:$0xf]
  %v3159 = vld [vmem:[%s3 + $0x43c] sm:$0xf]
  %v3160 = vld [vmem:[%s3 + $0x440] sm:$0xf]
  %v3161 = vld [vmem:[%s3 + $0x444] sm:$0xf]
  %v3162 = vld [vmem:[%s3 + $0x448] sm:$0xf]
  %v3163 = vld [vmem:[%s3 + $0x44c] sm:$0xf]
  %v3164 = vld [vmem:[%s3 + $0x450] sm:$0xf]
  %v3165 = vld [vmem:[%s3 + $0x454] sm:$0xf]
  %v3166 = vld [vmem:[%s3 + $0x458] sm:$0xf]
  %v3167 = vld [vmem:[%s3 + $0x45c] sm:$0xf]
  %v3168 = vld [vmem:[%s3 + $0x460] sm:$0xf]
  %v3169 = vld [vmem:[%s3 + $0x464] sm:$0xf]
  %v3170 = vld [vmem:[%s3 + $0x468] sm:$0xf]
  %v3171 = vld [vmem:[%s3 + $0x46c] sm:$0xf]
  %v3172 = vld [vmem:[%s3 + $0x470] sm:$0xf]
  %v3173 = vld [vmem:[%s3 + $0x474] sm:$0xf]
  %v3174 = vld [vmem:[%s3 + $0x478] sm:$0xf]
  %v3175 = vld [vmem:[%s3 + $0x47c] sm:$0xf]
  %v3176 = vld [vmem:[%s3 + $0x480] sm:$0xf]
  %v3177 = vld [vmem:[%s3 + $0x484] sm:$0xf]
  %v3178 = vld [vmem:[%s3 + $0x488] sm:$0xf]
  %v3179 = vld [vmem:[%s3 + $0x48c] sm:$0xf]
  %v3180 = vld [vmem:[%s3 + $0x490] sm:$0xf]
  %v3181 = vld [vmem:[%s3 + $0x494] sm:$0xf]
  %v3182 = vld [vmem:[%s3 + $0x498] sm:$0xf]
  %v3183 = vld [vmem:[%s3 + $0x49c] sm:$0xf]
  %v3184 = vld [vmem:[%s3 + $0x4a0] sm:$0xf]
  %v3185 = vld [vmem:[%s3 + $0x4a4] sm:$0xf]
  %v3186 = vld [vmem:[%s3 + $0x4a8] sm:$0xf]
  %v3187 = vld [vmem:[%s3 + $0x4ac] sm:$0xf]
  %v3188 = vld [vmem:[%s3 + $0x4b0] sm:$0xf]
  %v3189 = vld [vmem:[%s3 + $0x4b4] sm:$0xf]
  %v3190 = vld [vmem:[%s3 + $0x4b8] sm:$0xf]
  %v3191 = vld [vmem:[%s3 + $0x4bc] sm:$0xf]
  %v3192 = vld [vmem:[%s3 + $0x4c0] sm:$0xf]
  %v3193 = vld [vmem:[%s3 + $0x4c4] sm:$0xf]
  %v3194 = vld [vmem:[%s3 + $0x4c8] sm:$0xf]
  %v3195 = vld [vmem:[%s3 + $0x4cc] sm:$0xf]
  %v3196 = vld [vmem:[%s3 + $0x4d0] sm:$0xf]
  %v3197 = vld [vmem:[%s3 + $0x4d4] sm:$0xf]
  %v3198 = vld [vmem:[%s3 + $0x4d8] sm:$0xf]
  %v3199 = vld [vmem:[%s3 + $0x4dc] sm:$0xf]
  %v3200 = vld [vmem:[%s3 + $0x4e0] sm:$0xf]
  %v3201 = vld [vmem:[%s3 + $0x4e4] sm:$0xf]
  %v3202 = vld [vmem:[%s3 + $0x4e8] sm:$0xf]
  %v3203 = vld [vmem:[%s3 + $0x4ec] sm:$0xf]
  %v3204 = vld [vmem:[%s3 + $0x4f0] sm:$0xf]
  %v3205 = vld [vmem:[%s3 + $0x4f4] sm:$0xf]
  %v3206 = vld [vmem:[%s3 + $0x4f8] sm:$0xf]
  %v3207 = vld [vmem:[%s3 + $0x4fc] sm:$0xf]
  %v3288 = vunpack.c.l.b16 %v3128
  %v3289 = vunpack.c.l.b16 %v3129
  %v3290 = vunpack.c.l.b16 %v3130
  %v3291 = vunpack.c.l.b16 %v3131
  %v3292 = vunpack.c.l.b16 %v3132
  %v3293 = vunpack.c.l.b16 %v3133
  %v3294 = vunpack.c.l.b16 %v3134
  %v3295 = vunpack.c.l.b16 %v3135
  %v3296 = vunpack.c.l.b16 %v3136
  %v3297 = vunpack.c.l.b16 %v3137
  %v3298 = vunpack.c.l.b16 %v3138
  %v3299 = vunpack.c.l.b16 %v3139
  %v3300 = vunpack.c.l.b16 %v3140
  %v3301 = vunpack.c.l.b16 %v3141
  %v3302 = vunpack.c.l.b16 %v3142
  %v3303 = vunpack.c.l.b16 %v3143
  %v3304 = vunpack.c.l.b16 %v3144
  %v3305 = vunpack.c.l.b16 %v3145
  %v3306 = vunpack.c.l.b16 %v3146
  %v3307 = vunpack.c.l.b16 %v3147
  %v3308 = vunpack.c.l.b16 %v3148
  %v3309 = vunpack.c.l.b16 %v3149
  %v3310 = vunpack.c.l.b16 %v3150
  %v3311 = vunpack.c.l.b16 %v3151
  %v3312 = vunpack.c.l.b16 %v3152
  %v3313 = vunpack.c.l.b16 %v3153
  %v3314 = vunpack.c.l.b16 %v3154
  %v3315 = vunpack.c.l.b16 %v3155
  %v3316 = vunpack.c.l.b16 %v3156
  %v3317 = vunpack.c.l.b16 %v3157
  %v3318 = vunpack.c.l.b16 %v3158
  %v3319 = vunpack.c.l.b16 %v3159
  %v3320 = vunpack.c.l.b16 %v3160
  %v3321 = vunpack.c.l.b16 %v3161
  %v3322 = vunpack.c.l.b16 %v3162
  %v3323 = vunpack.c.l.b16 %v3163
  %v3324 = vunpack.c.l.b16 %v3164
  %v3325 = vunpack.c.l.b16 %v3165
  %v3326 = vunpack.c.l.b16 %v3166
  %v3327 = vunpack.c.l.b16 %v3167
  %v3328 = vunpack.c.l.b16 %v3168
  %v3329 = vunpack.c.l.b16 %v3169
  %v3330 = vunpack.c.l.b16 %v3170
  %v3331 = vunpack.c.l.b16 %v3171
  %v3332 = vunpack.c.l.b16 %v3172
  %v3333 = vunpack.c.l.b16 %v3173
  %v3334 = vunpack.c.l.b16 %v3174
  %v3335 = vunpack.c.l.b16 %v3175
  %v3336 = vunpack.c.l.b16 %v3176
  %v3337 = vunpack.c.l.b16 %v3177
  %v3338 = vunpack.c.l.b16 %v3178
  %v3339 = vunpack.c.l.b16 %v3179
  %v3340 = vunpack.c.l.b16 %v3180
  %v3341 = vunpack.c.l.b16 %v3181
  %v3342 = vunpack.c.l.b16 %v3182
  %v3343 = vunpack.c.l.b16 %v3183
  %v3344 = vunpack.c.l.b16 %v3184
  %v3345 = vunpack.c.l.b16 %v3185
  %v3346 = vunpack.c.l.b16 %v3186
  %v3347 = vunpack.c.l.b16 %v3187
  %v3348 = vunpack.c.l.b16 %v3188
  %v3349 = vunpack.c.l.b16 %v3189
  %v3350 = vunpack.c.l.b16 %v3190
  %v3351 = vunpack.c.l.b16 %v3191
  %v3352 = vunpack.c.l.b16 %v3192
  %v3353 = vunpack.c.l.b16 %v3193
  %v3354 = vunpack.c.l.b16 %v3194
  %v3355 = vunpack.c.l.b16 %v3195
  %v3356 = vunpack.c.l.b16 %v3196
  %v3357 = vunpack.c.l.b16 %v3197
  %v3358 = vunpack.c.l.b16 %v3198
  %v3359 = vunpack.c.l.b16 %v3199
  %v3360 = vunpack.c.l.b16 %v3200
  %v3361 = vunpack.c.l.b16 %v3201
  %v3362 = vunpack.c.l.b16 %v3202
  %v3363 = vunpack.c.l.b16 %v3203
  %v3364 = vunpack.c.l.b16 %v3204
  %v3365 = vunpack.c.l.b16 %v3205
  %v3366 = vunpack.c.l.b16 %v3206
  %v3367 = vunpack.c.l.b16 %v3207
  %v3368 = vpack.c.b16 %v3289, %v3288
  %v3369 = vpack.c.b16 %v3291, %v3290
  %v3370 = vpack.c.b16 %v3293, %v3292
  %v3371 = vpack.c.b16 %v3295, %v3294
  %v3372 = vpack.c.b16 %v3297, %v3296
  %v3373 = vpack.c.b16 %v3299, %v3298
  %v3374 = vpack.c.b16 %v3301, %v3300
  %v3375 = vpack.c.b16 %v3303, %v3302
  %v3376 = vpack.c.b16 %v3305, %v3304
  %v3377 = vpack.c.b16 %v3307, %v3306
  %v3378 = vpack.c.b16 %v3309, %v3308
  %v3379 = vpack.c.b16 %v3311, %v3310
  %v3380 = vpack.c.b16 %v3313, %v3312
  %v3381 = vpack.c.b16 %v3315, %v3314
  %v3382 = vpack.c.b16 %v3317, %v3316
  %v3383 = vpack.c.b16 %v3319, %v3318
  %v3384 = vpack.c.b16 %v3321, %v3320
  %v3385 = vpack.c.b16 %v3323, %v3322
  %v3386 = vpack.c.b16 %v3325, %v3324
  %v3387 = vpack.c.b16 %v3327, %v3326
  %v3388 = vpack.c.b16 %v3329, %v3328
  %v3389 = vpack.c.b16 %v3331, %v3330
  %v3390 = vpack.c.b16 %v3333, %v3332
  %v3391 = vpack.c.b16 %v3335, %v3334
  %v3392 = vpack.c.b16 %v3337, %v3336
  %v3393 = vpack.c.b16 %v3339, %v3338
  %v3394 = vpack.c.b16 %v3341, %v3340
  %v3395 = vpack.c.b16 %v3343, %v3342
  %v3396 = vpack.c.b16 %v3345, %v3344
  %v3397 = vpack.c.b16 %v3347, %v3346
  %v3398 = vpack.c.b16 %v3349, %v3348
  %v3399 = vpack.c.b16 %v3351, %v3350
  %v3400 = vpack.c.b16 %v3353, %v3352
  %v3401 = vpack.c.b16 %v3355, %v3354
  %v3402 = vpack.c.b16 %v3357, %v3356
  %v3403 = vpack.c.b16 %v3359, %v3358
  %v3404 = vpack.c.b16 %v3361, %v3360
  %v3405 = vpack.c.b16 %v3363, %v3362
  %v3406 = vpack.c.b16 %v3365, %v3364
  %v3407 = vpack.c.b16 %v3367, %v3366
  %3448 = vmatpush.bf16.msra.mxu0 %v3375
  %3449 = vmatpush.bf16.msra.mxu0 %v3374
  %3450 = vmatpush.bf16.msra.mxu0 %v3373
  %3451 = vmatpush.bf16.msra.mxu0 %v3372
  %3452 = vmatpush.bf16.msra.mxu0 %v3371
  %3453 = vmatpush.bf16.msra.mxu0 %v3370
  %3454 = vmatpush.bf16.msra.mxu0 %v3369
  %3455 = vmatpush.bf16.msra.mxu0 %v3368
  %3456 = vmatmul.bf16.gmra.mxu0 %v3108
  %v3457 = vpop.f32.mrf.mxu0
  %v3458 = vadd.f32 0.0, %v3457
  %v3459 = vpop.f32.mrf.mxu0
  %v3460 = vadd.f32 0.0, %v3459
  %3461 = vmatmul.bf16.gmra.mxu0 %v3113
  %v3462 = vpop.f32.mrf.mxu0
  %v3463 = vadd.f32 0.0, %v3462
  %v3464 = vpop.f32.mrf.mxu0
  %v3465 = vadd.f32 0.0, %v3464
  %3466 = vmatmul.bf16.gmra.mxu0 %v3118
  %v3467 = vpop.f32.mrf.mxu0
  %v3468 = vadd.f32 0.0, %v3467
  %v3469 = vpop.f32.mrf.mxu0
  %v3470 = vadd.f32 0.0, %v3469
  %3471 = vmatmul.bf16.gmra.mxu0 %v3123
  %v3472 = vpop.f32.mrf.mxu0
  %v3473 = vadd.f32 0.0, %v3472
  %v3474 = vpop.f32.mrf.mxu0
  %3475 = vdwg.mxu0
  %3476 = vmatpush.bf16.msra.mxu0 %v3383
  %3477 = vmatpush.bf16.msra.mxu0 %v3382
  %3478 = vmatpush.bf16.msra.mxu0 %v3381
  %3479 = vmatpush.bf16.msra.mxu0 %v3380
  %3480 = vmatpush.bf16.msra.mxu0 %v3379
  %3481 = vmatpush.bf16.msra.mxu0 %v3378
  %3482 = vmatpush.bf16.msra.mxu0 %v3377
  %3483 = vmatpush.bf16.msra.mxu0 %v3376
  %3484 = vmatmul.bf16.gmra.mxu0 %v3109
  %v3485 = vpop.f32.mrf.mxu0
  %v3486 = vadd.f32 %v3458, %v3485
  %v3487 = vpop.f32.mrf.mxu0
  %v3488 = vadd.f32 %v3460, %v3487
  %3489 = vmatmul.bf16.gmra.mxu0 %v3114
  %v3490 = vpop.f32.mrf.mxu0
  %v3491 = vadd.f32 %v3463, %v3490
  %v3492 = vpop.f32.mrf.mxu0
  %v3493 = vadd.f32 %v3465, %v3492
  %3494 = vmatmul.bf16.gmra.mxu0 %v3119
  %v3495 = vpop.f32.mrf.mxu0
  %v3496 = vadd.f32 %v3468, %v3495
  %v3497 = vpop.f32.mrf.mxu0
  %v3498 = vadd.f32 %v3470, %v3497
  %3499 = vmatmul.bf16.gmra.mxu0 %v3124
  %v3500 = vpop.f32.mrf.mxu0
  %v3501 = vadd.f32 %v3473, %v3500
  %v3502 = vpop.f32.mrf.mxu0
  %3503 = vdwg.mxu0
  %3504 = vmatpush.bf16.msra.mxu0 %v3391
  %3505 = vmatpush.bf16.msra.mxu0 %v3390
  %3506 = vmatpush.bf16.msra.mxu0 %v3389
  %3507 = vmatpush.bf16.msra.mxu0 %v3388
  %3508 = vmatpush.bf16.msra.mxu0 %v3387
  %3509 = vmatpush.bf16.msra.mxu0 %v3386
  %3510 = vmatpush.bf16.msra.mxu0 %v3385
  %3511 = vmatpush.bf16.msra.mxu0 %v3384
  %3512 = vmatmul.bf16.gmra.mxu0 %v3110
  %v3513 = vpop.f32.mrf.mxu0
  %v3514 = vadd.f32 %v3486, %v3513
  %v3515 = vpop.f32.mrf.mxu0
  %v3516 = vadd.f32 %v3488, %v3515
  %3517 = vmatmul.bf16.gmra.mxu0 %v3115
  %v3518 = vpop.f32.mrf.mxu0
  %v3519 = vadd.f32 %v3491, %v3518
  %v3520 = vpop.f32.mrf.mxu0
  %v3521 = vadd.f32 %v3493, %v3520
  %3522 = vmatmul.bf16.gmra.mxu0 %v3120
  %v3523 = vpop.f32.mrf.mxu0
  %v3524 = vadd.f32 %v3496, %v3523
  %v3525 = vpop.f32.mrf.mxu0
  %v3526 = vadd.f32 %v3498, %v3525
  %3527 = vmatmul.bf16.gmra.mxu0 %v3125
  %v3528 = vpop.f32.mrf.mxu0
  %v3529 = vadd.f32 %v3501, %v3528
  %v3530 = vpop.f32.mrf.mxu0
  %3531 = vdwg.mxu0
  %3532 = vmatpush.bf16.msra.mxu0 %v3399
  %3533 = vmatpush.bf16.msra.mxu0 %v3398
  %3534 = vmatpush.bf16.msra.mxu0 %v3397
  %3535 = vmatpush.bf16.msra.mxu0 %v3396
  %3536 = vmatpush.bf16.msra.mxu0 %v3395
  %3537 = vmatpush.bf16.msra.mxu0 %v3394
  %3538 = vmatpush.bf16.msra.mxu0 %v3393
  %3539 = vmatpush.bf16.msra.mxu0 %v3392
  %3540 = vmatmul.bf16.gmra.mxu0 %v3111
  %v3541 = vpop.f32.mrf.mxu0
  %v3542 = vadd.f32 %v3514, %v3541
  %v3543 = vpop.f32.mrf.mxu0
  %v3544 = vadd.f32 %v3516, %v3543
  %3545 = vmatmul.bf16.gmra.mxu0 %v3116
  %v3546 = vpop.f32.mrf.mxu0
  %v3547 = vadd.f32 %v3519, %v3546
  %v3548 = vpop.f32.mrf.mxu0
  %v3549 = vadd.f32 %v3521, %v3548
  %3550 = vmatmul.bf16.gmra.mxu0 %v3121
  %v3551 = vpop.f32.mrf.mxu0
  %v3552 = vadd.f32 %v3524, %v3551
  %v3553 = vpop.f32.mrf.mxu0
  %v3554 = vadd.f32 %v3526, %v3553
  %3555 = vmatmul.bf16.gmra.mxu0 %v3126
  %v3556 = vpop.f32.mrf.mxu0
  %v3557 = vadd.f32 %v3529, %v3556
  %v3558 = vpop.f32.mrf.mxu0
  %3559 = vdwg.mxu0
  %3560 = vmatpush.bf16.msra.mxu0 %v3407
  %3561 = vmatpush.bf16.msra.mxu0 %v3406
  %3562 = vmatpush.bf16.msra.mxu0 %v3405
  %3563 = vmatpush.bf16.msra.mxu0 %v3404
  %3564 = vmatpush.bf16.msra.mxu0 %v3403
  %3565 = vmatpush.bf16.msra.mxu0 %v3402
  %3566 = vmatpush.bf16.msra.mxu0 %v3401
  %3567 = vmatpush.bf16.msra.mxu0 %v3400
  %3568 = vmatmul.bf16.gmra.mxu0 %v3112
  %v3569 = vpop.f32.mrf.mxu0
  %v3570 = vadd.f32 %v3542, %v3569
  %v3571 = vpop.f32.mrf.mxu0
  %v3572 = vadd.f32 %v3544, %v3571
  %3573 = vmatmul.bf16.gmra.mxu0 %v3117
  %v3574 = vpop.f32.mrf.mxu0
  %v3575 = vadd.f32 %v3547, %v3574
  %v3576 = vpop.f32.mrf.mxu0
  %v3577 = vadd.f32 %v3549, %v3576
  %3578 = vmatmul.bf16.gmra.mxu0 %v3122
  %v3579 = vpop.f32.mrf.mxu0
  %v3580 = vadd.f32 %v3552, %v3579
  %v3581 = vpop.f32.mrf.mxu0
  %v3582 = vadd.f32 %v3554, %v3581
  %3583 = vmatmul.bf16.gmra.mxu0 %v3127
  %v3584 = vpop.f32.mrf.mxu0
  %v3585 = vadd.f32 %v3557, %v3584
  %v3586 = vpop.f32.mrf.mxu0
  %3587 = vdwg.mxu0
  %v3588 = vadd.f32 %v3066, %v3570
  %v3589 = vadd.f32 %v3067, %v3572
  %v3590 = vadd.f32 %v3068, %v3575
  %v3591 = vadd.f32 %v3069, %v3577
  %v3592 = vadd.f32 %v3070, %v3580
  %v3593 = vadd.f32 %v3071, %v3582
  %v3594 = vadd.f32 %v3072, %v3585
  %v3595 = vld [vmem:[#allocation3 + $0xa0] sm:$0xff]
  %v3596 = vld [vmem:[#allocation3 + $0xa8] sm:$0xff]
  %v3597 = vld [vmem:[#allocation3 + $0xb0] sm:$0xff]
  %v3598 = vld [vmem:[#allocation3 + $0xb8] sm:$0xff]
  %v3599 = vld [vmem:[#allocation3 + $0xc0] sm:$0xff]
  %v3600 = vld [vmem:[#allocation3 + $0x168] sm:$0xff]
  %v3601 = vld [vmem:[#allocation3 + $0x170] sm:$0xff]
  %v3602 = vld [vmem:[#allocation3 + $0x178] sm:$0xff]
  %v3603 = vld [vmem:[#allocation3 + $0x180] sm:$0xff]
  %v3604 = vld [vmem:[#allocation3 + $0x188] sm:$0xff]
  %v3605 = vld [vmem:[#allocation3 + $0x230] sm:$0xff]
  %v3606 = vld [vmem:[#allocation3 + $0x238] sm:$0xff]
  %v3607 = vld [vmem:[#allocation3 + $0x240] sm:$0xff]
  %v3608 = vld [vmem:[#allocation3 + $0x248] sm:$0xff]
  %v3609 = vld [vmem:[#allocation3 + $0x250] sm:$0xff]
  %v3610 = vld [vmem:[#allocation3 + $0x2f8] sm:$0xff]
  %v3611 = vld [vmem:[#allocation3 + $0x300] sm:$0xff]
  %v3612 = vld [vmem:[#allocation3 + $0x308] sm:$0xff]
  %v3613 = vld [vmem:[#allocation3 + $0x310] sm:$0xff]
  %v3614 = vld [vmem:[#allocation3 + $0x318] sm:$0xff]
  %v3615 = vld [vmem:[#allocation3 + $0x3c0] sm:$0xff]
  %v3616 = vld [vmem:[#allocation3 + $0x3c8] sm:$0xff]
  %v3617 = vld [vmem:[#allocation3 + $0x3d0] sm:$0xff]
  %v3618 = vld [vmem:[#allocation3 + $0x3d8] sm:$0xff]
  %v3619 = vld [vmem:[#allocation3 + $0x3e0] sm:$0xff]
  %v3620 = vld [vmem:[#allocation3 + $0x488] sm:$0xff]
  %v3621 = vld [vmem:[#allocation3 + $0x490] sm:$0xff]
  %v3622 = vld [vmem:[#allocation3 + $0x498] sm:$0xff]
  %v3623 = vld [vmem:[#allocation3 + $0x4a0] sm:$0xff]
  %v3624 = vld [vmem:[#allocation3 + $0x4a8] sm:$0xff]
  %v3625 = vld [vmem:[#allocation3 + $0x550] sm:$0x3]
  %v3626 = vld [vmem:[#allocation3 + $0x558] sm:$0x3]
  %v3627 = vld [vmem:[#allocation3 + $0x560] sm:$0x3]
  %v3628 = vld [vmem:[#allocation3 + $0x568] sm:$0x3]
  %v3629 = vld [vmem:[#allocation3 + $0x570] sm:$0x3]
  %v3630 = vpack.c.bf16 %v3600, %v3595
  %v3631 = vpack.c.bf16 %v3601, %v3596
  %v3632 = vpack.c.bf16 %v3602, %v3597
  %v3633 = vpack.c.bf16 %v3603, %v3598
  %v3634 = vpack.c.bf16 %v3604, %v3599
  %v3635 = vpack.c.bf16 %v3610, %v3605
  %v3636 = vpack.c.bf16 %v3611, %v3606
  %v3637 = vpack.c.bf16 %v3612, %v3607
  %v3638 = vpack.c.bf16 %v3613, %v3608
  %v3639 = vpack.c.bf16 %v3614, %v3609
  %v3640 = vpack.c.bf16 %v3620, %v3615
  %v3641 = vpack.c.bf16 %v3621, %v3616
  %v3642 = vpack.c.bf16 %v3622, %v3617
  %v3643 = vpack.c.bf16 %v3623, %v3618
  %v3644 = vpack.c.bf16 %v3624, %v3619
  %v3645 = vpack.c.bf16 %v3625, %v3625
  %v3646 = vpack.c.bf16 %v3626, %v3626
  %v3647 = vpack.c.bf16 %v3627, %v3627
  %v3648 = vpack.c.bf16 %v3628, %v3628
  %v3649 = vpack.c.bf16 %v3629, %v3629
  %v3650 = vld [vmem:[%s3 + $0x500] sm:$0xf]
  %v3651 = vld [vmem:[%s3 + $0x504] sm:$0xf]
  %v3652 = vld [vmem:[%s3 + $0x508] sm:$0xf]
  %v3653 = vld [vmem:[%s3 + $0x50c] sm:$0xf]
  %v3654 = vld [vmem:[%s3 + $0x510] sm:$0xf]
  %v3655 = vld [vmem:[%s3 + $0x514] sm:$0xf]
  %v3656 = vld [vmem:[%s3 + $0x518] sm:$0xf]
  %v3657 = vld [vmem:[%s3 + $0x51c] sm:$0xf]
  %v3658 = vld [vmem:[%s3 + $0x520] sm:$0xf]
  %v3659 = vld [vmem:[%s3 + $0x524] sm:$0xf]
  %v3660 = vld [vmem:[%s3 + $0x528] sm:$0xf]
  %v3661 = vld [vmem:[%s3 + $0x52c] sm:$0xf]
  %v3662 = vld [vmem:[%s3 + $0x530] sm:$0xf]
  %v3663 = vld [vmem:[%s3 + $0x534] sm:$0xf]
  %v3664 = vld [vmem:[%s3 + $0x538] sm:$0xf]
  %v3665 = vld [vmem:[%s3 + $0x53c] sm:$0xf]
  %v3666 = vld [vmem:[%s3 + $0x540] sm:$0xf]
  %v3667 = vld [vmem:[%s3 + $0x544] sm:$0xf]
  %v3668 = vld [vmem:[%s3 + $0x548] sm:$0xf]
  %v3669 = vld [vmem:[%s3 + $0x54c] sm:$0xf]
  %v3670 = vld [vmem:[%s3 + $0x550] sm:$0xf]
  %v3671 = vld [vmem:[%s3 + $0x554] sm:$0xf]
  %v3672 = vld [vmem:[%s3 + $0x558] sm:$0xf]
  %v3673 = vld [vmem:[%s3 + $0x55c] sm:$0xf]
  %v3674 = vld [vmem:[%s3 + $0x560] sm:$0xf]
  %v3675 = vld [vmem:[%s3 + $0x564] sm:$0xf]
  %v3676 = vld [vmem:[%s3 + $0x568] sm:$0xf]
  %v3677 = vld [vmem:[%s3 + $0x56c] sm:$0xf]
  %v3678 = vld [vmem:[%s3 + $0x570] sm:$0xf]
  %v3679 = vld [vmem:[%s3 + $0x574] sm:$0xf]
  %v3680 = vld [vmem:[%s3 + $0x578] sm:$0xf]
  %v3681 = vld [vmem:[%s3 + $0x57c] sm:$0xf]
  %v3682 = vld [vmem:[%s3 + $0x580] sm:$0xf]
  %v3683 = vld [vmem:[%s3 + $0x584] sm:$0xf]
  %v3684 = vld [vmem:[%s3 + $0x588] sm:$0xf]
  %v3685 = vld [vmem:[%s3 + $0x58c] sm:$0xf]
  %v3686 = vld [vmem:[%s3 + $0x590] sm:$0xf]
  %v3687 = vld [vmem:[%s3 + $0x594] sm:$0xf]
  %v3688 = vld [vmem:[%s3 + $0x598] sm:$0xf]
  %v3689 = vld [vmem:[%s3 + $0x59c] sm:$0xf]
  %v3690 = vld [vmem:[%s3 + $0x5a0] sm:$0xf]
  %v3691 = vld [vmem:[%s3 + $0x5a4] sm:$0xf]
  %v3692 = vld [vmem:[%s3 + $0x5a8] sm:$0xf]
  %v3693 = vld [vmem:[%s3 + $0x5ac] sm:$0xf]
  %v3694 = vld [vmem:[%s3 + $0x5b0] sm:$0xf]
  %v3695 = vld [vmem:[%s3 + $0x5b4] sm:$0xf]
  %v3696 = vld [vmem:[%s3 + $0x5b8] sm:$0xf]
  %v3697 = vld [vmem:[%s3 + $0x5bc] sm:$0xf]
  %v3698 = vld [vmem:[%s3 + $0x5c0] sm:$0xf]
  %v3699 = vld [vmem:[%s3 + $0x5c4] sm:$0xf]
  %v3700 = vld [vmem:[%s3 + $0x5c8] sm:$0xf]
  %v3701 = vld [vmem:[%s3 + $0x5cc] sm:$0xf]
  %v3702 = vld [vmem:[%s3 + $0x5d0] sm:$0xf]
  %v3703 = vld [vmem:[%s3 + $0x5d4] sm:$0xf]
  %v3704 = vld [vmem:[%s3 + $0x5d8] sm:$0xf]
  %v3705 = vld [vmem:[%s3 + $0x5dc] sm:$0xf]
  %v3706 = vld [vmem:[%s3 + $0x5e0] sm:$0xf]
  %v3707 = vld [vmem:[%s3 + $0x5e4] sm:$0xf]
  %v3708 = vld [vmem:[%s3 + $0x5e8] sm:$0xf]
  %v3709 = vld [vmem:[%s3 + $0x5ec] sm:$0xf]
  %v3710 = vld [vmem:[%s3 + $0x5f0] sm:$0xf]
  %v3711 = vld [vmem:[%s3 + $0x5f4] sm:$0xf]
  %v3712 = vld [vmem:[%s3 + $0x5f8] sm:$0xf]
  %v3713 = vld [vmem:[%s3 + $0x5fc] sm:$0xf]
  %v3714 = vld [vmem:[%s3 + $0x600] sm:$0xf]
  %v3715 = vld [vmem:[%s3 + $0x604] sm:$0xf]
  %v3716 = vld [vmem:[%s3 + $0x608] sm:$0xf]
  %v3717 = vld [vmem:[%s3 + $0x60c] sm:$0xf]
  %v3718 = vld [vmem:[%s3 + $0x610] sm:$0xf]
  %v3719 = vld [vmem:[%s3 + $0x614] sm:$0xf]
  %v3720 = vld [vmem:[%s3 + $0x618] sm:$0xf]
  %v3721 = vld [vmem:[%s3 + $0x61c] sm:$0xf]
  %v3722 = vld [vmem:[%s3 + $0x620] sm:$0xf]
  %v3723 = vld [vmem:[%s3 + $0x624] sm:$0xf]
  %v3724 = vld [vmem:[%s3 + $0x628] sm:$0xf]
  %v3725 = vld [vmem:[%s3 + $0x62c] sm:$0xf]
  %v3726 = vld [vmem:[%s3 + $0x630] sm:$0xf]
  %v3727 = vld [vmem:[%s3 + $0x634] sm:$0xf]
  %v3728 = vld [vmem:[%s3 + $0x638] sm:$0xf]
  %v3729 = vld [vmem:[%s3 + $0x63c] sm:$0xf]
  %v3810 = vunpack.c.l.b16 %v3650
  %v3811 = vunpack.c.l.b16 %v3651
  %v3812 = vunpack.c.l.b16 %v3652
  %v3813 = vunpack.c.l.b16 %v3653
  %v3814 = vunpack.c.l.b16 %v3654
  %v3815 = vunpack.c.l.b16 %v3655
  %v3816 = vunpack.c.l.b16 %v3656
  %v3817 = vunpack.c.l.b16 %v3657
  %v3818 = vunpack.c.l.b16 %v3658
  %v3819 = vunpack.c.l.b16 %v3659
  %v3820 = vunpack.c.l.b16 %v3660
  %v3821 = vunpack.c.l.b16 %v3661
  %v3822 = vunpack.c.l.b16 %v3662
  %v3823 = vunpack.c.l.b16 %v3663
  %v3824 = vunpack.c.l.b16 %v3664
  %v3825 = vunpack.c.l.b16 %v3665
  %v3826 = vunpack.c.l.b16 %v3666
  %v3827 = vunpack.c.l.b16 %v3667
  %v3828 = vunpack.c.l.b16 %v3668
  %v3829 = vunpack.c.l.b16 %v3669
  %v3830 = vunpack.c.l.b16 %v3670
  %v3831 = vunpack.c.l.b16 %v3671
  %v3832 = vunpack.c.l.b16 %v3672
  %v3833 = vunpack.c.l.b16 %v3673
  %v3834 = vunpack.c.l.b16 %v3674
  %v3835 = vunpack.c.l.b16 %v3675
  %v3836 = vunpack.c.l.b16 %v3676
  %v3837 = vunpack.c.l.b16 %v3677
  %v3838 = vunpack.c.l.b16 %v3678
  %v3839 = vunpack.c.l.b16 %v3679
  %v3840 = vunpack.c.l.b16 %v3680
  %v3841 = vunpack.c.l.b16 %v3681
  %v3842 = vunpack.c.l.b16 %v3682
  %v3843 = vunpack.c.l.b16 %v3683
  %v3844 = vunpack.c.l.b16 %v3684
  %v3845 = vunpack.c.l.b16 %v3685
  %v3846 = vunpack.c.l.b16 %v3686
  %v3847 = vunpack.c.l.b16 %v3687
  %v3848 = vunpack.c.l.b16 %v3688
  %v3849 = vunpack.c.l.b16 %v3689
  %v3850 = vunpack.c.l.b16 %v3690
  %v3851 = vunpack.c.l.b16 %v3691
  %v3852 = vunpack.c.l.b16 %v3692
  %v3853 = vunpack.c.l.b16 %v3693
  %v3854 = vunpack.c.l.b16 %v3694
  %v3855 = vunpack.c.l.b16 %v3695
  %v3856 = vunpack.c.l.b16 %v3696
  %v3857 = vunpack.c.l.b16 %v3697
  %v3858 = vunpack.c.l.b16 %v3698
  %v3859 = vunpack.c.l.b16 %v3699
  %v3860 = vunpack.c.l.b16 %v3700
  %v3861 = vunpack.c.l.b16 %v3701
  %v3862 = vunpack.c.l.b16 %v3702
  %v3863 = vunpack.c.l.b16 %v3703
  %v3864 = vunpack.c.l.b16 %v3704
  %v3865 = vunpack.c.l.b16 %v3705
  %v3866 = vunpack.c.l.b16 %v3706
  %v3867 = vunpack.c.l.b16 %v3707
  %v3868 = vunpack.c.l.b16 %v3708
  %v3869 = vunpack.c.l.b16 %v3709
  %v3870 = vunpack.c.l.b16 %v3710
  %v3871 = vunpack.c.l.b16 %v3711
  %v3872 = vunpack.c.l.b16 %v3712
  %v3873 = vunpack.c.l.b16 %v3713
  %v3874 = vunpack.c.l.b16 %v3714
  %v3875 = vunpack.c.l.b16 %v3715
  %v3876 = vunpack.c.l.b16 %v3716
  %v3877 = vunpack.c.l.b16 %v3717
  %v3878 = vunpack.c.l.b16 %v3718
  %v3879 = vunpack.c.l.b16 %v3719
  %v3880 = vunpack.c.l.b16 %v3720
  %v3881 = vunpack.c.l.b16 %v3721
  %v3882 = vunpack.c.l.b16 %v3722
  %v3883 = vunpack.c.l.b16 %v3723
  %v3884 = vunpack.c.l.b16 %v3724
  %v3885 = vunpack.c.l.b16 %v3725
  %v3886 = vunpack.c.l.b16 %v3726
  %v3887 = vunpack.c.l.b16 %v3727
  %v3888 = vunpack.c.l.b16 %v3728
  %v3889 = vunpack.c.l.b16 %v3729
  %v3890 = vpack.c.b16 %v3811, %v3810
  %v3891 = vpack.c.b16 %v3813, %v3812
  %v3892 = vpack.c.b16 %v3815, %v3814
  %v3893 = vpack.c.b16 %v3817, %v3816
  %v3894 = vpack.c.b16 %v3819, %v3818
  %v3895 = vpack.c.b16 %v3821, %v3820
  %v3896 = vpack.c.b16 %v3823, %v3822
  %v3897 = vpack.c.b16 %v3825, %v3824
  %v3898 = vpack.c.b16 %v3827, %v3826
  %v3899 = vpack.c.b16 %v3829, %v3828
  %v3900 = vpack.c.b16 %v3831, %v3830
  %v3901 = vpack.c.b16 %v3833, %v3832
  %v3902 = vpack.c.b16 %v3835, %v3834
  %v3903 = vpack.c.b16 %v3837, %v3836
  %v3904 = vpack.c.b16 %v3839, %v3838
  %v3905 = vpack.c.b16 %v3841, %v3840
  %v3906 = vpack.c.b16 %v3843, %v3842
  %v3907 = vpack.c.b16 %v3845, %v3844
  %v3908 = vpack.c.b16 %v3847, %v3846
  %v3909 = vpack.c.b16 %v3849, %v3848
  %v3910 = vpack.c.b16 %v3851, %v3850
  %v3911 = vpack.c.b16 %v3853, %v3852
  %v3912 = vpack.c.b16 %v3855, %v3854
  %v3913 = vpack.c.b16 %v3857, %v3856
  %v3914 = vpack.c.b16 %v3859, %v3858
  %v3915 = vpack.c.b16 %v3861, %v3860
  %v3916 = vpack.c.b16 %v3863, %v3862
  %v3917 = vpack.c.b16 %v3865, %v3864
  %v3918 = vpack.c.b16 %v3867, %v3866
  %v3919 = vpack.c.b16 %v3869, %v3868
  %v3920 = vpack.c.b16 %v3871, %v3870
  %v3921 = vpack.c.b16 %v3873, %v3872
  %v3922 = vpack.c.b16 %v3875, %v3874
  %v3923 = vpack.c.b16 %v3877, %v3876
  %v3924 = vpack.c.b16 %v3879, %v3878
  %v3925 = vpack.c.b16 %v3881, %v3880
  %v3926 = vpack.c.b16 %v3883, %v3882
  %v3927 = vpack.c.b16 %v3885, %v3884
  %v3928 = vpack.c.b16 %v3887, %v3886
  %v3929 = vpack.c.b16 %v3889, %v3888
  %3970 = vmatpush.bf16.msra.mxu0 %v3897
  %3971 = vmatpush.bf16.msra.mxu0 %v3896
  %3972 = vmatpush.bf16.msra.mxu0 %v3895
  %3973 = vmatpush.bf16.msra.mxu0 %v3894
  %3974 = vmatpush.bf16.msra.mxu0 %v3893
  %3975 = vmatpush.bf16.msra.mxu0 %v3892
  %3976 = vmatpush.bf16.msra.mxu0 %v3891
  %3977 = vmatpush.bf16.msra.mxu0 %v3890
  %3978 = vmatmul.bf16.gmra.mxu0 %v3630
  %v3979 = vpop.f32.mrf.mxu0
  %v3980 = vadd.f32 0.0, %v3979
  %v3981 = vpop.f32.mrf.mxu0
  %v3982 = vadd.f32 0.0, %v3981
  %3983 = vmatmul.bf16.gmra.mxu0 %v3635
  %v3984 = vpop.f32.mrf.mxu0
  %v3985 = vadd.f32 0.0, %v3984
  %v3986 = vpop.f32.mrf.mxu0
  %v3987 = vadd.f32 0.0, %v3986
  %3988 = vmatmul.bf16.gmra.mxu0 %v3640
  %v3989 = vpop.f32.mrf.mxu0
  %v3990 = vadd.f32 0.0, %v3989
  %v3991 = vpop.f32.mrf.mxu0
  %v3992 = vadd.f32 0.0, %v3991
  %3993 = vmatmul.bf16.gmra.mxu0 %v3645
  %v3994 = vpop.f32.mrf.mxu0
  %v3995 = vadd.f32 0.0, %v3994
  %v3996 = vpop.f32.mrf.mxu0
  %3997 = vdwg.mxu0
  %3998 = vmatpush.bf16.msra.mxu0 %v3905
  %3999 = vmatpush.bf16.msra.mxu0 %v3904
  %4000 = vmatpush.bf16.msra.mxu0 %v3903
  %4001 = vmatpush.bf16.msra.mxu0 %v3902
  %4002 = vmatpush.bf16.msra.mxu0 %v3901
  %4003 = vmatpush.bf16.msra.mxu0 %v3900
  %4004 = vmatpush.bf16.msra.mxu0 %v3899
  %4005 = vmatpush.bf16.msra.mxu0 %v3898
  %4006 = vmatmul.bf16.gmra.mxu0 %v3631
  %v4007 = vpop.f32.mrf.mxu0
  %v4008 = vadd.f32 %v3980, %v4007
  %v4009 = vpop.f32.mrf.mxu0
  %v4010 = vadd.f32 %v3982, %v4009
  %4011 = vmatmul.bf16.gmra.mxu0 %v3636
  %v4012 = vpop.f32.mrf.mxu0
  %v4013 = vadd.f32 %v3985, %v4012
  %v4014 = vpop.f32.mrf.mxu0
  %v4015 = vadd.f32 %v3987, %v4014
  %4016 = vmatmul.bf16.gmra.mxu0 %v3641
  %v4017 = vpop.f32.mrf.mxu0
  %v4018 = vadd.f32 %v3990, %v4017
  %v4019 = vpop.f32.mrf.mxu0
  %v4020 = vadd.f32 %v3992, %v4019
  %4021 = vmatmul.bf16.gmra.mxu0 %v3646
  %v4022 = vpop.f32.mrf.mxu0
  %v4023 = vadd.f32 %v3995, %v4022
  %v4024 = vpop.f32.mrf.mxu0
  %4025 = vdwg.mxu0
  %4026 = vmatpush.bf16.msra.mxu0 %v3913
  %4027 = vmatpush.bf16.msra.mxu0 %v3912
  %4028 = vmatpush.bf16.msra.mxu0 %v3911
  %4029 = vmatpush.bf16.msra.mxu0 %v3910
  %4030 = vmatpush.bf16.msra.mxu0 %v3909
  %4031 = vmatpush.bf16.msra.mxu0 %v3908
  %4032 = vmatpush.bf16.msra.mxu0 %v3907
  %4033 = vmatpush.bf16.msra.mxu0 %v3906
  %4034 = vmatmul.bf16.gmra.mxu0 %v3632
  %v4035 = vpop.f32.mrf.mxu0
  %v4036 = vadd.f32 %v4008, %v4035
  %v4037 = vpop.f32.mrf.mxu0
  %v4038 = vadd.f32 %v4010, %v4037
  %4039 = vmatmul.bf16.gmra.mxu0 %v3637
  %v4040 = vpop.f32.mrf.mxu0
  %v4041 = vadd.f32 %v4013, %v4040
  %v4042 = vpop.f32.mrf.mxu0
  %v4043 = vadd.f32 %v4015, %v4042
  %4044 = vmatmul.bf16.gmra.mxu0 %v3642
  %v4045 = vpop.f32.mrf.mxu0
  %v4046 = vadd.f32 %v4018, %v4045
  %v4047 = vpop.f32.mrf.mxu0
  %v4048 = vadd.f32 %v4020, %v4047
  %4049 = vmatmul.bf16.gmra.mxu0 %v3647
  %v4050 = vpop.f32.mrf.mxu0
  %v4051 = vadd.f32 %v4023, %v4050
  %v4052 = vpop.f32.mrf.mxu0
  %4053 = vdwg.mxu0
  %4054 = vmatpush.bf16.msra.mxu0 %v3921
  %4055 = vmatpush.bf16.msra.mxu0 %v3920
  %4056 = vmatpush.bf16.msra.mxu0 %v3919
  %4057 = vmatpush.bf16.msra.mxu0 %v3918
  %4058 = vmatpush.bf16.msra.mxu0 %v3917
  %4059 = vmatpush.bf16.msra.mxu0 %v3916
  %4060 = vmatpush.bf16.msra.mxu0 %v3915
  %4061 = vmatpush.bf16.msra.mxu0 %v3914
  %4062 = vmatmul.bf16.gmra.mxu0 %v3633
  %v4063 = vpop.f32.mrf.mxu0
  %v4064 = vadd.f32 %v4036, %v4063
  %v4065 = vpop.f32.mrf.mxu0
  %v4066 = vadd.f32 %v4038, %v4065
  %4067 = vmatmul.bf16.gmra.mxu0 %v3638
  %v4068 = vpop.f32.mrf.mxu0
  %v4069 = vadd.f32 %v4041, %v4068
  %v4070 = vpop.f32.mrf.mxu0
  %v4071 = vadd.f32 %v4043, %v4070
  %4072 = vmatmul.bf16.gmra.mxu0 %v3643
  %v4073 = vpop.f32.mrf.mxu0
  %v4074 = vadd.f32 %v4046, %v4073
  %v4075 = vpop.f32.mrf.mxu0
  %v4076 = vadd.f32 %v4048, %v4075
  %4077 = vmatmul.bf16.gmra.mxu0 %v3648
  %v4078 = vpop.f32.mrf.mxu0
  %v4079 = vadd.f32 %v4051, %v4078
  %v4080 = vpop.f32.mrf.mxu0
  %4081 = vdwg.mxu0
  %4082 = vmatpush.bf16.msra.mxu0 %v3929
  %4083 = vmatpush.bf16.msra.mxu0 %v3928
  %4084 = vmatpush.bf16.msra.mxu0 %v3927
  %4085 = vmatpush.bf16.msra.mxu0 %v3926
  %4086 = vmatpush.bf16.msra.mxu0 %v3925
  %4087 = vmatpush.bf16.msra.mxu0 %v3924
  %4088 = vmatpush.bf16.msra.mxu0 %v3923
  %4089 = vmatpush.bf16.msra.mxu0 %v3922
  %4090 = vmatmul.bf16.gmra.mxu0 %v3634
  %v4091 = vpop.f32.mrf.mxu0
  %v4092 = vadd.f32 %v4064, %v4091
  %v4093 = vpop.f32.mrf.mxu0
  %v4094 = vadd.f32 %v4066, %v4093
  %4095 = vmatmul.bf16.gmra.mxu0 %v3639
  %v4096 = vpop.f32.mrf.mxu0
  %v4097 = vadd.f32 %v4069, %v4096
  %v4098 = vpop.f32.mrf.mxu0
  %v4099 = vadd.f32 %v4071, %v4098
  %4100 = vmatmul.bf16.gmra.mxu0 %v3644
  %v4101 = vpop.f32.mrf.mxu0
  %v4102 = vadd.f32 %v4074, %v4101
  %v4103 = vpop.f32.mrf.mxu0
  %v4104 = vadd.f32 %v4076, %v4103
  %4105 = vmatmul.bf16.gmra.mxu0 %v3649
  %v4106 = vpop.f32.mrf.mxu0
  %v4107 = vadd.f32 %v4079, %v4106
  %v4108 = vpop.f32.mrf.mxu0
  %4109 = vdwg.mxu0
  %v4110 = vadd.f32 %v3588, %v4092
  %v4111 = vadd.f32 %v3589, %v4094
  %v4112 = vadd.f32 %v3590, %v4097
  %v4113 = vadd.f32 %v3591, %v4099
  %v4114 = vadd.f32 %v3592, %v4102
  %v4115 = vadd.f32 %v3593, %v4104
  %v4116 = vadd.f32 %v3594, %v4107
  %v4117 = vld [vmem:[%s4] sm:$0x1]
  %v4119 = vperm.slane %v4117, 0
  %v4121 = vadd.f32 %v4110, %v4119
  %v4122 = vadd.f32 %v4111, %v4119
  %v4123 = vadd.f32 %v4112, %v4119
  %v4124 = vadd.f32 %v4113, %v4119
  %v4125 = vadd.f32 %v4114, %v4119
  %v4126 = vadd.f32 %v4115, %v4119
  %v4127 = vadd.f32 %v4116, %v4119
  %v4128 = vmax.f32 %v4121, 0.0
  %v4129 = vmax.f32 %v4122, 0.0
  %v4130 = vmax.f32 %v4123, 0.0
  %v4131 = vmax.f32 %v4124, 0.0
  %v4132 = vmax.f32 %v4125, 0.0
  %v4133 = vmax.f32 %v4126, 0.0
  %v4134 = vmax.f32 %v4127, 0.0
  %4135 = vst [vmem:[#allocation4] sm:$0xff] %v4128
  %4136 = vst [vmem:[#allocation4 + $0x8] sm:$0xff] %v4129
  %4137 = vst [vmem:[#allocation4 + $0x10] sm:$0xff] %v4130
  %4138 = vst [vmem:[#allocation4 + $0x18] sm:$0xff] %v4131
  %4139 = vst [vmem:[#allocation4 + $0x20] sm:$0xff] %v4132
  %4140 = vst [vmem:[#allocation4 + $0x28] sm:$0xff] %v4133
  %4141 = vst [vmem:[#allocation4 + $0x30] sm:$0x3] %v4134
  %v4142 = vld [vmem:[#allocation4] sm:$0x1]
  %4143 = vst [vmem:[#allocation5] sm:$0x1] %v4142
  %v4144 = vld [vmem:[#allocation4 + $0x1] sm:$0x1]
  %4145 = vst [vmem:[#allocation5 + $0x2] sm:$0x1] %v4144
  %v4146 = vld [vmem:[#allocation4 + $0x2] sm:$0x1]
  %4147 = vst [vmem:[#allocation5 + $0x4] sm:$0x1] %v4146
  %v4148 = vld [vmem:[#allocation4 + $0x3] sm:$0x1]
  %4149 = vst [vmem:[#allocation5 + $0x6] sm:$0x1] %v4148
  %v4150 = vld [vmem:[#allocation4 + $0x4] sm:$0x1]
  %4151 = vst [vmem:[#allocation5 + $0x8] sm:$0x1] %v4150
  %v4152 = vld [vmem:[#allocation4 + $0x5] sm:$0x1]
  %4153 = vst [vmem:[#allocation5 + $0xa] sm:$0x1] %v4152
  %v4154 = vld [vmem:[#allocation4 + $0x6] sm:$0x1]
  %4155 = vst [vmem:[#allocation5 + $0xc] sm:$0x1] %v4154
  %v4156 = vld [vmem:[#allocation4 + $0x7] sm:$0x1]
  %4157 = vst [vmem:[#allocation5 + $0xe] sm:$0x1] %v4156
  %v4158 = vld [vmem:[#allocation4 + $0x8] sm:$0x1]
  %4159 = vst [vmem:[#allocation5 + $0x10] sm:$0x1] %v4158
  %v4160 = vld [vmem:[#allocation4 + $0x9] sm:$0x1]
  %4161 = vst [vmem:[#allocation5 + $0x12] sm:$0x1] %v4160
  %v4162 = vld [vmem:[#allocation4 + $0xa] sm:$0x1]
  %4163 = vst [vmem:[#allocation5 + $0x14] sm:$0x1] %v4162
  %v4164 = vld [vmem:[#allocation4 + $0xb] sm:$0x1]
  %4165 = vst [vmem:[#allocation5 + $0x16] sm:$0x1] %v4164
  %v4166 = vld [vmem:[#allocation4 + $0xc] sm:$0x1]
  %4167 = vst [vmem:[#allocation5 + $0x18] sm:$0x1] %v4166
  %v4168 = vld [vmem:[#allocation4 + $0xd] sm:$0x1]
  %4169 = vst [vmem:[#allocation5 + $0x1a] sm:$0x1] %v4168
  %v4170 = vld [vmem:[#allocation4 + $0xe] sm:$0x1]
  %4171 = vst [vmem:[#allocation5 + $0x1c] sm:$0x1] %v4170
  %v4172 = vld [vmem:[#allocation4 + $0xf] sm:$0x1]
  %4173 = vst [vmem:[#allocation5 + $0x1e] sm:$0x1] %v4172
  %v4174 = vld [vmem:[#allocation4 + $0x10] sm:$0x1]
  %4175 = vst [vmem:[#allocation5 + $0x20] sm:$0x1] %v4174
  %v4176 = vld [vmem:[#allocation4 + $0x11] sm:$0x1]
  %4177 = vst [vmem:[#allocation5 + $0x22] sm:$0x1] %v4176
  %v4178 = vld [vmem:[#allocation4 + $0x12] sm:$0x1]
  %4179 = vst [vmem:[#allocation5 + $0x24] sm:$0x1] %v4178
  %v4180 = vld [vmem:[#allocation4 + $0x13] sm:$0x1]
  %4181 = vst [vmem:[#allocation5 + $0x26] sm:$0x1] %v4180
  %v4182 = vld [vmem:[#allocation4 + $0x14] sm:$0x1]
  %4183 = vst [vmem:[#allocation5 + $0x28] sm:$0x1] %v4182
  %v4184 = vld [vmem:[#allocation4 + $0x15] sm:$0x1]
  %4185 = vst [vmem:[#allocation5 + $0x2a] sm:$0x1] %v4184
  %v4186 = vld [vmem:[#allocation4 + $0x16] sm:$0x1]
  %4187 = vst [vmem:[#allocation5 + $0x2c] sm:$0x1] %v4186
  %v4188 = vld [vmem:[#allocation4 + $0x17] sm:$0x1]
  %4189 = vst [vmem:[#allocation5 + $0x2e] sm:$0x1] %v4188
  %v4190 = vld [vmem:[#allocation4 + $0x18] sm:$0x1]
  %4191 = vst [vmem:[#allocation5 + $0x30] sm:$0x1] %v4190
  %v4192 = vld [vmem:[#allocation4 + $0x19] sm:$0x1]
  %4193 = vst [vmem:[#allocation5 + $0x1] sm:$0x1] %v4192
  %v4194 = vld [vmem:[#allocation4 + $0x1a] sm:$0x1]
  %4195 = vst [vmem:[#allocation5 + $0x3] sm:$0x1] %v4194
  %v4196 = vld [vmem:[#allocation4 + $0x1b] sm:$0x1]
  %4197 = vst [vmem:[#allocation5 + $0x5] sm:$0x1] %v4196
  %v4198 = vld [vmem:[#allocation4 + $0x1c] sm:$0x1]
  %4199 = vst [vmem:[#allocation5 + $0x7] sm:$0x1] %v4198
  %v4200 = vld [vmem:[#allocation4 + $0x1d] sm:$0x1]
  %4201 = vst [vmem:[#allocation5 + $0x9] sm:$0x1] %v4200
  %v4202 = vld [vmem:[#allocation4 + $0x1e] sm:$0x1]
  %4203 = vst [vmem:[#allocation5 + $0xb] sm:$0x1] %v4202
  %v4204 = vld [vmem:[#allocation4 + $0x1f] sm:$0x1]
  %4205 = vst [vmem:[#allocation5 + $0xd] sm:$0x1] %v4204
  %v4206 = vld [vmem:[#allocation4 + $0x20] sm:$0x1]
  %4207 = vst [vmem:[#allocation5 + $0xf] sm:$0x1] %v4206
  %v4208 = vld [vmem:[#allocation4 + $0x21] sm:$0x1]
  %4209 = vst [vmem:[#allocation5 + $0x11] sm:$0x1] %v4208
  %v4210 = vld [vmem:[#allocation4 + $0x22] sm:$0x1]
  %4211 = vst [vmem:[#allocation5 + $0x13] sm:$0x1] %v4210
  %v4212 = vld [vmem:[#allocation4 + $0x23] sm:$0x1]
  %4213 = vst [vmem:[#allocation5 + $0x15] sm:$0x1] %v4212
  %v4214 = vld [vmem:[#allocation4 + $0x24] sm:$0x1]
  %4215 = vst [vmem:[#allocation5 + $0x17] sm:$0x1] %v4214
  %v4216 = vld [vmem:[#allocation4 + $0x25] sm:$0x1]
  %4217 = vst [vmem:[#allocation5 + $0x19] sm:$0x1] %v4216
  %v4218 = vld [vmem:[#allocation4 + $0x26] sm:$0x1]
  %4219 = vst [vmem:[#allocation5 + $0x1b] sm:$0x1] %v4218
  %v4220 = vld [vmem:[#allocation4 + $0x27] sm:$0x1]
  %4221 = vst [vmem:[#allocation5 + $0x1d] sm:$0x1] %v4220
  %v4222 = vld [vmem:[#allocation4 + $0x28] sm:$0x1]
  %4223 = vst [vmem:[#allocation5 + $0x1f] sm:$0x1] %v4222
  %v4224 = vld [vmem:[#allocation4 + $0x29] sm:$0x1]
  %4225 = vst [vmem:[#allocation5 + $0x21] sm:$0x1] %v4224
  %v4226 = vld [vmem:[#allocation4 + $0x2a] sm:$0x1]
  %4227 = vst [vmem:[#allocation5 + $0x23] sm:$0x1] %v4226
  %v4228 = vld [vmem:[#allocation4 + $0x2b] sm:$0x1]
  %4229 = vst [vmem:[#allocation5 + $0x25] sm:$0x1] %v4228
  %v4230 = vld [vmem:[#allocation4 + $0x2c] sm:$0x1]
  %4231 = vst [vmem:[#allocation5 + $0x27] sm:$0x1] %v4230
  %v4232 = vld [vmem:[#allocation4 + $0x2d] sm:$0x1]
  %4233 = vst [vmem:[#allocation5 + $0x29] sm:$0x1] %v4232
  %v4234 = vld [vmem:[#allocation4 + $0x2e] sm:$0x1]
  %4235 = vst [vmem:[#allocation5 + $0x2b] sm:$0x1] %v4234
  %v4236 = vld [vmem:[#allocation4 + $0x2f] sm:$0x1]
  %4237 = vst [vmem:[#allocation5 + $0x2d] sm:$0x1] %v4236
  %v4238 = vld [vmem:[#allocation4 + $0x30] sm:$0x1]
  %4239 = vst [vmem:[#allocation5 + $0x2f] sm:$0x1] %v4238
  %v4240 = vld [vmem:[#allocation4 + $0x31] sm:$0x1]
  %4241 = vst [vmem:[#allocation5 + $0x31] sm:$0x1] %v4240
  %v4242 = vld [vmem:[#allocation5] sm:$0xff]
  %v4243 = vld [vmem:[#allocation5 + $0x8] sm:$0x3]
  %4246 = vst [vmem:[#allocation1] ss:$4 sm:$0xff] %v4242
  %s4247 = scalar_lea.vmem [#allocation1], 32
  %4248 = vst [vmem:[%s4247] ss:$4 sm:$0xff] %v4243
  %v4249 = vld.sshfl [vmem:[#allocation1] sm:$0xff pattern:$0x73625140]
  %v4250 = vld.sshfl [vmem:[#allocation1 + $0x8] sm:$0xff pattern:$0x73625140]
  %v4251 = vld.sshfl [vmem:[#allocation1 + $0x10] sm:$0xff pattern:$0x73625140]
  %v4252 = vld.sshfl [vmem:[#allocation1 + $0x18] sm:$0xff pattern:$0x73625140]
  %v4253 = vld.sshfl [vmem:[#allocation1 + $0x20] sm:$0xff pattern:$0x73625140]
  %v4259 = vpack.c.bf16 %v4249, %v4249
  %v4260 = vpack.c.bf16 %v4250, %v4250
  %v4261 = vpack.c.bf16 %v4251, %v4251
  %v4262 = vpack.c.bf16 %v4252, %v4252
  %v4263 = vpack.c.bf16 %v4253, %v4253
  %v4264 = vld [vmem:[%s5] sm:$0xff]
  %v4265 = vld [vmem:[%s5 + $0x8] sm:$0xff]
  %v4266 = vld [vmem:[%s5 + $0x10] sm:$0xff]
  %v4267 = vld [vmem:[%s5 + $0x18] sm:$0xff]
  %v4268 = vld [vmem:[%s5 + $0x20] sm:$0xff]
  %v4269 = vld [vmem:[%s5 + $0x28] sm:$0xff]
  %v4270 = vld [vmem:[%s5 + $0x30] sm:$0xff]
  %v4271 = vld [vmem:[%s5 + $0x38] sm:$0xff]
  %v4272 = vld [vmem:[%s5 + $0x40] sm:$0xff]
  %v4273 = vld [vmem:[%s5 + $0x48] sm:$0xff]
  %v4274 = vld [vmem:[%s5 + $0x50] sm:$0xff]
  %v4275 = vld [vmem:[%s5 + $0x58] sm:$0xff]
  %v4276 = vld [vmem:[%s5 + $0x60] sm:$0xff]
  %v4277 = vld [vmem:[%s5 + $0x68] sm:$0xff]
  %v4278 = vld [vmem:[%s5 + $0x70] sm:$0xff]
  %v4279 = vld [vmem:[%s5 + $0x78] sm:$0xff]
  %v4280 = vld [vmem:[%s5 + $0x80] sm:$0xff]
  %v4281 = vld [vmem:[%s5 + $0x88] sm:$0xff]
  %v4282 = vld [vmem:[%s5 + $0x90] sm:$0xff]
  %v4283 = vld [vmem:[%s5 + $0x98] sm:$0xff]
  %v4284 = vld [vmem:[%s5 + $0xa0] sm:$0xff]
  %v4285 = vld [vmem:[%s5 + $0xa8] sm:$0xff]
  %v4286 = vld [vmem:[%s5 + $0xb0] sm:$0xff]
  %v4287 = vld [vmem:[%s5 + $0xb8] sm:$0xff]
  %v4288 = vld [vmem:[%s5 + $0xc0] sm:$0xff]
  %v4289 = vld [vmem:[%s5 + $0xc8] sm:$0xff]
  %v4290 = vld [vmem:[%s5 + $0xd0] sm:$0xff]
  %v4291 = vld [vmem:[%s5 + $0xd8] sm:$0xff]
  %v4292 = vld [vmem:[%s5 + $0xe0] sm:$0xff]
  %v4293 = vld [vmem:[%s5 + $0xe8] sm:$0xff]
  %v4294 = vld [vmem:[%s5 + $0xf0] sm:$0xff]
  %v4295 = vld [vmem:[%s5 + $0xf8] sm:$0xff]
  %v4296 = vld [vmem:[%s5 + $0x100] sm:$0xff]
  %v4297 = vld [vmem:[%s5 + $0x108] sm:$0xff]
  %v4298 = vld [vmem:[%s5 + $0x110] sm:$0xff]
  %v4299 = vld [vmem:[%s5 + $0x118] sm:$0xff]
  %v4300 = vld [vmem:[%s5 + $0x120] sm:$0xff]
  %v4301 = vld [vmem:[%s5 + $0x128] sm:$0xff]
  %v4302 = vld [vmem:[%s5 + $0x130] sm:$0xff]
  %v4303 = vld [vmem:[%s5 + $0x138] sm:$0xff]
  %v4304 = vld [vmem:[%s5 + $0x140] sm:$0xff]
  %v4305 = vld [vmem:[%s5 + $0x148] sm:$0xff]
  %v4306 = vld [vmem:[%s5 + $0x150] sm:$0xff]
  %v4307 = vld [vmem:[%s5 + $0x158] sm:$0xff]
  %v4308 = vld [vmem:[%s5 + $0x160] sm:$0xff]
  %v4309 = vld [vmem:[%s5 + $0x168] sm:$0xff]
  %v4310 = vld [vmem:[%s5 + $0x170] sm:$0xff]
  %v4311 = vld [vmem:[%s5 + $0x178] sm:$0xff]
  %v4312 = vld [vmem:[%s5 + $0x180] sm:$0xff]
  %v4313 = vld [vmem:[%s5 + $0x188] sm:$0xff]
  %v4314 = vld [vmem:[%s5 + $0x190] sm:$0xff]
  %v4315 = vld [vmem:[%s5 + $0x198] sm:$0xff]
  %v4316 = vld [vmem:[%s5 + $0x1a0] sm:$0xff]
  %v4317 = vld [vmem:[%s5 + $0x1a8] sm:$0xff]
  %v4318 = vld [vmem:[%s5 + $0x1b0] sm:$0xff]
  %v4319 = vld [vmem:[%s5 + $0x1b8] sm:$0xff]
  %v4320 = vld [vmem:[%s5 + $0x1c0] sm:$0xff]
  %v4321 = vld [vmem:[%s5 + $0x1c8] sm:$0xff]
  %v4322 = vld [vmem:[%s5 + $0x1d0] sm:$0xff]
  %v4323 = vld [vmem:[%s5 + $0x1d8] sm:$0xff]
  %v4324 = vld [vmem:[%s5 + $0x1e0] sm:$0xff]
  %v4325 = vld [vmem:[%s5 + $0x1e8] sm:$0xff]
  %v4326 = vld [vmem:[%s5 + $0x1f0] sm:$0xff]
  %v4327 = vld [vmem:[%s5 + $0x1f8] sm:$0xff]
  %v4328 = vld [vmem:[%s5 + $0x200] sm:$0xff]
  %v4329 = vld [vmem:[%s5 + $0x208] sm:$0xff]
  %v4330 = vld [vmem:[%s5 + $0x210] sm:$0xff]
  %v4331 = vld [vmem:[%s5 + $0x218] sm:$0xff]
  %v4332 = vld [vmem:[%s5 + $0x220] sm:$0xff]
  %v4333 = vld [vmem:[%s5 + $0x228] sm:$0xff]
  %v4334 = vld [vmem:[%s5 + $0x230] sm:$0xff]
  %v4335 = vld [vmem:[%s5 + $0x238] sm:$0xff]
  %v4336 = vld [vmem:[%s5 + $0x240] sm:$0xff]
  %v4337 = vld [vmem:[%s5 + $0x248] sm:$0xff]
  %v4338 = vld [vmem:[%s5 + $0x250] sm:$0xff]
  %v4339 = vld [vmem:[%s5 + $0x258] sm:$0xff]
  %v4340 = vld [vmem:[%s5 + $0x260] sm:$0xff]
  %v4341 = vld [vmem:[%s5 + $0x268] sm:$0xff]
  %v4342 = vld [vmem:[%s5 + $0x270] sm:$0xff]
  %v4343 = vld [vmem:[%s5 + $0x278] sm:$0xff]
  %v4344 = vld [vmem:[#allocation5 + $0xa] sm:$0xff]
  %v4345 = vld [vmem:[#allocation5 + $0x12] sm:$0x3]
  %4348 = vst [vmem:[#allocation1] ss:$4 sm:$0xff] %v4344
  %s4349 = scalar_lea.vmem [#allocation1], 32
  %4350 = vst [vmem:[%s4349] ss:$4 sm:$0xff] %v4345
  %v4351 = vld.sshfl [vmem:[#allocation1] sm:$0xff pattern:$0x73625140]
  %v4352 = vld.sshfl [vmem:[#allocation1 + $0x8] sm:$0xff pattern:$0x73625140]
  %v4353 = vld.sshfl [vmem:[#allocation1 + $0x10] sm:$0xff pattern:$0x73625140]
  %v4354 = vld.sshfl [vmem:[#allocation1 + $0x18] sm:$0xff pattern:$0x73625140]
  %v4355 = vld.sshfl [vmem:[#allocation1 + $0x20] sm:$0xff pattern:$0x73625140]
  %v4361 = vpack.c.bf16 %v4351, %v4351
  %v4362 = vpack.c.bf16 %v4352, %v4352
  %v4363 = vpack.c.bf16 %v4353, %v4353
  %v4364 = vpack.c.bf16 %v4354, %v4354
  %v4365 = vpack.c.bf16 %v4355, %v4355
  %v4366 = vld [vmem:[%s5 + $0x280] sm:$0xff]
  %v4367 = vld [vmem:[%s5 + $0x288] sm:$0xff]
  %v4368 = vld [vmem:[%s5 + $0x290] sm:$0xff]
  %v4369 = vld [vmem:[%s5 + $0x298] sm:$0xff]
  %v4370 = vld [vmem:[%s5 + $0x2a0] sm:$0xff]
  %v4371 = vld [vmem:[%s5 + $0x2a8] sm:$0xff]
  %v4372 = vld [vmem:[%s5 + $0x2b0] sm:$0xff]
  %v4373 = vld [vmem:[%s5 + $0x2b8] sm:$0xff]
  %v4374 = vld [vmem:[%s5 + $0x2c0] sm:$0xff]
  %v4375 = vld [vmem:[%s5 + $0x2c8] sm:$0xff]
  %v4376 = vld [vmem:[%s5 + $0x2d0] sm:$0xff]
  %v4377 = vld [vmem:[%s5 + $0x2d8] sm:$0xff]
  %v4378 = vld [vmem:[%s5 + $0x2e0] sm:$0xff]
  %v4379 = vld [vmem:[%s5 + $0x2e8] sm:$0xff]
  %v4380 = vld [vmem:[%s5 + $0x2f0] sm:$0xff]
  %v4381 = vld [vmem:[%s5 + $0x2f8] sm:$0xff]
  %v4382 = vld [vmem:[%s5 + $0x300] sm:$0xff]
  %v4383 = vld [vmem:[%s5 + $0x308] sm:$0xff]
  %v4384 = vld [vmem:[%s5 + $0x310] sm:$0xff]
  %v4385 = vld [vmem:[%s5 + $0x318] sm:$0xff]
  %v4386 = vld [vmem:[%s5 + $0x320] sm:$0xff]
  %v4387 = vld [vmem:[%s5 + $0x328] sm:$0xff]
  %v4388 = vld [vmem:[%s5 + $0x330] sm:$0xff]
  %v4389 = vld [vmem:[%s5 + $0x338] sm:$0xff]
  %v4390 = vld [vmem:[%s5 + $0x340] sm:$0xff]
  %v4391 = vld [vmem:[%s5 + $0x348] sm:$0xff]
  %v4392 = vld [vmem:[%s5 + $0x350] sm:$0xff]
  %v4393 = vld [vmem:[%s5 + $0x358] sm:$0xff]
  %v4394 = vld [vmem:[%s5 + $0x360] sm:$0xff]
  %v4395 = vld [vmem:[%s5 + $0x368] sm:$0xff]
  %v4396 = vld [vmem:[%s5 + $0x370] sm:$0xff]
  %v4397 = vld [vmem:[%s5 + $0x378] sm:$0xff]
  %v4398 = vld [vmem:[%s5 + $0x380] sm:$0xff]
  %v4399 = vld [vmem:[%s5 + $0x388] sm:$0xff]
  %v4400 = vld [vmem:[%s5 + $0x390] sm:$0xff]
  %v4401 = vld [vmem:[%s5 + $0x398] sm:$0xff]
  %v4402 = vld [vmem:[%s5 + $0x3a0] sm:$0xff]
  %v4403 = vld [vmem:[%s5 + $0x3a8] sm:$0xff]
  %v4404 = vld [vmem:[%s5 + $0x3b0] sm:$0xff]
  %v4405 = vld [vmem:[%s5 + $0x3b8] sm:$0xff]
  %v4406 = vld [vmem:[%s5 + $0x3c0] sm:$0xff]
  %v4407 = vld [vmem:[%s5 + $0x3c8] sm:$0xff]
  %v4408 = vld [vmem:[%s5 + $0x3d0] sm:$0xff]
  %v4409 = vld [vmem:[%s5 + $0x3d8] sm:$0xff]
  %v4410 = vld [vmem:[%s5 + $0x3e0] sm:$0xff]
  %v4411 = vld [vmem:[%s5 + $0x3e8] sm:$0xff]
  %v4412 = vld [vmem:[%s5 + $0x3f0] sm:$0xff]
  %v4413 = vld [vmem:[%s5 + $0x3f8] sm:$0xff]
  %v4414 = vld [vmem:[%s5 + $0x400] sm:$0xff]
  %v4415 = vld [vmem:[%s5 + $0x408] sm:$0xff]
  %v4416 = vld [vmem:[%s5 + $0x410] sm:$0xff]
  %v4417 = vld [vmem:[%s5 + $0x418] sm:$0xff]
  %v4418 = vld [vmem:[%s5 + $0x420] sm:$0xff]
  %v4419 = vld [vmem:[%s5 + $0x428] sm:$0xff]
  %v4420 = vld [vmem:[%s5 + $0x430] sm:$0xff]
  %v4421 = vld [vmem:[%s5 + $0x438] sm:$0xff]
  %v4422 = vld [vmem:[%s5 + $0x440] sm:$0xff]
  %v4423 = vld [vmem:[%s5 + $0x448] sm:$0xff]
  %v4424 = vld [vmem:[%s5 + $0x450] sm:$0xff]
  %v4425 = vld [vmem:[%s5 + $0x458] sm:$0xff]
  %v4426 = vld [vmem:[%s5 + $0x460] sm:$0xff]
  %v4427 = vld [vmem:[%s5 + $0x468] sm:$0xff]
  %v4428 = vld [vmem:[%s5 + $0x470] sm:$0xff]
  %v4429 = vld [vmem:[%s5 + $0x478] sm:$0xff]
  %v4430 = vld [vmem:[%s5 + $0x480] sm:$0xff]
  %v4431 = vld [vmem:[%s5 + $0x488] sm:$0xff]
  %v4432 = vld [vmem:[%s5 + $0x490] sm:$0xff]
  %v4433 = vld [vmem:[%s5 + $0x498] sm:$0xff]
  %v4434 = vld [vmem:[%s5 + $0x4a0] sm:$0xff]
  %v4435 = vld [vmem:[%s5 + $0x4a8] sm:$0xff]
  %v4436 = vld [vmem:[%s5 + $0x4b0] sm:$0xff]
  %v4437 = vld [vmem:[%s5 + $0x4b8] sm:$0xff]
  %v4438 = vld [vmem:[%s5 + $0x4c0] sm:$0xff]
  %v4439 = vld [vmem:[%s5 + $0x4c8] sm:$0xff]
  %v4440 = vld [vmem:[%s5 + $0x4d0] sm:$0xff]
  %v4441 = vld [vmem:[%s5 + $0x4d8] sm:$0xff]
  %v4442 = vld [vmem:[%s5 + $0x4e0] sm:$0xff]
  %v4443 = vld [vmem:[%s5 + $0x4e8] sm:$0xff]
  %v4444 = vld [vmem:[%s5 + $0x4f0] sm:$0xff]
  %v4445 = vld [vmem:[%s5 + $0x4f8] sm:$0xff]
  %v4526 = vunpack.c.l.b16 %v4366
  %v4527 = vunpack.c.h.b16 %v4366
  %v4528 = vunpack.c.l.b16 %v4367
  %v4529 = vunpack.c.h.b16 %v4367
  %v4530 = vunpack.c.l.b16 %v4368
  %v4531 = vunpack.c.h.b16 %v4368
  %v4532 = vunpack.c.l.b16 %v4369
  %v4533 = vunpack.c.h.b16 %v4369
  %v4534 = vunpack.c.l.b16 %v4370
  %v4535 = vunpack.c.h.b16 %v4370
  %v4536 = vunpack.c.l.b16 %v4371
  %v4537 = vunpack.c.h.b16 %v4371
  %v4538 = vunpack.c.l.b16 %v4372
  %v4539 = vunpack.c.h.b16 %v4372
  %v4540 = vunpack.c.l.b16 %v4373
  %v4541 = vunpack.c.h.b16 %v4373
  %v4542 = vunpack.c.l.b16 %v4374
  %v4543 = vunpack.c.h.b16 %v4374
  %v4544 = vunpack.c.l.b16 %v4375
  %v4545 = vunpack.c.h.b16 %v4375
  %v4546 = vunpack.c.l.b16 %v4376
  %v4547 = vunpack.c.h.b16 %v4376
  %v4548 = vunpack.c.l.b16 %v4377
  %v4549 = vunpack.c.h.b16 %v4377
  %v4550 = vunpack.c.l.b16 %v4378
  %v4551 = vunpack.c.h.b16 %v4378
  %v4552 = vunpack.c.l.b16 %v4379
  %v4553 = vunpack.c.h.b16 %v4379
  %v4554 = vunpack.c.l.b16 %v4380
  %v4555 = vunpack.c.h.b16 %v4380
  %v4556 = vunpack.c.l.b16 %v4381
  %v4557 = vunpack.c.h.b16 %v4381
  %v4558 = vunpack.c.l.b16 %v4382
  %v4559 = vunpack.c.h.b16 %v4382
  %v4560 = vunpack.c.l.b16 %v4383
  %v4561 = vunpack.c.h.b16 %v4383
  %v4562 = vunpack.c.l.b16 %v4384
  %v4563 = vunpack.c.h.b16 %v4384
  %v4564 = vunpack.c.l.b16 %v4385
  %v4565 = vunpack.c.h.b16 %v4385
  %v4566 = vunpack.c.l.b16 %v4386
  %v4567 = vunpack.c.h.b16 %v4386
  %v4568 = vunpack.c.l.b16 %v4387
  %v4569 = vunpack.c.h.b16 %v4387
  %v4570 = vunpack.c.l.b16 %v4388
  %v4571 = vunpack.c.h.b16 %v4388
  %v4572 = vunpack.c.l.b16 %v4389
  %v4573 = vunpack.c.h.b16 %v4389
  %v4574 = vunpack.c.l.b16 %v4390
  %v4575 = vunpack.c.h.b16 %v4390
  %v4576 = vunpack.c.l.b16 %v4391
  %v4577 = vunpack.c.h.b16 %v4391
  %v4578 = vunpack.c.l.b16 %v4392
  %v4579 = vunpack.c.h.b16 %v4392
  %v4580 = vunpack.c.l.b16 %v4393
  %v4581 = vunpack.c.h.b16 %v4393
  %v4582 = vunpack.c.l.b16 %v4394
  %v4583 = vunpack.c.h.b16 %v4394
  %v4584 = vunpack.c.l.b16 %v4395
  %v4585 = vunpack.c.h.b16 %v4395
  %v4586 = vunpack.c.l.b16 %v4396
  %v4587 = vunpack.c.h.b16 %v4396
  %v4588 = vunpack.c.l.b16 %v4397
  %v4589 = vunpack.c.h.b16 %v4397
  %v4590 = vunpack.c.l.b16 %v4398
  %v4591 = vunpack.c.h.b16 %v4398
  %v4592 = vunpack.c.l.b16 %v4399
  %v4593 = vunpack.c.h.b16 %v4399
  %v4594 = vunpack.c.l.b16 %v4400
  %v4595 = vunpack.c.h.b16 %v4400
  %v4596 = vunpack.c.l.b16 %v4401
  %v4597 = vunpack.c.h.b16 %v4401
  %v4598 = vunpack.c.l.b16 %v4402
  %v4599 = vunpack.c.h.b16 %v4402
  %v4600 = vunpack.c.l.b16 %v4403
  %v4601 = vunpack.c.h.b16 %v4403
  %v4602 = vunpack.c.l.b16 %v4404
  %v4603 = vunpack.c.h.b16 %v4404
  %v4604 = vunpack.c.l.b16 %v4405
  %v4605 = vunpack.c.h.b16 %v4405
  %v4606 = vunpack.c.l.b16 %v4406
  %v4607 = vunpack.c.h.b16 %v4406
  %v4608 = vunpack.c.l.b16 %v4407
  %v4609 = vunpack.c.h.b16 %v4407
  %v4610 = vunpack.c.l.b16 %v4408
  %v4611 = vunpack.c.h.b16 %v4408
  %v4612 = vunpack.c.l.b16 %v4409
  %v4613 = vunpack.c.h.b16 %v4409
  %v4614 = vunpack.c.l.b16 %v4410
  %v4615 = vunpack.c.h.b16 %v4410
  %v4616 = vunpack.c.l.b16 %v4411
  %v4617 = vunpack.c.h.b16 %v4411
  %v4618 = vunpack.c.l.b16 %v4412
  %v4619 = vunpack.c.h.b16 %v4412
  %v4620 = vunpack.c.l.b16 %v4413
  %v4621 = vunpack.c.h.b16 %v4413
  %v4622 = vunpack.c.l.b16 %v4414
  %v4623 = vunpack.c.h.b16 %v4414
  %v4624 = vunpack.c.l.b16 %v4415
  %v4625 = vunpack.c.h.b16 %v4415
  %v4626 = vunpack.c.l.b16 %v4416
  %v4627 = vunpack.c.h.b16 %v4416
  %v4628 = vunpack.c.l.b16 %v4417
  %v4629 = vunpack.c.h.b16 %v4417
  %v4630 = vunpack.c.l.b16 %v4418
  %v4631 = vunpack.c.h.b16 %v4418
  %v4632 = vunpack.c.l.b16 %v4419
  %v4633 = vunpack.c.h.b16 %v4419
  %v4634 = vunpack.c.l.b16 %v4420
  %v4635 = vunpack.c.h.b16 %v4420
  %v4636 = vunpack.c.l.b16 %v4421
  %v4637 = vunpack.c.h.b16 %v4421
  %v4638 = vunpack.c.l.b16 %v4422
  %v4639 = vunpack.c.h.b16 %v4422
  %v4640 = vunpack.c.l.b16 %v4423
  %v4641 = vunpack.c.h.b16 %v4423
  %v4642 = vunpack.c.l.b16 %v4424
  %v4643 = vunpack.c.h.b16 %v4424
  %v4644 = vunpack.c.l.b16 %v4425
  %v4645 = vunpack.c.h.b16 %v4425
  %v4646 = vunpack.c.l.b16 %v4426
  %v4647 = vunpack.c.h.b16 %v4426
  %v4648 = vunpack.c.l.b16 %v4427
  %v4649 = vunpack.c.h.b16 %v4427
  %v4650 = vunpack.c.l.b16 %v4428
  %v4651 = vunpack.c.h.b16 %v4428
  %v4652 = vunpack.c.l.b16 %v4429
  %v4653 = vunpack.c.h.b16 %v4429
  %v4654 = vunpack.c.l.b16 %v4430
  %v4655 = vunpack.c.h.b16 %v4430
  %v4656 = vunpack.c.l.b16 %v4431
  %v4657 = vunpack.c.h.b16 %v4431
  %v4658 = vunpack.c.l.b16 %v4432
  %v4659 = vunpack.c.h.b16 %v4432
  %v4660 = vunpack.c.l.b16 %v4433
  %v4661 = vunpack.c.h.b16 %v4433
  %v4662 = vunpack.c.l.b16 %v4434
  %v4663 = vunpack.c.h.b16 %v4434
  %v4664 = vunpack.c.l.b16 %v4435
  %v4665 = vunpack.c.h.b16 %v4435
  %v4666 = vunpack.c.l.b16 %v4436
  %v4667 = vunpack.c.h.b16 %v4436
  %v4668 = vunpack.c.l.b16 %v4437
  %v4669 = vunpack.c.h.b16 %v4437
  %v4670 = vunpack.c.l.b16 %v4438
  %v4671 = vunpack.c.h.b16 %v4438
  %v4672 = vunpack.c.l.b16 %v4439
  %v4673 = vunpack.c.h.b16 %v4439
  %v4674 = vunpack.c.l.b16 %v4440
  %v4675 = vunpack.c.h.b16 %v4440
  %v4676 = vunpack.c.l.b16 %v4441
  %v4677 = vunpack.c.h.b16 %v4441
  %v4678 = vunpack.c.l.b16 %v4442
  %v4679 = vunpack.c.h.b16 %v4442
  %v4680 = vunpack.c.l.b16 %v4443
  %v4681 = vunpack.c.h.b16 %v4443
  %v4682 = vunpack.c.l.b16 %v4444
  %v4683 = vunpack.c.h.b16 %v4444
  %v4684 = vunpack.c.l.b16 %v4445
  %v4685 = vunpack.c.h.b16 %v4445
  %v4686 = vpack.c.b16 %v4528, %v4526
  %v4687 = vpack.c.b16 %v4529, %v4527
  %v4688 = vpack.c.b16 %v4532, %v4530
  %v4689 = vpack.c.b16 %v4533, %v4531
  %v4690 = vpack.c.b16 %v4536, %v4534
  %v4691 = vpack.c.b16 %v4537, %v4535
  %v4692 = vpack.c.b16 %v4540, %v4538
  %v4693 = vpack.c.b16 %v4541, %v4539
  %v4694 = vpack.c.b16 %v4544, %v4542
  %v4695 = vpack.c.b16 %v4545, %v4543
  %v4696 = vpack.c.b16 %v4548, %v4546
  %v4697 = vpack.c.b16 %v4549, %v4547
  %v4698 = vpack.c.b16 %v4552, %v4550
  %v4699 = vpack.c.b16 %v4553, %v4551
  %v4700 = vpack.c.b16 %v4556, %v4554
  %v4701 = vpack.c.b16 %v4557, %v4555
  %v4702 = vpack.c.b16 %v4560, %v4558
  %v4703 = vpack.c.b16 %v4561, %v4559
  %v4704 = vpack.c.b16 %v4564, %v4562
  %v4705 = vpack.c.b16 %v4565, %v4563
  %v4706 = vpack.c.b16 %v4568, %v4566
  %v4707 = vpack.c.b16 %v4569, %v4567
  %v4708 = vpack.c.b16 %v4572, %v4570
  %v4709 = vpack.c.b16 %v4573, %v4571
  %v4710 = vpack.c.b16 %v4576, %v4574
  %v4711 = vpack.c.b16 %v4577, %v4575
  %v4712 = vpack.c.b16 %v4580, %v4578
  %v4713 = vpack.c.b16 %v4581, %v4579
  %v4714 = vpack.c.b16 %v4584, %v4582
  %v4715 = vpack.c.b16 %v4585, %v4583
  %v4716 = vpack.c.b16 %v4588, %v4586
  %v4717 = vpack.c.b16 %v4589, %v4587
  %v4718 = vpack.c.b16 %v4592, %v4590
  %v4719 = vpack.c.b16 %v4593, %v4591
  %v4720 = vpack.c.b16 %v4596, %v4594
  %v4721 = vpack.c.b16 %v4597, %v4595
  %v4722 = vpack.c.b16 %v4600, %v4598
  %v4723 = vpack.c.b16 %v4601, %v4599
  %v4724 = vpack.c.b16 %v4604, %v4602
  %v4725 = vpack.c.b16 %v4605, %v4603
  %v4726 = vpack.c.b16 %v4608, %v4606
  %v4727 = vpack.c.b16 %v4609, %v4607
  %v4728 = vpack.c.b16 %v4612, %v4610
  %v4729 = vpack.c.b16 %v4613, %v4611
  %v4730 = vpack.c.b16 %v4616, %v4614
  %v4731 = vpack.c.b16 %v4617, %v4615
  %v4732 = vpack.c.b16 %v4620, %v4618
  %v4733 = vpack.c.b16 %v4621, %v4619
  %v4734 = vpack.c.b16 %v4624, %v4622
  %v4735 = vpack.c.b16 %v4625, %v4623
  %v4736 = vpack.c.b16 %v4628, %v4626
  %v4737 = vpack.c.b16 %v4629, %v4627
  %v4738 = vpack.c.b16 %v4632, %v4630
  %v4739 = vpack.c.b16 %v4633, %v4631
  %v4740 = vpack.c.b16 %v4636, %v4634
  %v4741 = vpack.c.b16 %v4637, %v4635
  %v4742 = vpack.c.b16 %v4640, %v4638
  %v4743 = vpack.c.b16 %v4641, %v4639
  %v4744 = vpack.c.b16 %v4644, %v4642
  %v4745 = vpack.c.b16 %v4645, %v4643
  %v4746 = vpack.c.b16 %v4648, %v4646
  %v4747 = vpack.c.b16 %v4649, %v4647
  %v4748 = vpack.c.b16 %v4652, %v4650
  %v4749 = vpack.c.b16 %v4653, %v4651
  %v4750 = vpack.c.b16 %v4656, %v4654
  %v4751 = vpack.c.b16 %v4657, %v4655
  %v4752 = vpack.c.b16 %v4660, %v4658
  %v4753 = vpack.c.b16 %v4661, %v4659
  %v4754 = vpack.c.b16 %v4664, %v4662
  %v4755 = vpack.c.b16 %v4665, %v4663
  %v4756 = vpack.c.b16 %v4668, %v4666
  %v4757 = vpack.c.b16 %v4669, %v4667
  %v4758 = vpack.c.b16 %v4672, %v4670
  %v4759 = vpack.c.b16 %v4673, %v4671
  %v4760 = vpack.c.b16 %v4676, %v4674
  %v4761 = vpack.c.b16 %v4677, %v4675
  %v4762 = vpack.c.b16 %v4680, %v4678
  %v4763 = vpack.c.b16 %v4681, %v4679
  %v4764 = vpack.c.b16 %v4684, %v4682
  %v4765 = vpack.c.b16 %v4685, %v4683
  %4846 = vmatpush.bf16.msra.mxu0 %v4700
  %4847 = vmatpush.bf16.msra.mxu0 %v4698
  %4848 = vmatpush.bf16.msra.mxu0 %v4696
  %4849 = vmatpush.bf16.msra.mxu0 %v4694
  %4850 = vmatpush.bf16.msra.mxu0 %v4692
  %4851 = vmatpush.bf16.msra.mxu0 %v4690
  %4852 = vmatpush.bf16.msra.mxu0 %v4688
  %4853 = vmatpush.bf16.msra.mxu0 %v4686
  %4854 = vmatmul.bf16.gmra.mxu0 %v4361
  %v4855 = vpop.f32.mrf.mxu0
  %v4856 = vadd.f32 0.0, %v4855
  %v4857 = vpop.f32.mrf.mxu0
  %4858 = vdwg.mxu0
  %4859 = vmatpush.bf16.msra.mxu0 %v4716
  %4860 = vmatpush.bf16.msra.mxu0 %v4714
  %4861 = vmatpush.bf16.msra.mxu0 %v4712
  %4862 = vmatpush.bf16.msra.mxu0 %v4710
  %4863 = vmatpush.bf16.msra.mxu0 %v4708
  %4864 = vmatpush.bf16.msra.mxu0 %v4706
  %4865 = vmatpush.bf16.msra.mxu0 %v4704
  %4866 = vmatpush.bf16.msra.mxu0 %v4702
  %4867 = vmatmul.bf16.gmra.mxu0 %v4362
  %v4868 = vpop.f32.mrf.mxu0
  %v4869 = vadd.f32 %v4856, %v4868
  %v4870 = vpop.f32.mrf.mxu0
  %4871 = vdwg.mxu0
  %4872 = vmatpush.bf16.msra.mxu0 %v4732
  %4873 = vmatpush.bf16.msra.mxu0 %v4730
  %4874 = vmatpush.bf16.msra.mxu0 %v4728
  %4875 = vmatpush.bf16.msra.mxu0 %v4726
  %4876 = vmatpush.bf16.msra.mxu0 %v4724
  %4877 = vmatpush.bf16.msra.mxu0 %v4722
  %4878 = vmatpush.bf16.msra.mxu0 %v4720
  %4879 = vmatpush.bf16.msra.mxu0 %v4718
  %4880 = vmatmul.bf16.gmra.mxu0 %v4363
  %v4881 = vpop.f32.mrf.mxu0
  %v4882 = vadd.f32 %v4869, %v4881
  %v4883 = vpop.f32.mrf.mxu0
  %4884 = vdwg.mxu0
  %4885 = vmatpush.bf16.msra.mxu0 %v4748
  %4886 = vmatpush.bf16.msra.mxu0 %v4746
  %4887 = vmatpush.bf16.msra.mxu0 %v4744
  %4888 = vmatpush.bf16.msra.mxu0 %v4742
  %4889 = vmatpush.bf16.msra.mxu0 %v4740
  %4890 = vmatpush.bf16.msra.mxu0 %v4738
  %4891 = vmatpush.bf16.msra.mxu0 %v4736
  %4892 = vmatpush.bf16.msra.mxu0 %v4734
  %4893 = vmatmul.bf16.gmra.mxu0 %v4364
  %v4894 = vpop.f32.mrf.mxu0
  %v4895 = vadd.f32 %v4882, %v4894
  %v4896 = vpop.f32.mrf.mxu0
  %4897 = vdwg.mxu0
  %4898 = vmatpush.bf16.msra.mxu0 %v4764
  %4899 = vmatpush.bf16.msra.mxu0 %v4762
  %4900 = vmatpush.bf16.msra.mxu0 %v4760
  %4901 = vmatpush.bf16.msra.mxu0 %v4758
  %4902 = vmatpush.bf16.msra.mxu0 %v4756
  %4903 = vmatpush.bf16.msra.mxu0 %v4754
  %4904 = vmatpush.bf16.msra.mxu0 %v4752
  %4905 = vmatpush.bf16.msra.mxu0 %v4750
  %4906 = vmatmul.bf16.gmra.mxu0 %v4365
  %v4907 = vpop.f32.mrf.mxu0
  %v4908 = vadd.f32 %v4895, %v4907
  %v4909 = vpop.f32.mrf.mxu0
  %4910 = vdwg.mxu0
  %4911 = vmatpush.bf16.msra.mxu0 %v4701
  %4912 = vmatpush.bf16.msra.mxu0 %v4699
  %4913 = vmatpush.bf16.msra.mxu0 %v4697
  %4914 = vmatpush.bf16.msra.mxu0 %v4695
  %4915 = vmatpush.bf16.msra.mxu0 %v4693
  %4916 = vmatpush.bf16.msra.mxu0 %v4691
  %4917 = vmatpush.bf16.msra.mxu0 %v4689
  %4918 = vmatpush.bf16.msra.mxu0 %v4687
  %4919 = vmatmul.bf16.gmra.mxu0 %v4361
  %v4920 = vpop.f32.mrf.mxu0
  %v4921 = vadd.f32 0.0, %v4920
  %v4922 = vpop.f32.mrf.mxu0
  %4923 = vdwg.mxu0
  %4924 = vmatpush.bf16.msra.mxu0 %v4717
  %4925 = vmatpush.bf16.msra.mxu0 %v4715
  %4926 = vmatpush.bf16.msra.mxu0 %v4713
  %4927 = vmatpush.bf16.msra.mxu0 %v4711
  %4928 = vmatpush.bf16.msra.mxu0 %v4709
  %4929 = vmatpush.bf16.msra.mxu0 %v4707
  %4930 = vmatpush.bf16.msra.mxu0 %v4705
  %4931 = vmatpush.bf16.msra.mxu0 %v4703
  %4932 = vmatmul.bf16.gmra.mxu0 %v4362
  %v4933 = vpop.f32.mrf.mxu0
  %v4934 = vadd.f32 %v4921, %v4933
  %v4935 = vpop.f32.mrf.mxu0
  %4936 = vdwg.mxu0
  %4937 = vmatpush.bf16.msra.mxu0 %v4733
  %4938 = vmatpush.bf16.msra.mxu0 %v4731
  %4939 = vmatpush.bf16.msra.mxu0 %v4729
  %4940 = vmatpush.bf16.msra.mxu0 %v4727
  %4941 = vmatpush.bf16.msra.mxu0 %v4725
  %4942 = vmatpush.bf16.msra.mxu0 %v4723
  %4943 = vmatpush.bf16.msra.mxu0 %v4721
  %4944 = vmatpush.bf16.msra.mxu0 %v4719
  %4945 = vmatmul.bf16.gmra.mxu0 %v4363
  %v4946 = vpop.f32.mrf.mxu0
  %v4947 = vadd.f32 %v4934, %v4946
  %v4948 = vpop.f32.mrf.mxu0
  %4949 = vdwg.mxu0
  %4950 = vmatpush.bf16.msra.mxu0 %v4749
  %4951 = vmatpush.bf16.msra.mxu0 %v4747
  %4952 = vmatpush.bf16.msra.mxu0 %v4745
  %4953 = vmatpush.bf16.msra.mxu0 %v4743
  %4954 = vmatpush.bf16.msra.mxu0 %v4741
  %4955 = vmatpush.bf16.msra.mxu0 %v4739
  %4956 = vmatpush.bf16.msra.mxu0 %v4737
  %4957 = vmatpush.bf16.msra.mxu0 %v4735
  %4958 = vmatmul.bf16.gmra.mxu0 %v4364
  %v4959 = vpop.f32.mrf.mxu0
  %v4960 = vadd.f32 %v4947, %v4959
  %v4961 = vpop.f32.mrf.mxu0
  %4962 = vdwg.mxu0
  %4963 = vmatpush.bf16.msra.mxu0 %v4765
  %4964 = vmatpush.bf16.msra.mxu0 %v4763
  %4965 = vmatpush.bf16.msra.mxu0 %v4761
  %4966 = vmatpush.bf16.msra.mxu0 %v4759
  %4967 = vmatpush.bf16.msra.mxu0 %v4757
  %4968 = vmatpush.bf16.msra.mxu0 %v4755
  %4969 = vmatpush.bf16.msra.mxu0 %v4753
  %4970 = vmatpush.bf16.msra.mxu0 %v4751
  %4971 = vmatmul.bf16.gmra.mxu0 %v4365
  %v4972 = vpop.f32.mrf.mxu0
  %v4973 = vadd.f32 %v4960, %v4972
  %v4974 = vpop.f32.mrf.mxu0
  %4975 = vdwg.mxu0
  %v5056 = vunpack.c.l.b16 %v4264
  %v5057 = vunpack.c.h.b16 %v4264
  %v5058 = vunpack.c.l.b16 %v4265
  %v5059 = vunpack.c.h.b16 %v4265
  %v5060 = vunpack.c.l.b16 %v4266
  %v5061 = vunpack.c.h.b16 %v4266
  %v5062 = vunpack.c.l.b16 %v4267
  %v5063 = vunpack.c.h.b16 %v4267
  %v5064 = vunpack.c.l.b16 %v4268
  %v5065 = vunpack.c.h.b16 %v4268
  %v5066 = vunpack.c.l.b16 %v4269
  %v5067 = vunpack.c.h.b16 %v4269
  %v5068 = vunpack.c.l.b16 %v4270
  %v5069 = vunpack.c.h.b16 %v4270
  %v5070 = vunpack.c.l.b16 %v4271
  %v5071 = vunpack.c.h.b16 %v4271
  %v5072 = vunpack.c.l.b16 %v4272
  %v5073 = vunpack.c.h.b16 %v4272
  %v5074 = vunpack.c.l.b16 %v4273
  %v5075 = vunpack.c.h.b16 %v4273
  %v5076 = vunpack.c.l.b16 %v4274
  %v5077 = vunpack.c.h.b16 %v4274
  %v5078 = vunpack.c.l.b16 %v4275
  %v5079 = vunpack.c.h.b16 %v4275
  %v5080 = vunpack.c.l.b16 %v4276
  %v5081 = vunpack.c.h.b16 %v4276
  %v5082 = vunpack.c.l.b16 %v4277
  %v5083 = vunpack.c.h.b16 %v4277
  %v5084 = vunpack.c.l.b16 %v4278
  %v5085 = vunpack.c.h.b16 %v4278
  %v5086 = vunpack.c.l.b16 %v4279
  %v5087 = vunpack.c.h.b16 %v4279
  %v5088 = vunpack.c.l.b16 %v4280
  %v5089 = vunpack.c.h.b16 %v4280
  %v5090 = vunpack.c.l.b16 %v4281
  %v5091 = vunpack.c.h.b16 %v4281
  %v5092 = vunpack.c.l.b16 %v4282
  %v5093 = vunpack.c.h.b16 %v4282
  %v5094 = vunpack.c.l.b16 %v4283
  %v5095 = vunpack.c.h.b16 %v4283
  %v5096 = vunpack.c.l.b16 %v4284
  %v5097 = vunpack.c.h.b16 %v4284
  %v5098 = vunpack.c.l.b16 %v4285
  %v5099 = vunpack.c.h.b16 %v4285
  %v5100 = vunpack.c.l.b16 %v4286
  %v5101 = vunpack.c.h.b16 %v4286
  %v5102 = vunpack.c.l.b16 %v4287
  %v5103 = vunpack.c.h.b16 %v4287
  %v5104 = vunpack.c.l.b16 %v4288
  %v5105 = vunpack.c.h.b16 %v4288
  %v5106 = vunpack.c.l.b16 %v4289
  %v5107 = vunpack.c.h.b16 %v4289
  %v5108 = vunpack.c.l.b16 %v4290
  %v5109 = vunpack.c.h.b16 %v4290
  %v5110 = vunpack.c.l.b16 %v4291
  %v5111 = vunpack.c.h.b16 %v4291
  %v5112 = vunpack.c.l.b16 %v4292
  %v5113 = vunpack.c.h.b16 %v4292
  %v5114 = vunpack.c.l.b16 %v4293
  %v5115 = vunpack.c.h.b16 %v4293
  %v5116 = vunpack.c.l.b16 %v4294
  %v5117 = vunpack.c.h.b16 %v4294
  %v5118 = vunpack.c.l.b16 %v4295
  %v5119 = vunpack.c.h.b16 %v4295
  %v5120 = vunpack.c.l.b16 %v4296
  %v5121 = vunpack.c.h.b16 %v4296
  %v5122 = vunpack.c.l.b16 %v4297
  %v5123 = vunpack.c.h.b16 %v4297
  %v5124 = vunpack.c.l.b16 %v4298
  %v5125 = vunpack.c.h.b16 %v4298
  %v5126 = vunpack.c.l.b16 %v4299
  %v5127 = vunpack.c.h.b16 %v4299
  %v5128 = vunpack.c.l.b16 %v4300
  %v5129 = vunpack.c.h.b16 %v4300
  %v5130 = vunpack.c.l.b16 %v4301
  %v5131 = vunpack.c.h.b16 %v4301
  %v5132 = vunpack.c.l.b16 %v4302
  %v5133 = vunpack.c.h.b16 %v4302
  %v5134 = vunpack.c.l.b16 %v4303
  %v5135 = vunpack.c.h.b16 %v4303
  %v5136 = vunpack.c.l.b16 %v4304
  %v5137 = vunpack.c.h.b16 %v4304
  %v5138 = vunpack.c.l.b16 %v4305
  %v5139 = vunpack.c.h.b16 %v4305
  %v5140 = vunpack.c.l.b16 %v4306
  %v5141 = vunpack.c.h.b16 %v4306
  %v5142 = vunpack.c.l.b16 %v4307
  %v5143 = vunpack.c.h.b16 %v4307
  %v5144 = vunpack.c.l.b16 %v4308
  %v5145 = vunpack.c.h.b16 %v4308
  %v5146 = vunpack.c.l.b16 %v4309
  %v5147 = vunpack.c.h.b16 %v4309
  %v5148 = vunpack.c.l.b16 %v4310
  %v5149 = vunpack.c.h.b16 %v4310
  %v5150 = vunpack.c.l.b16 %v4311
  %v5151 = vunpack.c.h.b16 %v4311
  %v5152 = vunpack.c.l.b16 %v4312
  %v5153 = vunpack.c.h.b16 %v4312
  %v5154 = vunpack.c.l.b16 %v4313
  %v5155 = vunpack.c.h.b16 %v4313
  %v5156 = vunpack.c.l.b16 %v4314
  %v5157 = vunpack.c.h.b16 %v4314
  %v5158 = vunpack.c.l.b16 %v4315
  %v5159 = vunpack.c.h.b16 %v4315
  %v5160 = vunpack.c.l.b16 %v4316
  %v5161 = vunpack.c.h.b16 %v4316
  %v5162 = vunpack.c.l.b16 %v4317
  %v5163 = vunpack.c.h.b16 %v4317
  %v5164 = vunpack.c.l.b16 %v4318
  %v5165 = vunpack.c.h.b16 %v4318
  %v5166 = vunpack.c.l.b16 %v4319
  %v5167 = vunpack.c.h.b16 %v4319
  %v5168 = vunpack.c.l.b16 %v4320
  %v5169 = vunpack.c.h.b16 %v4320
  %v5170 = vunpack.c.l.b16 %v4321
  %v5171 = vunpack.c.h.b16 %v4321
  %v5172 = vunpack.c.l.b16 %v4322
  %v5173 = vunpack.c.h.b16 %v4322
  %v5174 = vunpack.c.l.b16 %v4323
  %v5175 = vunpack.c.h.b16 %v4323
  %v5176 = vunpack.c.l.b16 %v4324
  %v5177 = vunpack.c.h.b16 %v4324
  %v5178 = vunpack.c.l.b16 %v4325
  %v5179 = vunpack.c.h.b16 %v4325
  %v5180 = vunpack.c.l.b16 %v4326
  %v5181 = vunpack.c.h.b16 %v4326
  %v5182 = vunpack.c.l.b16 %v4327
  %v5183 = vunpack.c.h.b16 %v4327
  %v5184 = vunpack.c.l.b16 %v4328
  %v5185 = vunpack.c.h.b16 %v4328
  %v5186 = vunpack.c.l.b16 %v4329
  %v5187 = vunpack.c.h.b16 %v4329
  %v5188 = vunpack.c.l.b16 %v4330
  %v5189 = vunpack.c.h.b16 %v4330
  %v5190 = vunpack.c.l.b16 %v4331
  %v5191 = vunpack.c.h.b16 %v4331
  %v5192 = vunpack.c.l.b16 %v4332
  %v5193 = vunpack.c.h.b16 %v4332
  %v5194 = vunpack.c.l.b16 %v4333
  %v5195 = vunpack.c.h.b16 %v4333
  %v5196 = vunpack.c.l.b16 %v4334
  %v5197 = vunpack.c.h.b16 %v4334
  %v5198 = vunpack.c.l.b16 %v4335
  %v5199 = vunpack.c.h.b16 %v4335
  %v5200 = vunpack.c.l.b16 %v4336
  %v5201 = vunpack.c.h.b16 %v4336
  %v5202 = vunpack.c.l.b16 %v4337
  %v5203 = vunpack.c.h.b16 %v4337
  %v5204 = vunpack.c.l.b16 %v4338
  %v5205 = vunpack.c.h.b16 %v4338
  %v5206 = vunpack.c.l.b16 %v4339
  %v5207 = vunpack.c.h.b16 %v4339
  %v5208 = vunpack.c.l.b16 %v4340
  %v5209 = vunpack.c.h.b16 %v4340
  %v5210 = vunpack.c.l.b16 %v4341
  %v5211 = vunpack.c.h.b16 %v4341
  %v5212 = vunpack.c.l.b16 %v4342
  %v5213 = vunpack.c.h.b16 %v4342
  %v5214 = vunpack.c.l.b16 %v4343
  %v5215 = vunpack.c.h.b16 %v4343
  %v5216 = vpack.c.b16 %v5058, %v5056
  %v5217 = vpack.c.b16 %v5059, %v5057
  %v5218 = vpack.c.b16 %v5062, %v5060
  %v5219 = vpack.c.b16 %v5063, %v5061
  %v5220 = vpack.c.b16 %v5066, %v5064
  %v5221 = vpack.c.b16 %v5067, %v5065
  %v5222 = vpack.c.b16 %v5070, %v5068
  %v5223 = vpack.c.b16 %v5071, %v5069
  %v5224 = vpack.c.b16 %v5074, %v5072
  %v5225 = vpack.c.b16 %v5075, %v5073
  %v5226 = vpack.c.b16 %v5078, %v5076
  %v5227 = vpack.c.b16 %v5079, %v5077
  %v5228 = vpack.c.b16 %v5082, %v5080
  %v5229 = vpack.c.b16 %v5083, %v5081
  %v5230 = vpack.c.b16 %v5086, %v5084
  %v5231 = vpack.c.b16 %v5087, %v5085
  %v5232 = vpack.c.b16 %v5090, %v5088
  %v5233 = vpack.c.b16 %v5091, %v5089
  %v5234 = vpack.c.b16 %v5094, %v5092
  %v5235 = vpack.c.b16 %v5095, %v5093
  %v5236 = vpack.c.b16 %v5098, %v5096
  %v5237 = vpack.c.b16 %v5099, %v5097
  %v5238 = vpack.c.b16 %v5102, %v5100
  %v5239 = vpack.c.b16 %v5103, %v5101
  %v5240 = vpack.c.b16 %v5106, %v5104
  %v5241 = vpack.c.b16 %v5107, %v5105
  %v5242 = vpack.c.b16 %v5110, %v5108
  %v5243 = vpack.c.b16 %v5111, %v5109
  %v5244 = vpack.c.b16 %v5114, %v5112
  %v5245 = vpack.c.b16 %v5115, %v5113
  %v5246 = vpack.c.b16 %v5118, %v5116
  %v5247 = vpack.c.b16 %v5119, %v5117
  %v5248 = vpack.c.b16 %v5122, %v5120
  %v5249 = vpack.c.b16 %v5123, %v5121
  %v5250 = vpack.c.b16 %v5126, %v5124
  %v5251 = vpack.c.b16 %v5127, %v5125
  %v5252 = vpack.c.b16 %v5130, %v5128
  %v5253 = vpack.c.b16 %v5131, %v5129
  %v5254 = vpack.c.b16 %v5134, %v5132
  %v5255 = vpack.c.b16 %v5135, %v5133
  %v5256 = vpack.c.b16 %v5138, %v5136
  %v5257 = vpack.c.b16 %v5139, %v5137
  %v5258 = vpack.c.b16 %v5142, %v5140
  %v5259 = vpack.c.b16 %v5143, %v5141
  %v5260 = vpack.c.b16 %v5146, %v5144
  %v5261 = vpack.c.b16 %v5147, %v5145
  %v5262 = vpack.c.b16 %v5150, %v5148
  %v5263 = vpack.c.b16 %v5151, %v5149
  %v5264 = vpack.c.b16 %v5154, %v5152
  %v5265 = vpack.c.b16 %v5155, %v5153
  %v5266 = vpack.c.b16 %v5158, %v5156
  %v5267 = vpack.c.b16 %v5159, %v5157
  %v5268 = vpack.c.b16 %v5162, %v5160
  %v5269 = vpack.c.b16 %v5163, %v5161
  %v5270 = vpack.c.b16 %v5166, %v5164
  %v5271 = vpack.c.b16 %v5167, %v5165
  %v5272 = vpack.c.b16 %v5170, %v5168
  %v5273 = vpack.c.b16 %v5171, %v5169
  %v5274 = vpack.c.b16 %v5174, %v5172
  %v5275 = vpack.c.b16 %v5175, %v5173
  %v5276 = vpack.c.b16 %v5178, %v5176
  %v5277 = vpack.c.b16 %v5179, %v5177
  %v5278 = vpack.c.b16 %v5182, %v5180
  %v5279 = vpack.c.b16 %v5183, %v5181
  %v5280 = vpack.c.b16 %v5186, %v5184
  %v5281 = vpack.c.b16 %v5187, %v5185
  %v5282 = vpack.c.b16 %v5190, %v5188
  %v5283 = vpack.c.b16 %v5191, %v5189
  %v5284 = vpack.c.b16 %v5194, %v5192
  %v5285 = vpack.c.b16 %v5195, %v5193
  %v5286 = vpack.c.b16 %v5198, %v5196
  %v5287 = vpack.c.b16 %v5199, %v5197
  %v5288 = vpack.c.b16 %v5202, %v5200
  %v5289 = vpack.c.b16 %v5203, %v5201
  %v5290 = vpack.c.b16 %v5206, %v5204
  %v5291 = vpack.c.b16 %v5207, %v5205
  %v5292 = vpack.c.b16 %v5210, %v5208
  %v5293 = vpack.c.b16 %v5211, %v5209
  %v5294 = vpack.c.b16 %v5214, %v5212
  %v5295 = vpack.c.b16 %v5215, %v5213
  %5376 = vmatpush.bf16.msra.mxu0 %v5230
  %5377 = vmatpush.bf16.msra.mxu0 %v5228
  %5378 = vmatpush.bf16.msra.mxu0 %v5226
  %5379 = vmatpush.bf16.msra.mxu0 %v5224
  %5380 = vmatpush.bf16.msra.mxu0 %v5222
  %5381 = vmatpush.bf16.msra.mxu0 %v5220
  %5382 = vmatpush.bf16.msra.mxu0 %v5218
  %5383 = vmatpush.bf16.msra.mxu0 %v5216
  %5384 = vmatmul.bf16.gmra.mxu0 %v4259
  %v5385 = vpop.f32.mrf.mxu0
  %v5386 = vadd.f32 %v4908, %v5385
  %v5387 = vpop.f32.mrf.mxu0
  %5388 = vdwg.mxu0
  %5389 = vmatpush.bf16.msra.mxu0 %v5246
  %5390 = vmatpush.bf16.msra.mxu0 %v5244
  %5391 = vmatpush.bf16.msra.mxu0 %v5242
  %5392 = vmatpush.bf16.msra.mxu0 %v5240
  %5393 = vmatpush.bf16.msra.mxu0 %v5238
  %5394 = vmatpush.bf16.msra.mxu0 %v5236
  %5395 = vmatpush.bf16.msra.mxu0 %v5234
  %5396 = vmatpush.bf16.msra.mxu0 %v5232
  %5397 = vmatmul.bf16.gmra.mxu0 %v4260
  %v5398 = vpop.f32.mrf.mxu0
  %v5399 = vadd.f32 %v5386, %v5398
  %v5400 = vpop.f32.mrf.mxu0
  %5401 = vdwg.mxu0
  %5402 = vmatpush.bf16.msra.mxu0 %v5262
  %5403 = vmatpush.bf16.msra.mxu0 %v5260
  %5404 = vmatpush.bf16.msra.mxu0 %v5258
  %5405 = vmatpush.bf16.msra.mxu0 %v5256
  %5406 = vmatpush.bf16.msra.mxu0 %v5254
  %5407 = vmatpush.bf16.msra.mxu0 %v5252
  %5408 = vmatpush.bf16.msra.mxu0 %v5250
  %5409 = vmatpush.bf16.msra.mxu0 %v5248
  %5410 = vmatmul.bf16.gmra.mxu0 %v4261
  %v5411 = vpop.f32.mrf.mxu0
  %v5412 = vadd.f32 %v5399, %v5411
  %v5413 = vpop.f32.mrf.mxu0
  %5414 = vdwg.mxu0
  %5415 = vmatpush.bf16.msra.mxu0 %v5278
  %5416 = vmatpush.bf16.msra.mxu0 %v5276
  %5417 = vmatpush.bf16.msra.mxu0 %v5274
  %5418 = vmatpush.bf16.msra.mxu0 %v5272
  %5419 = vmatpush.bf16.msra.mxu0 %v5270
  %5420 = vmatpush.bf16.msra.mxu0 %v5268
  %5421 = vmatpush.bf16.msra.mxu0 %v5266
  %5422 = vmatpush.bf16.msra.mxu0 %v5264
  %5423 = vmatmul.bf16.gmra.mxu0 %v4262
  %v5424 = vpop.f32.mrf.mxu0
  %v5425 = vadd.f32 %v5412, %v5424
  %v5426 = vpop.f32.mrf.mxu0
  %5427 = vdwg.mxu0
  %5428 = vmatpush.bf16.msra.mxu0 %v5294
  %5429 = vmatpush.bf16.msra.mxu0 %v5292
  %5430 = vmatpush.bf16.msra.mxu0 %v5290
  %5431 = vmatpush.bf16.msra.mxu0 %v5288
  %5432 = vmatpush.bf16.msra.mxu0 %v5286
  %5433 = vmatpush.bf16.msra.mxu0 %v5284
  %5434 = vmatpush.bf16.msra.mxu0 %v5282
  %5435 = vmatpush.bf16.msra.mxu0 %v5280
  %5436 = vmatmul.bf16.gmra.mxu0 %v4263
  %v5437 = vpop.f32.mrf.mxu0
  %v5438 = vadd.f32 %v5425, %v5437
  %v5439 = vpop.f32.mrf.mxu0
  %5440 = vdwg.mxu0
  %5441 = vmatpush.bf16.msra.mxu0 %v5231
  %5442 = vmatpush.bf16.msra.mxu0 %v5229
  %5443 = vmatpush.bf16.msra.mxu0 %v5227
  %5444 = vmatpush.bf16.msra.mxu0 %v5225
  %5445 = vmatpush.bf16.msra.mxu0 %v5223
  %5446 = vmatpush.bf16.msra.mxu0 %v5221
  %5447 = vmatpush.bf16.msra.mxu0 %v5219
  %5448 = vmatpush.bf16.msra.mxu0 %v5217
  %5449 = vmatmul.bf16.gmra.mxu0 %v4259
  %v5450 = vpop.f32.mrf.mxu0
  %v5451 = vadd.f32 %v4973, %v5450
  %v5452 = vpop.f32.mrf.mxu0
  %5453 = vdwg.mxu0
  %5454 = vmatpush.bf16.msra.mxu0 %v5247
  %5455 = vmatpush.bf16.msra.mxu0 %v5245
  %5456 = vmatpush.bf16.msra.mxu0 %v5243
  %5457 = vmatpush.bf16.msra.mxu0 %v5241
  %5458 = vmatpush.bf16.msra.mxu0 %v5239
  %5459 = vmatpush.bf16.msra.mxu0 %v5237
  %5460 = vmatpush.bf16.msra.mxu0 %v5235
  %5461 = vmatpush.bf16.msra.mxu0 %v5233
  %5462 = vmatmul.bf16.gmra.mxu0 %v4260
  %v5463 = vpop.f32.mrf.mxu0
  %v5464 = vadd.f32 %v5451, %v5463
  %v5465 = vpop.f32.mrf.mxu0
  %5466 = vdwg.mxu0
  %5467 = vmatpush.bf16.msra.mxu0 %v5263
  %5468 = vmatpush.bf16.msra.mxu0 %v5261
  %5469 = vmatpush.bf16.msra.mxu0 %v5259
  %5470 = vmatpush.bf16.msra.mxu0 %v5257
  %5471 = vmatpush.bf16.msra.mxu0 %v5255
  %5472 = vmatpush.bf16.msra.mxu0 %v5253
  %5473 = vmatpush.bf16.msra.mxu0 %v5251
  %5474 = vmatpush.bf16.msra.mxu0 %v5249
  %5475 = vmatmul.bf16.gmra.mxu0 %v4261
  %v5476 = vpop.f32.mrf.mxu0
  %v5477 = vadd.f32 %v5464, %v5476
  %v5478 = vpop.f32.mrf.mxu0
  %5479 = vdwg.mxu0
  %5480 = vmatpush.bf16.msra.mxu0 %v5279
  %5481 = vmatpush.bf16.msra.mxu0 %v5277
  %5482 = vmatpush.bf16.msra.mxu0 %v5275
  %5483 = vmatpush.bf16.msra.mxu0 %v5273
  %5484 = vmatpush.bf16.msra.mxu0 %v5271
  %5485 = vmatpush.bf16.msra.mxu0 %v5269
  %5486 = vmatpush.bf16.msra.mxu0 %v5267
  %5487 = vmatpush.bf16.msra.mxu0 %v5265
  %5488 = vmatmul.bf16.gmra.mxu0 %v4262
  %v5489 = vpop.f32.mrf.mxu0
  %v5490 = vadd.f32 %v5477, %v5489
  %v5491 = vpop.f32.mrf.mxu0
  %5492 = vdwg.mxu0
  %5493 = vmatpush.bf16.msra.mxu0 %v5295
  %5494 = vmatpush.bf16.msra.mxu0 %v5293
  %5495 = vmatpush.bf16.msra.mxu0 %v5291
  %5496 = vmatpush.bf16.msra.mxu0 %v5289
  %5497 = vmatpush.bf16.msra.mxu0 %v5287
  %5498 = vmatpush.bf16.msra.mxu0 %v5285
  %5499 = vmatpush.bf16.msra.mxu0 %v5283
  %5500 = vmatpush.bf16.msra.mxu0 %v5281
  %5501 = vmatmul.bf16.gmra.mxu0 %v4263
  %v5502 = vpop.f32.mrf.mxu0
  %v5503 = vadd.f32 %v5490, %v5502
  %v5504 = vpop.f32.mrf.mxu0
  %5505 = vdwg.mxu0
  %v5506 = vld [vmem:[#allocation5 + $0x14] sm:$0xff]
  %v5507 = vld [vmem:[#allocation5 + $0x1c] sm:$0x3]
  %5510 = vst [vmem:[#allocation1] ss:$4 sm:$0xff] %v5506
  %s5511 = scalar_lea.vmem [#allocation1], 32
  %5512 = vst [vmem:[%s5511] ss:$4 sm:$0xff] %v5507
  %v5513 = vld.sshfl [vmem:[#allocation1] sm:$0xff pattern:$0x73625140]
  %v5514 = vld.sshfl [vmem:[#allocation1 + $0x8] sm:$0xff pattern:$0x73625140]
  %v5515 = vld.sshfl [vmem:[#allocation1 + $0x10] sm:$0xff pattern:$0x73625140]
  %v5516 = vld.sshfl [vmem:[#allocation1 + $0x18] sm:$0xff pattern:$0x73625140]
  %v5517 = vld.sshfl [vmem:[#allocation1 + $0x20] sm:$0xff pattern:$0x73625140]
  %v5523 = vpack.c.bf16 %v5513, %v5513
  %v5524 = vpack.c.bf16 %v5514, %v5514
  %v5525 = vpack.c.bf16 %v5515, %v5515
  %v5526 = vpack.c.bf16 %v5516, %v5516
  %v5527 = vpack.c.bf16 %v5517, %v5517
  %v5528 = vld [vmem:[%s5 + $0x500] sm:$0xff]
  %v5529 = vld [vmem:[%s5 + $0x508] sm:$0xff]
  %v5530 = vld [vmem:[%s5 + $0x510] sm:$0xff]
  %v5531 = vld [vmem:[%s5 + $0x518] sm:$0xff]
  %v5532 = vld [vmem:[%s5 + $0x520] sm:$0xff]
  %v5533 = vld [vmem:[%s5 + $0x528] sm:$0xff]
  %v5534 = vld [vmem:[%s5 + $0x530] sm:$0xff]
  %v5535 = vld [vmem:[%s5 + $0x538] sm:$0xff]
  %v5536 = vld [vmem:[%s5 + $0x540] sm:$0xff]
  %v5537 = vld [vmem:[%s5 + $0x548] sm:$0xff]
  %v5538 = vld [vmem:[%s5 + $0x550] sm:$0xff]
  %v5539 = vld [vmem:[%s5 + $0x558] sm:$0xff]
  %v5540 = vld [vmem:[%s5 + $0x560] sm:$0xff]
  %v5541 = vld [vmem:[%s5 + $0x568] sm:$0xff]
  %v5542 = vld [vmem:[%s5 + $0x570] sm:$0xff]
  %v5543 = vld [vmem:[%s5 + $0x578] sm:$0xff]
  %v5544 = vld [vmem:[%s5 + $0x580] sm:$0xff]
  %v5545 = vld [vmem:[%s5 + $0x588] sm:$0xff]
  %v5546 = vld [vmem:[%s5 + $0x590] sm:$0xff]
  %v5547 = vld [vmem:[%s5 + $0x598] sm:$0xff]
  %v5548 = vld [vmem:[%s5 + $0x5a0] sm:$0xff]
  %v5549 = vld [vmem:[%s5 + $0x5a8] sm:$0xff]
  %v5550 = vld [vmem:[%s5 + $0x5b0] sm:$0xff]
  %v5551 = vld [vmem:[%s5 + $0x5b8] sm:$0xff]
  %v5552 = vld [vmem:[%s5 + $0x5c0] sm:$0xff]
  %v5553 = vld [vmem:[%s5 + $0x5c8] sm:$0xff]
  %v5554 = vld [vmem:[%s5 + $0x5d0] sm:$0xff]
  %v5555 = vld [vmem:[%s5 + $0x5d8] sm:$0xff]
  %v5556 = vld [vmem:[%s5 + $0x5e0] sm:$0xff]
  %v5557 = vld [vmem:[%s5 + $0x5e8] sm:$0xff]
  %v5558 = vld [vmem:[%s5 + $0x5f0] sm:$0xff]
  %v5559 = vld [vmem:[%s5 + $0x5f8] sm:$0xff]
  %v5560 = vld [vmem:[%s5 + $0x600] sm:$0xff]
  %v5561 = vld [vmem:[%s5 + $0x608] sm:$0xff]
  %v5562 = vld [vmem:[%s5 + $0x610] sm:$0xff]
  %v5563 = vld [vmem:[%s5 + $0x618] sm:$0xff]
  %v5564 = vld [vmem:[%s5 + $0x620] sm:$0xff]
  %v5565 = vld [vmem:[%s5 + $0x628] sm:$0xff]
  %v5566 = vld [vmem:[%s5 + $0x630] sm:$0xff]
  %v5567 = vld [vmem:[%s5 + $0x638] sm:$0xff]
  %v5568 = vld [vmem:[%s5 + $0x640] sm:$0xff]
  %v5569 = vld [vmem:[%s5 + $0x648] sm:$0xff]
  %v5570 = vld [vmem:[%s5 + $0x650] sm:$0xff]
  %v5571 = vld [vmem:[%s5 + $0x658] sm:$0xff]
  %v5572 = vld [vmem:[%s5 + $0x660] sm:$0xff]
  %v5573 = vld [vmem:[%s5 + $0x668] sm:$0xff]
  %v5574 = vld [vmem:[%s5 + $0x670] sm:$0xff]
  %v5575 = vld [vmem:[%s5 + $0x678] sm:$0xff]
  %v5576 = vld [vmem:[%s5 + $0x680] sm:$0xff]
  %v5577 = vld [vmem:[%s5 + $0x688] sm:$0xff]
  %v5578 = vld [vmem:[%s5 + $0x690] sm:$0xff]
  %v5579 = vld [vmem:[%s5 + $0x698] sm:$0xff]
  %v5580 = vld [vmem:[%s5 + $0x6a0] sm:$0xff]
  %v5581 = vld [vmem:[%s5 + $0x6a8] sm:$0xff]
  %v5582 = vld [vmem:[%s5 + $0x6b0] sm:$0xff]
  %v5583 = vld [vmem:[%s5 + $0x6b8] sm:$0xff]
  %v5584 = vld [vmem:[%s5 + $0x6c0] sm:$0xff]
  %v5585 = vld [vmem:[%s5 + $0x6c8] sm:$0xff]
  %v5586 = vld [vmem:[%s5 + $0x6d0] sm:$0xff]
  %v5587 = vld [vmem:[%s5 + $0x6d8] sm:$0xff]
  %v5588 = vld [vmem:[%s5 + $0x6e0] sm:$0xff]
  %v5589 = vld [vmem:[%s5 + $0x6e8] sm:$0xff]
  %v5590 = vld [vmem:[%s5 + $0x6f0] sm:$0xff]
  %v5591 = vld [vmem:[%s5 + $0x6f8] sm:$0xff]
  %v5592 = vld [vmem:[%s5 + $0x700] sm:$0xff]
  %v5593 = vld [vmem:[%s5 + $0x708] sm:$0xff]
  %v5594 = vld [vmem:[%s5 + $0x710] sm:$0xff]
  %v5595 = vld [vmem:[%s5 + $0x718] sm:$0xff]
  %v5596 = vld [vmem:[%s5 + $0x720] sm:$0xff]
  %v5597 = vld [vmem:[%s5 + $0x728] sm:$0xff]
  %v5598 = vld [vmem:[%s5 + $0x730] sm:$0xff]
  %v5599 = vld [vmem:[%s5 + $0x738] sm:$0xff]
  %v5600 = vld [vmem:[%s5 + $0x740] sm:$0xff]
  %v5601 = vld [vmem:[%s5 + $0x748] sm:$0xff]
  %v5602 = vld [vmem:[%s5 + $0x750] sm:$0xff]
  %v5603 = vld [vmem:[%s5 + $0x758] sm:$0xff]
  %v5604 = vld [vmem:[%s5 + $0x760] sm:$0xff]
  %v5605 = vld [vmem:[%s5 + $0x768] sm:$0xff]
  %v5606 = vld [vmem:[%s5 + $0x770] sm:$0xff]
  %v5607 = vld [vmem:[%s5 + $0x778] sm:$0xff]
  %v5688 = vunpack.c.l.b16 %v5528
  %v5689 = vunpack.c.h.b16 %v5528
  %v5690 = vunpack.c.l.b16 %v5529
  %v5691 = vunpack.c.h.b16 %v5529
  %v5692 = vunpack.c.l.b16 %v5530
  %v5693 = vunpack.c.h.b16 %v5530
  %v5694 = vunpack.c.l.b16 %v5531
  %v5695 = vunpack.c.h.b16 %v5531
  %v5696 = vunpack.c.l.b16 %v5532
  %v5697 = vunpack.c.h.b16 %v5532
  %v5698 = vunpack.c.l.b16 %v5533
  %v5699 = vunpack.c.h.b16 %v5533
  %v5700 = vunpack.c.l.b16 %v5534
  %v5701 = vunpack.c.h.b16 %v5534
  %v5702 = vunpack.c.l.b16 %v5535
  %v5703 = vunpack.c.h.b16 %v5535
  %v5704 = vunpack.c.l.b16 %v5536
  %v5705 = vunpack.c.h.b16 %v5536
  %v5706 = vunpack.c.l.b16 %v5537
  %v5707 = vunpack.c.h.b16 %v5537
  %v5708 = vunpack.c.l.b16 %v5538
  %v5709 = vunpack.c.h.b16 %v5538
  %v5710 = vunpack.c.l.b16 %v5539
  %v5711 = vunpack.c.h.b16 %v5539
  %v5712 = vunpack.c.l.b16 %v5540
  %v5713 = vunpack.c.h.b16 %v5540
  %v5714 = vunpack.c.l.b16 %v5541
  %v5715 = vunpack.c.h.b16 %v5541
  %v5716 = vunpack.c.l.b16 %v5542
  %v5717 = vunpack.c.h.b16 %v5542
  %v5718 = vunpack.c.l.b16 %v5543
  %v5719 = vunpack.c.h.b16 %v5543
  %v5720 = vunpack.c.l.b16 %v5544
  %v5721 = vunpack.c.h.b16 %v5544
  %v5722 = vunpack.c.l.b16 %v5545
  %v5723 = vunpack.c.h.b16 %v5545
  %v5724 = vunpack.c.l.b16 %v5546
  %v5725 = vunpack.c.h.b16 %v5546
  %v5726 = vunpack.c.l.b16 %v5547
  %v5727 = vunpack.c.h.b16 %v5547
  %v5728 = vunpack.c.l.b16 %v5548
  %v5729 = vunpack.c.h.b16 %v5548
  %v5730 = vunpack.c.l.b16 %v5549
  %v5731 = vunpack.c.h.b16 %v5549
  %v5732 = vunpack.c.l.b16 %v5550
  %v5733 = vunpack.c.h.b16 %v5550
  %v5734 = vunpack.c.l.b16 %v5551
  %v5735 = vunpack.c.h.b16 %v5551
  %v5736 = vunpack.c.l.b16 %v5552
  %v5737 = vunpack.c.h.b16 %v5552
  %v5738 = vunpack.c.l.b16 %v5553
  %v5739 = vunpack.c.h.b16 %v5553
  %v5740 = vunpack.c.l.b16 %v5554
  %v5741 = vunpack.c.h.b16 %v5554
  %v5742 = vunpack.c.l.b16 %v5555
  %v5743 = vunpack.c.h.b16 %v5555
  %v5744 = vunpack.c.l.b16 %v5556
  %v5745 = vunpack.c.h.b16 %v5556
  %v5746 = vunpack.c.l.b16 %v5557
  %v5747 = vunpack.c.h.b16 %v5557
  %v5748 = vunpack.c.l.b16 %v5558
  %v5749 = vunpack.c.h.b16 %v5558
  %v5750 = vunpack.c.l.b16 %v5559
  %v5751 = vunpack.c.h.b16 %v5559
  %v5752 = vunpack.c.l.b16 %v5560
  %v5753 = vunpack.c.h.b16 %v5560
  %v5754 = vunpack.c.l.b16 %v5561
  %v5755 = vunpack.c.h.b16 %v5561
  %v5756 = vunpack.c.l.b16 %v5562
  %v5757 = vunpack.c.h.b16 %v5562
  %v5758 = vunpack.c.l.b16 %v5563
  %v5759 = vunpack.c.h.b16 %v5563
  %v5760 = vunpack.c.l.b16 %v5564
  %v5761 = vunpack.c.h.b16 %v5564
  %v5762 = vunpack.c.l.b16 %v5565
  %v5763 = vunpack.c.h.b16 %v5565
  %v5764 = vunpack.c.l.b16 %v5566
  %v5765 = vunpack.c.h.b16 %v5566
  %v5766 = vunpack.c.l.b16 %v5567
  %v5767 = vunpack.c.h.b16 %v5567
  %v5768 = vunpack.c.l.b16 %v5568
  %v5769 = vunpack.c.h.b16 %v5568
  %v5770 = vunpack.c.l.b16 %v5569
  %v5771 = vunpack.c.h.b16 %v5569
  %v5772 = vunpack.c.l.b16 %v5570
  %v5773 = vunpack.c.h.b16 %v5570
  %v5774 = vunpack.c.l.b16 %v5571
  %v5775 = vunpack.c.h.b16 %v5571
  %v5776 = vunpack.c.l.b16 %v5572
  %v5777 = vunpack.c.h.b16 %v5572
  %v5778 = vunpack.c.l.b16 %v5573
  %v5779 = vunpack.c.h.b16 %v5573
  %v5780 = vunpack.c.l.b16 %v5574
  %v5781 = vunpack.c.h.b16 %v5574
  %v5782 = vunpack.c.l.b16 %v5575
  %v5783 = vunpack.c.h.b16 %v5575
  %v5784 = vunpack.c.l.b16 %v5576
  %v5785 = vunpack.c.h.b16 %v5576
  %v5786 = vunpack.c.l.b16 %v5577
  %v5787 = vunpack.c.h.b16 %v5577
  %v5788 = vunpack.c.l.b16 %v5578
  %v5789 = vunpack.c.h.b16 %v5578
  %v5790 = vunpack.c.l.b16 %v5579
  %v5791 = vunpack.c.h.b16 %v5579
  %v5792 = vunpack.c.l.b16 %v5580
  %v5793 = vunpack.c.h.b16 %v5580
  %v5794 = vunpack.c.l.b16 %v5581
  %v5795 = vunpack.c.h.b16 %v5581
  %v5796 = vunpack.c.l.b16 %v5582
  %v5797 = vunpack.c.h.b16 %v5582
  %v5798 = vunpack.c.l.b16 %v5583
  %v5799 = vunpack.c.h.b16 %v5583
  %v5800 = vunpack.c.l.b16 %v5584
  %v5801 = vunpack.c.h.b16 %v5584
  %v5802 = vunpack.c.l.b16 %v5585
  %v5803 = vunpack.c.h.b16 %v5585
  %v5804 = vunpack.c.l.b16 %v5586
  %v5805 = vunpack.c.h.b16 %v5586
  %v5806 = vunpack.c.l.b16 %v5587
  %v5807 = vunpack.c.h.b16 %v5587
  %v5808 = vunpack.c.l.b16 %v5588
  %v5809 = vunpack.c.h.b16 %v5588
  %v5810 = vunpack.c.l.b16 %v5589
  %v5811 = vunpack.c.h.b16 %v5589
  %v5812 = vunpack.c.l.b16 %v5590
  %v5813 = vunpack.c.h.b16 %v5590
  %v5814 = vunpack.c.l.b16 %v5591
  %v5815 = vunpack.c.h.b16 %v5591
  %v5816 = vunpack.c.l.b16 %v5592
  %v5817 = vunpack.c.h.b16 %v5592
  %v5818 = vunpack.c.l.b16 %v5593
  %v5819 = vunpack.c.h.b16 %v5593
  %v5820 = vunpack.c.l.b16 %v5594
  %v5821 = vunpack.c.h.b16 %v5594
  %v5822 = vunpack.c.l.b16 %v5595
  %v5823 = vunpack.c.h.b16 %v5595
  %v5824 = vunpack.c.l.b16 %v5596
  %v5825 = vunpack.c.h.b16 %v5596
  %v5826 = vunpack.c.l.b16 %v5597
  %v5827 = vunpack.c.h.b16 %v5597
  %v5828 = vunpack.c.l.b16 %v5598
  %v5829 = vunpack.c.h.b16 %v5598
  %v5830 = vunpack.c.l.b16 %v5599
  %v5831 = vunpack.c.h.b16 %v5599
  %v5832 = vunpack.c.l.b16 %v5600
  %v5833 = vunpack.c.h.b16 %v5600
  %v5834 = vunpack.c.l.b16 %v5601
  %v5835 = vunpack.c.h.b16 %v5601
  %v5836 = vunpack.c.l.b16 %v5602
  %v5837 = vunpack.c.h.b16 %v5602
  %v5838 = vunpack.c.l.b16 %v5603
  %v5839 = vunpack.c.h.b16 %v5603
  %v5840 = vunpack.c.l.b16 %v5604
  %v5841 = vunpack.c.h.b16 %v5604
  %v5842 = vunpack.c.l.b16 %v5605
  %v5843 = vunpack.c.h.b16 %v5605
  %v5844 = vunpack.c.l.b16 %v5606
  %v5845 = vunpack.c.h.b16 %v5606
  %v5846 = vunpack.c.l.b16 %v5607
  %v5847 = vunpack.c.h.b16 %v5607
  %v5848 = vpack.c.b16 %v5690, %v5688
  %v5849 = vpack.c.b16 %v5691, %v5689
  %v5850 = vpack.c.b16 %v5694, %v5692
  %v5851 = vpack.c.b16 %v5695, %v5693
  %v5852 = vpack.c.b16 %v5698, %v5696
  %v5853 = vpack.c.b16 %v5699, %v5697
  %v5854 = vpack.c.b16 %v5702, %v5700
  %v5855 = vpack.c.b16 %v5703, %v5701
  %v5856 = vpack.c.b16 %v5706, %v5704
  %v5857 = vpack.c.b16 %v5707, %v5705
  %v5858 = vpack.c.b16 %v5710, %v5708
  %v5859 = vpack.c.b16 %v5711, %v5709
  %v5860 = vpack.c.b16 %v5714, %v5712
  %v5861 = vpack.c.b16 %v5715, %v5713
  %v5862 = vpack.c.b16 %v5718, %v5716
  %v5863 = vpack.c.b16 %v5719, %v5717
  %v5864 = vpack.c.b16 %v5722, %v5720
  %v5865 = vpack.c.b16 %v5723, %v5721
  %v5866 = vpack.c.b16 %v5726, %v5724
  %v5867 = vpack.c.b16 %v5727, %v5725
  %v5868 = vpack.c.b16 %v5730, %v5728
  %v5869 = vpack.c.b16 %v5731, %v5729
  %v5870 = vpack.c.b16 %v5734, %v5732
  %v5871 = vpack.c.b16 %v5735, %v5733
  %v5872 = vpack.c.b16 %v5738, %v5736
  %v5873 = vpack.c.b16 %v5739, %v5737
  %v5874 = vpack.c.b16 %v5742, %v5740
  %v5875 = vpack.c.b16 %v5743, %v5741
  %v5876 = vpack.c.b16 %v5746, %v5744
  %v5877 = vpack.c.b16 %v5747, %v5745
  %v5878 = vpack.c.b16 %v5750, %v5748
  %v5879 = vpack.c.b16 %v5751, %v5749
  %v5880 = vpack.c.b16 %v5754, %v5752
  %v5881 = vpack.c.b16 %v5755, %v5753
  %v5882 = vpack.c.b16 %v5758, %v5756
  %v5883 = vpack.c.b16 %v5759, %v5757
  %v5884 = vpack.c.b16 %v5762, %v5760
  %v5885 = vpack.c.b16 %v5763, %v5761
  %v5886 = vpack.c.b16 %v5766, %v5764
  %v5887 = vpack.c.b16 %v5767, %v5765
  %v5888 = vpack.c.b16 %v5770, %v5768
  %v5889 = vpack.c.b16 %v5771, %v5769
  %v5890 = vpack.c.b16 %v5774, %v5772
  %v5891 = vpack.c.b16 %v5775, %v5773
  %v5892 = vpack.c.b16 %v5778, %v5776
  %v5893 = vpack.c.b16 %v5779, %v5777
  %v5894 = vpack.c.b16 %v5782, %v5780
  %v5895 = vpack.c.b16 %v5783, %v5781
  %v5896 = vpack.c.b16 %v5786, %v5784
  %v5897 = vpack.c.b16 %v5787, %v5785
  %v5898 = vpack.c.b16 %v5790, %v5788
  %v5899 = vpack.c.b16 %v5791, %v5789
  %v5900 = vpack.c.b16 %v5794, %v5792
  %v5901 = vpack.c.b16 %v5795, %v5793
  %v5902 = vpack.c.b16 %v5798, %v5796
  %v5903 = vpack.c.b16 %v5799, %v5797
  %v5904 = vpack.c.b16 %v5802, %v5800
  %v5905 = vpack.c.b16 %v5803, %v5801
  %v5906 = vpack.c.b16 %v5806, %v5804
  %v5907 = vpack.c.b16 %v5807, %v5805
  %v5908 = vpack.c.b16 %v5810, %v5808
  %v5909 = vpack.c.b16 %v5811, %v5809
  %v5910 = vpack.c.b16 %v5814, %v5812
  %v5911 = vpack.c.b16 %v5815, %v5813
  %v5912 = vpack.c.b16 %v5818, %v5816
  %v5913 = vpack.c.b16 %v5819, %v5817
  %v5914 = vpack.c.b16 %v5822, %v5820
  %v5915 = vpack.c.b16 %v5823, %v5821
  %v5916 = vpack.c.b16 %v5826, %v5824
  %v5917 = vpack.c.b16 %v5827, %v5825
  %v5918 = vpack.c.b16 %v5830, %v5828
  %v5919 = vpack.c.b16 %v5831, %v5829
  %v5920 = vpack.c.b16 %v5834, %v5832
  %v5921 = vpack.c.b16 %v5835, %v5833
  %v5922 = vpack.c.b16 %v5838, %v5836
  %v5923 = vpack.c.b16 %v5839, %v5837
  %v5924 = vpack.c.b16 %v5842, %v5840
  %v5925 = vpack.c.b16 %v5843, %v5841
  %v5926 = vpack.c.b16 %v5846, %v5844
  %v5927 = vpack.c.b16 %v5847, %v5845
  %6008 = vmatpush.bf16.msra.mxu0 %v5862
  %6009 = vmatpush.bf16.msra.mxu0 %v5860
  %6010 = vmatpush.bf16.msra.mxu0 %v5858
  %6011 = vmatpush.bf16.msra.mxu0 %v5856
  %6012 = vmatpush.bf16.msra.mxu0 %v5854
  %6013 = vmatpush.bf16.msra.mxu0 %v5852
  %6014 = vmatpush.bf16.msra.mxu0 %v5850
  %6015 = vmatpush.bf16.msra.mxu0 %v5848
  %6016 = vmatmul.bf16.gmra.mxu0 %v5523
  %v6017 = vpop.f32.mrf.mxu0
  %v6018 = vadd.f32 0.0, %v6017
  %v6019 = vpop.f32.mrf.mxu0
  %6020 = vdwg.mxu0
  %6021 = vmatpush.bf16.msra.mxu0 %v5878
  %6022 = vmatpush.bf16.msra.mxu0 %v5876
  %6023 = vmatpush.bf16.msra.mxu0 %v5874
  %6024 = vmatpush.bf16.msra.mxu0 %v5872
  %6025 = vmatpush.bf16.msra.mxu0 %v5870
  %6026 = vmatpush.bf16.msra.mxu0 %v5868
  %6027 = vmatpush.bf16.msra.mxu0 %v5866
  %6028 = vmatpush.bf16.msra.mxu0 %v5864
  %6029 = vmatmul.bf16.gmra.mxu0 %v5524
  %v6030 = vpop.f32.mrf.mxu0
  %v6031 = vadd.f32 %v6018, %v6030
  %v6032 = vpop.f32.mrf.mxu0
  %6033 = vdwg.mxu0
  %6034 = vmatpush.bf16.msra.mxu0 %v5894
  %6035 = vmatpush.bf16.msra.mxu0 %v5892
  %6036 = vmatpush.bf16.msra.mxu0 %v5890
  %6037 = vmatpush.bf16.msra.mxu0 %v5888
  %6038 = vmatpush.bf16.msra.mxu0 %v5886
  %6039 = vmatpush.bf16.msra.mxu0 %v5884
  %6040 = vmatpush.bf16.msra.mxu0 %v5882
  %6041 = vmatpush.bf16.msra.mxu0 %v5880
  %6042 = vmatmul.bf16.gmra.mxu0 %v5525
  %v6043 = vpop.f32.mrf.mxu0
  %v6044 = vadd.f32 %v6031, %v6043
  %v6045 = vpop.f32.mrf.mxu0
  %6046 = vdwg.mxu0
  %6047 = vmatpush.bf16.msra.mxu0 %v5910
  %6048 = vmatpush.bf16.msra.mxu0 %v5908
  %6049 = vmatpush.bf16.msra.mxu0 %v5906
  %6050 = vmatpush.bf16.msra.mxu0 %v5904
  %6051 = vmatpush.bf16.msra.mxu0 %v5902
  %6052 = vmatpush.bf16.msra.mxu0 %v5900
  %6053 = vmatpush.bf16.msra.mxu0 %v5898
  %6054 = vmatpush.bf16.msra.mxu0 %v5896
  %6055 = vmatmul.bf16.gmra.mxu0 %v5526
  %v6056 = vpop.f32.mrf.mxu0
  %v6057 = vadd.f32 %v6044, %v6056
  %v6058 = vpop.f32.mrf.mxu0
  %6059 = vdwg.mxu0
  %6060 = vmatpush.bf16.msra.mxu0 %v5926
  %6061 = vmatpush.bf16.msra.mxu0 %v5924
  %6062 = vmatpush.bf16.msra.mxu0 %v5922
  %6063 = vmatpush.bf16.msra.mxu0 %v5920
  %6064 = vmatpush.bf16.msra.mxu0 %v5918
  %6065 = vmatpush.bf16.msra.mxu0 %v5916
  %6066 = vmatpush.bf16.msra.mxu0 %v5914
  %6067 = vmatpush.bf16.msra.mxu0 %v5912
  %6068 = vmatmul.bf16.gmra.mxu0 %v5527
  %v6069 = vpop.f32.mrf.mxu0
  %v6070 = vadd.f32 %v6057, %v6069
  %v6071 = vpop.f32.mrf.mxu0
  %6072 = vdwg.mxu0
  %6073 = vmatpush.bf16.msra.mxu0 %v5863
  %6074 = vmatpush.bf16.msra.mxu0 %v5861
  %6075 = vmatpush.bf16.msra.mxu0 %v5859
  %6076 = vmatpush.bf16.msra.mxu0 %v5857
  %6077 = vmatpush.bf16.msra.mxu0 %v5855
  %6078 = vmatpush.bf16.msra.mxu0 %v5853
  %6079 = vmatpush.bf16.msra.mxu0 %v5851
  %6080 = vmatpush.bf16.msra.mxu0 %v5849
  %6081 = vmatmul.bf16.gmra.mxu0 %v5523
  %v6082 = vpop.f32.mrf.mxu0
  %v6083 = vadd.f32 0.0, %v6082
  %v6084 = vpop.f32.mrf.mxu0
  %6085 = vdwg.mxu0
  %6086 = vmatpush.bf16.msra.mxu0 %v5879
  %6087 = vmatpush.bf16.msra.mxu0 %v5877
  %6088 = vmatpush.bf16.msra.mxu0 %v5875
  %6089 = vmatpush.bf16.msra.mxu0 %v5873
  %6090 = vmatpush.bf16.msra.mxu0 %v5871
  %6091 = vmatpush.bf16.msra.mxu0 %v5869
  %6092 = vmatpush.bf16.msra.mxu0 %v5867
  %6093 = vmatpush.bf16.msra.mxu0 %v5865
  %6094 = vmatmul.bf16.gmra.mxu0 %v5524
  %v6095 = vpop.f32.mrf.mxu0
  %v6096 = vadd.f32 %v6083, %v6095
  %v6097 = vpop.f32.mrf.mxu0
  %6098 = vdwg.mxu0
  %6099 = vmatpush.bf16.msra.mxu0 %v5895
  %6100 = vmatpush.bf16.msra.mxu0 %v5893
  %6101 = vmatpush.bf16.msra.mxu0 %v5891
  %6102 = vmatpush.bf16.msra.mxu0 %v5889
  %6103 = vmatpush.bf16.msra.mxu0 %v5887
  %6104 = vmatpush.bf16.msra.mxu0 %v5885
  %6105 = vmatpush.bf16.msra.mxu0 %v5883
  %6106 = vmatpush.bf16.msra.mxu0 %v5881
  %6107 = vmatmul.bf16.gmra.mxu0 %v5525
  %v6108 = vpop.f32.mrf.mxu0
  %v6109 = vadd.f32 %v6096, %v6108
  %v6110 = vpop.f32.mrf.mxu0
  %6111 = vdwg.mxu0
  %6112 = vmatpush.bf16.msra.mxu0 %v5911
  %6113 = vmatpush.bf16.msra.mxu0 %v5909
  %6114 = vmatpush.bf16.msra.mxu0 %v5907
  %6115 = vmatpush.bf16.msra.mxu0 %v5905
  %6116 = vmatpush.bf16.msra.mxu0 %v5903
  %6117 = vmatpush.bf16.msra.mxu0 %v5901
  %6118 = vmatpush.bf16.msra.mxu0 %v5899
  %6119 = vmatpush.bf16.msra.mxu0 %v5897
  %6120 = vmatmul.bf16.gmra.mxu0 %v5526
  %v6121 = vpop.f32.mrf.mxu0
  %v6122 = vadd.f32 %v6109, %v6121
  %v6123 = vpop.f32.mrf.mxu0
  %6124 = vdwg.mxu0
  %6125 = vmatpush.bf16.msra.mxu0 %v5927
  %6126 = vmatpush.bf16.msra.mxu0 %v5925
  %6127 = vmatpush.bf16.msra.mxu0 %v5923
  %6128 = vmatpush.bf16.msra.mxu0 %v5921
  %6129 = vmatpush.bf16.msra.mxu0 %v5919
  %6130 = vmatpush.bf16.msra.mxu0 %v5917
  %6131 = vmatpush.bf16.msra.mxu0 %v5915
  %6132 = vmatpush.bf16.msra.mxu0 %v5913
  %6133 = vmatmul.bf16.gmra.mxu0 %v5527
  %v6134 = vpop.f32.mrf.mxu0
  %v6135 = vadd.f32 %v6122, %v6134
  %v6136 = vpop.f32.mrf.mxu0
  %6137 = vdwg.mxu0
  %v6138 = vadd.f32 %v5438, %v6070
  %v6139 = vadd.f32 %v5503, %v6135
  %v6140 = vld [vmem:[#allocation5 + $0x1e] sm:$0xff]
  %v6141 = vld [vmem:[#allocation5 + $0x26] sm:$0x3]
  %6144 = vst [vmem:[#allocation1] ss:$4 sm:$0xff] %v6140
  %s6145 = scalar_lea.vmem [#allocation1], 32
  %6146 = vst [vmem:[%s6145] ss:$4 sm:$0xff] %v6141
  %v6147 = vld.sshfl [vmem:[#allocation1] sm:$0xff pattern:$0x73625140]
  %v6148 = vld.sshfl [vmem:[#allocation1 + $0x8] sm:$0xff pattern:$0x73625140]
  %v6149 = vld.sshfl [vmem:[#allocation1 + $0x10] sm:$0xff pattern:$0x73625140]
  %v6150 = vld.sshfl [vmem:[#allocation1 + $0x18] sm:$0xff pattern:$0x73625140]
  %v6151 = vld.sshfl [vmem:[#allocation1 + $0x20] sm:$0xff pattern:$0x73625140]
  %v6157 = vpack.c.bf16 %v6147, %v6147
  %v6158 = vpack.c.bf16 %v6148, %v6148
  %v6159 = vpack.c.bf16 %v6149, %v6149
  %v6160 = vpack.c.bf16 %v6150, %v6150
  %v6161 = vpack.c.bf16 %v6151, %v6151
  %v6162 = vld [vmem:[%s5 + $0x780] sm:$0xff]
  %v6163 = vld [vmem:[%s5 + $0x788] sm:$0xff]
  %v6164 = vld [vmem:[%s5 + $0x790] sm:$0xff]
  %v6165 = vld [vmem:[%s5 + $0x798] sm:$0xff]
  %v6166 = vld [vmem:[%s5 + $0x7a0] sm:$0xff]
  %v6167 = vld [vmem:[%s5 + $0x7a8] sm:$0xff]
  %v6168 = vld [vmem:[%s5 + $0x7b0] sm:$0xff]
  %v6169 = vld [vmem:[%s5 + $0x7b8] sm:$0xff]
  %v6170 = vld [vmem:[%s5 + $0x7c0] sm:$0xff]
  %v6171 = vld [vmem:[%s5 + $0x7c8] sm:$0xff]
  %v6172 = vld [vmem:[%s5 + $0x7d0] sm:$0xff]
  %v6173 = vld [vmem:[%s5 + $0x7d8] sm:$0xff]
  %v6174 = vld [vmem:[%s5 + $0x7e0] sm:$0xff]
  %v6175 = vld [vmem:[%s5 + $0x7e8] sm:$0xff]
  %v6176 = vld [vmem:[%s5 + $0x7f0] sm:$0xff]
  %v6177 = vld [vmem:[%s5 + $0x7f8] sm:$0xff]
  %v6178 = vld [vmem:[%s5 + $0x800] sm:$0xff]
  %v6179 = vld [vmem:[%s5 + $0x808] sm:$0xff]
  %v6180 = vld [vmem:[%s5 + $0x810] sm:$0xff]
  %v6181 = vld [vmem:[%s5 + $0x818] sm:$0xff]
  %v6182 = vld [vmem:[%s5 + $0x820] sm:$0xff]
  %v6183 = vld [vmem:[%s5 + $0x828] sm:$0xff]
  %v6184 = vld [vmem:[%s5 + $0x830] sm:$0xff]
  %v6185 = vld [vmem:[%s5 + $0x838] sm:$0xff]
  %v6186 = vld [vmem:[%s5 + $0x840] sm:$0xff]
  %v6187 = vld [vmem:[%s5 + $0x848] sm:$0xff]
  %v6188 = vld [vmem:[%s5 + $0x850] sm:$0xff]
  %v6189 = vld [vmem:[%s5 + $0x858] sm:$0xff]
  %v6190 = vld [vmem:[%s5 + $0x860] sm:$0xff]
  %v6191 = vld [vmem:[%s5 + $0x868] sm:$0xff]
  %v6192 = vld [vmem:[%s5 + $0x870] sm:$0xff]
  %v6193 = vld [vmem:[%s5 + $0x878] sm:$0xff]
  %v6194 = vld [vmem:[%s5 + $0x880] sm:$0xff]
  %v6195 = vld [vmem:[%s5 + $0x888] sm:$0xff]
  %v6196 = vld [vmem:[%s5 + $0x890] sm:$0xff]
  %v6197 = vld [vmem:[%s5 + $0x898] sm:$0xff]
  %v6198 = vld [vmem:[%s5 + $0x8a0] sm:$0xff]
  %v6199 = vld [vmem:[%s5 + $0x8a8] sm:$0xff]
  %v6200 = vld [vmem:[%s5 + $0x8b0] sm:$0xff]
  %v6201 = vld [vmem:[%s5 + $0x8b8] sm:$0xff]
  %v6202 = vld [vmem:[%s5 + $0x8c0] sm:$0xff]
  %v6203 = vld [vmem:[%s5 + $0x8c8] sm:$0xff]
  %v6204 = vld [vmem:[%s5 + $0x8d0] sm:$0xff]
  %v6205 = vld [vmem:[%s5 + $0x8d8] sm:$0xff]
  %v6206 = vld [vmem:[%s5 + $0x8e0] sm:$0xff]
  %v6207 = vld [vmem:[%s5 + $0x8e8] sm:$0xff]
  %v6208 = vld [vmem:[%s5 + $0x8f0] sm:$0xff]
  %v6209 = vld [vmem:[%s5 + $0x8f8] sm:$0xff]
  %v6210 = vld [vmem:[%s5 + $0x900] sm:$0xff]
  %v6211 = vld [vmem:[%s5 + $0x908] sm:$0xff]
  %v6212 = vld [vmem:[%s5 + $0x910] sm:$0xff]
  %v6213 = vld [vmem:[%s5 + $0x918] sm:$0xff]
  %v6214 = vld [vmem:[%s5 + $0x920] sm:$0xff]
  %v6215 = vld [vmem:[%s5 + $0x928] sm:$0xff]
  %v6216 = vld [vmem:[%s5 + $0x930] sm:$0xff]
  %v6217 = vld [vmem:[%s5 + $0x938] sm:$0xff]
  %v6218 = vld [vmem:[%s5 + $0x940] sm:$0xff]
  %v6219 = vld [vmem:[%s5 + $0x948] sm:$0xff]
  %v6220 = vld [vmem:[%s5 + $0x950] sm:$0xff]
  %v6221 = vld [vmem:[%s5 + $0x958] sm:$0xff]
  %v6222 = vld [vmem:[%s5 + $0x960] sm:$0xff]
  %v6223 = vld [vmem:[%s5 + $0x968] sm:$0xff]
  %v6224 = vld [vmem:[%s5 + $0x970] sm:$0xff]
  %v6225 = vld [vmem:[%s5 + $0x978] sm:$0xff]
  %v6226 = vld [vmem:[%s5 + $0x980] sm:$0xff]
  %v6227 = vld [vmem:[%s5 + $0x988] sm:$0xff]
  %v6228 = vld [vmem:[%s5 + $0x990] sm:$0xff]
  %v6229 = vld [vmem:[%s5 + $0x998] sm:$0xff]
  %v6230 = vld [vmem:[%s5 + $0x9a0] sm:$0xff]
  %v6231 = vld [vmem:[%s5 + $0x9a8] sm:$0xff]
  %v6232 = vld [vmem:[%s5 + $0x9b0] sm:$0xff]
  %v6233 = vld [vmem:[%s5 + $0x9b8] sm:$0xff]
  %v6234 = vld [vmem:[%s5 + $0x9c0] sm:$0xff]
  %v6235 = vld [vmem:[%s5 + $0x9c8] sm:$0xff]
  %v6236 = vld [vmem:[%s5 + $0x9d0] sm:$0xff]
  %v6237 = vld [vmem:[%s5 + $0x9d8] sm:$0xff]
  %v6238 = vld [vmem:[%s5 + $0x9e0] sm:$0xff]
  %v6239 = vld [vmem:[%s5 + $0x9e8] sm:$0xff]
  %v6240 = vld [vmem:[%s5 + $0x9f0] sm:$0xff]
  %v6241 = vld [vmem:[%s5 + $0x9f8] sm:$0xff]
  %v6322 = vunpack.c.l.b16 %v6162
  %v6323 = vunpack.c.h.b16 %v6162
  %v6324 = vunpack.c.l.b16 %v6163
  %v6325 = vunpack.c.h.b16 %v6163
  %v6326 = vunpack.c.l.b16 %v6164
  %v6327 = vunpack.c.h.b16 %v6164
  %v6328 = vunpack.c.l.b16 %v6165
  %v6329 = vunpack.c.h.b16 %v6165
  %v6330 = vunpack.c.l.b16 %v6166
  %v6331 = vunpack.c.h.b16 %v6166
  %v6332 = vunpack.c.l.b16 %v6167
  %v6333 = vunpack.c.h.b16 %v6167
  %v6334 = vunpack.c.l.b16 %v6168
  %v6335 = vunpack.c.h.b16 %v6168
  %v6336 = vunpack.c.l.b16 %v6169
  %v6337 = vunpack.c.h.b16 %v6169
  %v6338 = vunpack.c.l.b16 %v6170
  %v6339 = vunpack.c.h.b16 %v6170
  %v6340 = vunpack.c.l.b16 %v6171
  %v6341 = vunpack.c.h.b16 %v6171
  %v6342 = vunpack.c.l.b16 %v6172
  %v6343 = vunpack.c.h.b16 %v6172
  %v6344 = vunpack.c.l.b16 %v6173
  %v6345 = vunpack.c.h.b16 %v6173
  %v6346 = vunpack.c.l.b16 %v6174
  %v6347 = vunpack.c.h.b16 %v6174
  %v6348 = vunpack.c.l.b16 %v6175
  %v6349 = vunpack.c.h.b16 %v6175
  %v6350 = vunpack.c.l.b16 %v6176
  %v6351 = vunpack.c.h.b16 %v6176
  %v6352 = vunpack.c.l.b16 %v6177
  %v6353 = vunpack.c.h.b16 %v6177
  %v6354 = vunpack.c.l.b16 %v6178
  %v6355 = vunpack.c.h.b16 %v6178
  %v6356 = vunpack.c.l.b16 %v6179
  %v6357 = vunpack.c.h.b16 %v6179
  %v6358 = vunpack.c.l.b16 %v6180
  %v6359 = vunpack.c.h.b16 %v6180
  %v6360 = vunpack.c.l.b16 %v6181
  %v6361 = vunpack.c.h.b16 %v6181
  %v6362 = vunpack.c.l.b16 %v6182
  %v6363 = vunpack.c.h.b16 %v6182
  %v6364 = vunpack.c.l.b16 %v6183
  %v6365 = vunpack.c.h.b16 %v6183
  %v6366 = vunpack.c.l.b16 %v6184
  %v6367 = vunpack.c.h.b16 %v6184
  %v6368 = vunpack.c.l.b16 %v6185
  %v6369 = vunpack.c.h.b16 %v6185
  %v6370 = vunpack.c.l.b16 %v6186
  %v6371 = vunpack.c.h.b16 %v6186
  %v6372 = vunpack.c.l.b16 %v6187
  %v6373 = vunpack.c.h.b16 %v6187
  %v6374 = vunpack.c.l.b16 %v6188
  %v6375 = vunpack.c.h.b16 %v6188
  %v6376 = vunpack.c.l.b16 %v6189
  %v6377 = vunpack.c.h.b16 %v6189
  %v6378 = vunpack.c.l.b16 %v6190
  %v6379 = vunpack.c.h.b16 %v6190
  %v6380 = vunpack.c.l.b16 %v6191
  %v6381 = vunpack.c.h.b16 %v6191
  %v6382 = vunpack.c.l.b16 %v6192
  %v6383 = vunpack.c.h.b16 %v6192
  %v6384 = vunpack.c.l.b16 %v6193
  %v6385 = vunpack.c.h.b16 %v6193
  %v6386 = vunpack.c.l.b16 %v6194
  %v6387 = vunpack.c.h.b16 %v6194
  %v6388 = vunpack.c.l.b16 %v6195
  %v6389 = vunpack.c.h.b16 %v6195
  %v6390 = vunpack.c.l.b16 %v6196
  %v6391 = vunpack.c.h.b16 %v6196
  %v6392 = vunpack.c.l.b16 %v6197
  %v6393 = vunpack.c.h.b16 %v6197
  %v6394 = vunpack.c.l.b16 %v6198
  %v6395 = vunpack.c.h.b16 %v6198
  %v6396 = vunpack.c.l.b16 %v6199
  %v6397 = vunpack.c.h.b16 %v6199
  %v6398 = vunpack.c.l.b16 %v6200
  %v6399 = vunpack.c.h.b16 %v6200
  %v6400 = vunpack.c.l.b16 %v6201
  %v6401 = vunpack.c.h.b16 %v6201
  %v6402 = vunpack.c.l.b16 %v6202
  %v6403 = vunpack.c.h.b16 %v6202
  %v6404 = vunpack.c.l.b16 %v6203
  %v6405 = vunpack.c.h.b16 %v6203
  %v6406 = vunpack.c.l.b16 %v6204
  %v6407 = vunpack.c.h.b16 %v6204
  %v6408 = vunpack.c.l.b16 %v6205
  %v6409 = vunpack.c.h.b16 %v6205
  %v6410 = vunpack.c.l.b16 %v6206
  %v6411 = vunpack.c.h.b16 %v6206
  %v6412 = vunpack.c.l.b16 %v6207
  %v6413 = vunpack.c.h.b16 %v6207
  %v6414 = vunpack.c.l.b16 %v6208
  %v6415 = vunpack.c.h.b16 %v6208
  %v6416 = vunpack.c.l.b16 %v6209
  %v6417 = vunpack.c.h.b16 %v6209
  %v6418 = vunpack.c.l.b16 %v6210
  %v6419 = vunpack.c.h.b16 %v6210
  %v6420 = vunpack.c.l.b16 %v6211
  %v6421 = vunpack.c.h.b16 %v6211
  %v6422 = vunpack.c.l.b16 %v6212
  %v6423 = vunpack.c.h.b16 %v6212
  %v6424 = vunpack.c.l.b16 %v6213
  %v6425 = vunpack.c.h.b16 %v6213
  %v6426 = vunpack.c.l.b16 %v6214
  %v6427 = vunpack.c.h.b16 %v6214
  %v6428 = vunpack.c.l.b16 %v6215
  %v6429 = vunpack.c.h.b16 %v6215
  %v6430 = vunpack.c.l.b16 %v6216
  %v6431 = vunpack.c.h.b16 %v6216
  %v6432 = vunpack.c.l.b16 %v6217
  %v6433 = vunpack.c.h.b16 %v6217
  %v6434 = vunpack.c.l.b16 %v6218
  %v6435 = vunpack.c.h.b16 %v6218
  %v6436 = vunpack.c.l.b16 %v6219
  %v6437 = vunpack.c.h.b16 %v6219
  %v6438 = vunpack.c.l.b16 %v6220
  %v6439 = vunpack.c.h.b16 %v6220
  %v6440 = vunpack.c.l.b16 %v6221
  %v6441 = vunpack.c.h.b16 %v6221
  %v6442 = vunpack.c.l.b16 %v6222
  %v6443 = vunpack.c.h.b16 %v6222
  %v6444 = vunpack.c.l.b16 %v6223
  %v6445 = vunpack.c.h.b16 %v6223
  %v6446 = vunpack.c.l.b16 %v6224
  %v6447 = vunpack.c.h.b16 %v6224
  %v6448 = vunpack.c.l.b16 %v6225
  %v6449 = vunpack.c.h.b16 %v6225
  %v6450 = vunpack.c.l.b16 %v6226
  %v6451 = vunpack.c.h.b16 %v6226
  %v6452 = vunpack.c.l.b16 %v6227
  %v6453 = vunpack.c.h.b16 %v6227
  %v6454 = vunpack.c.l.b16 %v6228
  %v6455 = vunpack.c.h.b16 %v6228
  %v6456 = vunpack.c.l.b16 %v6229
  %v6457 = vunpack.c.h.b16 %v6229
  %v6458 = vunpack.c.l.b16 %v6230
  %v6459 = vunpack.c.h.b16 %v6230
  %v6460 = vunpack.c.l.b16 %v6231
  %v6461 = vunpack.c.h.b16 %v6231
  %v6462 = vunpack.c.l.b16 %v6232
  %v6463 = vunpack.c.h.b16 %v6232
  %v6464 = vunpack.c.l.b16 %v6233
  %v6465 = vunpack.c.h.b16 %v6233
  %v6466 = vunpack.c.l.b16 %v6234
  %v6467 = vunpack.c.h.b16 %v6234
  %v6468 = vunpack.c.l.b16 %v6235
  %v6469 = vunpack.c.h.b16 %v6235
  %v6470 = vunpack.c.l.b16 %v6236
  %v6471 = vunpack.c.h.b16 %v6236
  %v6472 = vunpack.c.l.b16 %v6237
  %v6473 = vunpack.c.h.b16 %v6237
  %v6474 = vunpack.c.l.b16 %v6238
  %v6475 = vunpack.c.h.b16 %v6238
  %v6476 = vunpack.c.l.b16 %v6239
  %v6477 = vunpack.c.h.b16 %v6239
  %v6478 = vunpack.c.l.b16 %v6240
  %v6479 = vunpack.c.h.b16 %v6240
  %v6480 = vunpack.c.l.b16 %v6241
  %v6481 = vunpack.c.h.b16 %v6241
  %v6482 = vpack.c.b16 %v6324, %v6322
  %v6483 = vpack.c.b16 %v6325, %v6323
  %v6484 = vpack.c.b16 %v6328, %v6326
  %v6485 = vpack.c.b16 %v6329, %v6327
  %v6486 = vpack.c.b16 %v6332, %v6330
  %v6487 = vpack.c.b16 %v6333, %v6331
  %v6488 = vpack.c.b16 %v6336, %v6334
  %v6489 = vpack.c.b16 %v6337, %v6335
  %v6490 = vpack.c.b16 %v6340, %v6338
  %v6491 = vpack.c.b16 %v6341, %v6339
  %v6492 = vpack.c.b16 %v6344, %v6342
  %v6493 = vpack.c.b16 %v6345, %v6343
  %v6494 = vpack.c.b16 %v6348, %v6346
  %v6495 = vpack.c.b16 %v6349, %v6347
  %v6496 = vpack.c.b16 %v6352, %v6350
  %v6497 = vpack.c.b16 %v6353, %v6351
  %v6498 = vpack.c.b16 %v6356, %v6354
  %v6499 = vpack.c.b16 %v6357, %v6355
  %v6500 = vpack.c.b16 %v6360, %v6358
  %v6501 = vpack.c.b16 %v6361, %v6359
  %v6502 = vpack.c.b16 %v6364, %v6362
  %v6503 = vpack.c.b16 %v6365, %v6363
  %v6504 = vpack.c.b16 %v6368, %v6366
  %v6505 = vpack.c.b16 %v6369, %v6367
  %v6506 = vpack.c.b16 %v6372, %v6370
  %v6507 = vpack.c.b16 %v6373, %v6371
  %v6508 = vpack.c.b16 %v6376, %v6374
  %v6509 = vpack.c.b16 %v6377, %v6375
  %v6510 = vpack.c.b16 %v6380, %v6378
  %v6511 = vpack.c.b16 %v6381, %v6379
  %v6512 = vpack.c.b16 %v6384, %v6382
  %v6513 = vpack.c.b16 %v6385, %v6383
  %v6514 = vpack.c.b16 %v6388, %v6386
  %v6515 = vpack.c.b16 %v6389, %v6387
  %v6516 = vpack.c.b16 %v6392, %v6390
  %v6517 = vpack.c.b16 %v6393, %v6391
  %v6518 = vpack.c.b16 %v6396, %v6394
  %v6519 = vpack.c.b16 %v6397, %v6395
  %v6520 = vpack.c.b16 %v6400, %v6398
  %v6521 = vpack.c.b16 %v6401, %v6399
  %v6522 = vpack.c.b16 %v6404, %v6402
  %v6523 = vpack.c.b16 %v6405, %v6403
  %v6524 = vpack.c.b16 %v6408, %v6406
  %v6525 = vpack.c.b16 %v6409, %v6407
  %v6526 = vpack.c.b16 %v6412, %v6410
  %v6527 = vpack.c.b16 %v6413, %v6411
  %v6528 = vpack.c.b16 %v6416, %v6414
  %v6529 = vpack.c.b16 %v6417, %v6415
  %v6530 = vpack.c.b16 %v6420, %v6418
  %v6531 = vpack.c.b16 %v6421, %v6419
  %v6532 = vpack.c.b16 %v6424, %v6422
  %v6533 = vpack.c.b16 %v6425, %v6423
  %v6534 = vpack.c.b16 %v6428, %v6426
  %v6535 = vpack.c.b16 %v6429, %v6427
  %v6536 = vpack.c.b16 %v6432, %v6430
  %v6537 = vpack.c.b16 %v6433, %v6431
  %v6538 = vpack.c.b16 %v6436, %v6434
  %v6539 = vpack.c.b16 %v6437, %v6435
  %v6540 = vpack.c.b16 %v6440, %v6438
  %v6541 = vpack.c.b16 %v6441, %v6439
  %v6542 = vpack.c.b16 %v6444, %v6442
  %v6543 = vpack.c.b16 %v6445, %v6443
  %v6544 = vpack.c.b16 %v6448, %v6446
  %v6545 = vpack.c.b16 %v6449, %v6447
  %v6546 = vpack.c.b16 %v6452, %v6450
  %v6547 = vpack.c.b16 %v6453, %v6451
  %v6548 = vpack.c.b16 %v6456, %v6454
  %v6549 = vpack.c.b16 %v6457, %v6455
  %v6550 = vpack.c.b16 %v6460, %v6458
  %v6551 = vpack.c.b16 %v6461, %v6459
  %v6552 = vpack.c.b16 %v6464, %v6462
  %v6553 = vpack.c.b16 %v6465, %v6463
  %v6554 = vpack.c.b16 %v6468, %v6466
  %v6555 = vpack.c.b16 %v6469, %v6467
  %v6556 = vpack.c.b16 %v6472, %v6470
  %v6557 = vpack.c.b16 %v6473, %v6471
  %v6558 = vpack.c.b16 %v6476, %v6474
  %v6559 = vpack.c.b16 %v6477, %v6475
  %v6560 = vpack.c.b16 %v6480, %v6478
  %v6561 = vpack.c.b16 %v6481, %v6479
  %6642 = vmatpush.bf16.msra.mxu0 %v6496
  %6643 = vmatpush.bf16.msra.mxu0 %v6494
  %6644 = vmatpush.bf16.msra.mxu0 %v6492
  %6645 = vmatpush.bf16.msra.mxu0 %v6490
  %6646 = vmatpush.bf16.msra.mxu0 %v6488
  %6647 = vmatpush.bf16.msra.mxu0 %v6486
  %6648 = vmatpush.bf16.msra.mxu0 %v6484
  %6649 = vmatpush.bf16.msra.mxu0 %v6482
  %6650 = vmatmul.bf16.gmra.mxu0 %v6157
  %v6651 = vpop.f32.mrf.mxu0
  %v6652 = vadd.f32 0.0, %v6651
  %v6653 = vpop.f32.mrf.mxu0
  %6654 = vdwg.mxu0
  %6655 = vmatpush.bf16.msra.mxu0 %v6512
  %6656 = vmatpush.bf16.msra.mxu0 %v6510
  %6657 = vmatpush.bf16.msra.mxu0 %v6508
  %6658 = vmatpush.bf16.msra.mxu0 %v6506
  %6659 = vmatpush.bf16.msra.mxu0 %v6504
  %6660 = vmatpush.bf16.msra.mxu0 %v6502
  %6661 = vmatpush.bf16.msra.mxu0 %v6500
  %6662 = vmatpush.bf16.msra.mxu0 %v6498
  %6663 = vmatmul.bf16.gmra.mxu0 %v6158
  %v6664 = vpop.f32.mrf.mxu0
  %v6665 = vadd.f32 %v6652, %v6664
  %v6666 = vpop.f32.mrf.mxu0
  %6667 = vdwg.mxu0
  %6668 = vmatpush.bf16.msra.mxu0 %v6528
  %6669 = vmatpush.bf16.msra.mxu0 %v6526
  %6670 = vmatpush.bf16.msra.mxu0 %v6524
  %6671 = vmatpush.bf16.msra.mxu0 %v6522
  %6672 = vmatpush.bf16.msra.mxu0 %v6520
  %6673 = vmatpush.bf16.msra.mxu0 %v6518
  %6674 = vmatpush.bf16.msra.mxu0 %v6516
  %6675 = vmatpush.bf16.msra.mxu0 %v6514
  %6676 = vmatmul.bf16.gmra.mxu0 %v6159
  %v6677 = vpop.f32.mrf.mxu0
  %v6678 = vadd.f32 %v6665, %v6677
  %v6679 = vpop.f32.mrf.mxu0
  %6680 = vdwg.mxu0
  %6681 = vmatpush.bf16.msra.mxu0 %v6544
  %6682 = vmatpush.bf16.msra.mxu0 %v6542
  %6683 = vmatpush.bf16.msra.mxu0 %v6540
  %6684 = vmatpush.bf16.msra.mxu0 %v6538
  %6685 = vmatpush.bf16.msra.mxu0 %v6536
  %6686 = vmatpush.bf16.msra.mxu0 %v6534
  %6687 = vmatpush.bf16.msra.mxu0 %v6532
  %6688 = vmatpush.bf16.msra.mxu0 %v6530
  %6689 = vmatmul.bf16.gmra.mxu0 %v6160
  %v6690 = vpop.f32.mrf.mxu0
  %v6691 = vadd.f32 %v6678, %v6690
  %v6692 = vpop.f32.mrf.mxu0
  %6693 = vdwg.mxu0
  %6694 = vmatpush.bf16.msra.mxu0 %v6560
  %6695 = vmatpush.bf16.msra.mxu0 %v6558
  %6696 = vmatpush.bf16.msra.mxu0 %v6556
  %6697 = vmatpush.bf16.msra.mxu0 %v6554
  %6698 = vmatpush.bf16.msra.mxu0 %v6552
  %6699 = vmatpush.bf16.msra.mxu0 %v6550
  %6700 = vmatpush.bf16.msra.mxu0 %v6548
  %6701 = vmatpush.bf16.msra.mxu0 %v6546
  %6702 = vmatmul.bf16.gmra.mxu0 %v6161
  %v6703 = vpop.f32.mrf.mxu0
  %v6704 = vadd.f32 %v6691, %v6703
  %v6705 = vpop.f32.mrf.mxu0
  %6706 = vdwg.mxu0
  %6707 = vmatpush.bf16.msra.mxu0 %v6497
  %6708 = vmatpush.bf16.msra.mxu0 %v6495
  %6709 = vmatpush.bf16.msra.mxu0 %v6493
  %6710 = vmatpush.bf16.msra.mxu0 %v6491
  %6711 = vmatpush.bf16.msra.mxu0 %v6489
  %6712 = vmatpush.bf16.msra.mxu0 %v6487
  %6713 = vmatpush.bf16.msra.mxu0 %v6485
  %6714 = vmatpush.bf16.msra.mxu0 %v6483
  %6715 = vmatmul.bf16.gmra.mxu0 %v6157
  %v6716 = vpop.f32.mrf.mxu0
  %v6717 = vadd.f32 0.0, %v6716
  %v6718 = vpop.f32.mrf.mxu0
  %6719 = vdwg.mxu0
  %6720 = vmatpush.bf16.msra.mxu0 %v6513
  %6721 = vmatpush.bf16.msra.mxu0 %v6511
  %6722 = vmatpush.bf16.msra.mxu0 %v6509
  %6723 = vmatpush.bf16.msra.mxu0 %v6507
  %6724 = vmatpush.bf16.msra.mxu0 %v6505
  %6725 = vmatpush.bf16.msra.mxu0 %v6503
  %6726 = vmatpush.bf16.msra.mxu0 %v6501
  %6727 = vmatpush.bf16.msra.mxu0 %v6499
  %6728 = vmatmul.bf16.gmra.mxu0 %v6158
  %v6729 = vpop.f32.mrf.mxu0
  %v6730 = vadd.f32 %v6717, %v6729
  %v6731 = vpop.f32.mrf.mxu0
  %6732 = vdwg.mxu0
  %6733 = vmatpush.bf16.msra.mxu0 %v6529
  %6734 = vmatpush.bf16.msra.mxu0 %v6527
  %6735 = vmatpush.bf16.msra.mxu0 %v6525
  %6736 = vmatpush.bf16.msra.mxu0 %v6523
  %6737 = vmatpush.bf16.msra.mxu0 %v6521
  %6738 = vmatpush.bf16.msra.mxu0 %v6519
  %6739 = vmatpush.bf16.msra.mxu0 %v6517
  %6740 = vmatpush.bf16.msra.mxu0 %v6515
  %6741 = vmatmul.bf16.gmra.mxu0 %v6159
  %v6742 = vpop.f32.mrf.mxu0
  %v6743 = vadd.f32 %v6730, %v6742
  %v6744 = vpop.f32.mrf.mxu0
  %6745 = vdwg.mxu0
  %6746 = vmatpush.bf16.msra.mxu0 %v6545
  %6747 = vmatpush.bf16.msra.mxu0 %v6543
  %6748 = vmatpush.bf16.msra.mxu0 %v6541
  %6749 = vmatpush.bf16.msra.mxu0 %v6539
  %6750 = vmatpush.bf16.msra.mxu0 %v6537
  %6751 = vmatpush.bf16.msra.mxu0 %v6535
  %6752 = vmatpush.bf16.msra.mxu0 %v6533
  %6753 = vmatpush.bf16.msra.mxu0 %v6531
  %6754 = vmatmul.bf16.gmra.mxu0 %v6160
  %v6755 = vpop.f32.mrf.mxu0
  %v6756 = vadd.f32 %v6743, %v6755
  %v6757 = vpop.f32.mrf.mxu0
  %6758 = vdwg.mxu0
  %6759 = vmatpush.bf16.msra.mxu0 %v6561
  %6760 = vmatpush.bf16.msra.mxu0 %v6559
  %6761 = vmatpush.bf16.msra.mxu0 %v6557
  %6762 = vmatpush.bf16.msra.mxu0 %v6555
  %6763 = vmatpush.bf16.msra.mxu0 %v6553
  %6764 = vmatpush.bf16.msra.mxu0 %v6551
  %6765 = vmatpush.bf16.msra.mxu0 %v6549
  %6766 = vmatpush.bf16.msra.mxu0 %v6547
  %6767 = vmatmul.bf16.gmra.mxu0 %v6161
  %v6768 = vpop.f32.mrf.mxu0
  %v6769 = vadd.f32 %v6756, %v6768
  %v6770 = vpop.f32.mrf.mxu0
  %6771 = vdwg.mxu0
  %v6772 = vadd.f32 %v6138, %v6704
  %v6773 = vadd.f32 %v6139, %v6769
  %v6774 = vld [vmem:[#allocation5 + $0x28] sm:$0xff]
  %v6775 = vld [vmem:[#allocation5 + $0x30] sm:$0x3]
  %6778 = vst [vmem:[#allocation1] ss:$4 sm:$0xff] %v6774
  %s6779 = scalar_lea.vmem [#allocation1], 32
  %6780 = vst [vmem:[%s6779] ss:$4 sm:$0xff] %v6775
  %v6781 = vld.sshfl [vmem:[#allocation1] sm:$0xff pattern:$0x73625140]
  %v6782 = vld.sshfl [vmem:[#allocation1 + $0x8] sm:$0xff pattern:$0x73625140]
  %v6783 = vld.sshfl [vmem:[#allocation1 + $0x10] sm:$0xff pattern:$0x73625140]
  %v6784 = vld.sshfl [vmem:[#allocation1 + $0x18] sm:$0xff pattern:$0x73625140]
  %v6785 = vld.sshfl [vmem:[#allocation1 + $0x20] sm:$0xff pattern:$0x73625140]
  %v6791 = vpack.c.bf16 %v6781, %v6781
  %v6792 = vpack.c.bf16 %v6782, %v6782
  %v6793 = vpack.c.bf16 %v6783, %v6783
  %v6794 = vpack.c.bf16 %v6784, %v6784
  %v6795 = vpack.c.bf16 %v6785, %v6785
  %v6796 = vld [vmem:[%s5 + $0xa00] sm:$0xff]
  %v6797 = vld [vmem:[%s5 + $0xa08] sm:$0xff]
  %v6798 = vld [vmem:[%s5 + $0xa10] sm:$0xff]
  %v6799 = vld [vmem:[%s5 + $0xa18] sm:$0xff]
  %v6800 = vld [vmem:[%s5 + $0xa20] sm:$0xff]
  %v6801 = vld [vmem:[%s5 + $0xa28] sm:$0xff]
  %v6802 = vld [vmem:[%s5 + $0xa30] sm:$0xff]
  %v6803 = vld [vmem:[%s5 + $0xa38] sm:$0xff]
  %v6804 = vld [vmem:[%s5 + $0xa40] sm:$0xff]
  %v6805 = vld [vmem:[%s5 + $0xa48] sm:$0xff]
  %v6806 = vld [vmem:[%s5 + $0xa50] sm:$0xff]
  %v6807 = vld [vmem:[%s5 + $0xa58] sm:$0xff]
  %v6808 = vld [vmem:[%s5 + $0xa60] sm:$0xff]
  %v6809 = vld [vmem:[%s5 + $0xa68] sm:$0xff]
  %v6810 = vld [vmem:[%s5 + $0xa70] sm:$0xff]
  %v6811 = vld [vmem:[%s5 + $0xa78] sm:$0xff]
  %v6812 = vld [vmem:[%s5 + $0xa80] sm:$0xff]
  %v6813 = vld [vmem:[%s5 + $0xa88] sm:$0xff]
  %v6814 = vld [vmem:[%s5 + $0xa90] sm:$0xff]
  %v6815 = vld [vmem:[%s5 + $0xa98] sm:$0xff]
  %v6816 = vld [vmem:[%s5 + $0xaa0] sm:$0xff]
  %v6817 = vld [vmem:[%s5 + $0xaa8] sm:$0xff]
  %v6818 = vld [vmem:[%s5 + $0xab0] sm:$0xff]
  %v6819 = vld [vmem:[%s5 + $0xab8] sm:$0xff]
  %v6820 = vld [vmem:[%s5 + $0xac0] sm:$0xff]
  %v6821 = vld [vmem:[%s5 + $0xac8] sm:$0xff]
  %v6822 = vld [vmem:[%s5 + $0xad0] sm:$0xff]
  %v6823 = vld [vmem:[%s5 + $0xad8] sm:$0xff]
  %v6824 = vld [vmem:[%s5 + $0xae0] sm:$0xff]
  %v6825 = vld [vmem:[%s5 + $0xae8] sm:$0xff]
  %v6826 = vld [vmem:[%s5 + $0xaf0] sm:$0xff]
  %v6827 = vld [vmem:[%s5 + $0xaf8] sm:$0xff]
  %v6828 = vld [vmem:[%s5 + $0xb00] sm:$0xff]
  %v6829 = vld [vmem:[%s5 + $0xb08] sm:$0xff]
  %v6830 = vld [vmem:[%s5 + $0xb10] sm:$0xff]
  %v6831 = vld [vmem:[%s5 + $0xb18] sm:$0xff]
  %v6832 = vld [vmem:[%s5 + $0xb20] sm:$0xff]
  %v6833 = vld [vmem:[%s5 + $0xb28] sm:$0xff]
  %v6834 = vld [vmem:[%s5 + $0xb30] sm:$0xff]
  %v6835 = vld [vmem:[%s5 + $0xb38] sm:$0xff]
  %v6836 = vld [vmem:[%s5 + $0xb40] sm:$0xff]
  %v6837 = vld [vmem:[%s5 + $0xb48] sm:$0xff]
  %v6838 = vld [vmem:[%s5 + $0xb50] sm:$0xff]
  %v6839 = vld [vmem:[%s5 + $0xb58] sm:$0xff]
  %v6840 = vld [vmem:[%s5 + $0xb60] sm:$0xff]
  %v6841 = vld [vmem:[%s5 + $0xb68] sm:$0xff]
  %v6842 = vld [vmem:[%s5 + $0xb70] sm:$0xff]
  %v6843 = vld [vmem:[%s5 + $0xb78] sm:$0xff]
  %v6844 = vld [vmem:[%s5 + $0xb80] sm:$0xff]
  %v6845 = vld [vmem:[%s5 + $0xb88] sm:$0xff]
  %v6846 = vld [vmem:[%s5 + $0xb90] sm:$0xff]
  %v6847 = vld [vmem:[%s5 + $0xb98] sm:$0xff]
  %v6848 = vld [vmem:[%s5 + $0xba0] sm:$0xff]
  %v6849 = vld [vmem:[%s5 + $0xba8] sm:$0xff]
  %v6850 = vld [vmem:[%s5 + $0xbb0] sm:$0xff]
  %v6851 = vld [vmem:[%s5 + $0xbb8] sm:$0xff]
  %v6852 = vld [vmem:[%s5 + $0xbc0] sm:$0xff]
  %v6853 = vld [vmem:[%s5 + $0xbc8] sm:$0xff]
  %v6854 = vld [vmem:[%s5 + $0xbd0] sm:$0xff]
  %v6855 = vld [vmem:[%s5 + $0xbd8] sm:$0xff]
  %v6856 = vld [vmem:[%s5 + $0xbe0] sm:$0xff]
  %v6857 = vld [vmem:[%s5 + $0xbe8] sm:$0xff]
  %v6858 = vld [vmem:[%s5 + $0xbf0] sm:$0xff]
  %v6859 = vld [vmem:[%s5 + $0xbf8] sm:$0xff]
  %v6860 = vld [vmem:[%s5 + $0xc00] sm:$0xff]
  %v6861 = vld [vmem:[%s5 + $0xc08] sm:$0xff]
  %v6862 = vld [vmem:[%s5 + $0xc10] sm:$0xff]
  %v6863 = vld [vmem:[%s5 + $0xc18] sm:$0xff]
  %v6864 = vld [vmem:[%s5 + $0xc20] sm:$0xff]
  %v6865 = vld [vmem:[%s5 + $0xc28] sm:$0xff]
  %v6866 = vld [vmem:[%s5 + $0xc30] sm:$0xff]
  %v6867 = vld [vmem:[%s5 + $0xc38] sm:$0xff]
  %v6868 = vld [vmem:[%s5 + $0xc40] sm:$0xff]
  %v6869 = vld [vmem:[%s5 + $0xc48] sm:$0xff]
  %v6870 = vld [vmem:[%s5 + $0xc50] sm:$0xff]
  %v6871 = vld [vmem:[%s5 + $0xc58] sm:$0xff]
  %v6872 = vld [vmem:[%s5 + $0xc60] sm:$0xff]
  %v6873 = vld [vmem:[%s5 + $0xc68] sm:$0xff]
  %v6874 = vld [vmem:[%s5 + $0xc70] sm:$0xff]
  %v6875 = vld [vmem:[%s5 + $0xc78] sm:$0xff]
  %v6956 = vunpack.c.l.b16 %v6796
  %v6957 = vunpack.c.h.b16 %v6796
  %v6958 = vunpack.c.l.b16 %v6797
  %v6959 = vunpack.c.h.b16 %v6797
  %v6960 = vunpack.c.l.b16 %v6798
  %v6961 = vunpack.c.h.b16 %v6798
  %v6962 = vunpack.c.l.b16 %v6799
  %v6963 = vunpack.c.h.b16 %v6799
  %v6964 = vunpack.c.l.b16 %v6800
  %v6965 = vunpack.c.h.b16 %v6800
  %v6966 = vunpack.c.l.b16 %v6801
  %v6967 = vunpack.c.h.b16 %v6801
  %v6968 = vunpack.c.l.b16 %v6802
  %v6969 = vunpack.c.h.b16 %v6802
  %v6970 = vunpack.c.l.b16 %v6803
  %v6971 = vunpack.c.h.b16 %v6803
  %v6972 = vunpack.c.l.b16 %v6804
  %v6973 = vunpack.c.h.b16 %v6804
  %v6974 = vunpack.c.l.b16 %v6805
  %v6975 = vunpack.c.h.b16 %v6805
  %v6976 = vunpack.c.l.b16 %v6806
  %v6977 = vunpack.c.h.b16 %v6806
  %v6978 = vunpack.c.l.b16 %v6807
  %v6979 = vunpack.c.h.b16 %v6807
  %v6980 = vunpack.c.l.b16 %v6808
  %v6981 = vunpack.c.h.b16 %v6808
  %v6982 = vunpack.c.l.b16 %v6809
  %v6983 = vunpack.c.h.b16 %v6809
  %v6984 = vunpack.c.l.b16 %v6810
  %v6985 = vunpack.c.h.b16 %v6810
  %v6986 = vunpack.c.l.b16 %v6811
  %v6987 = vunpack.c.h.b16 %v6811
  %v6988 = vunpack.c.l.b16 %v6812
  %v6989 = vunpack.c.h.b16 %v6812
  %v6990 = vunpack.c.l.b16 %v6813
  %v6991 = vunpack.c.h.b16 %v6813
  %v6992 = vunpack.c.l.b16 %v6814
  %v6993 = vunpack.c.h.b16 %v6814
  %v6994 = vunpack.c.l.b16 %v6815
  %v6995 = vunpack.c.h.b16 %v6815
  %v6996 = vunpack.c.l.b16 %v6816
  %v6997 = vunpack.c.h.b16 %v6816
  %v6998 = vunpack.c.l.b16 %v6817
  %v6999 = vunpack.c.h.b16 %v6817
  %v7000 = vunpack.c.l.b16 %v6818
  %v7001 = vunpack.c.h.b16 %v6818
  %v7002 = vunpack.c.l.b16 %v6819
  %v7003 = vunpack.c.h.b16 %v6819
  %v7004 = vunpack.c.l.b16 %v6820
  %v7005 = vunpack.c.h.b16 %v6820
  %v7006 = vunpack.c.l.b16 %v6821
  %v7007 = vunpack.c.h.b16 %v6821
  %v7008 = vunpack.c.l.b16 %v6822
  %v7009 = vunpack.c.h.b16 %v6822
  %v7010 = vunpack.c.l.b16 %v6823
  %v7011 = vunpack.c.h.b16 %v6823
  %v7012 = vunpack.c.l.b16 %v6824
  %v7013 = vunpack.c.h.b16 %v6824
  %v7014 = vunpack.c.l.b16 %v6825
  %v7015 = vunpack.c.h.b16 %v6825
  %v7016 = vunpack.c.l.b16 %v6826
  %v7017 = vunpack.c.h.b16 %v6826
  %v7018 = vunpack.c.l.b16 %v6827
  %v7019 = vunpack.c.h.b16 %v6827
  %v7020 = vunpack.c.l.b16 %v6828
  %v7021 = vunpack.c.h.b16 %v6828
  %v7022 = vunpack.c.l.b16 %v6829
  %v7023 = vunpack.c.h.b16 %v6829
  %v7024 = vunpack.c.l.b16 %v6830
  %v7025 = vunpack.c.h.b16 %v6830
  %v7026 = vunpack.c.l.b16 %v6831
  %v7027 = vunpack.c.h.b16 %v6831
  %v7028 = vunpack.c.l.b16 %v6832
  %v7029 = vunpack.c.h.b16 %v6832
  %v7030 = vunpack.c.l.b16 %v6833
  %v7031 = vunpack.c.h.b16 %v6833
  %v7032 = vunpack.c.l.b16 %v6834
  %v7033 = vunpack.c.h.b16 %v6834
  %v7034 = vunpack.c.l.b16 %v6835
  %v7035 = vunpack.c.h.b16 %v6835
  %v7036 = vunpack.c.l.b16 %v6836
  %v7037 = vunpack.c.h.b16 %v6836
  %v7038 = vunpack.c.l.b16 %v6837
  %v7039 = vunpack.c.h.b16 %v6837
  %v7040 = vunpack.c.l.b16 %v6838
  %v7041 = vunpack.c.h.b16 %v6838
  %v7042 = vunpack.c.l.b16 %v6839
  %v7043 = vunpack.c.h.b16 %v6839
  %v7044 = vunpack.c.l.b16 %v6840
  %v7045 = vunpack.c.h.b16 %v6840
  %v7046 = vunpack.c.l.b16 %v6841
  %v7047 = vunpack.c.h.b16 %v6841
  %v7048 = vunpack.c.l.b16 %v6842
  %v7049 = vunpack.c.h.b16 %v6842
  %v7050 = vunpack.c.l.b16 %v6843
  %v7051 = vunpack.c.h.b16 %v6843
  %v7052 = vunpack.c.l.b16 %v6844
  %v7053 = vunpack.c.h.b16 %v6844
  %v7054 = vunpack.c.l.b16 %v6845
  %v7055 = vunpack.c.h.b16 %v6845
  %v7056 = vunpack.c.l.b16 %v6846
  %v7057 = vunpack.c.h.b16 %v6846
  %v7058 = vunpack.c.l.b16 %v6847
  %v7059 = vunpack.c.h.b16 %v6847
  %v7060 = vunpack.c.l.b16 %v6848
  %v7061 = vunpack.c.h.b16 %v6848
  %v7062 = vunpack.c.l.b16 %v6849
  %v7063 = vunpack.c.h.b16 %v6849
  %v7064 = vunpack.c.l.b16 %v6850
  %v7065 = vunpack.c.h.b16 %v6850
  %v7066 = vunpack.c.l.b16 %v6851
  %v7067 = vunpack.c.h.b16 %v6851
  %v7068 = vunpack.c.l.b16 %v6852
  %v7069 = vunpack.c.h.b16 %v6852
  %v7070 = vunpack.c.l.b16 %v6853
  %v7071 = vunpack.c.h.b16 %v6853
  %v7072 = vunpack.c.l.b16 %v6854
  %v7073 = vunpack.c.h.b16 %v6854
  %v7074 = vunpack.c.l.b16 %v6855
  %v7075 = vunpack.c.h.b16 %v6855
  %v7076 = vunpack.c.l.b16 %v6856
  %v7077 = vunpack.c.h.b16 %v6856
  %v7078 = vunpack.c.l.b16 %v6857
  %v7079 = vunpack.c.h.b16 %v6857
  %v7080 = vunpack.c.l.b16 %v6858
  %v7081 = vunpack.c.h.b16 %v6858
  %v7082 = vunpack.c.l.b16 %v6859
  %v7083 = vunpack.c.h.b16 %v6859
  %v7084 = vunpack.c.l.b16 %v6860
  %v7085 = vunpack.c.h.b16 %v6860
  %v7086 = vunpack.c.l.b16 %v6861
  %v7087 = vunpack.c.h.b16 %v6861
  %v7088 = vunpack.c.l.b16 %v6862
  %v7089 = vunpack.c.h.b16 %v6862
  %v7090 = vunpack.c.l.b16 %v6863
  %v7091 = vunpack.c.h.b16 %v6863
  %v7092 = vunpack.c.l.b16 %v6864
  %v7093 = vunpack.c.h.b16 %v6864
  %v7094 = vunpack.c.l.b16 %v6865
  %v7095 = vunpack.c.h.b16 %v6865
  %v7096 = vunpack.c.l.b16 %v6866
  %v7097 = vunpack.c.h.b16 %v6866
  %v7098 = vunpack.c.l.b16 %v6867
  %v7099 = vunpack.c.h.b16 %v6867
  %v7100 = vunpack.c.l.b16 %v6868
  %v7101 = vunpack.c.h.b16 %v6868
  %v7102 = vunpack.c.l.b16 %v6869
  %v7103 = vunpack.c.h.b16 %v6869
  %v7104 = vunpack.c.l.b16 %v6870
  %v7105 = vunpack.c.h.b16 %v6870
  %v7106 = vunpack.c.l.b16 %v6871
  %v7107 = vunpack.c.h.b16 %v6871
  %v7108 = vunpack.c.l.b16 %v6872
  %v7109 = vunpack.c.h.b16 %v6872
  %v7110 = vunpack.c.l.b16 %v6873
  %v7111 = vunpack.c.h.b16 %v6873
  %v7112 = vunpack.c.l.b16 %v6874
  %v7113 = vunpack.c.h.b16 %v6874
  %v7114 = vunpack.c.l.b16 %v6875
  %v7115 = vunpack.c.h.b16 %v6875
  %v7116 = vpack.c.b16 %v6958, %v6956
  %v7117 = vpack.c.b16 %v6959, %v6957
  %v7118 = vpack.c.b16 %v6962, %v6960
  %v7119 = vpack.c.b16 %v6963, %v6961
  %v7120 = vpack.c.b16 %v6966, %v6964
  %v7121 = vpack.c.b16 %v6967, %v6965
  %v7122 = vpack.c.b16 %v6970, %v6968
  %v7123 = vpack.c.b16 %v6971, %v6969
  %v7124 = vpack.c.b16 %v6974, %v6972
  %v7125 = vpack.c.b16 %v6975, %v6973
  %v7126 = vpack.c.b16 %v6978, %v6976
  %v7127 = vpack.c.b16 %v6979, %v6977
  %v7128 = vpack.c.b16 %v6982, %v6980
  %v7129 = vpack.c.b16 %v6983, %v6981
  %v7130 = vpack.c.b16 %v6986, %v6984
  %v7131 = vpack.c.b16 %v6987, %v6985
  %v7132 = vpack.c.b16 %v6990, %v6988
  %v7133 = vpack.c.b16 %v6991, %v6989
  %v7134 = vpack.c.b16 %v6994, %v6992
  %v7135 = vpack.c.b16 %v6995, %v6993
  %v7136 = vpack.c.b16 %v6998, %v6996
  %v7137 = vpack.c.b16 %v6999, %v6997
  %v7138 = vpack.c.b16 %v7002, %v7000
  %v7139 = vpack.c.b16 %v7003, %v7001
  %v7140 = vpack.c.b16 %v7006, %v7004
  %v7141 = vpack.c.b16 %v7007, %v7005
  %v7142 = vpack.c.b16 %v7010, %v7008
  %v7143 = vpack.c.b16 %v7011, %v7009
  %v7144 = vpack.c.b16 %v7014, %v7012
  %v7145 = vpack.c.b16 %v7015, %v7013
  %v7146 = vpack.c.b16 %v7018, %v7016
  %v7147 = vpack.c.b16 %v7019, %v7017
  %v7148 = vpack.c.b16 %v7022, %v7020
  %v7149 = vpack.c.b16 %v7023, %v7021
  %v7150 = vpack.c.b16 %v7026, %v7024
  %v7151 = vpack.c.b16 %v7027, %v7025
  %v7152 = vpack.c.b16 %v7030, %v7028
  %v7153 = vpack.c.b16 %v7031, %v7029
  %v7154 = vpack.c.b16 %v7034, %v7032
  %v7155 = vpack.c.b16 %v7035, %v7033
  %v7156 = vpack.c.b16 %v7038, %v7036
  %v7157 = vpack.c.b16 %v7039, %v7037
  %v7158 = vpack.c.b16 %v7042, %v7040
  %v7159 = vpack.c.b16 %v7043, %v7041
  %v7160 = vpack.c.b16 %v7046, %v7044
  %v7161 = vpack.c.b16 %v7047, %v7045
  %v7162 = vpack.c.b16 %v7050, %v7048
  %v7163 = vpack.c.b16 %v7051, %v7049
  %v7164 = vpack.c.b16 %v7054, %v7052
  %v7165 = vpack.c.b16 %v7055, %v7053
  %v7166 = vpack.c.b16 %v7058, %v7056
  %v7167 = vpack.c.b16 %v7059, %v7057
  %v7168 = vpack.c.b16 %v7062, %v7060
  %v7169 = vpack.c.b16 %v7063, %v7061
  %v7170 = vpack.c.b16 %v7066, %v7064
  %v7171 = vpack.c.b16 %v7067, %v7065
  %v7172 = vpack.c.b16 %v7070, %v7068
  %v7173 = vpack.c.b16 %v7071, %v7069
  %v7174 = vpack.c.b16 %v7074, %v7072
  %v7175 = vpack.c.b16 %v7075, %v7073
  %v7176 = vpack.c.b16 %v7078, %v7076
  %v7177 = vpack.c.b16 %v7079, %v7077
  %v7178 = vpack.c.b16 %v7082, %v7080
  %v7179 = vpack.c.b16 %v7083, %v7081
  %v7180 = vpack.c.b16 %v7086, %v7084
  %v7181 = vpack.c.b16 %v7087, %v7085
  %v7182 = vpack.c.b16 %v7090, %v7088
  %v7183 = vpack.c.b16 %v7091, %v7089
  %v7184 = vpack.c.b16 %v7094, %v7092
  %v7185 = vpack.c.b16 %v7095, %v7093
  %v7186 = vpack.c.b16 %v7098, %v7096
  %v7187 = vpack.c.b16 %v7099, %v7097
  %v7188 = vpack.c.b16 %v7102, %v7100
  %v7189 = vpack.c.b16 %v7103, %v7101
  %v7190 = vpack.c.b16 %v7106, %v7104
  %v7191 = vpack.c.b16 %v7107, %v7105
  %v7192 = vpack.c.b16 %v7110, %v7108
  %v7193 = vpack.c.b16 %v7111, %v7109
  %v7194 = vpack.c.b16 %v7114, %v7112
  %v7195 = vpack.c.b16 %v7115, %v7113
  %7276 = vmatpush.bf16.msra.mxu0 %v7130
  %7277 = vmatpush.bf16.msra.mxu0 %v7128
  %7278 = vmatpush.bf16.msra.mxu0 %v7126
  %7279 = vmatpush.bf16.msra.mxu0 %v7124
  %7280 = vmatpush.bf16.msra.mxu0 %v7122
  %7281 = vmatpush.bf16.msra.mxu0 %v7120
  %7282 = vmatpush.bf16.msra.mxu0 %v7118
  %7283 = vmatpush.bf16.msra.mxu0 %v7116
  %7284 = vmatmul.bf16.gmra.mxu0 %v6791
  %v7285 = vpop.f32.mrf.mxu0
  %v7286 = vadd.f32 0.0, %v7285
  %v7287 = vpop.f32.mrf.mxu0
  %7288 = vdwg.mxu0
  %7289 = vmatpush.bf16.msra.mxu0 %v7146
  %7290 = vmatpush.bf16.msra.mxu0 %v7144
  %7291 = vmatpush.bf16.msra.mxu0 %v7142
  %7292 = vmatpush.bf16.msra.mxu0 %v7140
  %7293 = vmatpush.bf16.msra.mxu0 %v7138
  %7294 = vmatpush.bf16.msra.mxu0 %v7136
  %7295 = vmatpush.bf16.msra.mxu0 %v7134
  %7296 = vmatpush.bf16.msra.mxu0 %v7132
  %7297 = vmatmul.bf16.gmra.mxu0 %v6792
  %v7298 = vpop.f32.mrf.mxu0
  %v7299 = vadd.f32 %v7286, %v7298
  %v7300 = vpop.f32.mrf.mxu0
  %7301 = vdwg.mxu0
  %7302 = vmatpush.bf16.msra.mxu0 %v7162
  %7303 = vmatpush.bf16.msra.mxu0 %v7160
  %7304 = vmatpush.bf16.msra.mxu0 %v7158
  %7305 = vmatpush.bf16.msra.mxu0 %v7156
  %7306 = vmatpush.bf16.msra.mxu0 %v7154
  %7307 = vmatpush.bf16.msra.mxu0 %v7152
  %7308 = vmatpush.bf16.msra.mxu0 %v7150
  %7309 = vmatpush.bf16.msra.mxu0 %v7148
  %7310 = vmatmul.bf16.gmra.mxu0 %v6793
  %v7311 = vpop.f32.mrf.mxu0
  %v7312 = vadd.f32 %v7299, %v7311
  %v7313 = vpop.f32.mrf.mxu0
  %7314 = vdwg.mxu0
  %7315 = vmatpush.bf16.msra.mxu0 %v7178
  %7316 = vmatpush.bf16.msra.mxu0 %v7176
  %7317 = vmatpush.bf16.msra.mxu0 %v7174
  %7318 = vmatpush.bf16.msra.mxu0 %v7172
  %7319 = vmatpush.bf16.msra.mxu0 %v7170
  %7320 = vmatpush.bf16.msra.mxu0 %v7168
  %7321 = vmatpush.bf16.msra.mxu0 %v7166
  %7322 = vmatpush.bf16.msra.mxu0 %v7164
  %7323 = vmatmul.bf16.gmra.mxu0 %v6794
  %v7324 = vpop.f32.mrf.mxu0
  %v7325 = vadd.f32 %v7312, %v7324
  %v7326 = vpop.f32.mrf.mxu0
  %7327 = vdwg.mxu0
  %7328 = vmatpush.bf16.msra.mxu0 %v7194
  %7329 = vmatpush.bf16.msra.mxu0 %v7192
  %7330 = vmatpush.bf16.msra.mxu0 %v7190
  %7331 = vmatpush.bf16.msra.mxu0 %v7188
  %7332 = vmatpush.bf16.msra.mxu0 %v7186
  %7333 = vmatpush.bf16.msra.mxu0 %v7184
  %7334 = vmatpush.bf16.msra.mxu0 %v7182
  %7335 = vmatpush.bf16.msra.mxu0 %v7180
  %7336 = vmatmul.bf16.gmra.mxu0 %v6795
  %v7337 = vpop.f32.mrf.mxu0
  %v7338 = vadd.f32 %v7325, %v7337
  %v7339 = vpop.f32.mrf.mxu0
  %7340 = vdwg.mxu0
  %7341 = vmatpush.bf16.msra.mxu0 %v7131
  %7342 = vmatpush.bf16.msra.mxu0 %v7129
  %7343 = vmatpush.bf16.msra.mxu0 %v7127
  %7344 = vmatpush.bf16.msra.mxu0 %v7125
  %7345 = vmatpush.bf16.msra.mxu0 %v7123
  %7346 = vmatpush.bf16.msra.mxu0 %v7121
  %7347 = vmatpush.bf16.msra.mxu0 %v7119
  %7348 = vmatpush.bf16.msra.mxu0 %v7117
  %7349 = vmatmul.bf16.gmra.mxu0 %v6791
  %v7350 = vpop.f32.mrf.mxu0
  %v7351 = vadd.f32 0.0, %v7350
  %v7352 = vpop.f32.mrf.mxu0
  %7353 = vdwg.mxu0
  %7354 = vmatpush.bf16.msra.mxu0 %v7147
  %7355 = vmatpush.bf16.msra.mxu0 %v7145
  %7356 = vmatpush.bf16.msra.mxu0 %v7143
  %7357 = vmatpush.bf16.msra.mxu0 %v7141
  %7358 = vmatpush.bf16.msra.mxu0 %v7139
  %7359 = vmatpush.bf16.msra.mxu0 %v7137
  %7360 = vmatpush.bf16.msra.mxu0 %v7135
  %7361 = vmatpush.bf16.msra.mxu0 %v7133
  %7362 = vmatmul.bf16.gmra.mxu0 %v6792
  %v7363 = vpop.f32.mrf.mxu0
  %v7364 = vadd.f32 %v7351, %v7363
  %v7365 = vpop.f32.mrf.mxu0
  %7366 = vdwg.mxu0
  %7367 = vmatpush.bf16.msra.mxu0 %v7163
  %7368 = vmatpush.bf16.msra.mxu0 %v7161
  %7369 = vmatpush.bf16.msra.mxu0 %v7159
  %7370 = vmatpush.bf16.msra.mxu0 %v7157
  %7371 = vmatpush.bf16.msra.mxu0 %v7155
  %7372 = vmatpush.bf16.msra.mxu0 %v7153
  %7373 = vmatpush.bf16.msra.mxu0 %v7151
  %7374 = vmatpush.bf16.msra.mxu0 %v7149
  %7375 = vmatmul.bf16.gmra.mxu0 %v6793
  %v7376 = vpop.f32.mrf.mxu0
  %v7377 = vadd.f32 %v7364, %v7376
  %v7378 = vpop.f32.mrf.mxu0
  %7379 = vdwg.mxu0
  %7380 = vmatpush.bf16.msra.mxu0 %v7179
  %7381 = vmatpush.bf16.msra.mxu0 %v7177
  %7382 = vmatpush.bf16.msra.mxu0 %v7175
  %7383 = vmatpush.bf16.msra.mxu0 %v7173
  %7384 = vmatpush.bf16.msra.mxu0 %v7171
  %7385 = vmatpush.bf16.msra.mxu0 %v7169
  %7386 = vmatpush.bf16.msra.mxu0 %v7167
  %7387 = vmatpush.bf16.msra.mxu0 %v7165
  %7388 = vmatmul.bf16.gmra.mxu0 %v6794
  %v7389 = vpop.f32.mrf.mxu0
  %v7390 = vadd.f32 %v7377, %v7389
  %v7391 = vpop.f32.mrf.mxu0
  %7392 = vdwg.mxu0
  %7393 = vmatpush.bf16.msra.mxu0 %v7195
  %7394 = vmatpush.bf16.msra.mxu0 %v7193
  %7395 = vmatpush.bf16.msra.mxu0 %v7191
  %7396 = vmatpush.bf16.msra.mxu0 %v7189
  %7397 = vmatpush.bf16.msra.mxu0 %v7187
  %7398 = vmatpush.bf16.msra.mxu0 %v7185
  %7399 = vmatpush.bf16.msra.mxu0 %v7183
  %7400 = vmatpush.bf16.msra.mxu0 %v7181
  %7401 = vmatmul.bf16.gmra.mxu0 %v6795
  %v7402 = vpop.f32.mrf.mxu0
  %v7403 = vadd.f32 %v7390, %v7402
  %v7404 = vpop.f32.mrf.mxu0
  %7405 = vdwg.mxu0
  %v7406 = vadd.f32 %v6772, %v7338
  %v7407 = vadd.f32 %v6773, %v7403
  %v7408 = vld [vmem:[%s6] sm:$0x3]
  %v7410 = vperm.slane %v7408, 0
  %v7411 = vperm.slane %v7408, 1
  %v7414 = vadd.f32 %v7406, %v7410
  %v7415 = vadd.f32 %v7407, %v7411
  %v7416 = vmax.f32 %v7414, 0.0
  %v7417 = vmax.f32 %v7415, 0.0
  %v7418 = vpack.c.bf16 %v7416, %v7416
  %v7419 = vpack.c.bf16 %v7417, %v7417
  %v7420 = vld [vmem:[%s7] sm:$0xff]
  %v7421 = vld [vmem:[%s7 + $0x8] sm:$0xff]
  %v7422 = vld [vmem:[%s7 + $0x10] sm:$0xff]
  %v7423 = vld [vmem:[%s7 + $0x18] sm:$0xff]
  %v7424 = vld [vmem:[%s7 + $0x20] sm:$0xff]
  %v7425 = vld [vmem:[%s7 + $0x28] sm:$0xff]
  %v7426 = vld [vmem:[%s7 + $0x30] sm:$0xff]
  %v7427 = vld [vmem:[%s7 + $0x38] sm:$0xff]
  %v7428 = vld [vmem:[%s7 + $0x40] sm:$0xff]
  %v7429 = vld [vmem:[%s7 + $0x48] sm:$0xff]
  %v7430 = vld [vmem:[%s7 + $0x50] sm:$0xff]
  %v7431 = vld [vmem:[%s7 + $0x58] sm:$0xff]
  %v7432 = vld [vmem:[%s7 + $0x60] sm:$0xff]
  %v7433 = vld [vmem:[%s7 + $0x68] sm:$0xff]
  %v7434 = vld [vmem:[%s7 + $0x70] sm:$0xff]
  %v7435 = vld [vmem:[%s7 + $0x78] sm:$0xff]
  %v7436 = vld [vmem:[%s7 + $0x80] sm:$0xff]
  %v7437 = vld [vmem:[%s7 + $0x88] sm:$0xff]
  %v7438 = vld [vmem:[%s7 + $0x90] sm:$0xff]
  %v7439 = vld [vmem:[%s7 + $0x98] sm:$0xff]
  %v7440 = vld [vmem:[%s7 + $0xa0] sm:$0xff]
  %v7441 = vld [vmem:[%s7 + $0xa8] sm:$0xff]
  %v7442 = vld [vmem:[%s7 + $0xb0] sm:$0xff]
  %v7443 = vld [vmem:[%s7 + $0xb8] sm:$0xff]
  %v7444 = vld [vmem:[%s7 + $0xc0] sm:$0xff]
  %v7445 = vld [vmem:[%s7 + $0xc8] sm:$0xff]
  %v7446 = vld [vmem:[%s7 + $0xd0] sm:$0xff]
  %v7447 = vld [vmem:[%s7 + $0xd8] sm:$0xff]
  %v7448 = vld [vmem:[%s7 + $0xe0] sm:$0xff]
  %v7449 = vld [vmem:[%s7 + $0xe8] sm:$0xff]
  %v7450 = vld [vmem:[%s7 + $0xf0] sm:$0xff]
  %v7451 = vld [vmem:[%s7 + $0xf8] sm:$0xff]
  %v7452 = vld [vmem:[%s7 + $0x100] sm:$0xff]
  %v7453 = vld [vmem:[%s7 + $0x108] sm:$0xff]
  %v7454 = vld [vmem:[%s7 + $0x110] sm:$0xff]
  %v7455 = vld [vmem:[%s7 + $0x118] sm:$0xff]
  %v7456 = vld [vmem:[%s7 + $0x120] sm:$0xff]
  %v7457 = vld [vmem:[%s7 + $0x128] sm:$0xff]
  %v7458 = vld [vmem:[%s7 + $0x130] sm:$0xff]
  %v7459 = vld [vmem:[%s7 + $0x138] sm:$0xff]
  %v7460 = vld [vmem:[%s7 + $0x140] sm:$0xff]
  %v7461 = vld [vmem:[%s7 + $0x148] sm:$0xff]
  %v7462 = vld [vmem:[%s7 + $0x150] sm:$0xff]
  %v7463 = vld [vmem:[%s7 + $0x158] sm:$0xff]
  %v7464 = vld [vmem:[%s7 + $0x160] sm:$0xff]
  %v7465 = vld [vmem:[%s7 + $0x168] sm:$0xff]
  %v7466 = vld [vmem:[%s7 + $0x170] sm:$0xff]
  %v7467 = vld [vmem:[%s7 + $0x178] sm:$0xff]
  %v7468 = vld [vmem:[%s7 + $0x180] sm:$0xff]
  %v7469 = vld [vmem:[%s7 + $0x188] sm:$0xff]
  %v7470 = vld [vmem:[%s7 + $0x190] sm:$0xff]
  %v7471 = vld [vmem:[%s7 + $0x198] sm:$0xff]
  %v7472 = vld [vmem:[%s7 + $0x1a0] sm:$0xff]
  %v7473 = vld [vmem:[%s7 + $0x1a8] sm:$0xff]
  %v7474 = vld [vmem:[%s7 + $0x1b0] sm:$0xff]
  %v7475 = vld [vmem:[%s7 + $0x1b8] sm:$0xff]
  %v7476 = vld [vmem:[%s7 + $0x1c0] sm:$0xff]
  %v7477 = vld [vmem:[%s7 + $0x1c8] sm:$0xff]
  %v7478 = vld [vmem:[%s7 + $0x1d0] sm:$0xff]
  %v7479 = vld [vmem:[%s7 + $0x1d8] sm:$0xff]
  %v7480 = vld [vmem:[%s7 + $0x1e0] sm:$0xff]
  %v7481 = vld [vmem:[%s7 + $0x1e8] sm:$0xff]
  %v7482 = vld [vmem:[%s7 + $0x1f0] sm:$0xff]
  %v7483 = vld [vmem:[%s7 + $0x1f8] sm:$0xff]
  %v7484 = vld [vmem:[%s8] sm:$0xf]
  %v7486 = vperm.slane %v7484, 0
  %v7487 = vperm.slane %v7484, 1
  %v7488 = vperm.slane %v7484, 2
  %v7489 = vperm.slane %v7484, 3
  %v7558 = vunpack.c.l.b16 %v7420
  %v7559 = vunpack.c.h.b16 %v7420
  %v7560 = vunpack.c.l.b16 %v7421
  %v7561 = vunpack.c.h.b16 %v7421
  %v7562 = vunpack.c.l.b16 %v7422
  %v7563 = vunpack.c.h.b16 %v7422
  %v7564 = vunpack.c.l.b16 %v7423
  %v7565 = vunpack.c.h.b16 %v7423
  %v7566 = vunpack.c.l.b16 %v7424
  %v7567 = vunpack.c.h.b16 %v7424
  %v7568 = vunpack.c.l.b16 %v7425
  %v7569 = vunpack.c.h.b16 %v7425
  %v7570 = vunpack.c.l.b16 %v7426
  %v7571 = vunpack.c.h.b16 %v7426
  %v7572 = vunpack.c.l.b16 %v7427
  %v7573 = vunpack.c.h.b16 %v7427
  %v7574 = vunpack.c.l.b16 %v7428
  %v7575 = vunpack.c.h.b16 %v7428
  %v7576 = vunpack.c.l.b16 %v7429
  %v7577 = vunpack.c.h.b16 %v7429
  %v7578 = vunpack.c.l.b16 %v7430
  %v7579 = vunpack.c.h.b16 %v7430
  %v7580 = vunpack.c.l.b16 %v7431
  %v7581 = vunpack.c.h.b16 %v7431
  %v7582 = vunpack.c.l.b16 %v7432
  %v7583 = vunpack.c.h.b16 %v7432
  %v7584 = vunpack.c.l.b16 %v7433
  %v7585 = vunpack.c.h.b16 %v7433
  %v7586 = vunpack.c.l.b16 %v7434
  %v7587 = vunpack.c.h.b16 %v7434
  %v7588 = vunpack.c.l.b16 %v7435
  %v7589 = vunpack.c.h.b16 %v7435
  %v7590 = vunpack.c.l.b16 %v7436
  %v7591 = vunpack.c.h.b16 %v7436
  %v7592 = vunpack.c.l.b16 %v7437
  %v7593 = vunpack.c.h.b16 %v7437
  %v7594 = vunpack.c.l.b16 %v7438
  %v7595 = vunpack.c.h.b16 %v7438
  %v7596 = vunpack.c.l.b16 %v7439
  %v7597 = vunpack.c.h.b16 %v7439
  %v7598 = vunpack.c.l.b16 %v7440
  %v7599 = vunpack.c.h.b16 %v7440
  %v7600 = vunpack.c.l.b16 %v7441
  %v7601 = vunpack.c.h.b16 %v7441
  %v7602 = vunpack.c.l.b16 %v7442
  %v7603 = vunpack.c.h.b16 %v7442
  %v7604 = vunpack.c.l.b16 %v7443
  %v7605 = vunpack.c.h.b16 %v7443
  %v7606 = vunpack.c.l.b16 %v7444
  %v7607 = vunpack.c.h.b16 %v7444
  %v7608 = vunpack.c.l.b16 %v7445
  %v7609 = vunpack.c.h.b16 %v7445
  %v7610 = vunpack.c.l.b16 %v7446
  %v7611 = vunpack.c.h.b16 %v7446
  %v7612 = vunpack.c.l.b16 %v7447
  %v7613 = vunpack.c.h.b16 %v7447
  %v7614 = vunpack.c.l.b16 %v7448
  %v7615 = vunpack.c.h.b16 %v7448
  %v7616 = vunpack.c.l.b16 %v7449
  %v7617 = vunpack.c.h.b16 %v7449
  %v7618 = vunpack.c.l.b16 %v7450
  %v7619 = vunpack.c.h.b16 %v7450
  %v7620 = vunpack.c.l.b16 %v7451
  %v7621 = vunpack.c.h.b16 %v7451
  %v7622 = vunpack.c.l.b16 %v7452
  %v7623 = vunpack.c.h.b16 %v7452
  %v7624 = vunpack.c.l.b16 %v7453
  %v7625 = vunpack.c.h.b16 %v7453
  %v7626 = vunpack.c.l.b16 %v7454
  %v7627 = vunpack.c.h.b16 %v7454
  %v7628 = vunpack.c.l.b16 %v7455
  %v7629 = vunpack.c.h.b16 %v7455
  %v7630 = vunpack.c.l.b16 %v7456
  %v7631 = vunpack.c.h.b16 %v7456
  %v7632 = vunpack.c.l.b16 %v7457
  %v7633 = vunpack.c.h.b16 %v7457
  %v7634 = vunpack.c.l.b16 %v7458
  %v7635 = vunpack.c.h.b16 %v7458
  %v7636 = vunpack.c.l.b16 %v7459
  %v7637 = vunpack.c.h.b16 %v7459
  %v7638 = vunpack.c.l.b16 %v7460
  %v7639 = vunpack.c.h.b16 %v7460
  %v7640 = vunpack.c.l.b16 %v7461
  %v7641 = vunpack.c.h.b16 %v7461
  %v7642 = vunpack.c.l.b16 %v7462
  %v7643 = vunpack.c.h.b16 %v7462
  %v7644 = vunpack.c.l.b16 %v7463
  %v7645 = vunpack.c.h.b16 %v7463
  %v7646 = vunpack.c.l.b16 %v7464
  %v7647 = vunpack.c.h.b16 %v7464
  %v7648 = vunpack.c.l.b16 %v7465
  %v7649 = vunpack.c.h.b16 %v7465
  %v7650 = vunpack.c.l.b16 %v7466
  %v7651 = vunpack.c.h.b16 %v7466
  %v7652 = vunpack.c.l.b16 %v7467
  %v7653 = vunpack.c.h.b16 %v7467
  %v7654 = vunpack.c.l.b16 %v7468
  %v7655 = vunpack.c.h.b16 %v7468
  %v7656 = vunpack.c.l.b16 %v7469
  %v7657 = vunpack.c.h.b16 %v7469
  %v7658 = vunpack.c.l.b16 %v7470
  %v7659 = vunpack.c.h.b16 %v7470
  %v7660 = vunpack.c.l.b16 %v7471
  %v7661 = vunpack.c.h.b16 %v7471
  %v7662 = vunpack.c.l.b16 %v7472
  %v7663 = vunpack.c.h.b16 %v7472
  %v7664 = vunpack.c.l.b16 %v7473
  %v7665 = vunpack.c.h.b16 %v7473
  %v7666 = vunpack.c.l.b16 %v7474
  %v7667 = vunpack.c.h.b16 %v7474
  %v7668 = vunpack.c.l.b16 %v7475
  %v7669 = vunpack.c.h.b16 %v7475
  %v7670 = vunpack.c.l.b16 %v7476
  %v7671 = vunpack.c.h.b16 %v7476
  %v7672 = vunpack.c.l.b16 %v7477
  %v7673 = vunpack.c.h.b16 %v7477
  %v7674 = vunpack.c.l.b16 %v7478
  %v7675 = vunpack.c.h.b16 %v7478
  %v7676 = vunpack.c.l.b16 %v7479
  %v7677 = vunpack.c.h.b16 %v7479
  %v7678 = vunpack.c.l.b16 %v7480
  %v7679 = vunpack.c.h.b16 %v7480
  %v7680 = vunpack.c.l.b16 %v7481
  %v7681 = vunpack.c.h.b16 %v7481
  %v7682 = vunpack.c.l.b16 %v7482
  %v7683 = vunpack.c.h.b16 %v7482
  %v7684 = vunpack.c.l.b16 %v7483
  %v7685 = vunpack.c.h.b16 %v7483
  %v7686 = vpack.c.b16 %v7562, %v7558
  %v7687 = vpack.c.b16 %v7563, %v7559
  %v7688 = vpack.c.b16 %v7564, %v7560
  %v7689 = vpack.c.b16 %v7565, %v7561
  %v7690 = vpack.c.b16 %v7570, %v7566
  %v7691 = vpack.c.b16 %v7571, %v7567
  %v7692 = vpack.c.b16 %v7572, %v7568
  %v7693 = vpack.c.b16 %v7573, %v7569
  %v7694 = vpack.c.b16 %v7578, %v7574
  %v7695 = vpack.c.b16 %v7579, %v7575
  %v7696 = vpack.c.b16 %v7580, %v7576
  %v7697 = vpack.c.b16 %v7581, %v7577
  %v7698 = vpack.c.b16 %v7586, %v7582
  %v7699 = vpack.c.b16 %v7587, %v7583
  %v7700 = vpack.c.b16 %v7588, %v7584
  %v7701 = vpack.c.b16 %v7589, %v7585
  %v7702 = vpack.c.b16 %v7594, %v7590
  %v7703 = vpack.c.b16 %v7595, %v7591
  %v7704 = vpack.c.b16 %v7596, %v7592
  %v7705 = vpack.c.b16 %v7597, %v7593
  %v7706 = vpack.c.b16 %v7602, %v7598
  %v7707 = vpack.c.b16 %v7603, %v7599
  %v7708 = vpack.c.b16 %v7604, %v7600
  %v7709 = vpack.c.b16 %v7605, %v7601
  %v7710 = vpack.c.b16 %v7610, %v7606
  %v7711 = vpack.c.b16 %v7611, %v7607
  %v7712 = vpack.c.b16 %v7612, %v7608
  %v7713 = vpack.c.b16 %v7613, %v7609
  %v7714 = vpack.c.b16 %v7618, %v7614
  %v7715 = vpack.c.b16 %v7619, %v7615
  %v7716 = vpack.c.b16 %v7620, %v7616
  %v7717 = vpack.c.b16 %v7621, %v7617
  %v7718 = vpack.c.b16 %v7626, %v7622
  %v7719 = vpack.c.b16 %v7627, %v7623
  %v7720 = vpack.c.b16 %v7628, %v7624
  %v7721 = vpack.c.b16 %v7629, %v7625
  %v7722 = vpack.c.b16 %v7634, %v7630
  %v7723 = vpack.c.b16 %v7635, %v7631
  %v7724 = vpack.c.b16 %v7636, %v7632
  %v7725 = vpack.c.b16 %v7637, %v7633
  %v7726 = vpack.c.b16 %v7642, %v7638
  %v7727 = vpack.c.b16 %v7643, %v7639
  %v7728 = vpack.c.b16 %v7644, %v7640
  %v7729 = vpack.c.b16 %v7645, %v7641
  %v7730 = vpack.c.b16 %v7650, %v7646
  %v7731 = vpack.c.b16 %v7651, %v7647
  %v7732 = vpack.c.b16 %v7652, %v7648
  %v7733 = vpack.c.b16 %v7653, %v7649
  %v7734 = vpack.c.b16 %v7658, %v7654
  %v7735 = vpack.c.b16 %v7659, %v7655
  %v7736 = vpack.c.b16 %v7660, %v7656
  %v7737 = vpack.c.b16 %v7661, %v7657
  %v7738 = vpack.c.b16 %v7666, %v7662
  %v7739 = vpack.c.b16 %v7667, %v7663
  %v7740 = vpack.c.b16 %v7668, %v7664
  %v7741 = vpack.c.b16 %v7669, %v7665
  %v7742 = vpack.c.b16 %v7674, %v7670
  %v7743 = vpack.c.b16 %v7675, %v7671
  %v7744 = vpack.c.b16 %v7676, %v7672
  %v7745 = vpack.c.b16 %v7677, %v7673
  %v7746 = vpack.c.b16 %v7682, %v7678
  %v7747 = vpack.c.b16 %v7683, %v7679
  %v7748 = vpack.c.b16 %v7684, %v7680
  %v7749 = vpack.c.b16 %v7685, %v7681
  %7814 = vmatpush.bf16.msra.mxu0 %v7714
  %7815 = vmatpush.bf16.msra.mxu0 %v7710
  %7816 = vmatpush.bf16.msra.mxu0 %v7706
  %7817 = vmatpush.bf16.msra.mxu0 %v7702
  %7818 = vmatpush.bf16.msra.mxu0 %v7698
  %7819 = vmatpush.bf16.msra.mxu0 %v7694
  %7820 = vmatpush.bf16.msra.mxu0 %v7690
  %7821 = vmatpush.bf16.msra.mxu0 %v7686
  %7822 = vmatmul.bf16.gmra.mxu0 %v7418
  %v7823 = vpop.f32.mrf.mxu0
  %v7824 = vadd.f32 %v7486, %v7823
  %v7825 = vpop.f32.mrf.mxu0
  %7826 = vdwg.mxu0
  %7827 = vmatpush.bf16.msra.mxu0 %v7746
  %7828 = vmatpush.bf16.msra.mxu0 %v7742
  %7829 = vmatpush.bf16.msra.mxu0 %v7738
  %7830 = vmatpush.bf16.msra.mxu0 %v7734
  %7831 = vmatpush.bf16.msra.mxu0 %v7730
  %7832 = vmatpush.bf16.msra.mxu0 %v7726
  %7833 = vmatpush.bf16.msra.mxu0 %v7722
  %7834 = vmatpush.bf16.msra.mxu0 %v7718
  %7835 = vmatmul.bf16.gmra.mxu0 %v7419
  %v7836 = vpop.f32.mrf.mxu0
  %v7837 = vadd.f32 %v7824, %v7836
  %v7838 = vpop.f32.mrf.mxu0
  %7839 = vdwg.mxu0
  %7840 = vmatpush.bf16.msra.mxu0 %v7715
  %7841 = vmatpush.bf16.msra.mxu0 %v7711
  %7842 = vmatpush.bf16.msra.mxu0 %v7707
  %7843 = vmatpush.bf16.msra.mxu0 %v7703
  %7844 = vmatpush.bf16.msra.mxu0 %v7699
  %7845 = vmatpush.bf16.msra.mxu0 %v7695
  %7846 = vmatpush.bf16.msra.mxu0 %v7691
  %7847 = vmatpush.bf16.msra.mxu0 %v7687
  %7848 = vmatmul.bf16.gmra.mxu0 %v7418
  %v7849 = vpop.f32.mrf.mxu0
  %v7850 = vadd.f32 %v7487, %v7849
  %v7851 = vpop.f32.mrf.mxu0
  %7852 = vdwg.mxu0
  %7853 = vmatpush.bf16.msra.mxu0 %v7747
  %7854 = vmatpush.bf16.msra.mxu0 %v7743
  %7855 = vmatpush.bf16.msra.mxu0 %v7739
  %7856 = vmatpush.bf16.msra.mxu0 %v7735
  %7857 = vmatpush.bf16.msra.mxu0 %v7731
  %7858 = vmatpush.bf16.msra.mxu0 %v7727
  %7859 = vmatpush.bf16.msra.mxu0 %v7723
  %7860 = vmatpush.bf16.msra.mxu0 %v7719
  %7861 = vmatmul.bf16.gmra.mxu0 %v7419
  %v7862 = vpop.f32.mrf.mxu0
  %v7863 = vadd.f32 %v7850, %v7862
  %v7864 = vpop.f32.mrf.mxu0
  %7865 = vdwg.mxu0
  %7866 = vmatpush.bf16.msra.mxu0 %v7716
  %7867 = vmatpush.bf16.msra.mxu0 %v7712
  %7868 = vmatpush.bf16.msra.mxu0 %v7708
  %7869 = vmatpush.bf16.msra.mxu0 %v7704
  %7870 = vmatpush.bf16.msra.mxu0 %v7700
  %7871 = vmatpush.bf16.msra.mxu0 %v7696
  %7872 = vmatpush.bf16.msra.mxu0 %v7692
  %7873 = vmatpush.bf16.msra.mxu0 %v7688
  %7874 = vmatmul.bf16.gmra.mxu0 %v7418
  %v7875 = vpop.f32.mrf.mxu0
  %v7876 = vadd.f32 %v7488, %v7875
  %v7877 = vpop.f32.mrf.mxu0
  %7878 = vdwg.mxu0
  %7879 = vmatpush.bf16.msra.mxu0 %v7748
  %7880 = vmatpush.bf16.msra.mxu0 %v7744
  %7881 = vmatpush.bf16.msra.mxu0 %v7740
  %7882 = vmatpush.bf16.msra.mxu0 %v7736
  %7883 = vmatpush.bf16.msra.mxu0 %v7732
  %7884 = vmatpush.bf16.msra.mxu0 %v7728
  %7885 = vmatpush.bf16.msra.mxu0 %v7724
  %7886 = vmatpush.bf16.msra.mxu0 %v7720
  %7887 = vmatmul.bf16.gmra.mxu0 %v7419
  %v7888 = vpop.f32.mrf.mxu0
  %v7889 = vadd.f32 %v7876, %v7888
  %v7890 = vpop.f32.mrf.mxu0
  %7891 = vdwg.mxu0
  %7892 = vmatpush.bf16.msra.mxu0 %v7717
  %7893 = vmatpush.bf16.msra.mxu0 %v7713
  %7894 = vmatpush.bf16.msra.mxu0 %v7709
  %7895 = vmatpush.bf16.msra.mxu0 %v7705
  %7896 = vmatpush.bf16.msra.mxu0 %v7701
  %7897 = vmatpush.bf16.msra.mxu0 %v7697
  %7898 = vmatpush.bf16.msra.mxu0 %v7693
  %7899 = vmatpush.bf16.msra.mxu0 %v7689
  %7900 = vmatmul.bf16.gmra.mxu0 %v7418
  %v7901 = vpop.f32.mrf.mxu0
  %v7902 = vadd.f32 %v7489, %v7901
  %v7903 = vpop.f32.mrf.mxu0
  %7904 = vdwg.mxu0
  %7905 = vmatpush.bf16.msra.mxu0 %v7749
  %7906 = vmatpush.bf16.msra.mxu0 %v7745
  %7907 = vmatpush.bf16.msra.mxu0 %v7741
  %7908 = vmatpush.bf16.msra.mxu0 %v7737
  %7909 = vmatpush.bf16.msra.mxu0 %v7733
  %7910 = vmatpush.bf16.msra.mxu0 %v7729
  %7911 = vmatpush.bf16.msra.mxu0 %v7725
  %7912 = vmatpush.bf16.msra.mxu0 %v7721
  %7913 = vmatmul.bf16.gmra.mxu0 %v7419
  %v7914 = vpop.f32.mrf.mxu0
  %v7915 = vadd.f32 %v7902, %v7914
  %v7916 = vpop.f32.mrf.mxu0
  %7917 = vdwg.mxu0
  %v7918 = vmax.f32 %v7837, 0.0
  %v7919 = vmax.f32 %v7863, 0.0
  %v7920 = vmax.f32 %v7889, 0.0
  %v7921 = vmax.f32 %v7915, 0.0
  %v7922 = vpack.c.bf16 %v7918, %v7918
  %v7923 = vpack.c.bf16 %v7919, %v7919
  %v7924 = vpack.c.bf16 %v7920, %v7920
  %v7925 = vpack.c.bf16 %v7921, %v7921
  %v7926 = vld [vmem:[%s9] sm:$0xf]
  %v7927 = vld [vmem:[%s9 + $0x4] sm:$0xf]
  %v7928 = vld [vmem:[%s9 + $0x8] sm:$0xf]
  %v7929 = vld [vmem:[%s9 + $0xc] sm:$0xf]
  %v7930 = vld [vmem:[%s9 + $0x10] sm:$0xf]
  %v7931 = vld [vmem:[%s9 + $0x14] sm:$0xf]
  %v7932 = vld [vmem:[%s9 + $0x18] sm:$0xf]
  %v7933 = vld [vmem:[%s9 + $0x1c] sm:$0xf]
  %v7934 = vld [vmem:[%s9 + $0x20] sm:$0xf]
  %v7935 = vld [vmem:[%s9 + $0x24] sm:$0xf]
  %v7936 = vld [vmem:[%s9 + $0x28] sm:$0xf]
  %v7937 = vld [vmem:[%s9 + $0x2c] sm:$0xf]
  %v7938 = vld [vmem:[%s9 + $0x30] sm:$0xf]
  %v7939 = vld [vmem:[%s9 + $0x34] sm:$0xf]
  %v7940 = vld [vmem:[%s9 + $0x38] sm:$0xf]
  %v7941 = vld [vmem:[%s9 + $0x3c] sm:$0xf]
  %v7942 = vld [vmem:[%s9 + $0x40] sm:$0xf]
  %v7943 = vld [vmem:[%s9 + $0x44] sm:$0xf]
  %v7944 = vld [vmem:[%s9 + $0x48] sm:$0xf]
  %v7945 = vld [vmem:[%s9 + $0x4c] sm:$0xf]
  %v7946 = vld [vmem:[%s9 + $0x50] sm:$0xf]
  %v7947 = vld [vmem:[%s9 + $0x54] sm:$0xf]
  %v7948 = vld [vmem:[%s9 + $0x58] sm:$0xf]
  %v7949 = vld [vmem:[%s9 + $0x5c] sm:$0xf]
  %v7950 = vld [vmem:[%s9 + $0x60] sm:$0xf]
  %v7951 = vld [vmem:[%s9 + $0x64] sm:$0xf]
  %v7952 = vld [vmem:[%s9 + $0x68] sm:$0xf]
  %v7953 = vld [vmem:[%s9 + $0x6c] sm:$0xf]
  %v7954 = vld [vmem:[%s9 + $0x70] sm:$0xf]
  %v7955 = vld [vmem:[%s9 + $0x74] sm:$0xf]
  %v7956 = vld [vmem:[%s9 + $0x78] sm:$0xf]
  %v7957 = vld [vmem:[%s9 + $0x7c] sm:$0xf]
  %v7958 = vld [vmem:[%s9 + $0x80] sm:$0xf]
  %v7959 = vld [vmem:[%s9 + $0x84] sm:$0xf]
  %v7960 = vld [vmem:[%s9 + $0x88] sm:$0xf]
  %v7961 = vld [vmem:[%s9 + $0x8c] sm:$0xf]
  %v7962 = vld [vmem:[%s9 + $0x90] sm:$0xf]
  %v7963 = vld [vmem:[%s9 + $0x94] sm:$0xf]
  %v7964 = vld [vmem:[%s9 + $0x98] sm:$0xf]
  %v7965 = vld [vmem:[%s9 + $0x9c] sm:$0xf]
  %v7966 = vld [vmem:[%s9 + $0xa0] sm:$0xf]
  %v7967 = vld [vmem:[%s9 + $0xa4] sm:$0xf]
  %v7968 = vld [vmem:[%s9 + $0xa8] sm:$0xf]
  %v7969 = vld [vmem:[%s9 + $0xac] sm:$0xf]
  %v7970 = vld [vmem:[%s9 + $0xb0] sm:$0xf]
  %v7971 = vld [vmem:[%s9 + $0xb4] sm:$0xf]
  %v7972 = vld [vmem:[%s9 + $0xb8] sm:$0xf]
  %v7973 = vld [vmem:[%s9 + $0xbc] sm:$0xf]
  %v7974 = vld [vmem:[%s9 + $0xc0] sm:$0xf]
  %v7975 = vld [vmem:[%s9 + $0xc4] sm:$0xf]
  %v7976 = vld [vmem:[%s9 + $0xc8] sm:$0xf]
  %v7977 = vld [vmem:[%s9 + $0xcc] sm:$0xf]
  %v7978 = vld [vmem:[%s9 + $0xd0] sm:$0xf]
  %v7979 = vld [vmem:[%s9 + $0xd4] sm:$0xf]
  %v7980 = vld [vmem:[%s9 + $0xd8] sm:$0xf]
  %v7981 = vld [vmem:[%s9 + $0xdc] sm:$0xf]
  %v7982 = vld [vmem:[%s9 + $0xe0] sm:$0xf]
  %v7983 = vld [vmem:[%s9 + $0xe4] sm:$0xf]
  %v7984 = vld [vmem:[%s9 + $0xe8] sm:$0xf]
  %v7985 = vld [vmem:[%s9 + $0xec] sm:$0xf]
  %v7986 = vld [vmem:[%s9 + $0xf0] sm:$0xf]
  %v7987 = vld [vmem:[%s9 + $0xf4] sm:$0xf]
  %v7988 = vld [vmem:[%s9 + $0xf8] sm:$0xf]
  %v7989 = vld [vmem:[%s9 + $0xfc] sm:$0xf]
  %v7990 = vld [vmem:[%s10] sm:$0x1]
  %v7992 = vperm.slane %v7990, 0
  %v8058 = vunpack.c.l.b16 %v7926
  %v8059 = vunpack.c.l.b16 %v7927
  %v8060 = vunpack.c.l.b16 %v7928
  %v8061 = vunpack.c.l.b16 %v7929
  %v8062 = vunpack.c.l.b16 %v7930
  %v8063 = vunpack.c.l.b16 %v7931
  %v8064 = vunpack.c.l.b16 %v7932
  %v8065 = vunpack.c.l.b16 %v7933
  %v8066 = vunpack.c.l.b16 %v7934
  %v8067 = vunpack.c.l.b16 %v7935
  %v8068 = vunpack.c.l.b16 %v7936
  %v8069 = vunpack.c.l.b16 %v7937
  %v8070 = vunpack.c.l.b16 %v7938
  %v8071 = vunpack.c.l.b16 %v7939
  %v8072 = vunpack.c.l.b16 %v7940
  %v8073 = vunpack.c.l.b16 %v7941
  %v8074 = vunpack.c.l.b16 %v7942
  %v8075 = vunpack.c.l.b16 %v7943
  %v8076 = vunpack.c.l.b16 %v7944
  %v8077 = vunpack.c.l.b16 %v7945
  %v8078 = vunpack.c.l.b16 %v7946
  %v8079 = vunpack.c.l.b16 %v7947
  %v8080 = vunpack.c.l.b16 %v7948
  %v8081 = vunpack.c.l.b16 %v7949
  %v8082 = vunpack.c.l.b16 %v7950
  %v8083 = vunpack.c.l.b16 %v7951
  %v8084 = vunpack.c.l.b16 %v7952
  %v8085 = vunpack.c.l.b16 %v7953
  %v8086 = vunpack.c.l.b16 %v7954
  %v8087 = vunpack.c.l.b16 %v7955
  %v8088 = vunpack.c.l.b16 %v7956
  %v8089 = vunpack.c.l.b16 %v7957
  %v8090 = vunpack.c.l.b16 %v7958
  %v8091 = vunpack.c.l.b16 %v7959
  %v8092 = vunpack.c.l.b16 %v7960
  %v8093 = vunpack.c.l.b16 %v7961
  %v8094 = vunpack.c.l.b16 %v7962
  %v8095 = vunpack.c.l.b16 %v7963
  %v8096 = vunpack.c.l.b16 %v7964
  %v8097 = vunpack.c.l.b16 %v7965
  %v8098 = vunpack.c.l.b16 %v7966
  %v8099 = vunpack.c.l.b16 %v7967
  %v8100 = vunpack.c.l.b16 %v7968
  %v8101 = vunpack.c.l.b16 %v7969
  %v8102 = vunpack.c.l.b16 %v7970
  %v8103 = vunpack.c.l.b16 %v7971
  %v8104 = vunpack.c.l.b16 %v7972
  %v8105 = vunpack.c.l.b16 %v7973
  %v8106 = vunpack.c.l.b16 %v7974
  %v8107 = vunpack.c.l.b16 %v7975
  %v8108 = vunpack.c.l.b16 %v7976
  %v8109 = vunpack.c.l.b16 %v7977
  %v8110 = vunpack.c.l.b16 %v7978
  %v8111 = vunpack.c.l.b16 %v7979
  %v8112 = vunpack.c.l.b16 %v7980
  %v8113 = vunpack.c.l.b16 %v7981
  %v8114 = vunpack.c.l.b16 %v7982
  %v8115 = vunpack.c.l.b16 %v7983
  %v8116 = vunpack.c.l.b16 %v7984
  %v8117 = vunpack.c.l.b16 %v7985
  %v8118 = vunpack.c.l.b16 %v7986
  %v8119 = vunpack.c.l.b16 %v7987
  %v8120 = vunpack.c.l.b16 %v7988
  %v8121 = vunpack.c.l.b16 %v7989
  %v8122 = vpack.c.b16 %v8059, %v8058
  %v8123 = vpack.c.b16 %v8061, %v8060
  %v8124 = vpack.c.b16 %v8063, %v8062
  %v8125 = vpack.c.b16 %v8065, %v8064
  %v8126 = vpack.c.b16 %v8067, %v8066
  %v8127 = vpack.c.b16 %v8069, %v8068
  %v8128 = vpack.c.b16 %v8071, %v8070
  %v8129 = vpack.c.b16 %v8073, %v8072
  %v8130 = vpack.c.b16 %v8075, %v8074
  %v8131 = vpack.c.b16 %v8077, %v8076
  %v8132 = vpack.c.b16 %v8079, %v8078
  %v8133 = vpack.c.b16 %v8081, %v8080
  %v8134 = vpack.c.b16 %v8083, %v8082
  %v8135 = vpack.c.b16 %v8085, %v8084
  %v8136 = vpack.c.b16 %v8087, %v8086
  %v8137 = vpack.c.b16 %v8089, %v8088
  %v8138 = vpack.c.b16 %v8091, %v8090
  %v8139 = vpack.c.b16 %v8093, %v8092
  %v8140 = vpack.c.b16 %v8095, %v8094
  %v8141 = vpack.c.b16 %v8097, %v8096
  %v8142 = vpack.c.b16 %v8099, %v8098
  %v8143 = vpack.c.b16 %v8101, %v8100
  %v8144 = vpack.c.b16 %v8103, %v8102
  %v8145 = vpack.c.b16 %v8105, %v8104
  %v8146 = vpack.c.b16 %v8107, %v8106
  %v8147 = vpack.c.b16 %v8109, %v8108
  %v8148 = vpack.c.b16 %v8111, %v8110
  %v8149 = vpack.c.b16 %v8113, %v8112
  %v8150 = vpack.c.b16 %v8115, %v8114
  %v8151 = vpack.c.b16 %v8117, %v8116
  %v8152 = vpack.c.b16 %v8119, %v8118
  %v8153 = vpack.c.b16 %v8121, %v8120
  %8186 = vmatpush.bf16.msra.mxu0 %v8129
  %8187 = vmatpush.bf16.msra.mxu0 %v8128
  %8188 = vmatpush.bf16.msra.mxu0 %v8127
  %8189 = vmatpush.bf16.msra.mxu0 %v8126
  %8190 = vmatpush.bf16.msra.mxu0 %v8125
  %8191 = vmatpush.bf16.msra.mxu0 %v8124
  %8192 = vmatpush.bf16.msra.mxu0 %v8123
  %8193 = vmatpush.bf16.msra.mxu0 %v8122
  %8194 = vmatmul.bf16.gmra.mxu0 %v7922
  %v8195 = vpop.f32.mrf.mxu0
  %v8196 = vadd.f32 %v7992, %v8195
  %v8197 = vpop.f32.mrf.mxu0
  %8198 = vdwg.mxu0
  %8199 = vmatpush.bf16.msra.mxu0 %v8137
  %8200 = vmatpush.bf16.msra.mxu0 %v8136
  %8201 = vmatpush.bf16.msra.mxu0 %v8135
  %8202 = vmatpush.bf16.msra.mxu0 %v8134
  %8203 = vmatpush.bf16.msra.mxu0 %v8133
  %8204 = vmatpush.bf16.msra.mxu0 %v8132
  %8205 = vmatpush.bf16.msra.mxu0 %v8131
  %8206 = vmatpush.bf16.msra.mxu0 %v8130
  %8207 = vmatmul.bf16.gmra.mxu0 %v7923
  %v8208 = vpop.f32.mrf.mxu0
  %v8209 = vadd.f32 %v8196, %v8208
  %v8210 = vpop.f32.mrf.mxu0
  %8211 = vdwg.mxu0
  %8212 = vmatpush.bf16.msra.mxu0 %v8145
  %8213 = vmatpush.bf16.msra.mxu0 %v8144
  %8214 = vmatpush.bf16.msra.mxu0 %v8143
  %8215 = vmatpush.bf16.msra.mxu0 %v8142
  %8216 = vmatpush.bf16.msra.mxu0 %v8141
  %8217 = vmatpush.bf16.msra.mxu0 %v8140
  %8218 = vmatpush.bf16.msra.mxu0 %v8139
  %8219 = vmatpush.bf16.msra.mxu0 %v8138
  %8220 = vmatmul.bf16.gmra.mxu0 %v7924
  %v8221 = vpop.f32.mrf.mxu0
  %v8222 = vadd.f32 %v8209, %v8221
  %v8223 = vpop.f32.mrf.mxu0
  %8224 = vdwg.mxu0
  %8225 = vmatpush.bf16.msra.mxu0 %v8153
  %8226 = vmatpush.bf16.msra.mxu0 %v8152
  %8227 = vmatpush.bf16.msra.mxu0 %v8151
  %8228 = vmatpush.bf16.msra.mxu0 %v8150
  %8229 = vmatpush.bf16.msra.mxu0 %v8149
  %8230 = vmatpush.bf16.msra.mxu0 %v8148
  %8231 = vmatpush.bf16.msra.mxu0 %v8147
  %8232 = vmatpush.bf16.msra.mxu0 %v8146
  %8233 = vmatmul.bf16.gmra.mxu0 %v7925
  %v8234 = vpop.f32.mrf.mxu0
  %v8235 = vadd.f32 %v8222, %v8234
  %v8236 = vpop.f32.mrf.mxu0
  %8237 = vdwg.mxu0
  %v8238 = vxor.u32 %v8235, 2147483648
  %v8239 = vmul.f32 %v8238, 1.442695
  %v8240 = vpow.pop %v8239
  %v8241 = vadd.f32 %v8240, 1.0
  %v8242 = vrcp.pop %v8241
  %v8243 = vmul.f32 %v8241, %v8242
  %v8244 = vsub.f32 1.0, %v8243
  %v8245 = vmul.f32 %v8242, %v8244
  %v8246 = vadd.f32 %v8242, %v8245
  %vm8247 = vweird.f32 %v8241
  %vm8248 = vweird.f32 %v8242
  %vm8249 = vmor %vm8247, %vm8248
  %v8250 = vsel %vm8249, %v8242, %v8246
  %v8251 = vand.u32 2147483647, %v8241
  %vm8252 = vcmp.eq.f32.partialorder %v8251, 8.507059e+37
  %v8253 = vand.u32 %v8241, 2147483648
  %v8254 = vor.u32 1.1754944e-38, %v8253
  %v8255 = vsel %vm8252, %v8254, %v8250
  %v8256 = vmul.f32 1.0, %v8255
  %8257 = vst [vmem:[%s11] sm:$0x3] %v8256
  // Predicated region
  $region46: #{discriminator_forward.1} parent=0 // pred_check
    _
  $region47: #{discriminator_forward.1} parent=0 // pred_check_branch
    %8259 = sbr.rel (0) target = $region49
  $region48: #{discriminator_forward.1} parent=0 // pred_region
    _
  $region49: #{discriminator_forward.1} parent=0 // pred_fallthru
    _
  // Predicated region
  $region50: #{discriminator_forward.1} parent=0 // pred_check
    _
  $region51: #{discriminator_forward.1} parent=0 // pred_check_branch
    %8261 = sbr.rel (0) target = $region53
  $region52: #{discriminator_forward.1} parent=0 // pred_region
    _
  $region53: #{discriminator_forward.1} parent=0 // pred_fallthru
    _

</llo_original>
